<compile_context>
chip_gen: v6e
topology: v6e:2x2x1
jax: 0.10.0
libtpu: 0.0.40
codegen_flags: <defaults>
</compile_context>

<pallas_src>
import math

import jax
import jax.numpy as jnp
from jax.experimental import pallas as pl
from jax.experimental.pallas import tpu as pltpu

_LEFT = 8            # sublane-aligned column where the image starts in the scratch
_GUARD = 16          # extra scratch columns (left guard + right slack) past Wpc
_NEG_SLOPE = 0.01    # nn.LeakyReLU default negative_slope

# How the +/-1-column-shifted conv operands are produced inside the kernel:
#   "pltpu" -> pltpu.roll on the sublane axis (XLU rotate, no relayout) [preferred]
#   "slice" -> sublane-unaligned Ref slices (always lowers)             [fallback]
_ROLL_IMPL = None
_ROLL_SIGN = 1


def _round_up(x, m):
    return ((x + m - 1) // m) * m


# --------------------------------------------------------------------------
# One-off probe: does pltpu.roll lower for a bf16 sublane rotate, and which
# shift convention does it use?  Must run eagerly (outside any jit trace).
# --------------------------------------------------------------------------
def _probe_roll_support():
    global _ROLL_IMPL, _ROLL_SIGN
    if _ROLL_IMPL is not None:
        return
    shape = (16, 32, 24)
    n = shape[0] * shape[1] * shape[2]
    x = (jnp.arange(n, dtype=jnp.int32) % 251).astype(jnp.bfloat16).reshape(shape)

    def kernel(x_ref, o_ref):
        o_ref[...] = pltpu.roll(x_ref[...], 1, axis=1)

    try:
        got = pl.pallas_call(
            kernel, out_shape=jax.ShapeDtypeStruct(shape, jnp.bfloat16))(x)
        got = jax.block_until_ready(got)
        if bool(jnp.all(got == jnp.roll(x, 1, axis=1))):
            _ROLL_IMPL, _ROLL_SIGN = "pltpu", 1
        elif bool(jnp.all(got == jnp.roll(x, -1, axis=1))):
            _ROLL_IMPL, _ROLL_SIGN = "pltpu", -1
        else:
            _ROLL_IMPL, _ROLL_SIGN = "slice", 1
    except Exception:  # lowering / runtime failure -> safe fallback path
        _ROLL_IMPL, _ROLL_SIGN = "slice", 1


# --------------------------------------------------------------------------
# In-kernel helpers
# --------------------------------------------------------------------------
def _build_stacked(st_ref, src):
    """Write the dy-stacked, zero-padded conv operand into VMEM.

    st_ref: (H, Wg, 3*Cin) scratch with semantics
        st[y, _LEFT + x, dy*Cin:(dy+1)*Cin] = src[y + dy - 1, x]   (zero outside)
    Only the border stripes are zero-filled; the interior is fully overwritten
    each call, so the fill cost is O(perimeter), not O(area).
    """
    H, W, Cin = src.shape
    Wg = st_ref.shape[1]
    zdt = st_ref.dtype
    zrow = jnp.zeros((1, Wg, Cin), zdt)
    # left guard columns + right halo/slack columns (all dy blocks at once)
    st_ref[:, 0:_LEFT, :] = jnp.zeros((H, _LEFT, 3 * Cin), zdt)
    st_ref[:, _LEFT + W:Wg, :] = jnp.zeros((H, Wg - _LEFT - W, 3 * Cin), zdt)
    # dy = 0 tap (reads input row y - 1)
    st_ref[0:1, :, 0:Cin] = zrow
    st_ref[1:H, _LEFT:_LEFT + W, 0:Cin] = src[0:H - 1]
    # dy = 1 tap (reads input row y)
    st_ref[:, _LEFT:_LEFT + W, Cin:2 * Cin] = src
    # dy = 2 tap (reads input row y + 1)
    st_ref[0:H - 1, _LEFT:_LEFT + W, 2 * Cin:3 * Cin] = src[1:H]
    st_ref[H - 1:H, :, 2 * Cin:3 * Cin] = zrow


def _conv3x3_from_stacked(st_ref, w_ref, b_ref):
    """3x3 'same' conv (+ folded-BN bias + LeakyReLU) from a dy-stacked operand.

    st_ref: (H, Wg, 3*Cin)  dy-stacked padded input (see _build_stacked)
    w_ref : (3, 3*Cin, Cout)  per-dx weights with dy folded into K
    b_ref : (1, Cout)        float32 folded bias
    Returns (H, Wpc, Cout) float32; the valid output sits in columns [0, W).
    Only 3 accumulating MXU matmuls (K = 3*Cin) instead of 9 K=Cin ones.
    """
    H, Wg, K = st_ref.shape
    Wpc = Wg - _GUARD                 # compute width: multiple of 16, >= W + 2

    if _ROLL_IMPL == "pltpu":
        slab = st_ref[:, _LEFT:_LEFT + Wpc, :]          # sublane-aligned window
    acc = None
    for dx in range(3):
        if _ROLL_IMPL == "pltpu":
            if dx == 1:
                op = slab
            else:
                shift = (_ROLL_SIGN * (1 - dx)) % Wpc   # +/-1 column shift (XLU)
                op = pltpu.roll(slab, shift, axis=1)
        else:
            # Fallback: unaligned Ref slices at offsets {7, 8, 9} (proven path).
            c0 = _LEFT - 1 + dx
            op = st_ref[:, c0:c0 + Wpc, :]
        d = jnp.dot(op.reshape(H * Wpc, K), w_ref[dx],
                    preferred_element_type=jnp.float32)
        acc = d if acc is None else acc + d

    y = acc + b_ref[...]                                 # (H*Wpc, Cout) + (1, Cout)
    y = jnp.maximum(y, _NEG_SLOPE * y)                   # LeakyReLU
    Cout = w_ref.shape[2]
    return y.reshape(H, Wpc, Cout)


# --------------------------------------------------------------------------
# Fused basic-block kernel: conv+BN+LReLU -> conv+BN+LReLU -> maxpool2x2
# --------------------------------------------------------------------------
def _fused_block_kernel(x_ref, w1_ref, b1_ref, w2_ref, b2_ref, out_ref,
                        st1_ref, st2_ref):
    """One batch tile (bb images) per grid step.

    x_ref : (bb, H, W, C1)   bf16 input tile
    w*_ref: (3, 3*Cin, Cout) bf16 dy-stacked conv weights (eval BN folded in)
    b*_ref: (1, Cout)        f32 folded bias
    out_ref:(bb, H//2, W//2, C3)
    st*_ref: (H, Wg, 3*Cin)  bf16 VMEM dy-stacked operand scratch (reused)
    """
    bb, H, W, _ = x_ref.shape
    C3 = out_ref.shape[3]
    Ho, Wo = H // 2, W // 2

    for b in range(bb):
        # ---- conv1 (+ folded BN) + LeakyReLU -------------------------------
        _build_stacked(st1_ref, x_ref[b])
        y1 = _conv3x3_from_stacked(st1_ref, w1_ref, b1_ref)   # (H, Wpc, C2) f32
        # ---- conv2 (+ folded BN) + LeakyReLU -------------------------------
        _build_stacked(st2_ref, y1[:, :W, :].astype(st2_ref.dtype))
        y2 = _conv3x3_from_stacked(st2_ref, w2_ref, b2_ref)   # (H, Wpc, C3) f32
        # ---- MaxPool2d(2), entirely in-kernel ------------------------------
        Wpc = y2.shape[1]
        t = y2.reshape(Ho, 2 * Wpc, C3)                       # rows 2p | 2p+1
        rmax = jnp.maximum(t[:, :Wpc, :], t[:, Wpc:, :])      # (Ho, Wpc, C3)
        u = rmax.reshape(Ho * (Wpc // 2), 2, C3)              # adjacent col pairs
        cmax = jnp.maximum(u[:, 0, :], u[:, 1, :]).reshape(Ho, Wpc // 2, C3)
        out_ref[b] = cmax[:, :Wo, :].astype(out_ref.dtype)


def _batch_block(B, H, W):
    """Images per grid step: amortize per-step overhead at small sizes while
    keeping >= 2 grid steps so both v7x TensorCores stay occupied."""
    if H * W > 48 * 48:
        return 1
    for bb in (4, 2):
        if B % bb == 0 and B // bb >= 2:
            return bb
    return 1


def _fused_basic_block(x, params, out_dtype):
    """x: (B, H, W, C1) bf16 NHWC -> (B, H//2, W//2, C3); one pallas_call."""
    B, H, W, C1 = x.shape
    w1s, b1, w2s, b2 = params["w1s"], params["b1"], params["w2s"], params["b2"]
    C2, C3 = w1s.shape[2], w2s.shape[2]
    assert H % 2 == 0 and W % 2 == 0, "MaxPool2d(2) path assumes even H, W"
    Ho, Wo = H // 2, W // 2
    Wpc = _round_up(W + 2, 16)       # compute width (bf16 sublane-tile aligned)
    Wg = Wpc + _GUARD                # scratch width (left guard + right slack)
    bb = _batch_block(B, H, W)

    return pl.pallas_call(
        _fused_block_kernel,
        out_shape=jax.ShapeDtypeStruct((B, Ho, Wo, C3), out_dtype),
        grid=(B // bb,),
        in_specs=[
            pl.BlockSpec((bb, H, W, C1), lambda i: (i, 0, 0, 0)),
            pl.BlockSpec((3, 3 * C1, C2), lambda i: (0, 0, 0)),
            pl.BlockSpec((1, C2), lambda i: (0, 0)),
            pl.BlockSpec((3, 3 * C2, C3), lambda i: (0, 0, 0)),
            pl.BlockSpec((1, C3), lambda i: (0, 0)),
        ],
        out_specs=pl.BlockSpec((bb, Ho, Wo, C3), lambda i: (i, 0, 0, 0)),
        scratch_shapes=[
            pltpu.VMEM((H, Wg, 3 * C1), jnp.bfloat16),
            pltpu.VMEM((H, Wg, 3 * C2), jnp.bfloat16),
        ],
        compiler_params=pltpu.CompilerParams(
            dimension_semantics=("parallel",),        # batch tiles shard across TCs
            vmem_limit_bytes=32 * 1024 * 1024),
    )(x, w1s, b1, w2s, b2)


# --------------------------------------------------------------------------
# Parameter init (deterministic, mirrors the PyTorch __init__ init scheme)
# --------------------------------------------------------------------------
def _kaiming_normal_fanout(key, shape):
    """kaiming_normal_(mode='fan_out', nonlinearity='leaky_relu', a=0), HWIO."""
    kh, kw, _, cout = shape
    std = math.sqrt(2.0) / math.sqrt(cout * kh * kw)
    return std * jax.random.normal(key, shape, jnp.float32)


def _stack_dy(w_hwio):
    """(3, 3, Cin, Cout) HWIO -> (3, 3*Cin, Cout) indexed [dx, dy*Cin + cin, cout]."""
    kh, kw, cin, cout = w_hwio.shape
    return jnp.transpose(w_hwio, (1, 0, 2, 3)).reshape(kw, kh * cin, cout)


def _init_basic_block(key, in_ch, dest_ch, feat_ch):
    """Conv weights (HWIO) with eval-mode BatchNorm folded in.

    Fresh BN (gamma=1, beta=0, running_mean=0, running_var=1, eps=1e-5):
    scale = 1/sqrt(1+eps) folds into the conv weights; the folded bias is 0.
    """
    k1, k2 = jax.random.split(key)
    bn_scale = 1.0 / math.sqrt(1.0 + 1e-5)
    w1 = _kaiming_normal_fanout(k1, (3, 3, in_ch, dest_ch)) * bn_scale
    w2 = _kaiming_normal_fanout(k2, (3, 3, dest_ch, feat_ch)) * bn_scale
    return {
        "w1": w1, "w2": w2,                             # f32 masters (reference)
        "w1s": _stack_dy(w1).astype(jnp.bfloat16),      # kernel weights (dy in K)
        "w2s": _stack_dy(w2).astype(jnp.bfloat16),
        "b1": jnp.zeros((1, dest_ch), jnp.float32),
        "b2": jnp.zeros((1, feat_ch), jnp.float32),
    }


# --------------------------------------------------------------------------
# EncoderVCNet4
# --------------------------------------------------------------------------
class EncoderVCNet4Pallas:
    def __init__(self, key, orig_channels=3, dest_channels=9, feat_channels=64):
        _probe_roll_support()      # eager, before any jit tracing
        kv, k1, k2 = jax.random.split(key, 3)
        self.vision = _init_basic_block(kv, orig_channels, dest_channels, feat_channels)
        self.branch1 = _init_basic_block(k1, feat_channels, dest_channels, feat_channels)
        self.branch2 = _init_basic_block(k2, feat_channels, dest_channels, feat_channels)
        self.out_dim = feat_channels

    def __call__(self, x_nchw, branch=1):
        if branch == 1:
            bp = self.branch1
        elif branch == 2:
            bp = self.branch2
        else:
            raise ValueError()
        x = jnp.transpose(x_nchw, (0, 2, 3, 1)).astype(jnp.bfloat16)  # NCHW -> NHWC
        x = _fused_basic_block(x, self.vision, out_dtype=jnp.bfloat16)
        x = _fused_basic_block(x, bp, out_dtype=jnp.float32)
        return jnp.transpose(x, (0, 3, 1, 2))                         # back to NCHW


# --------------------------------------------------------------------------
# Pure-XLA reference (same bf16 activation/weight handling as the kernels)
# --------------------------------------------------------------------------
def _reference_forward(enc, x_nchw, branch=1):
    bp = enc.branch1 if branch == 1 else enc.branch2
    x = jnp.transpose(x_nchw, (0, 2, 3, 1)).astype(jnp.bfloat16)

    def conv(x_bf16, w_f32, b):
        y = jax.lax.conv_general_dilated(
            x_bf16, w_f32.astype(jnp.bfloat16),
            window_strides=(1, 1), padding="SAME",
            dimension_numbers=("NHWC", "HWIO", "NHWC"),
            preferred_element_type=jnp.float32)
        y = y + b[0]
        return jnp.maximum(y, _NEG_SLOPE * y)

    def block(p, x_bf16, out_dtype):
        y = conv(x_bf16, p["w1"], p["b1"])
        y = conv(y.astype(jnp.bfloat16), p["w2"], p["b2"])
        y = jax.lax.reduce_window(y, -jnp.inf, jax.lax.max,
                                  (1, 2, 2, 1), (1, 2, 2, 1), "VALID")
        return y.astype(out_dtype)

    x = block(enc.vision, x, jnp.bfloat16)
    x = block(bp, x, jnp.float32)
    return jnp.transpose(x, (0, 3, 1, 2))


if __name__ == "__main__":
    key = jax.random.PRNGKey(0)
    kp, kx = jax.random.split(key)

    # Small shapes consistent with the module's forward (NCHW input).
    B, C, H, W = 2, 4, 16, 16
    dest_channels, feat_channels = 8, 32

    enc = EncoderVCNet4Pallas(kp, orig_channels=C,
                              dest_channels=dest_channels,
                              feat_channels=feat_channels)
    x = jax.random.normal(kx, (B, C, H, W), jnp.float32)

    fwd = jax.jit(lambda inp: enc(inp, branch=1))
    out = jax.block_until_ready(fwd(x))

    assert out.shape == (B, feat_channels, H // 4, W // 4), out.shape
    assert out.dtype == jnp.float32

    # Numerics sanity check against a plain-XLA reference that mirrors the
    # kernel's bf16 activation/weight handling (loose tolerance for MXU vs
    # XLA accumulation-order differences).
    ref = jax.block_until_ready(_reference_forward(enc, x, branch=1))
    err = float(jnp.max(jnp.abs(out - ref)))
    assert err < 5e-2, f"max |pallas - reference| = {err}"

    print("KERNEL_OK")
</pallas_src>

<mosaic_0001>
module attributes {stable_mosaic.version = 11 : i64} {
  func.func @kernel(%arg0: memref<16x32x24xbf16, #tpu.memory_space<vmem>>, %arg1: memref<16x32x24xbf16, #tpu.memory_space<vmem>>) attributes {dimension_semantics = [], scalar_prefetch = 0 : i64, scratch_operands = 0 : i64, tpu.core_type = #tpu.core_type<tc>} {
    %c0 = arith.constant 0 : index
    %c0_0 = arith.constant 0 : index
    %c0_1 = arith.constant 0 : index
    %0 = vector.load %arg0[%c0, %c0_0, %c0_1] : memref<16x32x24xbf16, #tpu.memory_space<vmem>>, vector<16x32x24xbf16>
    %c1_i32 = arith.constant 1 : i32
    %1 = tpu.dynamic_rotate %0 by %c1_i32 dim 1 : vector<16x32x24xbf16>, i32 -> vector<16x32x24xbf16>
    %c0_2 = arith.constant 0 : index
    %c0_3 = arith.constant 0 : index
    %c0_4 = arith.constant 0 : index
    %2 = vector.load %arg1[%c0_2, %c0_3, %c0_4] : memref<16x32x24xbf16, #tpu.memory_space<vmem>>, vector<16x32x24xbf16>
    tpu.vector_store %arg1[%c0_2, %c0_3, %c0_4], %1 {strides = array<i32>} : memref<16x32x24xbf16, #tpu.memory_space<vmem>>, vector<16x32x24xbf16>,
    return
  }
}

module attributes {stable_mosaic.version = 11 : i64} {
  func.func @_fused_block_kernel(%arg0: i32, %arg1: memref<1x8x8x32xbf16, #tpu.memory_space<vmem>>, %arg2: memref<3x96x8xbf16, #tpu.memory_space<vmem>>, %arg3: memref<1x8xf32, #tpu.memory_space<vmem>>, %arg4: memref<3x24x32xbf16, #tpu.memory_space<vmem>>, %arg5: memref<1x32xf32, #tpu.memory_space<vmem>>, %arg6: memref<1x4x4x32xf32, #tpu.memory_space<vmem>>, %arg7: memref<8x32x96xbf16, #tpu.memory_space<vmem>>, %arg8: memref<8x32x24xbf16, #tpu.memory_space<vmem>>) attributes {dimension_semantics = [#tpu.dimension_semantics<parallel>], iteration_bounds = array<i64: 2>, scalar_prefetch = 0 : i64, scratch_operands = 2 : i64, tpu.core_type = #tpu.core_type<tc>, window_params = [{transform_indices = @transform_0, window_bounds = array<i64: 1, 8, 8, 32>}, {pipeline_mode = #tpu.pipeline_mode<synchronous>, transform_indices = @transform_1, window_bounds = array<i64: 3, 96, 8>}, {pipeline_mode = #tpu.pipeline_mode<synchronous>, transform_indices = @transform_2, window_bounds = array<i64: 1, 8>}, {pipeline_mode = #tpu.pipeline_mode<synchronous>, transform_indices = @transform_3, window_bounds = array<i64: 3, 24, 32>}, {pipeline_mode = #tpu.pipeline_mode<synchronous>, transform_indices = @transform_4, window_bounds = array<i64: 1, 32>}, {transform_indices = @transform_5, window_bounds = array<i64: 1, 4, 4, 32>}]} {
    %c0 = arith.constant 0 : index
    %c0_0 = arith.constant 0 : index
    %c0_1 = arith.constant 0 : index
    %c0_2 = arith.constant 0 : index
    %0 = vector.load %arg1[%c0, %c0_0, %c0_1, %c0_2] : memref<1x8x8x32xbf16, #tpu.memory_space<vmem>>, vector<1x8x8x32xbf16>
    %1 = vector.shape_cast %0 : vector<1x8x8x32xbf16> to vector<8x8x32xbf16>
    %cst = arith.constant 0.000000e+00 : bf16
    %2 = vector.broadcast %cst : bf16 to vector<1x32x32xbf16>
    %cst_3 = arith.constant 0.000000e+00 : bf16
    %3 = vector.broadcast %cst_3 : bf16 to vector<8x8x96xbf16>
    %c0_4 = arith.constant 0 : index
    %c0_5 = arith.constant 0 : index
    %c0_6 = arith.constant 0 : index
    %4 = vector.load %arg7[%c0_4, %c0_5, %c0_6] : memref<8x32x96xbf16, #tpu.memory_space<vmem>>, vector<8x8x96xbf16>
    tpu.vector_store %arg7[%c0_4, %c0_5, %c0_6], %3 {strides = array<i32>} : memref<8x32x96xbf16, #tpu.memory_space<vmem>>, vector<8x8x96xbf16>,
    %cst_7 = arith.constant 0.000000e+00 : bf16
    %5 = vector.broadcast %cst_7 : bf16 to vector<8x16x96xbf16>
    %c0_8 = arith.constant 0 : index
    %c16 = arith.constant 16 : index
    %c0_9 = arith.constant 0 : index
    %6 = vector.load %arg7[%c0_8, %c16, %c0_9] : memref<8x32x96xbf16, #tpu.memory_space<vmem>>, vector<8x16x96xbf16>
    tpu.vector_store %arg7[%c0_8, %c16, %c0_9], %5 {strides = array<i32>} : memref<8x32x96xbf16, #tpu.memory_space<vmem>>, vector<8x16x96xbf16>,
    %c0_10 = arith.constant 0 : index
    %c0_11 = arith.constant 0 : index
    %c0_12 = arith.constant 0 : index
    %7 = vector.load %arg7[%c0_10, %c0_11, %c0_12] : memref<8x32x96xbf16, #tpu.memory_space<vmem>>, vector<1x32x32xbf16>
    tpu.vector_store %arg7[%c0_10, %c0_11, %c0_12], %2 {strides = array<i32>} : memref<8x32x96xbf16, #tpu.memory_space<vmem>>, vector<1x32x32xbf16>,
    %8 = vector.extract_strided_slice %1 {offsets = [0, 0, 0], sizes = [7, 8, 32], strides = [1, 1, 1]} : vector<8x8x32xbf16> to vector<7x8x32xbf16>
    %c1 = arith.constant 1 : index
    %c8 = arith.constant 8 : index
    %c0_13 = arith.constant 0 : index
    %9 = vector.load %arg7[%c1, %c8, %c0_13] : memref<8x32x96xbf16, #tpu.memory_space<vmem>>, vector<7x8x32xbf16>
    tpu.vector_store %arg7[%c1, %c8, %c0_13], %8 {strides = array<i32>} : memref<8x32x96xbf16, #tpu.memory_space<vmem>>, vector<7x8x32xbf16>,
    %c0_14 = arith.constant 0 : index
    %c8_15 = arith.constant 8 : index
    %c32 = arith.constant 32 : index
    %10 = vector.load %arg7[%c0_14, %c8_15, %c32] : memref<8x32x96xbf16, #tpu.memory_space<vmem>>, vector<8x8x32xbf16>
    tpu.vector_store %arg7[%c0_14, %c8_15, %c32], %1 {strides = array<i32>} : memref<8x32x96xbf16, #tpu.memory_space<vmem>>, vector<8x8x32xbf16>,
    %11 = vector.extract_strided_slice %1 {offsets = [1, 0, 0], sizes = [7, 8, 32], strides = [1, 1, 1]} : vector<8x8x32xbf16> to vector<7x8x32xbf16>
    %c0_16 = arith.constant 0 : index
    %c8_17 = arith.constant 8 : index
    %c64 = arith.constant 64 : index
    %12 = vector.load %arg7[%c0_16, %c8_17, %c64] : memref<8x32x96xbf16, #tpu.memory_space<vmem>>, vector<7x8x32xbf16>
    tpu.vector_store %arg7[%c0_16, %c8_17, %c64], %11 {strides = array<i32>} : memref<8x32x96xbf16, #tpu.memory_space<vmem>>, vector<7x8x32xbf16>,
    %c7 = arith.constant 7 : index
    %c0_18 = arith.constant 0 : index
    %c64_19 = arith.constant 64 : index
    %13 = vector.load %arg7[%c7, %c0_18, %c64_19] : memref<8x32x96xbf16, #tpu.memory_space<vmem>>, vector<1x32x32xbf16>
    tpu.vector_store %arg7[%c7, %c0_18, %c64_19], %2 {strides = array<i32>} : memref<8x32x96xbf16, #tpu.memory_space<vmem>>, vector<1x32x32xbf16>,
    %c0_20 = arith.constant 0 : index
    %c7_21 = arith.constant 7 : index
    %c0_22 = arith.constant 0 : index
    %14 = vector.load %arg7[%c0_20, %c7_21, %c0_22] : memref<8x32x96xbf16, #tpu.memory_space<vmem>>, vector<8x16x96xbf16>
    %15 = vector.shape_cast %14 : vector<8x16x96xbf16> to vector<128x96xbf16>
    %c0_23 = arith.constant 0 : index
    %c0_24 = arith.constant 0 : index
    %c0_25 = arith.constant 0 : index
    %16 = vector.load %arg2[%c0_23, %c0_24, %c0_25] : memref<3x96x8xbf16, #tpu.memory_space<vmem>>, vector<1x96x8xbf16>
    %17 = vector.shape_cast %16 : vector<1x96x8xbf16> to vector<96x8xbf16>
    %cst_26 = arith.constant dense<0.000000e+00> : vector<128x8xf32>
    %18 = tpu.matmul %15, %17, %cst_26 {dimension_numbers = #tpu.dot_dimension_numbers<[1], [0], [0], [1], [0, 0, 1, 1], [], []>} : vector<128x96xbf16>, vector<96x8xbf16>, vector<128x8xf32> -> vector<128x8xf32>
    %c0_27 = arith.constant 0 : index
    %c8_28 = arith.constant 8 : index
    %c0_29 = arith.constant 0 : index
    %19 = vector.load %arg7[%c0_27, %c8_28, %c0_29] : memref<8x32x96xbf16, #tpu.memory_space<vmem>>, vector<8x16x96xbf16>
    %20 = vector.shape_cast %19 : vector<8x16x96xbf16> to vector<128x96xbf16>
    %c1_30 = arith.constant 1 : index
    %c0_31 = arith.constant 0 : index
    %c0_32 = arith.constant 0 : index
    %21 = vector.load %arg2[%c1_30, %c0_31, %c0_32] : memref<3x96x8xbf16, #tpu.memory_space<vmem>>, vector<1x96x8xbf16>
    %22 = vector.shape_cast %21 : vector<1x96x8xbf16> to vector<96x8xbf16>
    %cst_33 = arith.constant dense<0.000000e+00> : vector<128x8xf32>
    %23 = tpu.matmul %20, %22, %cst_33 {dimension_numbers = #tpu.dot_dimension_numbers<[1], [0], [0], [1], [0, 0, 1, 1], [], []>} : vector<128x96xbf16>, vector<96x8xbf16>, vector<128x8xf32> -> vector<128x8xf32>
    %24 = arith.addf %18, %23 : vector<128x8xf32>
    %c0_34 = arith.constant 0 : index
    %c9 = arith.constant 9 : index
    %c0_35 = arith.constant 0 : index
    %25 = vector.load %arg7[%c0_34, %c9, %c0_35] : memref<8x32x96xbf16, #tpu.memory_space<vmem>>, vector<8x16x96xbf16>
    %26 = vector.shape_cast %25 : vector<8x16x96xbf16> to vector<128x96xbf16>
    %c2 = arith.constant 2 : index
    %c0_36 = arith.constant 0 : index
    %c0_37 = arith.constant 0 : index
    %27 = vector.load %arg2[%c2, %c0_36, %c0_37] : memref<3x96x8xbf16, #tpu.memory_space<vmem>>, vector<1x96x8xbf16>
    %28 = vector.shape_cast %27 : vector<1x96x8xbf16> to vector<96x8xbf16>
    %cst_38 = arith.constant dense<0.000000e+00> : vector<128x8xf32>
    %29 = tpu.matmul %26, %28, %cst_38 {dimension_numbers = #tpu.dot_dimension_numbers<[1], [0], [0], [1], [0, 0, 1, 1], [], []>} : vector<128x96xbf16>, vector<96x8xbf16>, vector<128x8xf32> -> vector<128x8xf32>
    %30 = arith.addf %24, %29 : vector<128x8xf32>
    %c0_39 = arith.constant 0 : index
    %c0_40 = arith.constant 0 : index
    %31 = vector.load %arg3[%c0_39, %c0_40] : memref<1x8xf32, #tpu.memory_space<vmem>>, vector<1x8xf32>
    %32 = vector.broadcast %31 : vector<1x8xf32> to vector<128x8xf32>
    %33 = arith.addf %30, %32 : vector<128x8xf32>
    %cst_41 = arith.constant 0.00999999977 : f32
    %34 = vector.broadcast %cst_41 : f32 to vector<128x8xf32>
    %35 = arith.mulf %34, %33 : vector<128x8xf32>
    %36 = arith.maximumf %33, %35 : vector<128x8xf32>
    %37 = vector.shape_cast %36 : vector<128x8xf32> to vector<8x16x8xf32>
    %38 = vector.extract_strided_slice %37 {offsets = [0, 0, 0], sizes = [8, 8, 8], strides = [1, 1, 1]} : vector<8x16x8xf32> to vector<8x8x8xf32>
    %39 = arith.truncf %38 : vector<8x8x8xf32> to vector<8x8x8xbf16>
    %cst_42 = arith.constant 0.000000e+00 : bf16
    %40 = vector.broadcast %cst_42 : bf16 to vector<1x32x8xbf16>
    %cst_43 = arith.constant 0.000000e+00 : bf16
    %41 = vector.broadcast %cst_43 : bf16 to vector<8x8x24xbf16>
    %c0_44 = arith.constant 0 : index
    %c0_45 = arith.constant 0 : index
    %c0_46 = arith.constant 0 : index
    %42 = vector.load %arg8[%c0_44, %c0_45, %c0_46] : memref<8x32x24xbf16, #tpu.memory_space<vmem>>, vector<8x8x24xbf16>
    tpu.vector_store %arg8[%c0_44, %c0_45, %c0_46], %41 {strides = array<i32>} : memref<8x32x24xbf16, #tpu.memory_space<vmem>>, vector<8x8x24xbf16>,
    %cst_47 = arith.constant 0.000000e+00 : bf16
    %43 = vector.broadcast %cst_47 : bf16 to vector<8x16x24xbf16>
    %c0_48 = arith.constant 0 : index
    %c16_49 = arith.constant 16 : index
    %c0_50 = arith.constant 0 : index
    %44 = vector.load %arg8[%c0_48, %c16_49, %c0_50] : memref<8x32x24xbf16, #tpu.memory_space<vmem>>, vector<8x16x24xbf16>
    tpu.vector_store %arg8[%c0_48, %c16_49, %c0_50], %43 {strides = array<i32>} : memref<8x32x24xbf16, #tpu.memory_space<vmem>>, vector<8x16x24xbf16>,
    %c0_51 = arith.constant 0 : index
    %c0_52 = arith.constant 0 : index
    %c0_53 = arith.constant 0 : index
    %45 = vector.load %arg8[%c0_51, %c0_52, %c0_53] : memref<8x32x24xbf16, #tpu.memory_space<vmem>>, vector<1x32x8xbf16>
    tpu.vector_store %arg8[%c0_51, %c0_52, %c0_53], %40 {strides = array<i32>} : memref<8x32x24xbf16, #tpu.memory_space<vmem>>, vector<1x32x8xbf16>,
    %46 = vector.extract_strided_slice %39 {offsets = [0, 0, 0], sizes = [7, 8, 8], strides = [1, 1, 1]} : vector<8x8x8xbf16> to vector<7x8x8xbf16>
    %c1_54 = arith.constant 1 : index
    %c8_55 = arith.constant 8 : index
    %c0_56 = arith.constant 0 : index
    %47 = vector.load %arg8[%c1_54, %c8_55, %c0_56] : memref<8x32x24xbf16, #tpu.memory_space<vmem>>, vector<7x8x8xbf16>
    tpu.vector_store %arg8[%c1_54, %c8_55, %c0_56], %46 {strides = array<i32>} : memref<8x32x24xbf16, #tpu.memory_space<vmem>>, vector<7x8x8xbf16>,
    %c0_57 = arith.constant 0 : index
    %c8_58 = arith.constant 8 : index
    %c8_59 = arith.constant 8 : index
    %48 = vector.load %arg8[%c0_57, %c8_58, %c8_59] : memref<8x32x24xbf16, #tpu.memory_space<vmem>>, vector<8x8x8xbf16>
    tpu.vector_store %arg8[%c0_57, %c8_58, %c8_59], %39 {strides = array<i32>} : memref<8x32x24xbf16, #tpu.memory_space<vmem>>, vector<8x8x8xbf16>,
    %49 = vector.extract_strided_slice %39 {offsets = [1, 0, 0], sizes = [7, 8, 8], strides = [1, 1, 1]} : vector<8x8x8xbf16> to vector<7x8x8xbf16>
    %c0_60 = arith.constant 0 : index
    %c8_61 = arith.constant 8 : index
    %c16_62 = arith.constant 16 : index
    %50 = vector.load %arg8[%c0_60, %c8_61, %c16_62] : memref<8x32x24xbf16, #tpu.memory_space<vmem>>, vector<7x8x8xbf16>
    tpu.vector_store %arg8[%c0_60, %c8_61, %c16_62], %49 {strides = array<i32>} : memref<8x32x24xbf16, #tpu.memory_space<vmem>>, vector<7x8x8xbf16>,
    %c7_63 = arith.constant 7 : index
    %c0_64 = arith.constant 0 : index
    %c16_65 = arith.constant 16 : index
    %51 = vector.load %arg8[%c7_63, %c0_64, %c16_65] : memref<8x32x24xbf16, #tpu.memory_space<vmem>>, vector<1x32x8xbf16>
    tpu.vector_store %arg8[%c7_63, %c0_64, %c16_65], %40 {strides = array<i32>} : memref<8x32x24xbf16, #tpu.memory_space<vmem>>, vector<1x32x8xbf16>,
    %c0_66 = arith.constant 0 : index
    %c7_67 = arith.constant 7 : index
    %c0_68 = arith.constant 0 : index
    %52 = vector.load %arg8[%c0_66, %c7_67, %c0_68] : memref<8x32x24xbf16, #tpu.memory_space<vmem>>, vector<8x16x24xbf16>
    %53 = vector.shape_cast %52 : vector<8x16x24xbf16> to vector<128x24xbf16>
    %c0_69 = arith.constant 0 : index
    %c0_70 = arith.constant 0 : index
    %c0_71 = arith.constant 0 : index
    %54 = vector.load %arg4[%c0_69, %c0_70, %c0_71] : memref<3x24x32xbf16, #tpu.memory_space<vmem>>, vector<1x24x32xbf16>
    %55 = vector.shape_cast %54 : vector<1x24x32xbf16> to vector<24x32xbf16>
    %cst_72 = arith.constant dense<0.000000e+00> : vector<128x32xf32>
    %56 = tpu.matmul %53, %55, %cst_72 {dimension_numbers = #tpu.dot_dimension_numbers<[1], [0], [0], [1], [0, 0, 1, 1], [], []>} : vector<128x24xbf16>, vector<24x32xbf16>, vector<128x32xf32> -> vector<128x32xf32>
    %c0_73 = arith.constant 0 : index
    %c8_74 = arith.constant 8 : index
    %c0_75 = arith.constant 0 : index
    %57 = vector.load %arg8[%c0_73, %c8_74, %c0_75] : memref<8x32x24xbf16, #tpu.memory_space<vmem>>, vector<8x16x24xbf16>
    %58 = vector.shape_cast %57 : vector<8x16x24xbf16> to vector<128x24xbf16>
    %c1_76 = arith.constant 1 : index
    %c0_77 = arith.constant 0 : index
    %c0_78 = arith.constant 0 : index
    %59 = vector.load %arg4[%c1_76, %c0_77, %c0_78] : memref<3x24x32xbf16, #tpu.memory_space<vmem>>, vector<1x24x32xbf16>
    %60 = vector.shape_cast %59 : vector<1x24x32xbf16> to vector<24x32xbf16>
    %cst_79 = arith.constant dense<0.000000e+00> : vector<128x32xf32>
    %61 = tpu.matmul %58, %60, %cst_79 {dimension_numbers = #tpu.dot_dimension_numbers<[1], [0], [0], [1], [0, 0, 1, 1], [], []>} : vector<128x24xbf16>, vector<24x32xbf16>, vector<128x32xf32> -> vector<128x32xf32>
    %62 = arith.addf %56, %61 : vector<128x32xf32>
    %c0_80 = arith.constant 0 : index
    %c9_81 = arith.constant 9 : index
    %c0_82 = arith.constant 0 : index
    %63 = vector.load %arg8[%c0_80, %c9_81, %c0_82] : memref<8x32x24xbf16, #tpu.memory_space<vmem>>, vector<8x16x24xbf16>
    %64 = vector.shape_cast %63 : vector<8x16x24xbf16> to vector<128x24xbf16>
    %c2_83 = arith.constant 2 : index
    %c0_84 = arith.constant 0 : index
    %c0_85 = arith.constant 0 : index
    %65 = vector.load %arg4[%c2_83, %c0_84, %c0_85] : memref<3x24x32xbf16, #tpu.memory_space<vmem>>, vector<1x24x32xbf16>
    %66 = vector.shape_cast %65 : vector<1x24x32xbf16> to vector<24x32xbf16>
    %cst_86 = arith.constant dense<0.000000e+00> : vector<128x32xf32>
    %67 = tpu.matmul %64, %66, %cst_86 {dimension_numbers = #tpu.dot_dimension_numbers<[1], [0], [0], [1], [0, 0, 1, 1], [], []>} : vector<128x24xbf16>, vector<24x32xbf16>, vector<128x32xf32> -> vector<128x32xf32>
    %68 = arith.addf %62, %67 : vector<128x32xf32>
    %c0_87 = arith.constant 0 : index
    %c0_88 = arith.constant 0 : index
    %69 = vector.load %arg5[%c0_87, %c0_88] : memref<1x32xf32, #tpu.memory_space<vmem>>, vector<1x32xf32>
    %70 = vector.broadcast %69 : vector<1x32xf32> to vector<128x32xf32>
    %71 = arith.addf %68, %70 : vector<128x32xf32>
    %cst_89 = arith.constant 0.00999999977 : f32
    %72 = vector.broadcast %cst_89 : f32 to vector<128x32xf32>
    %73 = arith.mulf %72, %71 : vector<128x32xf32>
    %74 = arith.maximumf %71, %73 : vector<128x32xf32>
    %75 = vector.shape_cast %74 : vector<128x32xf32> to vector<8x16x32xf32>
    %76 = vector.shape_cast %75 : vector<8x16x32xf32> to vector<4x32x32xf32>
    %77 = vector.extract_strided_slice %76 {offsets = [0, 0, 0], sizes = [4, 16, 32], strides = [1, 1, 1]} : vector<4x32x32xf32> to vector<4x16x32xf32>
    %78 = vector.extract_strided_slice %76 {offsets = [0, 16, 0], sizes = [4, 16, 32], strides = [1, 1, 1]} : vector<4x32x32xf32> to vector<4x16x32xf32>
    %79 = arith.maximumf %77, %78 : vector<4x16x32xf32>
    %80 = vector.shape_cast %79 : vector<4x16x32xf32> to vector<32x2x32xf32>
    %81 = vector.extract_strided_slice %80 {offsets = [0, 0, 0], sizes = [32, 1, 32], strides = [1, 1, 1]} : vector<32x2x32xf32> to vector<32x1x32xf32>
    %82 = vector.shape_cast %81 : vector<32x1x32xf32> to vector<32x32xf32>
    %83 = vector.extract_strided_slice %80 {offsets = [0, 1, 0], sizes = [32, 1, 32], strides = [1, 1, 1]} : vector<32x2x32xf32> to vector<32x1x32xf32>
    %84 = vector.shape_cast %83 : vector<32x1x32xf32> to vector<32x32xf32>
    %85 = arith.maximumf %82, %84 : vector<32x32xf32>
    %86 = vector.shape_cast %85 : vector<32x32xf32> to vector<4x8x32xf32>
    %87 = vector.extract_strided_slice %86 {offsets = [0, 0, 0], sizes = [4, 4, 32], strides = [1, 1, 1]} : vector<4x8x32xf32> to vector<4x4x32xf32>
    %c0_90 = arith.constant 0 : index
    %c0_91 = arith.constant 0 : index
    %c0_92 = arith.constant 0 : index
    %c0_93 = arith.constant 0 : index
    %88 = vector.load %arg6[%c0_90, %c0_91, %c0_92, %c0_93] : memref<1x4x4x32xf32, #tpu.memory_space<vmem>>, vector<1x4x4x32xf32>
    %89 = vector.shape_cast %88 : vector<1x4x4x32xf32> to vector<4x4x32xf32>
    %90 = vector.shape_cast %87 : vector<4x4x32xf32> to vector<1x4x4x32xf32>
    tpu.vector_store %arg6[%c0_90, %c0_91, %c0_92, %c0_93], %90 {strides = array<i32>} : memref<1x4x4x32xf32, #tpu.memory_space<vmem>>, vector<1x4x4x32xf32>,
    return
  }
  func.func @transform_0(%arg0: i32) -> (i32, i32, i32, i32) {
    %c0_i32 = arith.constant 0 : i32
    %c0_i32_0 = arith.constant 0 : i32
    %c0_i32_1 = arith.constant 0 : i32
    %c0_i32_2 = arith.constant 0 : i32
    return %arg0, %c0_i32, %c0_i32_0, %c0_i32_1 : i32, i32, i32, i32
  }
  func.func @transform_1(%arg0: i32) -> (i32, i32, i32) {
    %c0_i32 = arith.constant 0 : i32
    %c0_i32_0 = arith.constant 0 : i32
    %c0_i32_1 = arith.constant 0 : i32
    %c0_i32_2 = arith.constant 0 : i32
    return %c0_i32, %c0_i32_0, %c0_i32_1 : i32, i32, i32
  }
  func.func @transform_2(%arg0: i32) -> (i32, i32) {
    %c0_i32 = arith.constant 0 : i32
    %c0_i32_0 = arith.constant 0 : i32
    %c0_i32_1 = arith.constant 0 : i32
    return %c0_i32, %c0_i32_0 : i32, i32
  }
  func.func @transform_3(%arg0: i32) -> (i32, i32, i32) {
    %c0_i32 = arith.constant 0 : i32
    %c0_i32_0 = arith.constant 0 : i32
    %c0_i32_1 = arith.constant 0 : i32
    %c0_i32_2 = arith.constant 0 : i32
    return %c0_i32, %c0_i32_0, %c0_i32_1 : i32, i32, i32
  }
  func.func @transform_4(%arg0: i32) -> (i32, i32) {
    %c0_i32 = arith.constant 0 : i32
    %c0_i32_0 = arith.constant 0 : i32
    %c0_i32_1 = arith.constant 0 : i32
    return %c0_i32, %c0_i32_0 : i32, i32
  }
  func.func @transform_5(%arg0: i32) -> (i32, i32, i32, i32) {
    %c0_i32 = arith.constant 0 : i32
    %c0_i32_0 = arith.constant 0 : i32
    %c0_i32_1 = arith.constant 0 : i32
    %c0_i32_2 = arith.constant 0 : i32
    return %arg0, %c0_i32, %c0_i32_0, %c0_i32_1 : i32, i32, i32, i32
  }
}

module attributes {stable_mosaic.version = 11 : i64} {
  func.func @_fused_block_kernel(%arg0: i32, %arg1: memref<1x16x16x4xbf16, #tpu.memory_space<vmem>>, %arg2: memref<3x12x8xbf16, #tpu.memory_space<vmem>>, %arg3: memref<1x8xf32, #tpu.memory_space<vmem>>, %arg4: memref<3x24x32xbf16, #tpu.memory_space<vmem>>, %arg5: memref<1x32xf32, #tpu.memory_space<vmem>>, %arg6: memref<1x8x8x32xbf16, #tpu.memory_space<vmem>>, %arg7: memref<16x48x12xbf16, #tpu.memory_space<vmem>>, %arg8: memref<16x48x24xbf16, #tpu.memory_space<vmem>>) attributes {dimension_semantics = [#tpu.dimension_semantics<parallel>], iteration_bounds = array<i64: 2>, scalar_prefetch = 0 : i64, scratch_operands = 2 : i64, tpu.core_type = #tpu.core_type<tc>, window_params = [{transform_indices = @transform_0, window_bounds = array<i64: 1, 16, 16, 4>}, {pipeline_mode = #tpu.pipeline_mode<synchronous>, transform_indices = @transform_1, window_bounds = array<i64: 3, 12, 8>}, {pipeline_mode = #tpu.pipeline_mode<synchronous>, transform_indices = @transform_2, window_bounds = array<i64: 1, 8>}, {pipeline_mode = #tpu.pipeline_mode<synchronous>, transform_indices = @transform_3, window_bounds = array<i64: 3, 24, 32>}, {pipeline_mode = #tpu.pipeline_mode<synchronous>, transform_indices = @transform_4, window_bounds = array<i64: 1, 32>}, {transform_indices = @transform_5, window_bounds = array<i64: 1, 8, 8, 32>}]} {
    %c0 = arith.constant 0 : index
    %c0_0 = arith.constant 0 : index
    %c0_1 = arith.constant 0 : index
    %c0_2 = arith.constant 0 : index
    %0 = vector.load %arg1[%c0, %c0_0, %c0_1, %c0_2] : memref<1x16x16x4xbf16, #tpu.memory_space<vmem>>, vector<1x16x16x4xbf16>
    %1 = vector.shape_cast %0 : vector<1x16x16x4xbf16> to vector<16x16x4xbf16>
    %cst = arith.constant 0.000000e+00 : bf16
    %2 = vector.broadcast %cst : bf16 to vector<1x48x4xbf16>
    %cst_3 = arith.constant 0.000000e+00 : bf16
    %3 = vector.broadcast %cst_3 : bf16 to vector<16x8x12xbf16>
    %c0_4 = arith.constant 0 : index
    %c0_5 = arith.constant 0 : index
    %c0_6 = arith.constant 0 : index
    %4 = vector.load %arg7[%c0_4, %c0_5, %c0_6] : memref<16x48x12xbf16, #tpu.memory_space<vmem>>, vector<16x8x12xbf16>
    tpu.vector_store %arg7[%c0_4, %c0_5, %c0_6], %3 {strides = array<i32>} : memref<16x48x12xbf16, #tpu.memory_space<vmem>>, vector<16x8x12xbf16>,
    %cst_7 = arith.constant 0.000000e+00 : bf16
    %5 = vector.broadcast %cst_7 : bf16 to vector<16x24x12xbf16>
    %c0_8 = arith.constant 0 : index
    %c24 = arith.constant 24 : index
    %c0_9 = arith.constant 0 : index
    %6 = vector.load %arg7[%c0_8, %c24, %c0_9] : memref<16x48x12xbf16, #tpu.memory_space<vmem>>, vector<16x24x12xbf16>
    tpu.vector_store %arg7[%c0_8, %c24, %c0_9], %5 {strides = array<i32>} : memref<16x48x12xbf16, #tpu.memory_space<vmem>>, vector<16x24x12xbf16>,
    %c0_10 = arith.constant 0 : index
    %c0_11 = arith.constant 0 : index
    %c0_12 = arith.constant 0 : index
    %7 = vector.load %arg7[%c0_10, %c0_11, %c0_12] : memref<16x48x12xbf16, #tpu.memory_space<vmem>>, vector<1x48x4xbf16>
    tpu.vector_store %arg7[%c0_10, %c0_11, %c0_12], %2 {strides = array<i32>} : memref<16x48x12xbf16, #tpu.memory_space<vmem>>, vector<1x48x4xbf16>,
    %8 = vector.extract_strided_slice %1 {offsets = [0, 0, 0], sizes = [15, 16, 4], strides = [1, 1, 1]} : vector<16x16x4xbf16> to vector<15x16x4xbf16>
    %c1 = arith.constant 1 : index
    %c8 = arith.constant 8 : index
    %c0_13 = arith.constant 0 : index
    %9 = vector.load %arg7[%c1, %c8, %c0_13] : memref<16x48x12xbf16, #tpu.memory_space<vmem>>, vector<15x16x4xbf16>
    tpu.vector_store %arg7[%c1, %c8, %c0_13], %8 {strides = array<i32>} : memref<16x48x12xbf16, #tpu.memory_space<vmem>>, vector<15x16x4xbf16>,
    %c0_14 = arith.constant 0 : index
    %c8_15 = arith.constant 8 : index
    %c4 = arith.constant 4 : index
    %10 = vector.load %arg7[%c0_14, %c8_15, %c4] : memref<16x48x12xbf16, #tpu.memory_space<vmem>>, vector<16x16x4xbf16>
    tpu.vector_store %arg7[%c0_14, %c8_15, %c4], %1 {strides = array<i32>} : memref<16x48x12xbf16, #tpu.memory_space<vmem>>, vector<16x16x4xbf16>,
    %11 = vector.extract_strided_slice %1 {offsets = [1, 0, 0], sizes = [15, 16, 4], strides = [1, 1, 1]} : vector<16x16x4xbf16> to vector<15x16x4xbf16>
    %c0_16 = arith.constant 0 : index
    %c8_17 = arith.constant 8 : index
    %c8_18 = arith.constant 8 : index
    %12 = vector.load %arg7[%c0_16, %c8_17, %c8_18] : memref<16x48x12xbf16, #tpu.memory_space<vmem>>, vector<15x16x4xbf16>
    tpu.vector_store %arg7[%c0_16, %c8_17, %c8_18], %11 {strides = array<i32>} : memref<16x48x12xbf16, #tpu.memory_space<vmem>>, vector<15x16x4xbf16>,
    %c15 = arith.constant 15 : index
    %c0_19 = arith.constant 0 : index
    %c8_20 = arith.constant 8 : index
    %13 = vector.load %arg7[%c15, %c0_19, %c8_20] : memref<16x48x12xbf16, #tpu.memory_space<vmem>>, vector<1x48x4xbf16>
    tpu.vector_store %arg7[%c15, %c0_19, %c8_20], %2 {strides = array<i32>} : memref<16x48x12xbf16, #tpu.memory_space<vmem>>, vector<1x48x4xbf16>,
    %c0_21 = arith.constant 0 : index
    %c7 = arith.constant 7 : index
    %c0_22 = arith.constant 0 : index
    %14 = vector.load %arg7[%c0_21, %c7, %c0_22] : memref<16x48x12xbf16, #tpu.memory_space<vmem>>, vector<16x32x12xbf16>
    %15 = vector.shape_cast %14 : vector<16x32x12xbf16> to vector<512x12xbf16>
    %c0_23 = arith.constant 0 : index
    %c0_24 = arith.constant 0 : index
    %c0_25 = arith.constant 0 : index
    %16 = vector.load %arg2[%c0_23, %c0_24, %c0_25] : memref<3x12x8xbf16, #tpu.memory_space<vmem>>, vector<1x12x8xbf16>
    %17 = vector.shape_cast %16 : vector<1x12x8xbf16> to vector<12x8xbf16>
    %cst_26 = arith.constant dense<0.000000e+00> : vector<512x8xf32>
    %18 = tpu.matmul %15, %17, %cst_26 {dimension_numbers = #tpu.dot_dimension_numbers<[1], [0], [0], [1], [0, 0, 1, 1], [], []>} : vector<512x12xbf16>, vector<12x8xbf16>, vector<512x8xf32> -> vector<512x8xf32>
    %c0_27 = arith.constant 0 : index
    %c8_28 = arith.constant 8 : index
    %c0_29 = arith.constant 0 : index
    %19 = vector.load %arg7[%c0_27, %c8_28, %c0_29] : memref<16x48x12xbf16, #tpu.memory_space<vmem>>, vector<16x32x12xbf16>
    %20 = vector.shape_cast %19 : vector<16x32x12xbf16> to vector<512x12xbf16>
    %c1_30 = arith.constant 1 : index
    %c0_31 = arith.constant 0 : index
    %c0_32 = arith.constant 0 : index
    %21 = vector.load %arg2[%c1_30, %c0_31, %c0_32] : memref<3x12x8xbf16, #tpu.memory_space<vmem>>, vector<1x12x8xbf16>
    %22 = vector.shape_cast %21 : vector<1x12x8xbf16> to vector<12x8xbf16>
    %cst_33 = arith.constant dense<0.000000e+00> : vector<512x8xf32>
    %23 = tpu.matmul %20, %22, %cst_33 {dimension_numbers = #tpu.dot_dimension_numbers<[1], [0], [0], [1], [0, 0, 1, 1], [], []>} : vector<512x12xbf16>, vector<12x8xbf16>, vector<512x8xf32> -> vector<512x8xf32>
    %24 = arith.addf %18, %23 : vector<512x8xf32>
    %c0_34 = arith.constant 0 : index
    %c9 = arith.constant 9 : index
    %c0_35 = arith.constant 0 : index
    %25 = vector.load %arg7[%c0_34, %c9, %c0_35] : memref<16x48x12xbf16, #tpu.memory_space<vmem>>, vector<16x32x12xbf16>
    %26 = vector.shape_cast %25 : vector<16x32x12xbf16> to vector<512x12xbf16>
    %c2 = arith.constant 2 : index
    %c0_36 = arith.constant 0 : index
    %c0_37 = arith.constant 0 : index
    %27 = vector.load %arg2[%c2, %c0_36, %c0_37] : memref<3x12x8xbf16, #tpu.memory_space<vmem>>, vector<1x12x8xbf16>
    %28 = vector.shape_cast %27 : vector<1x12x8xbf16> to vector<12x8xbf16>
    %cst_38 = arith.constant dense<0.000000e+00> : vector<512x8xf32>
    %29 = tpu.matmul %26, %28, %cst_38 {dimension_numbers = #tpu.dot_dimension_numbers<[1], [0], [0], [1], [0, 0, 1, 1], [], []>} : vector<512x12xbf16>, vector<12x8xbf16>, vector<512x8xf32> -> vector<512x8xf32>
    %30 = arith.addf %24, %29 : vector<512x8xf32>
    %c0_39 = arith.constant 0 : index
    %c0_40 = arith.constant 0 : index
    %31 = vector.load %arg3[%c0_39, %c0_40] : memref<1x8xf32, #tpu.memory_space<vmem>>, vector<1x8xf32>
    %32 = vector.broadcast %31 : vector<1x8xf32> to vector<512x8xf32>
    %33 = arith.addf %30, %32 : vector<512x8xf32>
    %cst_41 = arith.constant 0.00999999977 : f32
    %34 = vector.broadcast %cst_41 : f32 to vector<512x8xf32>
    %35 = arith.mulf %34, %33 : vector<512x8xf32>
    %36 = arith.maximumf %33, %35 : vector<512x8xf32>
    %37 = vector.shape_cast %36 : vector<512x8xf32> to vector<16x32x8xf32>
    %38 = vector.extract_strided_slice %37 {offsets = [0, 0, 0], sizes = [16, 16, 8], strides = [1, 1, 1]} : vector<16x32x8xf32> to vector<16x16x8xf32>
    %39 = arith.truncf %38 : vector<16x16x8xf32> to vector<16x16x8xbf16>
    %cst_42 = arith.constant 0.000000e+00 : bf16
    %40 = vector.broadcast %cst_42 : bf16 to vector<1x48x8xbf16>
    %cst_43 = arith.constant 0.000000e+00 : bf16
    %41 = vector.broadcast %cst_43 : bf16 to vector<16x8x24xbf16>
    %c0_44 = arith.constant 0 : index
    %c0_45 = arith.constant 0 : index
    %c0_46 = arith.constant 0 : index
    %42 = vector.load %arg8[%c0_44, %c0_45, %c0_46] : memref<16x48x24xbf16, #tpu.memory_space<vmem>>, vector<16x8x24xbf16>
    tpu.vector_store %arg8[%c0_44, %c0_45, %c0_46], %41 {strides = array<i32>} : memref<16x48x24xbf16, #tpu.memory_space<vmem>>, vector<16x8x24xbf16>,
    %cst_47 = arith.constant 0.000000e+00 : bf16
    %43 = vector.broadcast %cst_47 : bf16 to vector<16x24x24xbf16>
    %c0_48 = arith.constant 0 : index
    %c24_49 = arith.constant 24 : index
    %c0_50 = arith.constant 0 : index
    %44 = vector.load %arg8[%c0_48, %c24_49, %c0_50] : memref<16x48x24xbf16, #tpu.memory_space<vmem>>, vector<16x24x24xbf16>
    tpu.vector_store %arg8[%c0_48, %c24_49, %c0_50], %43 {strides = array<i32>} : memref<16x48x24xbf16, #tpu.memory_space<vmem>>, vector<16x24x24xbf16>,
    %c0_51 = arith.constant 0 : index
    %c0_52 = arith.constant 0 : index
    %c0_53 = arith.constant 0 : index
    %45 = vector.load %arg8[%c0_51, %c0_52, %c0_53] : memref<16x48x24xbf16, #tpu.memory_space<vmem>>, vector<1x48x8xbf16>
    tpu.vector_store %arg8[%c0_51, %c0_52, %c0_53], %40 {strides = array<i32>} : memref<16x48x24xbf16, #tpu.memory_space<vmem>>, vector<1x48x8xbf16>,
    %46 = vector.extract_strided_slice %39 {offsets = [0, 0, 0], sizes = [15, 16, 8], strides = [1, 1, 1]} : vector<16x16x8xbf16> to vector<15x16x8xbf16>
    %c1_54 = arith.constant 1 : index
    %c8_55 = arith.constant 8 : index
    %c0_56 = arith.constant 0 : index
    %47 = vector.load %arg8[%c1_54, %c8_55, %c0_56] : memref<16x48x24xbf16, #tpu.memory_space<vmem>>, vector<15x16x8xbf16>
    tpu.vector_store %arg8[%c1_54, %c8_55, %c0_56], %46 {strides = array<i32>} : memref<16x48x24xbf16, #tpu.memory_space<vmem>>, vector<15x16x8xbf16>,
    %c0_57 = arith.constant 0 : index
    %c8_58 = arith.constant 8 : index
    %c8_59 = arith.constant 8 : index
    %48 = vector.load %arg8[%c0_57, %c8_58, %c8_59] : memref<16x48x24xbf16, #tpu.memory_space<vmem>>, vector<16x16x8xbf16>
    tpu.vector_store %arg8[%c0_57, %c8_58, %c8_59], %39 {strides = array<i32>} : memref<16x48x24xbf16, #tpu.memory_space<vmem>>, vector<16x16x8xbf16>,
    %49 = vector.extract_strided_slice %39 {offsets = [1, 0, 0], sizes = [15, 16, 8], strides = [1, 1, 1]} : vector<16x16x8xbf16> to vector<15x16x8xbf16>
    %c0_60 = arith.constant 0 : index
    %c8_61 = arith.constant 8 : index
    %c16 = arith.constant 16 : index
    %50 = vector.load %arg8[%c0_60, %c8_61, %c16] : memref<16x48x24xbf16, #tpu.memory_space<vmem>>, vector<15x16x8xbf16>
    tpu.vector_store %arg8[%c0_60, %c8_61, %c16], %49 {strides = array<i32>} : memref<16x48x24xbf16, #tpu.memory_space<vmem>>, vector<15x16x8xbf16>,
    %c15_62 = arith.constant 15 : index
    %c0_63 = arith.constant 0 : index
    %c16_64 = arith.constant 16 : index
    %51 = vector.load %arg8[%c15_62, %c0_63, %c16_64] : memref<16x48x24xbf16, #tpu.memory_space<vmem>>, vector<1x48x8xbf16>
    tpu.vector_store %arg8[%c15_62, %c0_63, %c16_64], %40 {strides = array<i32>} : memref<16x48x24xbf16, #tpu.memory_space<vmem>>, vector<1x48x8xbf16>,
    %c0_65 = arith.constant 0 : index
    %c7_66 = arith.constant 7 : index
    %c0_67 = arith.constant 0 : index
    %52 = vector.load %arg8[%c0_65, %c7_66, %c0_67] : memref<16x48x24xbf16, #tpu.memory_space<vmem>>, vector<16x32x24xbf16>
    %53 = vector.shape_cast %52 : vector<16x32x24xbf16> to vector<512x24xbf16>
    %c0_68 = arith.constant 0 : index
    %c0_69 = arith.constant 0 : index
    %c0_70 = arith.constant 0 : index
    %54 = vector.load %arg4[%c0_68, %c0_69, %c0_70] : memref<3x24x32xbf16, #tpu.memory_space<vmem>>, vector<1x24x32xbf16>
    %55 = vector.shape_cast %54 : vector<1x24x32xbf16> to vector<24x32xbf16>
    %cst_71 = arith.constant dense<0.000000e+00> : vector<512x32xf32>
    %56 = tpu.matmul %53, %55, %cst_71 {dimension_numbers = #tpu.dot_dimension_numbers<[1], [0], [0], [1], [0, 0, 1, 1], [], []>} : vector<512x24xbf16>, vector<24x32xbf16>, vector<512x32xf32> -> vector<512x32xf32>
    %c0_72 = arith.constant 0 : index
    %c8_73 = arith.constant 8 : index
    %c0_74 = arith.constant 0 : index
    %57 = vector.load %arg8[%c0_72, %c8_73, %c0_74] : memref<16x48x24xbf16, #tpu.memory_space<vmem>>, vector<16x32x24xbf16>
    %58 = vector.shape_cast %57 : vector<16x32x24xbf16> to vector<512x24xbf16>
    %c1_75 = arith.constant 1 : index
    %c0_76 = arith.constant 0 : index
    %c0_77 = arith.constant 0 : index
    %59 = vector.load %arg4[%c1_75, %c0_76, %c0_77] : memref<3x24x32xbf16, #tpu.memory_space<vmem>>, vector<1x24x32xbf16>
    %60 = vector.shape_cast %59 : vector<1x24x32xbf16> to vector<24x32xbf16>
    %cst_78 = arith.constant dense<0.000000e+00> : vector<512x32xf32>
    %61 = tpu.matmul %58, %60, %cst_78 {dimension_numbers = #tpu.dot_dimension_numbers<[1], [0], [0], [1], [0, 0, 1, 1], [], []>} : vector<512x24xbf16>, vector<24x32xbf16>, vector<512x32xf32> -> vector<512x32xf32>
    %62 = arith.addf %56, %61 : vector<512x32xf32>
    %c0_79 = arith.constant 0 : index
    %c9_80 = arith.constant 9 : index
    %c0_81 = arith.constant 0 : index
    %63 = vector.load %arg8[%c0_79, %c9_80, %c0_81] : memref<16x48x24xbf16, #tpu.memory_space<vmem>>, vector<16x32x24xbf16>
    %64 = vector.shape_cast %63 : vector<16x32x24xbf16> to vector<512x24xbf16>
    %c2_82 = arith.constant 2 : index
    %c0_83 = arith.constant 0 : index
    %c0_84 = arith.constant 0 : index
    %65 = vector.load %arg4[%c2_82, %c0_83, %c0_84] : memref<3x24x32xbf16, #tpu.memory_space<vmem>>, vector<1x24x32xbf16>
    %66 = vector.shape_cast %65 : vector<1x24x32xbf16> to vector<24x32xbf16>
    %cst_85 = arith.constant dense<0.000000e+00> : vector<512x32xf32>
    %67 = tpu.matmul %64, %66, %cst_85 {dimension_numbers = #tpu.dot_dimension_numbers<[1], [0], [0], [1], [0, 0, 1, 1], [], []>} : vector<512x24xbf16>, vector<24x32xbf16>, vector<512x32xf32> -> vector<512x32xf32>
    %68 = arith.addf %62, %67 : vector<512x32xf32>
    %c0_86 = arith.constant 0 : index
    %c0_87 = arith.constant 0 : index
    %69 = vector.load %arg5[%c0_86, %c0_87] : memref<1x32xf32, #tpu.memory_space<vmem>>, vector<1x32xf32>
    %70 = vector.broadcast %69 : vector<1x32xf32> to vector<512x32xf32>
    %71 = arith.addf %68, %70 : vector<512x32xf32>
    %cst_88 = arith.constant 0.00999999977 : f32
    %72 = vector.broadcast %cst_88 : f32 to vector<512x32xf32>
    %73 = arith.mulf %72, %71 : vector<512x32xf32>
    %74 = arith.maximumf %71, %73 : vector<512x32xf32>
    %75 = vector.shape_cast %74 : vector<512x32xf32> to vector<16x32x32xf32>
    %76 = vector.shape_cast %75 : vector<16x32x32xf32> to vector<8x64x32xf32>
    %77 = vector.extract_strided_slice %76 {offsets = [0, 0, 0], sizes = [8, 32, 32], strides = [1, 1, 1]} : vector<8x64x32xf32> to vector<8x32x32xf32>
    %78 = vector.extract_strided_slice %76 {offsets = [0, 32, 0], sizes = [8, 32, 32], strides = [1, 1, 1]} : vector<8x64x32xf32> to vector<8x32x32xf32>
    %79 = arith.maximumf %77, %78 : vector<8x32x32xf32>
    %80 = vector.shape_cast %79 : vector<8x32x32xf32> to vector<128x2x32xf32>
    %81 = vector.extract_strided_slice %80 {offsets = [0, 0, 0], sizes = [128, 1, 32], strides = [1, 1, 1]} : vector<128x2x32xf32> to vector<128x1x32xf32>
    %82 = vector.shape_cast %81 : vector<128x1x32xf32> to vector<128x32xf32>
    %83 = vector.extract_strided_slice %80 {offsets = [0, 1, 0], sizes = [128, 1, 32], strides = [1, 1, 1]} : vector<128x2x32xf32> to vector<128x1x32xf32>
    %84 = vector.shape_cast %83 : vector<128x1x32xf32> to vector<128x32xf32>
    %85 = arith.maximumf %82, %84 : vector<128x32xf32>
    %86 = vector.shape_cast %85 : vector<128x32xf32> to vector<8x16x32xf32>
    %87 = vector.extract_strided_slice %86 {offsets = [0, 0, 0], sizes = [8, 8, 32], strides = [1, 1, 1]} : vector<8x16x32xf32> to vector<8x8x32xf32>
    %88 = arith.truncf %87 : vector<8x8x32xf32> to vector<8x8x32xbf16>
    %c0_89 = arith.constant 0 : index
    %c0_90 = arith.constant 0 : index
    %c0_91 = arith.constant 0 : index
    %c0_92 = arith.constant 0 : index
    %89 = vector.load %arg6[%c0_89, %c0_90, %c0_91, %c0_92] : memref<1x8x8x32xbf16, #tpu.memory_space<vmem>>, vector<1x8x8x32xbf16>
    %90 = vector.shape_cast %89 : vector<1x8x8x32xbf16> to vector<8x8x32xbf16>
    %91 = vector.shape_cast %88 : vector<8x8x32xbf16> to vector<1x8x8x32xbf16>
    tpu.vector_store %arg6[%c0_89, %c0_90, %c0_91, %c0_92], %91 {strides = array<i32>} : memref<1x8x8x32xbf16, #tpu.memory_space<vmem>>, vector<1x8x8x32xbf16>,
    return
  }
  func.func @transform_0(%arg0: i32) -> (i32, i32, i32, i32) {
    %c0_i32 = arith.constant 0 : i32
    %c0_i32_0 = arith.constant 0 : i32
    %c0_i32_1 = arith.constant 0 : i32
    %c0_i32_2 = arith.constant 0 : i32
    return %arg0, %c0_i32, %c0_i32_0, %c0_i32_1 : i32, i32, i32, i32
  }
  func.func @transform_1(%arg0: i32) -> (i32, i32, i32) {
    %c0_i32 = arith.constant 0 : i32
    %c0_i32_0 = arith.constant 0 : i32
    %c0_i32_1 = arith.constant 0 : i32
    %c0_i32_2 = arith.constant 0 : i32
    return %c0_i32, %c0_i32_0, %c0_i32_1 : i32, i32, i32
  }
  func.func @transform_2(%arg0: i32) -> (i32, i32) {
    %c0_i32 = arith.constant 0 : i32
    %c0_i32_0 = arith.constant 0 : i32
    %c0_i32_1 = arith.constant 0 : i32
    return %c0_i32, %c0_i32_0 : i32, i32
  }
  func.func @transform_3(%arg0: i32) -> (i32, i32, i32) {
    %c0_i32 = arith.constant 0 : i32
    %c0_i32_0 = arith.constant 0 : i32
    %c0_i32_1 = arith.constant 0 : i32
    %c0_i32_2 = arith.constant 0 : i32
    return %c0_i32, %c0_i32_0, %c0_i32_1 : i32, i32, i32
  }
  func.func @transform_4(%arg0: i32) -> (i32, i32) {
    %c0_i32 = arith.constant 0 : i32
    %c0_i32_0 = arith.constant 0 : i32
    %c0_i32_1 = arith.constant 0 : i32
    return %c0_i32, %c0_i32_0 : i32, i32
  }
  func.func @transform_5(%arg0: i32) -> (i32, i32, i32, i32) {
    %c0_i32 = arith.constant 0 : i32
    %c0_i32_0 = arith.constant 0 : i32
    %c0_i32_1 = arith.constant 0 : i32
    %c0_i32_2 = arith.constant 0 : i32
    return %arg0, %c0_i32, %c0_i32_0, %c0_i32_1 : i32, i32, i32, i32
  }
}

</mosaic_0001>

<llo_original>
// kernel: _lambda_.3
$region0: #{_lambda_.3}
  #allocation0 [shape = 'u32[]', space=smem, size = 0x4, offset = 0x4, fixed_abs, tag = 'smem constant byte address 0x4 - core index']
  #allocation1 [shape = 'u32[144,128]{1,0:T(1,128)}', space=vmem, size = 0x12000, scoped, tag = 'internal scratch']
  #allocation2 [shape = 'bf16[8,32,96]{2,1,0:T(8,128)(2,1)}', space=vmem, size = 0x10000, scoped, tag = 'scratch operand']
  #allocation3 [shape = 'bf16[8,32,24]{2,1,0:T(8,128)(2,1)}', space=vmem, size = 0x10000, scoped, tag = 'scratch operand']
  %s0 = inlined_call_operand.vmem [shape: bf16[2,8,8,32], index: 0, kind: input, shape index: {}]
  %s1 = inlined_call_operand.vmem [shape: bf16[3,96,8], index: 1, kind: input, shape index: {}]
  %s2 = inlined_call_operand.vmem [shape: f32[1,8], index: 2, kind: input, shape index: {}]
  %s3 = inlined_call_operand.vmem [shape: bf16[3,24,32], index: 3, kind: input, shape index: {}]
  %s4 = inlined_call_operand.vmem [shape: f32[1,32], index: 4, kind: input, shape index: {}]
  %s5 = inlined_call_operand.hbm [shape: f32[2,4,4,32], index: 5, kind: output, shape index: {}]
  %s6 = sld [smem:[#allocation0]]
  $region53: #{_lambda_.3} parent=0
    _
  %s8 = ssub.s32 1, %s6
  %s9 = scalar_select 0, %s8, %s6
  $region1: #{_lambda_.3} parent=0
    #allocation4 [shape = 'u8[16384]{0}', space=vmem, size = 0x4000, scoped, tag = 'output window, operand 0']
    #allocation5 [shape = 's32[2]{0}', space=sflag, size = 0x8, scoped, tag = 'scoped memory for _lambda_.3']
    %10 = vsyncpa [#allocation5], 0
    %s11 = scalar_lea.sflag [#allocation5], 1
    %12 = vsyncpa %s11, 0
    loop: start=0, step=1, limit=4
    $region2: #{_lambda_.3} parent=1 // loop_pre_header
      _
    $region3: #{_lambda_.3} parent=1 // loop_header
      %s14 = sphi 0, %s18
      %p15 = scmp.ge.s32.totalorder %s14, 4
      %s24 = sphi 0, %s26
      %s27 = sphi 0, %s24
      %s28 = sphi 0, %s27
      %s44 = sphi 0, %s28
      %s48 = sphi 0, %s48
      %s50 = sphi 0, %s48
      %s51 = sphi 0, %s50
      %s65 = sphi 0, %s51
      %s69 = sphi 0, %s69
      %s71 = sphi 0, %s69
      %s72 = sphi 0, %s71
      %s86 = sphi 0, %s72
      %s90 = sphi 0, %s90
      %s92 = sphi 0, %s90
      %s93 = sphi 0, %s92
      %s107 = sphi 0, %s93
      %s111 = sphi 0, %s111
      %s113 = sphi 0, %s111
      %s114 = sphi 0, %s113
      %s128 = sphi 0, %s114
      %s134 = sphi 0, %s136
      %s137 = sphi 0, %s134
      %s138 = sphi 0, %s137
      %s154 = sphi 0, %s138
    $region4: #{_lambda_.3} parent=1 // loop_header_branch
      %17 = sbr.rel (%p15) target = $region8
    $region5: #{_lambda_.3} parent=1 // loop_body
      %s19 = ssub.s32 %s14, 1
      %s20 = ssub.s32 %s14, 2
      %s21 = sadd.s32 %s14, 1
      %s22 = ssub.s32 %s14, %s21
      %p23 = scmp.eq.s32.totalorder %s22, 0
      %s25 = sadd.s32 %s24, 1
      %s26 = scalar_select %p23, %s24, %s25
      %p29 = pneg %p23
      %p30 = scmp.eq.s32.totalorder %s14, 1
      %p31 = por %p29, %p30
      %p32 = scmp.ne.s32.totalorder %s24, %s27
      %p33 = scmp.eq.s32.totalorder %s14, 0
      %p34 = por %p32, %p33
      %p35 = scmp.ne.s32.totalorder %s24, %s27
      %p36 = scmp.eq.s32.totalorder %s19, 1
      %p37 = por %p35, %p36
      %p38 = scmp.ne.s32.totalorder %s27, %s28
      %p39 = scmp.eq.s32.totalorder %s19, 0
      %p40 = por %p38, %p39
      %p41 = scmp.ne.s32.totalorder %s27, %s28
      %p42 = scmp.eq.s32.totalorder %s20, 1
      %p43 = por %p41, %p42
      %p45 = scmp.ne.s32.totalorder %s28, %s44
      %p46 = scmp.eq.s32.totalorder %s20, 0
      %p47 = por %p45, %p46
      %s49 = sadd.s32 %s48, 1
      %p52 = scmp.eq.s32.totalorder %s14, 1
      %p53 = scmp.ne.s32.totalorder %s48, %s50
      %p54 = scmp.eq.s32.totalorder %s14, 0
      %p55 = por %p53, %p54
      %p56 = scmp.ne.s32.totalorder %s48, %s50
      %p57 = scmp.eq.s32.totalorder %s19, 1
      %p58 = por %p56, %p57
      %p59 = scmp.ne.s32.totalorder %s50, %s51
      %p60 = scmp.eq.s32.totalorder %s19, 0
      %p61 = por %p59, %p60
      %p62 = scmp.ne.s32.totalorder %s50, %s51
      %p63 = scmp.eq.s32.totalorder %s20, 1
      %p64 = por %p62, %p63
      %p66 = scmp.ne.s32.totalorder %s51, %s65
      %p67 = scmp.eq.s32.totalorder %s20, 0
      %p68 = por %p66, %p67
      %s70 = sadd.s32 %s69, 1
      %p73 = scmp.eq.s32.totalorder %s14, 1
      %p74 = scmp.ne.s32.totalorder %s69, %s71
      %p75 = scmp.eq.s32.totalorder %s14, 0
      %p76 = por %p74, %p75
      %p77 = scmp.ne.s32.totalorder %s69, %s71
      %p78 = scmp.eq.s32.totalorder %s19, 1
      %p79 = por %p77, %p78
      %p80 = scmp.ne.s32.totalorder %s71, %s72
      %p81 = scmp.eq.s32.totalorder %s19, 0
      %p82 = por %p80, %p81
      %p83 = scmp.ne.s32.totalorder %s71, %s72
      %p84 = scmp.eq.s32.totalorder %s20, 1
      %p85 = por %p83, %p84
      %p87 = scmp.ne.s32.totalorder %s72, %s86
      %p88 = scmp.eq.s32.totalorder %s20, 0
      %p89 = por %p87, %p88
      %s91 = sadd.s32 %s90, 1
      %p94 = scmp.eq.s32.totalorder %s14, 1
      %p95 = scmp.ne.s32.totalorder %s90, %s92
      %p96 = scmp.eq.s32.totalorder %s14, 0
      %p97 = por %p95, %p96
      %p98 = scmp.ne.s32.totalorder %s90, %s92
      %p99 = scmp.eq.s32.totalorder %s19, 1
      %p100 = por %p98, %p99
      %p101 = scmp.ne.s32.totalorder %s92, %s93
      %p102 = scmp.eq.s32.totalorder %s19, 0
      %p103 = por %p101, %p102
      %p104 = scmp.ne.s32.totalorder %s92, %s93
      %p105 = scmp.eq.s32.totalorder %s20, 1
      %p106 = por %p104, %p105
      %p108 = scmp.ne.s32.totalorder %s93, %s107
      %p109 = scmp.eq.s32.totalorder %s20, 0
      %p110 = por %p108, %p109
      %s112 = sadd.s32 %s111, 1
      %p115 = scmp.eq.s32.totalorder %s14, 1
      %p116 = scmp.ne.s32.totalorder %s111, %s113
      %p117 = scmp.eq.s32.totalorder %s14, 0
      %p118 = por %p116, %p117
      %p119 = scmp.ne.s32.totalorder %s111, %s113
      %p120 = scmp.eq.s32.totalorder %s19, 1
      %p121 = por %p119, %p120
      %p122 = scmp.ne.s32.totalorder %s113, %s114
      %p123 = scmp.eq.s32.totalorder %s19, 0
      %p124 = por %p122, %p123
      %p125 = scmp.ne.s32.totalorder %s113, %s114
      %p126 = scmp.eq.s32.totalorder %s20, 1
      %p127 = por %p125, %p126
      %p129 = scmp.ne.s32.totalorder %s114, %s128
      %p130 = scmp.eq.s32.totalorder %s20, 0
      %p131 = por %p129, %p130
      %s132 = ssub.s32 %s14, %s21
      %p133 = scmp.eq.s32.totalorder %s132, 0
      %s135 = sadd.s32 %s134, 1
      %s136 = scalar_select %p133, %s134, %s135
      %p139 = pneg %p133
      %p140 = scmp.eq.s32.totalorder %s14, 1
      %p141 = por %p139, %p140
      %p142 = scmp.ne.s32.totalorder %s134, %s137
      %p143 = scmp.eq.s32.totalorder %s14, 0
      %p144 = por %p142, %p143
      %p145 = scmp.ne.s32.totalorder %s134, %s137
      %p146 = scmp.eq.s32.totalorder %s19, 1
      %p147 = por %p145, %p146
      %p148 = scmp.ne.s32.totalorder %s137, %s138
      %p149 = scmp.eq.s32.totalorder %s19, 0
      %p150 = por %p148, %p149
      %p151 = scmp.ne.s32.totalorder %s137, %s138
      %p152 = scmp.eq.s32.totalorder %s20, 1
      %p153 = por %p151, %p152
      %p155 = scmp.ne.s32.totalorder %s138, %s154
      %p156 = scmp.eq.s32.totalorder %s20, 0
      %p157 = por %p155, %p156
      %p158 = scmp.le.s32.totalorder 1, %s14
      %p159 = scmp.lt.s32.totalorder %s14, 3
      %p160 = pnand %p158, %p159
      %p161 = pneg %p160
      // Predicated region
      $region9: #{_lambda_.3} parent=5 // pred_check
        _
      $region10: #{_lambda_.3} parent=5 // pred_check_branch
        %163 = sbr.rel (%p160) target = $region12
      $region11: #{_lambda_.3} parent=5 // pred_region
        %s164 = ssub.s32 %s14, 1
        // Predicated region
        $region13: #{_lambda_.3} parent=11 // pred_check
          %p165 = pneg %p61
        $region14: #{_lambda_.3} parent=11 // pred_check_branch
          %167 = sbr.rel (%p165) target = $region16
        $region15: #{_lambda_.3} parent=11 // pred_region
          _
        $region16: #{_lambda_.3} parent=11 // pred_fallthru
          _
        // Predicated region
        $region17: #{_lambda_.3} parent=11 // pred_check
          %p168 = pneg %p82
        $region18: #{_lambda_.3} parent=11 // pred_check_branch
          %170 = sbr.rel (%p168) target = $region20
        $region19: #{_lambda_.3} parent=11 // pred_region
          _
        $region20: #{_lambda_.3} parent=11 // pred_fallthru
          _
        // Predicated region
        $region21: #{_lambda_.3} parent=11 // pred_check
          %p171 = pneg %p103
        $region22: #{_lambda_.3} parent=11 // pred_check_branch
          %173 = sbr.rel (%p171) target = $region24
        $region23: #{_lambda_.3} parent=11 // pred_region
          _
        $region24: #{_lambda_.3} parent=11 // pred_fallthru
          _
        // Predicated region
        $region25: #{_lambda_.3} parent=11 // pred_check
          %p174 = pneg %p124
        $region26: #{_lambda_.3} parent=11 // pred_check_branch
          %176 = sbr.rel (%p174) target = $region28
        $region27: #{_lambda_.3} parent=11 // pred_region
          _
        $region28: #{_lambda_.3} parent=11 // pred_fallthru
          _
      $region12: #{_lambda_.3} parent=5 // pred_fallthru
        _
      %p177 = scmp.lt.s32.totalorder %s14, 2
      // Predicated region
      $region29: #{_lambda_.3} parent=5 // pred_check
        %p178 = pneg %p177
      $region30: #{_lambda_.3} parent=5 // pred_check_branch
        %180 = sbr.rel (%p178) target = $region32
      $region31: #{_lambda_.3} parent=5 // pred_region
        // Predicated region
        $region33: #{_lambda_.3} parent=31 // pred_check
          %p181 = pneg %p34
        $region34: #{_lambda_.3} parent=31 // pred_check_branch
          %183 = sbr.rel (%p181) target = $region36
        $region35: #{_lambda_.3} parent=31 // pred_region
          %p184 = scmp.lt.s32.totalorder %s14, 1
          %s185 = scalar_select %p184, %s14, 1
          %s186 = smul.addr %s185, 8
          %s187 = smul.addr %s186, 4
          %s188 = scalar_lea.vmem %s0, %s187
        $region36: #{_lambda_.3} parent=31 // pred_fallthru
          _
      $region32: #{_lambda_.3} parent=5 // pred_fallthru
        _
      %p189 = scmp.le.s32.totalorder 1, %s14
      %p190 = scmp.lt.s32.totalorder %s14, 3
      %p191 = pnand %p189, %p190
      %p192 = pneg %p191
      // Predicated region
      $region37: #{_lambda_.3} parent=5 // pred_check
        _
      $region38: #{_lambda_.3} parent=5 // pred_check_branch
        %194 = sbr.rel (%p191) target = $region40
      $region39: #{_lambda_.3} parent=5 // pred_region
        %s195 = ssub.s32 %s14, 1
        %p196 = scmp.lt.s32.totalorder %s19, 1
        %s197 = scalar_select %p196, %s19, 1
        %s198 = smul.addr %s197, 8
        %s199 = smul.addr %s198, 4
        %s200 = scalar_lea.vmem %s0, %s199
        %p201 = pneg %p40
        %p202 = pneg %p37
        %p203 = pneg %p61
        %p204 = pneg %p58
        %p205 = pneg %p82
        %p206 = pneg %p79
        %p207 = pneg %p103
        %p208 = pneg %p100
        %p209 = pneg %p124
        %p210 = pneg %p121
        %p211 = pneg %p150
        %p212 = pneg %p147
        %s213 = sand.u32 %s137, 1
        %s214 = scalar_lea.sflag [#allocation5], %s213
        %s215 = sand.u32 %s137, 1
        %s216 = smul.addr %s215, 16
        %s217 = scalar_lea.vmem [#allocation4], %s216
        %p218 = scmp.lt.s32.totalorder %s19, 1
        %s219 = scalar_select %p218, %s19, 1
        %s220 = smul.addr %s219, 8
        %s221 = smul.addr %s220, 4
        %s222 = scalar_lea.vmem %s0, %s221
        %v224 = vld [vmem:[%s222] sm:$0xf]
        %v225 = vld [vmem:[%s222 + $0x4] sm:$0xf]
        %v226 = vld [vmem:[%s222 + $0x8] sm:$0xf]
        %v227 = vld [vmem:[%s222 + $0xc] sm:$0xf]
        %v228 = vld [vmem:[%s222 + $0x10] sm:$0xf]
        %v229 = vld [vmem:[%s222 + $0x14] sm:$0xf]
        %v230 = vld [vmem:[%s222 + $0x18] sm:$0xf]
        %v231 = vld [vmem:[%s222 + $0x1c] sm:$0xf]
        %vm232 = vcmask 781312
        %233 = vst.msk [vmem:[#allocation2] sm:$0xf] %vm232, 0
        %234 = vst.msk [vmem:[#allocation2 + $0x10] sm:$0xf] %vm232, 0
        %235 = vst.msk [vmem:[#allocation2 + $0x20] sm:$0xf] %vm232, 0
        %236 = vst.msk [vmem:[#allocation2 + $0x30] sm:$0xf] %vm232, 0
        %237 = vst.msk [vmem:[#allocation2 + $0x40] sm:$0xf] %vm232, 0
        %238 = vst.msk [vmem:[#allocation2 + $0x50] sm:$0xf] %vm232, 0
        %239 = vst.msk [vmem:[#allocation2 + $0x60] sm:$0xf] %vm232, 0
        %240 = vst.msk [vmem:[#allocation2 + $0x70] sm:$0xf] %vm232, 0
        %241 = vst.msk [vmem:[#allocation2 + $0x8] sm:$0xf] %vm232, 0
        %242 = vst.msk [vmem:[#allocation2 + $0xc] sm:$0xf] %vm232, 0
        %243 = vst.msk [vmem:[#allocation2 + $0x18] sm:$0xf] %vm232, 0
        %244 = vst.msk [vmem:[#allocation2 + $0x1c] sm:$0xf] %vm232, 0
        %245 = vst.msk [vmem:[#allocation2 + $0x28] sm:$0xf] %vm232, 0
        %246 = vst.msk [vmem:[#allocation2 + $0x2c] sm:$0xf] %vm232, 0
        %247 = vst.msk [vmem:[#allocation2 + $0x38] sm:$0xf] %vm232, 0
        %248 = vst.msk [vmem:[#allocation2 + $0x3c] sm:$0xf] %vm232, 0
        %249 = vst.msk [vmem:[#allocation2 + $0x48] sm:$0xf] %vm232, 0
        %250 = vst.msk [vmem:[#allocation2 + $0x4c] sm:$0xf] %vm232, 0
        %251 = vst.msk [vmem:[#allocation2 + $0x58] sm:$0xf] %vm232, 0
        %252 = vst.msk [vmem:[#allocation2 + $0x5c] sm:$0xf] %vm232, 0
        %253 = vst.msk [vmem:[#allocation2 + $0x68] sm:$0xf] %vm232, 0
        %254 = vst.msk [vmem:[#allocation2 + $0x6c] sm:$0xf] %vm232, 0
        %255 = vst.msk [vmem:[#allocation2 + $0x78] sm:$0xf] %vm232, 0
        %256 = vst.msk [vmem:[#allocation2 + $0x7c] sm:$0xf] %vm232, 0
        %vm257 = vcmask 257024
        %258 = vst.msk [vmem:[#allocation2] sm:$0xf] %vm257, 0
        %259 = vst.msk [vmem:[#allocation2 + $0x4] sm:$0xf] %vm257, 0
        %260 = vst.msk [vmem:[#allocation2 + $0x8] sm:$0xf] %vm257, 0
        %261 = vst.msk [vmem:[#allocation2 + $0xc] sm:$0xf] %vm257, 0
        %s262 = scalar_lea.vmem [#allocation2], 16
        %263 = vst.msk [vmem:[%s262 + $0x4] sm:$0xf] %vm257, %v224
        %264 = vst.msk [vmem:[%s262 + $0x14] sm:$0xf] %vm257, %v225
        %265 = vst.msk [vmem:[%s262 + $0x24] sm:$0xf] %vm257, %v226
        %266 = vst.msk [vmem:[%s262 + $0x34] sm:$0xf] %vm257, %v227
        %267 = vst.msk [vmem:[%s262 + $0x44] sm:$0xf] %vm257, %v228
        %268 = vst.msk [vmem:[%s262 + $0x54] sm:$0xf] %vm257, %v229
        %269 = vst.msk [vmem:[%s262 + $0x64] sm:$0xf] %vm257, %v230
        %278 = vrot.lane.b32.xlu0 %v224, 32
        %v279 = vpop.permute.xlu0 %278
        %280 = vrot.lane.b32.xlu0 %v225, 32
        %v281 = vpop.permute.xlu0 %280
        %282 = vrot.lane.b32.xlu0 %v226, 32
        %v283 = vpop.permute.xlu0 %282
        %284 = vrot.lane.b32.xlu0 %v227, 32
        %v285 = vpop.permute.xlu0 %284
        %286 = vrot.lane.b32.xlu0 %v228, 32
        %v287 = vpop.permute.xlu0 %286
        %288 = vrot.lane.b32.xlu0 %v229, 32
        %v289 = vpop.permute.xlu0 %288
        %290 = vrot.lane.b32.xlu0 %v230, 32
        %v291 = vpop.permute.xlu0 %290
        %292 = vrot.lane.b32.xlu0 %v231, 32
        %v293 = vpop.permute.xlu0 %292
        %vm302 = vcmask 519424
        %303 = vst.msk [vmem:[#allocation2 + $0x4] sm:$0xf] %vm302, %v279
        %304 = vst.msk [vmem:[#allocation2 + $0x14] sm:$0xf] %vm302, %v281
        %305 = vst.msk [vmem:[#allocation2 + $0x24] sm:$0xf] %vm302, %v283
        %306 = vst.msk [vmem:[#allocation2 + $0x34] sm:$0xf] %vm302, %v285
        %307 = vst.msk [vmem:[#allocation2 + $0x44] sm:$0xf] %vm302, %v287
        %308 = vst.msk [vmem:[#allocation2 + $0x54] sm:$0xf] %vm302, %v289
        %309 = vst.msk [vmem:[#allocation2 + $0x64] sm:$0xf] %vm302, %v291
        %310 = vst.msk [vmem:[#allocation2 + $0x74] sm:$0xf] %vm302, %v293
        %311 = vrot.lane.b32.xlu0 %v225, 64
        %v312 = vpop.permute.xlu0 %311
        %313 = vrot.lane.b32.xlu0 %v226, 64
        %v314 = vpop.permute.xlu0 %313
        %315 = vrot.lane.b32.xlu0 %v227, 64
        %v316 = vpop.permute.xlu0 %315
        %317 = vrot.lane.b32.xlu0 %v228, 64
        %v318 = vpop.permute.xlu0 %317
        %319 = vrot.lane.b32.xlu0 %v229, 64
        %v320 = vpop.permute.xlu0 %319
        %321 = vrot.lane.b32.xlu0 %v230, 64
        %v322 = vpop.permute.xlu0 %321
        %323 = vrot.lane.b32.xlu0 %v231, 64
        %v324 = vpop.permute.xlu0 %323
        %vm332 = vcmask 781824
        %333 = vst.msk [vmem:[#allocation2 + $0x4] sm:$0xf] %vm332, %v312
        %334 = vst.msk [vmem:[#allocation2 + $0x14] sm:$0xf] %vm332, %v314
        %335 = vst.msk [vmem:[#allocation2 + $0x24] sm:$0xf] %vm332, %v316
        %336 = vst.msk [vmem:[#allocation2 + $0x34] sm:$0xf] %vm332, %v318
        %337 = vst.msk [vmem:[#allocation2 + $0x44] sm:$0xf] %vm332, %v320
        %338 = vst.msk [vmem:[#allocation2 + $0x54] sm:$0xf] %vm332, %v322
        %339 = vst.msk [vmem:[#allocation2 + $0x64] sm:$0xf] %vm332, %v324
        %s340 = scalar_lea.vmem [#allocation2], 112
        %341 = vst.msk [vmem:[%s340] sm:$0xf] %vm332, 0
        %342 = vst.msk [vmem:[%s340 + $0x4] sm:$0xf] %vm332, 0
        %343 = vst.msk [vmem:[%s340 + $0x8] sm:$0xf] %vm332, 0
        %344 = vst.msk [vmem:[%s340 + $0xc] sm:$0xf] %vm332, 0
        %v345 = vld [vmem:[#allocation2] sm:$0x8]
        %v346 = vld [vmem:[#allocation2 + $0x4] sm:$0xf]
        %v347 = vld [vmem:[#allocation2 + $0x8] sm:$0xf]
        %v348 = vld [vmem:[#allocation2 + $0x10] sm:$0x8]
        %v349 = vld [vmem:[#allocation2 + $0x14] sm:$0xf]
        %v350 = vld [vmem:[#allocation2 + $0x18] sm:$0xf]
        %v351 = vld [vmem:[#allocation2 + $0x20] sm:$0x8]
        %v352 = vld [vmem:[#allocation2 + $0x24] sm:$0xf]
        %v353 = vld [vmem:[#allocation2 + $0x28] sm:$0xf]
        %v354 = vld [vmem:[#allocation2 + $0x30] sm:$0x8]
        %v355 = vld [vmem:[#allocation2 + $0x34] sm:$0xf]
        %v356 = vld [vmem:[#allocation2 + $0x38] sm:$0xf]
        %v357 = vld [vmem:[#allocation2 + $0x40] sm:$0x8]
        %v358 = vld [vmem:[#allocation2 + $0x44] sm:$0xf]
        %v359 = vld [vmem:[#allocation2 + $0x48] sm:$0xf]
        %v360 = vld [vmem:[#allocation2 + $0x50] sm:$0x8]
        %v361 = vld [vmem:[#allocation2 + $0x54] sm:$0xf]
        %v362 = vld [vmem:[#allocation2 + $0x58] sm:$0xf]
        %v363 = vld [vmem:[#allocation2 + $0x60] sm:$0x8]
        %v364 = vld [vmem:[#allocation2 + $0x64] sm:$0xf]
        %v365 = vld [vmem:[#allocation2 + $0x68] sm:$0xf]
        %v366 = vld [vmem:[#allocation2 + $0x70] sm:$0x8]
        %v367 = vld [vmem:[#allocation2 + $0x74] sm:$0xf]
        %v368 = vld [vmem:[#allocation2 + $0x78] sm:$0xf]
        %vm369 = vsmask.f32 256
        %vm370 = vsmask.f32 4368
        %vm371 = vmor %vm369, %vm370
        %v373 = vshrl.u32 %v345, 16
        %v375 = vrot.slane %v373, 7
        %v376 = vrot.slane %v375, 4
        %v378 = vshrl.u32 %v346, 16
        %v380 = vrot.slane %v378, 7
        %v381 = vshll.u32 %v346, 16
        %v383 = vor.u32 %v380, %v381
        %v384 = vsel %vm371, %v376, %v383
        %v385 = vrot.slane %v380, 4
        %v387 = vshrl.u32 %v347, 16
        %v389 = vrot.slane %v387, 7
        %v390 = vshll.u32 %v347, 16
        %v392 = vor.u32 %v389, %v390
        %v393 = vsel %vm371, %v385, %v392
        %v395 = vshrl.u32 %v348, 16
        %v397 = vrot.slane %v395, 7
        %v398 = vrot.slane %v397, 4
        %v400 = vshrl.u32 %v349, 16
        %v402 = vrot.slane %v400, 7
        %v403 = vshll.u32 %v349, 16
        %v405 = vor.u32 %v402, %v403
        %v406 = vsel %vm371, %v398, %v405
        %v407 = vrot.slane %v402, 4
        %v409 = vshrl.u32 %v350, 16
        %v411 = vrot.slane %v409, 7
        %v412 = vshll.u32 %v350, 16
        %v414 = vor.u32 %v411, %v412
        %v415 = vsel %vm371, %v407, %v414
        %v417 = vshrl.u32 %v351, 16
        %v419 = vrot.slane %v417, 7
        %v420 = vrot.slane %v419, 4
        %v422 = vshrl.u32 %v352, 16
        %v424 = vrot.slane %v422, 7
        %v425 = vshll.u32 %v352, 16
        %v427 = vor.u32 %v424, %v425
        %v428 = vsel %vm371, %v420, %v427
        %v429 = vrot.slane %v424, 4
        %v431 = vshrl.u32 %v353, 16
        %v433 = vrot.slane %v431, 7
        %v434 = vshll.u32 %v353, 16
        %v436 = vor.u32 %v433, %v434
        %v437 = vsel %vm371, %v429, %v436
        %v439 = vshrl.u32 %v354, 16
        %v441 = vrot.slane %v439, 7
        %v442 = vrot.slane %v441, 4
        %v444 = vshrl.u32 %v355, 16
        %v446 = vrot.slane %v444, 7
        %v447 = vshll.u32 %v355, 16
        %v449 = vor.u32 %v446, %v447
        %v450 = vsel %vm371, %v442, %v449
        %v451 = vrot.slane %v446, 4
        %v453 = vshrl.u32 %v356, 16
        %v455 = vrot.slane %v453, 7
        %v456 = vshll.u32 %v356, 16
        %v458 = vor.u32 %v455, %v456
        %v459 = vsel %vm371, %v451, %v458
        %v461 = vshrl.u32 %v357, 16
        %v463 = vrot.slane %v461, 7
        %v464 = vrot.slane %v463, 4
        %v466 = vshrl.u32 %v358, 16
        %v468 = vrot.slane %v466, 7
        %v469 = vshll.u32 %v358, 16
        %v471 = vor.u32 %v468, %v469
        %v472 = vsel %vm371, %v464, %v471
        %v473 = vrot.slane %v468, 4
        %v475 = vshrl.u32 %v359, 16
        %v477 = vrot.slane %v475, 7
        %v478 = vshll.u32 %v359, 16
        %v480 = vor.u32 %v477, %v478
        %v481 = vsel %vm371, %v473, %v480
        %v483 = vshrl.u32 %v360, 16
        %v485 = vrot.slane %v483, 7
        %v486 = vrot.slane %v485, 4
        %v488 = vshrl.u32 %v361, 16
        %v490 = vrot.slane %v488, 7
        %v491 = vshll.u32 %v361, 16
        %v493 = vor.u32 %v490, %v491
        %v494 = vsel %vm371, %v486, %v493
        %v495 = vrot.slane %v490, 4
        %v497 = vshrl.u32 %v362, 16
        %v499 = vrot.slane %v497, 7
        %v500 = vshll.u32 %v362, 16
        %v502 = vor.u32 %v499, %v500
        %v503 = vsel %vm371, %v495, %v502
        %v505 = vshrl.u32 %v363, 16
        %v507 = vrot.slane %v505, 7
        %v508 = vrot.slane %v507, 4
        %v510 = vshrl.u32 %v364, 16
        %v512 = vrot.slane %v510, 7
        %v513 = vshll.u32 %v364, 16
        %v515 = vor.u32 %v512, %v513
        %v516 = vsel %vm371, %v508, %v515
        %v517 = vrot.slane %v512, 4
        %v519 = vshrl.u32 %v365, 16
        %v521 = vrot.slane %v519, 7
        %v522 = vshll.u32 %v365, 16
        %v524 = vor.u32 %v521, %v522
        %v525 = vsel %vm371, %v517, %v524
        %v527 = vshrl.u32 %v366, 16
        %v529 = vrot.slane %v527, 7
        %v530 = vrot.slane %v529, 4
        %v532 = vshrl.u32 %v367, 16
        %v534 = vrot.slane %v532, 7
        %v535 = vshll.u32 %v367, 16
        %v537 = vor.u32 %v534, %v535
        %v538 = vsel %vm371, %v530, %v537
        %v539 = vrot.slane %v534, 4
        %v541 = vshrl.u32 %v368, 16
        %v543 = vrot.slane %v541, 7
        %v544 = vshll.u32 %v368, 16
        %v546 = vor.u32 %v543, %v544
        %v547 = vsel %vm371, %v539, %v546
        %v548 = vld [vmem:[%s1] sm:$0xf]
        %v549 = vld [vmem:[%s1 + $0x4] sm:$0xf]
        %v550 = vld [vmem:[%s1 + $0x8] sm:$0xf]
        %v551 = vld [vmem:[%s1 + $0xc] sm:$0xf]
        %v552 = vld [vmem:[%s1 + $0x10] sm:$0xf]
        %v553 = vld [vmem:[%s1 + $0x14] sm:$0xf]
        %v554 = vld [vmem:[%s1 + $0x18] sm:$0xf]
        %v555 = vld [vmem:[%s1 + $0x1c] sm:$0xf]
        %v556 = vld [vmem:[%s1 + $0x20] sm:$0xf]
        %v557 = vld [vmem:[%s1 + $0x24] sm:$0xf]
        %v558 = vld [vmem:[%s1 + $0x28] sm:$0xf]
        %v559 = vld [vmem:[%s1 + $0x2c] sm:$0xf]
        %s560 = scalar_lea.vmem %s1, 48
        %v561 = vld [vmem:[%s560] sm:$0xf]
        %v562 = vld [vmem:[%s560 + $0x4] sm:$0xf]
        %v563 = vld [vmem:[%s560 + $0x8] sm:$0xf]
        %v564 = vld [vmem:[%s560 + $0xc] sm:$0xf]
        %v565 = vld [vmem:[%s560 + $0x10] sm:$0xf]
        %v566 = vld [vmem:[%s560 + $0x14] sm:$0xf]
        %v567 = vld [vmem:[%s560 + $0x18] sm:$0xf]
        %v568 = vld [vmem:[%s560 + $0x1c] sm:$0xf]
        %v569 = vld [vmem:[%s560 + $0x20] sm:$0xf]
        %v570 = vld [vmem:[%s560 + $0x24] sm:$0xf]
        %v571 = vld [vmem:[%s560 + $0x28] sm:$0xf]
        %v572 = vld [vmem:[%s560 + $0x2c] sm:$0xf]
        %v589 = vunpack.c.l.b16 %v346
        %v590 = vunpack.c.l.b16 %v347
        %v591 = vunpack.c.l.b16 %v349
        %v592 = vunpack.c.l.b16 %v350
        %v593 = vunpack.c.l.b16 %v352
        %v594 = vunpack.c.l.b16 %v353
        %v595 = vunpack.c.l.b16 %v355
        %v596 = vunpack.c.l.b16 %v356
        %v597 = vunpack.c.l.b16 %v358
        %v598 = vunpack.c.l.b16 %v359
        %v599 = vunpack.c.l.b16 %v361
        %v600 = vunpack.c.l.b16 %v362
        %v601 = vunpack.c.l.b16 %v364
        %v602 = vunpack.c.l.b16 %v365
        %v603 = vunpack.c.l.b16 %v367
        %v604 = vunpack.c.l.b16 %v368
        %v605 = vpack.c.b16 %v590, %v589
        %v606 = vpack.c.b16 %v592, %v591
        %v607 = vpack.c.b16 %v594, %v593
        %v608 = vpack.c.b16 %v596, %v595
        %v609 = vpack.c.b16 %v598, %v597
        %v610 = vpack.c.b16 %v600, %v599
        %v611 = vpack.c.b16 %v602, %v601
        %v612 = vpack.c.b16 %v604, %v603
        %v625 = vunpack.c.l.b16 %v561
        %v626 = vunpack.c.l.b16 %v562
        %v627 = vunpack.c.l.b16 %v563
        %v628 = vunpack.c.l.b16 %v564
        %v629 = vunpack.c.l.b16 %v565
        %v630 = vunpack.c.l.b16 %v566
        %v631 = vunpack.c.l.b16 %v567
        %v632 = vunpack.c.l.b16 %v568
        %v633 = vunpack.c.l.b16 %v569
        %v634 = vunpack.c.l.b16 %v570
        %v635 = vunpack.c.l.b16 %v571
        %v636 = vunpack.c.l.b16 %v572
        %v637 = vpack.c.b16 %v626, %v625
        %v638 = vpack.c.b16 %v628, %v627
        %v639 = vpack.c.b16 %v630, %v629
        %v640 = vpack.c.b16 %v632, %v631
        %v641 = vpack.c.b16 %v634, %v633
        %v642 = vpack.c.b16 %v636, %v635
        %vm649 = vcmask 785408
        %v651 = vsel %vm649, %v605, 0
        %v654 = vsel %vm649, %v606, 0
        %v657 = vsel %vm649, %v607, 0
        %v660 = vsel %vm649, %v608, 0
        %v663 = vsel %vm649, %v609, 0
        %v666 = vsel %vm649, %v610, 0
        %v669 = vsel %vm649, %v611, 0
        %v672 = vsel %vm649, %v612, 0
        %674 = vmatprep.subr.bf16.mxu0 0
        %675 = vmatpush1.bf16.msra.mxu0 0
        %676 = vmatprep.subr.bf16.mxu0 0
        %677 = vmatpush1.bf16.msra.mxu0 0
        %678 = vmatprep.subr.bf16.mxu0 0
        %679 = vmatpush1.bf16.msra.mxu0 %v642
        %680 = vmatprep.subr.bf16.mxu0 0
        %681 = vmatpush1.bf16.msra.mxu0 %v641
        %682 = vmatprep.subr.bf16.mxu0 0
        %683 = vmatpush1.bf16.msra.mxu0 %v640
        %684 = vmatprep.subr.bf16.mxu0 0
        %685 = vmatpush1.bf16.msra.mxu0 %v639
        %686 = vmatprep.subr.bf16.mxu0 0
        %687 = vmatpush1.bf16.msra.mxu0 %v638
        %688 = vmatprep.subr.bf16.mxu0 0
        %689 = vmatpush1.bf16.msra.mxu0 %v637
        %690 = vmatprep.subr.bf16.mxu0 0
        %691 = vmatpush2.bf16.msra.mxu0 0
        %692 = vmatprep.subr.bf16.mxu0 0
        %693 = vmatpush2.bf16.msra.mxu0 0
        %694 = vmatprep.subr.bf16.mxu0 0
        %695 = vmatpush2.bf16.msra.mxu0 0
        %696 = vmatprep.subr.bf16.mxu0 0
        %697 = vmatpush2.bf16.msra.mxu0 0
        %698 = vmatprep.subr.bf16.mxu0 0
        %699 = vmatpush2.bf16.msra.mxu0 0
        %700 = vmatprep.subr.bf16.mxu0 0
        %701 = vmatpush2.bf16.msra.mxu0 0
        %702 = vmatprep.subr.bf16.mxu0 0
        %703 = vmatpush2.bf16.msra.mxu0 0
        %704 = vmatprep.subr.bf16.mxu0 0
        %705 = vmatpush2.bf16.msra.mxu0 0
        %706 = vmatprep.mubr.bf16.mxu0 0
        %707 = vmatmul.mubr.bf16.gmra.mxu0 %v651
        %v708 = vpop.f32.mrf.mxu0
        %v709 = vadd.f32 0.0, %v708
        %v710 = vpop.f32.mrf.mxu0
        %v711 = vpop.f32.mrf.mxu0
        %v712 = vpop.f32.mrf.mxu0
        %713 = vmatprep.mubr.bf16.mxu0 0
        %714 = vmatmul.mubr.bf16.gmra.mxu0 %v654
        %v715 = vpop.f32.mrf.mxu0
        %v716 = vadd.f32 0.0, %v715
        %v717 = vpop.f32.mrf.mxu0
        %v718 = vpop.f32.mrf.mxu0
        %v719 = vpop.f32.mrf.mxu0
        %720 = vmatprep.mubr.bf16.mxu0 0
        %721 = vmatmul.mubr.bf16.gmra.mxu0 %v657
        %v722 = vpop.f32.mrf.mxu0
        %v723 = vadd.f32 0.0, %v722
        %v724 = vpop.f32.mrf.mxu0
        %v725 = vpop.f32.mrf.mxu0
        %v726 = vpop.f32.mrf.mxu0
        %727 = vmatprep.mubr.bf16.mxu0 0
        %728 = vmatmul.mubr.bf16.gmra.mxu0 %v660
        %v729 = vpop.f32.mrf.mxu0
        %v730 = vadd.f32 0.0, %v729
        %v731 = vpop.f32.mrf.mxu0
        %v732 = vpop.f32.mrf.mxu0
        %v733 = vpop.f32.mrf.mxu0
        %734 = vmatprep.mubr.bf16.mxu0 0
        %735 = vmatmul.mubr.bf16.gmra.mxu0 %v663
        %v736 = vpop.f32.mrf.mxu0
        %v737 = vadd.f32 0.0, %v736
        %v738 = vpop.f32.mrf.mxu0
        %v739 = vpop.f32.mrf.mxu0
        %v740 = vpop.f32.mrf.mxu0
        %741 = vmatprep.mubr.bf16.mxu0 0
        %742 = vmatmul.mubr.bf16.gmra.mxu0 %v666
        %v743 = vpop.f32.mrf.mxu0
        %v744 = vadd.f32 0.0, %v743
        %v745 = vpop.f32.mrf.mxu0
        %v746 = vpop.f32.mrf.mxu0
        %v747 = vpop.f32.mrf.mxu0
        %748 = vmatprep.mubr.bf16.mxu0 0
        %749 = vmatmul.mubr.bf16.gmra.mxu0 %v669
        %v750 = vpop.f32.mrf.mxu0
        %v751 = vadd.f32 0.0, %v750
        %v752 = vpop.f32.mrf.mxu0
        %v753 = vpop.f32.mrf.mxu0
        %v754 = vpop.f32.mrf.mxu0
        %755 = vmatprep.mubr.bf16.mxu0 0
        %756 = vmatmul.mubr.bf16.gmra.mxu0 %v672
        %v757 = vpop.f32.mrf.mxu0
        %v758 = vadd.f32 0.0, %v757
        %v759 = vpop.f32.mrf.mxu0
        %v760 = vpop.f32.mrf.mxu0
        %v761 = vpop.f32.mrf.mxu0
        %762 = vdwg.mxu0
        %v763 = vunpack.c.l.b16 %v384
        %v764 = vunpack.c.l.b16 %v393
        %v765 = vunpack.c.l.b16 %v406
        %v766 = vunpack.c.l.b16 %v415
        %v767 = vunpack.c.l.b16 %v428
        %v768 = vunpack.c.l.b16 %v437
        %v769 = vunpack.c.l.b16 %v450
        %v770 = vunpack.c.l.b16 %v459
        %v771 = vunpack.c.l.b16 %v472
        %v772 = vunpack.c.l.b16 %v481
        %v773 = vunpack.c.l.b16 %v494
        %v774 = vunpack.c.l.b16 %v503
        %v775 = vunpack.c.l.b16 %v516
        %v776 = vunpack.c.l.b16 %v525
        %v777 = vunpack.c.l.b16 %v538
        %v778 = vunpack.c.l.b16 %v547
        %v779 = vpack.c.b16 %v764, %v763
        %v780 = vpack.c.b16 %v766, %v765
        %v781 = vpack.c.b16 %v768, %v767
        %v782 = vpack.c.b16 %v770, %v769
        %v783 = vpack.c.b16 %v772, %v771
        %v784 = vpack.c.b16 %v774, %v773
        %v785 = vpack.c.b16 %v776, %v775
        %v786 = vpack.c.b16 %v778, %v777
        %v799 = vunpack.c.l.b16 %v548
        %v800 = vunpack.c.l.b16 %v549
        %v801 = vunpack.c.l.b16 %v550
        %v802 = vunpack.c.l.b16 %v551
        %v803 = vunpack.c.l.b16 %v552
        %v804 = vunpack.c.l.b16 %v553
        %v805 = vunpack.c.l.b16 %v554
        %v806 = vunpack.c.l.b16 %v555
        %v807 = vunpack.c.l.b16 %v556
        %v808 = vunpack.c.l.b16 %v557
        %v809 = vunpack.c.l.b16 %v558
        %v810 = vunpack.c.l.b16 %v559
        %v811 = vpack.c.b16 %v800, %v799
        %v812 = vpack.c.b16 %v802, %v801
        %v813 = vpack.c.b16 %v804, %v803
        %v814 = vpack.c.b16 %v806, %v805
        %v815 = vpack.c.b16 %v808, %v807
        %v816 = vpack.c.b16 %v810, %v809
        %v824 = vsel %vm649, %v779, 0
        %v827 = vsel %vm649, %v780, 0
        %v830 = vsel %vm649, %v781, 0
        %v833 = vsel %vm649, %v782, 0
        %v836 = vsel %vm649, %v783, 0
        %v839 = vsel %vm649, %v784, 0
        %v842 = vsel %vm649, %v785, 0
        %v845 = vsel %vm649, %v786, 0
        %847 = vmatprep.subr.bf16.mxu0 0
        %848 = vmatpush1.bf16.msra.mxu0 0
        %849 = vmatprep.subr.bf16.mxu0 0
        %850 = vmatpush1.bf16.msra.mxu0 0
        %851 = vmatprep.subr.bf16.mxu0 0
        %852 = vmatpush1.bf16.msra.mxu0 %v816
        %853 = vmatprep.subr.bf16.mxu0 0
        %854 = vmatpush1.bf16.msra.mxu0 %v815
        %855 = vmatprep.subr.bf16.mxu0 0
        %856 = vmatpush1.bf16.msra.mxu0 %v814
        %857 = vmatprep.subr.bf16.mxu0 0
        %858 = vmatpush1.bf16.msra.mxu0 %v813
        %859 = vmatprep.subr.bf16.mxu0 0
        %860 = vmatpush1.bf16.msra.mxu0 %v812
        %861 = vmatprep.subr.bf16.mxu0 0
        %862 = vmatpush1.bf16.msra.mxu0 %v811
        %863 = vmatprep.subr.bf16.mxu0 0
        %864 = vmatpush2.bf16.msra.mxu0 0
        %865 = vmatprep.subr.bf16.mxu0 0
        %866 = vmatpush2.bf16.msra.mxu0 0
        %867 = vmatprep.subr.bf16.mxu0 0
        %868 = vmatpush2.bf16.msra.mxu0 0
        %869 = vmatprep.subr.bf16.mxu0 0
        %870 = vmatpush2.bf16.msra.mxu0 0
        %871 = vmatprep.subr.bf16.mxu0 0
        %872 = vmatpush2.bf16.msra.mxu0 0
        %873 = vmatprep.subr.bf16.mxu0 0
        %874 = vmatpush2.bf16.msra.mxu0 0
        %875 = vmatprep.subr.bf16.mxu0 0
        %876 = vmatpush2.bf16.msra.mxu0 0
        %877 = vmatprep.subr.bf16.mxu0 0
        %878 = vmatpush2.bf16.msra.mxu0 0
        %879 = vmatprep.mubr.bf16.mxu0 0
        %880 = vmatmul.mubr.bf16.gmra.mxu0 %v824
        %v881 = vpop.f32.mrf.mxu0
        %v882 = vadd.f32 %v709, %v881
        %v883 = vpop.f32.mrf.mxu0
        %v884 = vpop.f32.mrf.mxu0
        %v885 = vpop.f32.mrf.mxu0
        %886 = vmatprep.mubr.bf16.mxu0 0
        %887 = vmatmul.mubr.bf16.gmra.mxu0 %v827
        %v888 = vpop.f32.mrf.mxu0
        %v889 = vadd.f32 %v716, %v888
        %v890 = vpop.f32.mrf.mxu0
        %v891 = vpop.f32.mrf.mxu0
        %v892 = vpop.f32.mrf.mxu0
        %893 = vmatprep.mubr.bf16.mxu0 0
        %894 = vmatmul.mubr.bf16.gmra.mxu0 %v830
        %v895 = vpop.f32.mrf.mxu0
        %v896 = vadd.f32 %v723, %v895
        %v897 = vpop.f32.mrf.mxu0
        %v898 = vpop.f32.mrf.mxu0
        %v899 = vpop.f32.mrf.mxu0
        %900 = vmatprep.mubr.bf16.mxu0 0
        %901 = vmatmul.mubr.bf16.gmra.mxu0 %v833
        %v902 = vpop.f32.mrf.mxu0
        %v903 = vadd.f32 %v730, %v902
        %v904 = vpop.f32.mrf.mxu0
        %v905 = vpop.f32.mrf.mxu0
        %v906 = vpop.f32.mrf.mxu0
        %907 = vmatprep.mubr.bf16.mxu0 0
        %908 = vmatmul.mubr.bf16.gmra.mxu0 %v836
        %v909 = vpop.f32.mrf.mxu0
        %v910 = vadd.f32 %v737, %v909
        %v911 = vpop.f32.mrf.mxu0
        %v912 = vpop.f32.mrf.mxu0
        %v913 = vpop.f32.mrf.mxu0
        %914 = vmatprep.mubr.bf16.mxu0 0
        %915 = vmatmul.mubr.bf16.gmra.mxu0 %v839
        %v916 = vpop.f32.mrf.mxu0
        %v917 = vadd.f32 %v744, %v916
        %v918 = vpop.f32.mrf.mxu0
        %v919 = vpop.f32.mrf.mxu0
        %v920 = vpop.f32.mrf.mxu0
        %921 = vmatprep.mubr.bf16.mxu0 0
        %922 = vmatmul.mubr.bf16.gmra.mxu0 %v842
        %v923 = vpop.f32.mrf.mxu0
        %v924 = vadd.f32 %v751, %v923
        %v925 = vpop.f32.mrf.mxu0
        %v926 = vpop.f32.mrf.mxu0
        %v927 = vpop.f32.mrf.mxu0
        %928 = vmatprep.mubr.bf16.mxu0 0
        %929 = vmatmul.mubr.bf16.gmra.mxu0 %v845
        %v930 = vpop.f32.mrf.mxu0
        %v931 = vadd.f32 %v758, %v930
        %v932 = vpop.f32.mrf.mxu0
        %v933 = vpop.f32.mrf.mxu0
        %v934 = vpop.f32.mrf.mxu0
        %935 = vdwg.mxu0
        %v936 = vld [vmem:[#allocation2 + $0x4] sm:$0xf]
        %v937 = vld [vmem:[#allocation2 + $0x8] sm:$0xf]
        %v938 = vld [vmem:[#allocation2 + $0xc] sm:$0x1]
        %v939 = vld [vmem:[#allocation2 + $0x14] sm:$0xf]
        %v940 = vld [vmem:[#allocation2 + $0x18] sm:$0xf]
        %v941 = vld [vmem:[#allocation2 + $0x1c] sm:$0x1]
        %v942 = vld [vmem:[#allocation2 + $0x24] sm:$0xf]
        %v943 = vld [vmem:[#allocation2 + $0x28] sm:$0xf]
        %v944 = vld [vmem:[#allocation2 + $0x2c] sm:$0x1]
        %v945 = vld [vmem:[#allocation2 + $0x34] sm:$0xf]
        %v946 = vld [vmem:[#allocation2 + $0x38] sm:$0xf]
        %v947 = vld [vmem:[#allocation2 + $0x3c] sm:$0x1]
        %v948 = vld [vmem:[#allocation2 + $0x44] sm:$0xf]
        %v949 = vld [vmem:[#allocation2 + $0x48] sm:$0xf]
        %v950 = vld [vmem:[#allocation2 + $0x4c] sm:$0x1]
        %v951 = vld [vmem:[#allocation2 + $0x54] sm:$0xf]
        %v952 = vld [vmem:[#allocation2 + $0x58] sm:$0xf]
        %v953 = vld [vmem:[#allocation2 + $0x5c] sm:$0x1]
        %v954 = vld [vmem:[#allocation2 + $0x64] sm:$0xf]
        %v955 = vld [vmem:[#allocation2 + $0x68] sm:$0xf]
        %v956 = vld [vmem:[#allocation2 + $0x6c] sm:$0x1]
        %v957 = vld [vmem:[#allocation2 + $0x74] sm:$0xf]
        %v958 = vld [vmem:[#allocation2 + $0x78] sm:$0xf]
        %v959 = vld [vmem:[#allocation2 + $0x7c] sm:$0x1]
        %vm960 = vsmask.f32 3328
        %vm961 = vsmask.f32 7440
        %vm962 = vmor %vm960, %vm961
        %v964 = vshrl.u32 %v936, 16
        %v966 = vrot.slane %v964, 4
        %v967 = vshll.u32 %v936, 16
        %v969 = vrot.slane %v967, 5
        %v970 = vor.u32 %v966, %v969
        %v971 = vrot.slane %v970, 4
        %v973 = vshll.u32 %v937, 16
        %v975 = vrot.slane %v973, 5
        %v976 = vsel %vm962, %v971, %v975
        %v977 = vshrl.u32 %v937, 16
        %v979 = vrot.slane %v977, 4
        %v980 = vor.u32 %v979, %v975
        %v981 = vrot.slane %v980, 4
        %v983 = vshll.u32 %v938, 16
        %v985 = vrot.slane %v983, 5
        %v986 = vsel %vm962, %v981, %v985
        %v988 = vshrl.u32 %v939, 16
        %v990 = vrot.slane %v988, 4
        %v991 = vshll.u32 %v939, 16
        %v993 = vrot.slane %v991, 5
        %v994 = vor.u32 %v990, %v993
        %v995 = vrot.slane %v994, 4
        %v997 = vshll.u32 %v940, 16
        %v999 = vrot.slane %v997, 5
        %v1000 = vsel %vm962, %v995, %v999
        %v1001 = vshrl.u32 %v940, 16
        %v1003 = vrot.slane %v1001, 4
        %v1004 = vor.u32 %v1003, %v999
        %v1005 = vrot.slane %v1004, 4
        %v1007 = vshll.u32 %v941, 16
        %v1009 = vrot.slane %v1007, 5
        %v1010 = vsel %vm962, %v1005, %v1009
        %v1012 = vshrl.u32 %v942, 16
        %v1014 = vrot.slane %v1012, 4
        %v1015 = vshll.u32 %v942, 16
        %v1017 = vrot.slane %v1015, 5
        %v1018 = vor.u32 %v1014, %v1017
        %v1019 = vrot.slane %v1018, 4
        %v1021 = vshll.u32 %v943, 16
        %v1023 = vrot.slane %v1021, 5
        %v1024 = vsel %vm962, %v1019, %v1023
        %v1025 = vshrl.u32 %v943, 16
        %v1027 = vrot.slane %v1025, 4
        %v1028 = vor.u32 %v1027, %v1023
        %v1029 = vrot.slane %v1028, 4
        %v1031 = vshll.u32 %v944, 16
        %v1033 = vrot.slane %v1031, 5
        %v1034 = vsel %vm962, %v1029, %v1033
        %v1036 = vshrl.u32 %v945, 16
        %v1038 = vrot.slane %v1036, 4
        %v1039 = vshll.u32 %v945, 16
        %v1041 = vrot.slane %v1039, 5
        %v1042 = vor.u32 %v1038, %v1041
        %v1043 = vrot.slane %v1042, 4
        %v1045 = vshll.u32 %v946, 16
        %v1047 = vrot.slane %v1045, 5
        %v1048 = vsel %vm962, %v1043, %v1047
        %v1049 = vshrl.u32 %v946, 16
        %v1051 = vrot.slane %v1049, 4
        %v1052 = vor.u32 %v1051, %v1047
        %v1053 = vrot.slane %v1052, 4
        %v1055 = vshll.u32 %v947, 16
        %v1057 = vrot.slane %v1055, 5
        %v1058 = vsel %vm962, %v1053, %v1057
        %v1060 = vshrl.u32 %v948, 16
        %v1062 = vrot.slane %v1060, 4
        %v1063 = vshll.u32 %v948, 16
        %v1065 = vrot.slane %v1063, 5
        %v1066 = vor.u32 %v1062, %v1065
        %v1067 = vrot.slane %v1066, 4
        %v1069 = vshll.u32 %v949, 16
        %v1071 = vrot.slane %v1069, 5
        %v1072 = vsel %vm962, %v1067, %v1071
        %v1073 = vshrl.u32 %v949, 16
        %v1075 = vrot.slane %v1073, 4
        %v1076 = vor.u32 %v1075, %v1071
        %v1077 = vrot.slane %v1076, 4
        %v1079 = vshll.u32 %v950, 16
        %v1081 = vrot.slane %v1079, 5
        %v1082 = vsel %vm962, %v1077, %v1081
        %v1084 = vshrl.u32 %v951, 16
        %v1086 = vrot.slane %v1084, 4
        %v1087 = vshll.u32 %v951, 16
        %v1089 = vrot.slane %v1087, 5
        %v1090 = vor.u32 %v1086, %v1089
        %v1091 = vrot.slane %v1090, 4
        %v1093 = vshll.u32 %v952, 16
        %v1095 = vrot.slane %v1093, 5
        %v1096 = vsel %vm962, %v1091, %v1095
        %v1097 = vshrl.u32 %v952, 16
        %v1099 = vrot.slane %v1097, 4
        %v1100 = vor.u32 %v1099, %v1095
        %v1101 = vrot.slane %v1100, 4
        %v1103 = vshll.u32 %v953, 16
        %v1105 = vrot.slane %v1103, 5
        %v1106 = vsel %vm962, %v1101, %v1105
        %v1108 = vshrl.u32 %v954, 16
        %v1110 = vrot.slane %v1108, 4
        %v1111 = vshll.u32 %v954, 16
        %v1113 = vrot.slane %v1111, 5
        %v1114 = vor.u32 %v1110, %v1113
        %v1115 = vrot.slane %v1114, 4
        %v1117 = vshll.u32 %v955, 16
        %v1119 = vrot.slane %v1117, 5
        %v1120 = vsel %vm962, %v1115, %v1119
        %v1121 = vshrl.u32 %v955, 16
        %v1123 = vrot.slane %v1121, 4
        %v1124 = vor.u32 %v1123, %v1119
        %v1125 = vrot.slane %v1124, 4
        %v1127 = vshll.u32 %v956, 16
        %v1129 = vrot.slane %v1127, 5
        %v1130 = vsel %vm962, %v1125, %v1129
        %v1132 = vshrl.u32 %v957, 16
        %v1134 = vrot.slane %v1132, 4
        %v1135 = vshll.u32 %v957, 16
        %v1137 = vrot.slane %v1135, 5
        %v1138 = vor.u32 %v1134, %v1137
        %v1139 = vrot.slane %v1138, 4
        %v1141 = vshll.u32 %v958, 16
        %v1143 = vrot.slane %v1141, 5
        %v1144 = vsel %vm962, %v1139, %v1143
        %v1145 = vshrl.u32 %v958, 16
        %v1147 = vrot.slane %v1145, 4
        %v1148 = vor.u32 %v1147, %v1143
        %v1149 = vrot.slane %v1148, 4
        %v1151 = vshll.u32 %v959, 16
        %v1153 = vrot.slane %v1151, 5
        %v1154 = vsel %vm962, %v1149, %v1153
        %s1155 = scalar_lea.vmem %s1, 96
        %v1156 = vld [vmem:[%s1155] sm:$0xf]
        %v1157 = vld [vmem:[%s1155 + $0x4] sm:$0xf]
        %v1158 = vld [vmem:[%s1155 + $0x8] sm:$0xf]
        %v1159 = vld [vmem:[%s1155 + $0xc] sm:$0xf]
        %v1160 = vld [vmem:[%s1155 + $0x10] sm:$0xf]
        %v1161 = vld [vmem:[%s1155 + $0x14] sm:$0xf]
        %v1162 = vld [vmem:[%s1155 + $0x18] sm:$0xf]
        %v1163 = vld [vmem:[%s1155 + $0x1c] sm:$0xf]
        %v1164 = vld [vmem:[%s1155 + $0x20] sm:$0xf]
        %v1165 = vld [vmem:[%s1155 + $0x24] sm:$0xf]
        %v1166 = vld [vmem:[%s1155 + $0x28] sm:$0xf]
        %v1167 = vld [vmem:[%s1155 + $0x2c] sm:$0xf]
        %v1168 = vunpack.c.l.b16 %v976
        %v1169 = vunpack.c.l.b16 %v986
        %v1170 = vunpack.c.l.b16 %v1000
        %v1171 = vunpack.c.l.b16 %v1010
        %v1172 = vunpack.c.l.b16 %v1024
        %v1173 = vunpack.c.l.b16 %v1034
        %v1174 = vunpack.c.l.b16 %v1048
        %v1175 = vunpack.c.l.b16 %v1058
        %v1176 = vunpack.c.l.b16 %v1072
        %v1177 = vunpack.c.l.b16 %v1082
        %v1178 = vunpack.c.l.b16 %v1096
        %v1179 = vunpack.c.l.b16 %v1106
        %v1180 = vunpack.c.l.b16 %v1120
        %v1181 = vunpack.c.l.b16 %v1130
        %v1182 = vunpack.c.l.b16 %v1144
        %v1183 = vunpack.c.l.b16 %v1154
        %v1184 = vpack.c.b16 %v1169, %v1168
        %v1185 = vpack.c.b16 %v1171, %v1170
        %v1186 = vpack.c.b16 %v1173, %v1172
        %v1187 = vpack.c.b16 %v1175, %v1174
        %v1188 = vpack.c.b16 %v1177, %v1176
        %v1189 = vpack.c.b16 %v1179, %v1178
        %v1190 = vpack.c.b16 %v1181, %v1180
        %v1191 = vpack.c.b16 %v1183, %v1182
        %v1204 = vunpack.c.l.b16 %v1156
        %v1205 = vunpack.c.l.b16 %v1157
        %v1206 = vunpack.c.l.b16 %v1158
        %v1207 = vunpack.c.l.b16 %v1159
        %v1208 = vunpack.c.l.b16 %v1160
        %v1209 = vunpack.c.l.b16 %v1161
        %v1210 = vunpack.c.l.b16 %v1162
        %v1211 = vunpack.c.l.b16 %v1163
        %v1212 = vunpack.c.l.b16 %v1164
        %v1213 = vunpack.c.l.b16 %v1165
        %v1214 = vunpack.c.l.b16 %v1166
        %v1215 = vunpack.c.l.b16 %v1167
        %v1216 = vpack.c.b16 %v1205, %v1204
        %v1217 = vpack.c.b16 %v1207, %v1206
        %v1218 = vpack.c.b16 %v1209, %v1208
        %v1219 = vpack.c.b16 %v1211, %v1210
        %v1220 = vpack.c.b16 %v1213, %v1212
        %v1221 = vpack.c.b16 %v1215, %v1214
        %v1229 = vsel %vm649, %v1184, 0
        %v1232 = vsel %vm649, %v1185, 0
        %v1235 = vsel %vm649, %v1186, 0
        %v1238 = vsel %vm649, %v1187, 0
        %v1241 = vsel %vm649, %v1188, 0
        %v1244 = vsel %vm649, %v1189, 0
        %v1247 = vsel %vm649, %v1190, 0
        %v1250 = vsel %vm649, %v1191, 0
        %1252 = vmatprep.subr.bf16.mxu0 0
        %1253 = vmatpush1.bf16.msra.mxu0 0
        %1254 = vmatprep.subr.bf16.mxu0 0
        %1255 = vmatpush1.bf16.msra.mxu0 0
        %1256 = vmatprep.subr.bf16.mxu0 0
        %1257 = vmatpush1.bf16.msra.mxu0 %v1221
        %1258 = vmatprep.subr.bf16.mxu0 0
        %1259 = vmatpush1.bf16.msra.mxu0 %v1220
        %1260 = vmatprep.subr.bf16.mxu0 0
        %1261 = vmatpush1.bf16.msra.mxu0 %v1219
        %1262 = vmatprep.subr.bf16.mxu0 0
        %1263 = vmatpush1.bf16.msra.mxu0 %v1218
        %1264 = vmatprep.subr.bf16.mxu0 0
        %1265 = vmatpush1.bf16.msra.mxu0 %v1217
        %1266 = vmatprep.subr.bf16.mxu0 0
        %1267 = vmatpush1.bf16.msra.mxu0 %v1216
        %1268 = vmatprep.subr.bf16.mxu0 0
        %1269 = vmatpush2.bf16.msra.mxu0 0
        %1270 = vmatprep.subr.bf16.mxu0 0
        %1271 = vmatpush2.bf16.msra.mxu0 0
        %1272 = vmatprep.subr.bf16.mxu0 0
        %1273 = vmatpush2.bf16.msra.mxu0 0
        %1274 = vmatprep.subr.bf16.mxu0 0
        %1275 = vmatpush2.bf16.msra.mxu0 0
        %1276 = vmatprep.subr.bf16.mxu0 0
        %1277 = vmatpush2.bf16.msra.mxu0 0
        %1278 = vmatprep.subr.bf16.mxu0 0
        %1279 = vmatpush2.bf16.msra.mxu0 0
        %1280 = vmatprep.subr.bf16.mxu0 0
        %1281 = vmatpush2.bf16.msra.mxu0 0
        %1282 = vmatprep.subr.bf16.mxu0 0
        %1283 = vmatpush2.bf16.msra.mxu0 0
        %1284 = vmatprep.mubr.bf16.mxu0 0
        %1285 = vmatmul.mubr.bf16.gmra.mxu0 %v1229
        %v1286 = vpop.f32.mrf.mxu0
        %v1287 = vadd.f32 0.0, %v1286
        %v1288 = vpop.f32.mrf.mxu0
        %v1289 = vpop.f32.mrf.mxu0
        %v1290 = vpop.f32.mrf.mxu0
        %1291 = vmatprep.mubr.bf16.mxu0 0
        %1292 = vmatmul.mubr.bf16.gmra.mxu0 %v1232
        %v1293 = vpop.f32.mrf.mxu0
        %v1294 = vadd.f32 0.0, %v1293
        %v1295 = vpop.f32.mrf.mxu0
        %v1296 = vpop.f32.mrf.mxu0
        %v1297 = vpop.f32.mrf.mxu0
        %1298 = vmatprep.mubr.bf16.mxu0 0
        %1299 = vmatmul.mubr.bf16.gmra.mxu0 %v1235
        %v1300 = vpop.f32.mrf.mxu0
        %v1301 = vadd.f32 0.0, %v1300
        %v1302 = vpop.f32.mrf.mxu0
        %v1303 = vpop.f32.mrf.mxu0
        %v1304 = vpop.f32.mrf.mxu0
        %1305 = vmatprep.mubr.bf16.mxu0 0
        %1306 = vmatmul.mubr.bf16.gmra.mxu0 %v1238
        %v1307 = vpop.f32.mrf.mxu0
        %v1308 = vadd.f32 0.0, %v1307
        %v1309 = vpop.f32.mrf.mxu0
        %v1310 = vpop.f32.mrf.mxu0
        %v1311 = vpop.f32.mrf.mxu0
        %1312 = vmatprep.mubr.bf16.mxu0 0
        %1313 = vmatmul.mubr.bf16.gmra.mxu0 %v1241
        %v1314 = vpop.f32.mrf.mxu0
        %v1315 = vadd.f32 0.0, %v1314
        %v1316 = vpop.f32.mrf.mxu0
        %v1317 = vpop.f32.mrf.mxu0
        %v1318 = vpop.f32.mrf.mxu0
        %1319 = vmatprep.mubr.bf16.mxu0 0
        %1320 = vmatmul.mubr.bf16.gmra.mxu0 %v1244
        %v1321 = vpop.f32.mrf.mxu0
        %v1322 = vadd.f32 0.0, %v1321
        %v1323 = vpop.f32.mrf.mxu0
        %v1324 = vpop.f32.mrf.mxu0
        %v1325 = vpop.f32.mrf.mxu0
        %1326 = vmatprep.mubr.bf16.mxu0 0
        %1327 = vmatmul.mubr.bf16.gmra.mxu0 %v1247
        %v1328 = vpop.f32.mrf.mxu0
        %v1329 = vadd.f32 0.0, %v1328
        %v1330 = vpop.f32.mrf.mxu0
        %v1331 = vpop.f32.mrf.mxu0
        %v1332 = vpop.f32.mrf.mxu0
        %1333 = vmatprep.mubr.bf16.mxu0 0
        %1334 = vmatmul.mubr.bf16.gmra.mxu0 %v1250
        %v1335 = vpop.f32.mrf.mxu0
        %v1336 = vadd.f32 0.0, %v1335
        %v1337 = vpop.f32.mrf.mxu0
        %v1338 = vpop.f32.mrf.mxu0
        %v1339 = vpop.f32.mrf.mxu0
        %1340 = vdwg.mxu0
        %v1341 = vadd.f32 %v882, %v1287
        %v1342 = vadd.f32 %v889, %v1294
        %v1343 = vadd.f32 %v896, %v1301
        %v1344 = vadd.f32 %v903, %v1308
        %v1345 = vadd.f32 %v910, %v1315
        %v1346 = vadd.f32 %v917, %v1322
        %v1347 = vadd.f32 %v924, %v1329
        %v1348 = vadd.f32 %v931, %v1336
        %v1349 = vld [vmem:[%s2] sm:$0x1]
        %v1351 = vlaneseq
        %v1352 = vshrl.u32 %v1351, 7
        %v1353 = vsub.s32 0, %v1352
        %v1354 = vrot.slane %v1349, %v1353
        %v1356 = vadd.f32 %v1341, %v1354
        %v1357 = vadd.f32 %v1342, %v1354
        %v1358 = vadd.f32 %v1343, %v1354
        %v1359 = vadd.f32 %v1344, %v1354
        %v1360 = vadd.f32 %v1345, %v1354
        %v1361 = vadd.f32 %v1346, %v1354
        %v1362 = vadd.f32 %v1347, %v1354
        %v1363 = vadd.f32 %v1348, %v1354
        %v1364 = vmul.f32 %v1356, 0.01
        %v1365 = vmul.f32 %v1357, 0.01
        %v1366 = vmul.f32 %v1358, 0.01
        %v1367 = vmul.f32 %v1359, 0.01
        %v1368 = vmul.f32 %v1360, 0.01
        %v1369 = vmul.f32 %v1361, 0.01
        %v1370 = vmul.f32 %v1362, 0.01
        %v1371 = vmul.f32 %v1363, 0.01
        %v1372 = vmax.f32 %v1356, %v1364
        %v1373 = vmax.f32 %v1357, %v1365
        %v1374 = vmax.f32 %v1358, %v1366
        %v1375 = vmax.f32 %v1359, %v1367
        %v1376 = vmax.f32 %v1360, %v1368
        %v1377 = vmax.f32 %v1361, %v1369
        %v1378 = vmax.f32 %v1362, %v1370
        %v1379 = vmax.f32 %v1363, %v1371
        %v1380 = vpack.c.bf16 %v1372, %v1372
        %v1381 = vpack.c.bf16 %v1373, %v1373
        %v1382 = vpack.c.bf16 %v1374, %v1374
        %v1383 = vpack.c.bf16 %v1375, %v1375
        %v1384 = vpack.c.bf16 %v1376, %v1376
        %v1385 = vpack.c.bf16 %v1377, %v1377
        %v1386 = vpack.c.bf16 %v1378, %v1378
        %v1387 = vpack.c.bf16 %v1379, %v1379
        %vm1388 = vcmask 191488
        %1389 = vst.msk [vmem:[#allocation3] sm:$0xf] %vm1388, 0
        %1390 = vst.msk [vmem:[#allocation3 + $0x10] sm:$0xf] %vm1388, 0
        %1391 = vst.msk [vmem:[#allocation3 + $0x20] sm:$0xf] %vm1388, 0
        %1392 = vst.msk [vmem:[#allocation3 + $0x30] sm:$0xf] %vm1388, 0
        %1393 = vst.msk [vmem:[#allocation3 + $0x40] sm:$0xf] %vm1388, 0
        %1394 = vst.msk [vmem:[#allocation3 + $0x50] sm:$0xf] %vm1388, 0
        %1395 = vst.msk [vmem:[#allocation3 + $0x60] sm:$0xf] %vm1388, 0
        %1396 = vst.msk [vmem:[#allocation3 + $0x70] sm:$0xf] %vm1388, 0
        %1397 = vst.msk [vmem:[#allocation3 + $0x8] sm:$0xf] %vm1388, 0
        %1398 = vst.msk [vmem:[#allocation3 + $0xc] sm:$0xf] %vm1388, 0
        %1399 = vst.msk [vmem:[#allocation3 + $0x18] sm:$0xf] %vm1388, 0
        %1400 = vst.msk [vmem:[#allocation3 + $0x1c] sm:$0xf] %vm1388, 0
        %1401 = vst.msk [vmem:[#allocation3 + $0x28] sm:$0xf] %vm1388, 0
        %1402 = vst.msk [vmem:[#allocation3 + $0x2c] sm:$0xf] %vm1388, 0
        %1403 = vst.msk [vmem:[#allocation3 + $0x38] sm:$0xf] %vm1388, 0
        %1404 = vst.msk [vmem:[#allocation3 + $0x3c] sm:$0xf] %vm1388, 0
        %1405 = vst.msk [vmem:[#allocation3 + $0x48] sm:$0xf] %vm1388, 0
        %1406 = vst.msk [vmem:[#allocation3 + $0x4c] sm:$0xf] %vm1388, 0
        %1407 = vst.msk [vmem:[#allocation3 + $0x58] sm:$0xf] %vm1388, 0
        %1408 = vst.msk [vmem:[#allocation3 + $0x5c] sm:$0xf] %vm1388, 0
        %1409 = vst.msk [vmem:[#allocation3 + $0x68] sm:$0xf] %vm1388, 0
        %1410 = vst.msk [vmem:[#allocation3 + $0x6c] sm:$0xf] %vm1388, 0
        %1411 = vst.msk [vmem:[#allocation3 + $0x78] sm:$0xf] %vm1388, 0
        %1412 = vst.msk [vmem:[#allocation3 + $0x7c] sm:$0xf] %vm1388, 0
        %vm1413 = vcmask 60416
        %1414 = vst.msk [vmem:[#allocation3] sm:$0xf] %vm1413, 0
        %1415 = vst.msk [vmem:[#allocation3 + $0x4] sm:$0xf] %vm1413, 0
        %1416 = vst.msk [vmem:[#allocation3 + $0x8] sm:$0xf] %vm1413, 0
        %1417 = vst.msk [vmem:[#allocation3 + $0xc] sm:$0xf] %vm1413, 0
        %s1418 = scalar_lea.vmem [#allocation3], 16
        %1419 = vst.msk [vmem:[%s1418 + $0x4] sm:$0xf] %vm1413, %v1380
        %1420 = vst.msk [vmem:[%s1418 + $0x14] sm:$0xf] %vm1413, %v1381
        %1421 = vst.msk [vmem:[%s1418 + $0x24] sm:$0xf] %vm1413, %v1382
        %1422 = vst.msk [vmem:[%s1418 + $0x34] sm:$0xf] %vm1413, %v1383
        %1423 = vst.msk [vmem:[%s1418 + $0x44] sm:$0xf] %vm1413, %v1384
        %1424 = vst.msk [vmem:[%s1418 + $0x54] sm:$0xf] %vm1413, %v1385
        %1425 = vst.msk [vmem:[%s1418 + $0x64] sm:$0xf] %vm1413, %v1386
        %v1434 = vunpack.c.l.b16 %v1380
        %v1435 = vunpack.c.l.b16 %v1381
        %v1436 = vunpack.c.l.b16 %v1382
        %v1437 = vunpack.c.l.b16 %v1383
        %v1438 = vunpack.c.l.b16 %v1384
        %v1439 = vunpack.c.l.b16 %v1385
        %v1440 = vunpack.c.l.b16 %v1386
        %v1441 = vunpack.c.l.b16 %v1387
        %v1442 = vpack.c.b16 %v1434, %v1434
        %v1443 = vpack.c.b16 %v1435, %v1435
        %v1444 = vpack.c.b16 %v1436, %v1436
        %v1445 = vpack.c.b16 %v1437, %v1437
        %v1446 = vpack.c.b16 %v1438, %v1438
        %v1447 = vpack.c.b16 %v1439, %v1439
        %v1448 = vpack.c.b16 %v1440, %v1440
        %v1449 = vpack.c.b16 %v1441, %v1441
        %1450 = vrot.lane.b32.xlu0 %v1442, 8
        %v1451 = vpop.permute.xlu0 %1450
        %1452 = vrot.lane.b32.xlu0 %v1443, 8
        %v1453 = vpop.permute.xlu0 %1452
        %1454 = vrot.lane.b32.xlu0 %v1444, 8
        %v1455 = vpop.permute.xlu0 %1454
        %1456 = vrot.lane.b32.xlu0 %v1445, 8
        %v1457 = vpop.permute.xlu0 %1456
        %1458 = vrot.lane.b32.xlu0 %v1446, 8
        %v1459 = vpop.permute.xlu0 %1458
        %1460 = vrot.lane.b32.xlu0 %v1447, 8
        %v1461 = vpop.permute.xlu0 %1460
        %1462 = vrot.lane.b32.xlu0 %v1448, 8
        %v1463 = vpop.permute.xlu0 %1462
        %1464 = vrot.lane.b32.xlu0 %v1449, 8
        %v1465 = vpop.permute.xlu0 %1464
        %vm1474 = vcmask 126016
        %1475 = vst.msk [vmem:[#allocation3 + $0x4] sm:$0xf] %vm1474, %v1451
        %1476 = vst.msk [vmem:[#allocation3 + $0x14] sm:$0xf] %vm1474, %v1453
        %1477 = vst.msk [vmem:[#allocation3 + $0x24] sm:$0xf] %vm1474, %v1455
        %1478 = vst.msk [vmem:[#allocation3 + $0x34] sm:$0xf] %vm1474, %v1457
        %1479 = vst.msk [vmem:[#allocation3 + $0x44] sm:$0xf] %vm1474, %v1459
        %1480 = vst.msk [vmem:[#allocation3 + $0x54] sm:$0xf] %vm1474, %v1461
        %1481 = vst.msk [vmem:[#allocation3 + $0x64] sm:$0xf] %vm1474, %v1463
        %1482 = vst.msk [vmem:[#allocation3 + $0x74] sm:$0xf] %vm1474, %v1465
        %1483 = vrot.lane.b32.xlu0 %v1443, 16
        %v1484 = vpop.permute.xlu0 %1483
        %1485 = vrot.lane.b32.xlu0 %v1444, 16
        %v1486 = vpop.permute.xlu0 %1485
        %1487 = vrot.lane.b32.xlu0 %v1445, 16
        %v1488 = vpop.permute.xlu0 %1487
        %1489 = vrot.lane.b32.xlu0 %v1446, 16
        %v1490 = vpop.permute.xlu0 %1489
        %1491 = vrot.lane.b32.xlu0 %v1447, 16
        %v1492 = vpop.permute.xlu0 %1491
        %1493 = vrot.lane.b32.xlu0 %v1448, 16
        %v1494 = vpop.permute.xlu0 %1493
        %1495 = vrot.lane.b32.xlu0 %v1449, 16
        %v1496 = vpop.permute.xlu0 %1495
        %vm1504 = vcmask 191616
        %1505 = vst.msk [vmem:[#allocation3 + $0x4] sm:$0xf] %vm1504, %v1484
        %1506 = vst.msk [vmem:[#allocation3 + $0x14] sm:$0xf] %vm1504, %v1486
        %1507 = vst.msk [vmem:[#allocation3 + $0x24] sm:$0xf] %vm1504, %v1488
        %1508 = vst.msk [vmem:[#allocation3 + $0x34] sm:$0xf] %vm1504, %v1490
        %1509 = vst.msk [vmem:[#allocation3 + $0x44] sm:$0xf] %vm1504, %v1492
        %1510 = vst.msk [vmem:[#allocation3 + $0x54] sm:$0xf] %vm1504, %v1494
        %1511 = vst.msk [vmem:[#allocation3 + $0x64] sm:$0xf] %vm1504, %v1496
        %s1512 = scalar_lea.vmem [#allocation3], 112
        %1513 = vst.msk [vmem:[%s1512] sm:$0xf] %vm1504, 0
        %1514 = vst.msk [vmem:[%s1512 + $0x4] sm:$0xf] %vm1504, 0
        %1515 = vst.msk [vmem:[%s1512 + $0x8] sm:$0xf] %vm1504, 0
        %1516 = vst.msk [vmem:[%s1512 + $0xc] sm:$0xf] %vm1504, 0
        %v1517 = vld [vmem:[#allocation3] sm:$0x8]
        %v1518 = vld [vmem:[#allocation3 + $0x4] sm:$0xf]
        %v1519 = vld [vmem:[#allocation3 + $0x8] sm:$0xf]
        %v1520 = vld [vmem:[#allocation3 + $0x10] sm:$0x8]
        %v1521 = vld [vmem:[#allocation3 + $0x14] sm:$0xf]
        %v1522 = vld [vmem:[#allocation3 + $0x18] sm:$0xf]
        %v1523 = vld [vmem:[#allocation3 + $0x20] sm:$0x8]
        %v1524 = vld [vmem:[#allocation3 + $0x24] sm:$0xf]
        %v1525 = vld [vmem:[#allocation3 + $0x28] sm:$0xf]
        %v1526 = vld [vmem:[#allocation3 + $0x30] sm:$0x8]
        %v1527 = vld [vmem:[#allocation3 + $0x34] sm:$0xf]
        %v1528 = vld [vmem:[#allocation3 + $0x38] sm:$0xf]
        %v1529 = vld [vmem:[#allocation3 + $0x40] sm:$0x8]
        %v1530 = vld [vmem:[#allocation3 + $0x44] sm:$0xf]
        %v1531 = vld [vmem:[#allocation3 + $0x48] sm:$0xf]
        %v1532 = vld [vmem:[#allocation3 + $0x50] sm:$0x8]
        %v1533 = vld [vmem:[#allocation3 + $0x54] sm:$0xf]
        %v1534 = vld [vmem:[#allocation3 + $0x58] sm:$0xf]
        %v1535 = vld [vmem:[#allocation3 + $0x60] sm:$0x8]
        %v1536 = vld [vmem:[#allocation3 + $0x64] sm:$0xf]
        %v1537 = vld [vmem:[#allocation3 + $0x68] sm:$0xf]
        %v1538 = vld [vmem:[#allocation3 + $0x70] sm:$0x8]
        %v1539 = vld [vmem:[#allocation3 + $0x74] sm:$0xf]
        %v1540 = vld [vmem:[#allocation3 + $0x78] sm:$0xf]
        %v1542 = vshrl.u32 %v1517, 16
        %v1544 = vrot.slane %v1542, 7
        %v1545 = vrot.slane %v1544, 4
        %v1547 = vshrl.u32 %v1518, 16
        %v1549 = vrot.slane %v1547, 7
        %v1550 = vshll.u32 %v1518, 16
        %v1552 = vor.u32 %v1549, %v1550
        %v1553 = vsel %vm371, %v1545, %v1552
        %v1554 = vrot.slane %v1549, 4
        %v1556 = vshrl.u32 %v1519, 16
        %v1558 = vrot.slane %v1556, 7
        %v1559 = vshll.u32 %v1519, 16
        %v1561 = vor.u32 %v1558, %v1559
        %v1562 = vsel %vm371, %v1554, %v1561
        %v1564 = vshrl.u32 %v1520, 16
        %v1566 = vrot.slane %v1564, 7
        %v1567 = vrot.slane %v1566, 4
        %v1569 = vshrl.u32 %v1521, 16
        %v1571 = vrot.slane %v1569, 7
        %v1572 = vshll.u32 %v1521, 16
        %v1574 = vor.u32 %v1571, %v1572
        %v1575 = vsel %vm371, %v1567, %v1574
        %v1576 = vrot.slane %v1571, 4
        %v1578 = vshrl.u32 %v1522, 16
        %v1580 = vrot.slane %v1578, 7
        %v1581 = vshll.u32 %v1522, 16
        %v1583 = vor.u32 %v1580, %v1581
        %v1584 = vsel %vm371, %v1576, %v1583
        %v1586 = vshrl.u32 %v1523, 16
        %v1588 = vrot.slane %v1586, 7
        %v1589 = vrot.slane %v1588, 4
        %v1591 = vshrl.u32 %v1524, 16
        %v1593 = vrot.slane %v1591, 7
        %v1594 = vshll.u32 %v1524, 16
        %v1596 = vor.u32 %v1593, %v1594
        %v1597 = vsel %vm371, %v1589, %v1596
        %v1598 = vrot.slane %v1593, 4
        %v1600 = vshrl.u32 %v1525, 16
        %v1602 = vrot.slane %v1600, 7
        %v1603 = vshll.u32 %v1525, 16
        %v1605 = vor.u32 %v1602, %v1603
        %v1606 = vsel %vm371, %v1598, %v1605
        %v1608 = vshrl.u32 %v1526, 16
        %v1610 = vrot.slane %v1608, 7
        %v1611 = vrot.slane %v1610, 4
        %v1613 = vshrl.u32 %v1527, 16
        %v1615 = vrot.slane %v1613, 7
        %v1616 = vshll.u32 %v1527, 16
        %v1618 = vor.u32 %v1615, %v1616
        %v1619 = vsel %vm371, %v1611, %v1618
        %v1620 = vrot.slane %v1615, 4
        %v1622 = vshrl.u32 %v1528, 16
        %v1624 = vrot.slane %v1622, 7
        %v1625 = vshll.u32 %v1528, 16
        %v1627 = vor.u32 %v1624, %v1625
        %v1628 = vsel %vm371, %v1620, %v1627
        %v1630 = vshrl.u32 %v1529, 16
        %v1632 = vrot.slane %v1630, 7
        %v1633 = vrot.slane %v1632, 4
        %v1635 = vshrl.u32 %v1530, 16
        %v1637 = vrot.slane %v1635, 7
        %v1638 = vshll.u32 %v1530, 16
        %v1640 = vor.u32 %v1637, %v1638
        %v1641 = vsel %vm371, %v1633, %v1640
        %v1642 = vrot.slane %v1637, 4
        %v1644 = vshrl.u32 %v1531, 16
        %v1646 = vrot.slane %v1644, 7
        %v1647 = vshll.u32 %v1531, 16
        %v1649 = vor.u32 %v1646, %v1647
        %v1650 = vsel %vm371, %v1642, %v1649
        %v1652 = vshrl.u32 %v1532, 16
        %v1654 = vrot.slane %v1652, 7
        %v1655 = vrot.slane %v1654, 4
        %v1657 = vshrl.u32 %v1533, 16
        %v1659 = vrot.slane %v1657, 7
        %v1660 = vshll.u32 %v1533, 16
        %v1662 = vor.u32 %v1659, %v1660
        %v1663 = vsel %vm371, %v1655, %v1662
        %v1664 = vrot.slane %v1659, 4
        %v1666 = vshrl.u32 %v1534, 16
        %v1668 = vrot.slane %v1666, 7
        %v1669 = vshll.u32 %v1534, 16
        %v1671 = vor.u32 %v1668, %v1669
        %v1672 = vsel %vm371, %v1664, %v1671
        %v1674 = vshrl.u32 %v1535, 16
        %v1676 = vrot.slane %v1674, 7
        %v1677 = vrot.slane %v1676, 4
        %v1679 = vshrl.u32 %v1536, 16
        %v1681 = vrot.slane %v1679, 7
        %v1682 = vshll.u32 %v1536, 16
        %v1684 = vor.u32 %v1681, %v1682
        %v1685 = vsel %vm371, %v1677, %v1684
        %v1686 = vrot.slane %v1681, 4
        %v1688 = vshrl.u32 %v1537, 16
        %v1690 = vrot.slane %v1688, 7
        %v1691 = vshll.u32 %v1537, 16
        %v1693 = vor.u32 %v1690, %v1691
        %v1694 = vsel %vm371, %v1686, %v1693
        %v1696 = vshrl.u32 %v1538, 16
        %v1698 = vrot.slane %v1696, 7
        %v1699 = vrot.slane %v1698, 4
        %v1701 = vshrl.u32 %v1539, 16
        %v1703 = vrot.slane %v1701, 7
        %v1704 = vshll.u32 %v1539, 16
        %v1706 = vor.u32 %v1703, %v1704
        %v1707 = vsel %vm371, %v1699, %v1706
        %v1708 = vrot.slane %v1703, 4
        %v1710 = vshrl.u32 %v1540, 16
        %v1712 = vrot.slane %v1710, 7
        %v1713 = vshll.u32 %v1540, 16
        %v1715 = vor.u32 %v1712, %v1713
        %v1716 = vsel %vm371, %v1708, %v1715
        %v1717 = vld [vmem:[%s3] sm:$0xf]
        %v1718 = vld [vmem:[%s3 + $0x4] sm:$0xf]
        %v1719 = vld [vmem:[%s3 + $0x8] sm:$0xf]
        %s1720 = scalar_lea.vmem %s3, 12
        %v1721 = vld [vmem:[%s1720] sm:$0xf]
        %v1722 = vld [vmem:[%s1720 + $0x4] sm:$0xf]
        %v1723 = vld [vmem:[%s1720 + $0x8] sm:$0xf]
        %v1740 = vunpack.c.l.b16 %v1518
        %v1741 = vunpack.c.l.b16 %v1519
        %v1742 = vunpack.c.l.b16 %v1521
        %v1743 = vunpack.c.l.b16 %v1522
        %v1744 = vunpack.c.l.b16 %v1524
        %v1745 = vunpack.c.l.b16 %v1525
        %v1746 = vunpack.c.l.b16 %v1527
        %v1747 = vunpack.c.l.b16 %v1528
        %v1748 = vunpack.c.l.b16 %v1530
        %v1749 = vunpack.c.l.b16 %v1531
        %v1750 = vunpack.c.l.b16 %v1533
        %v1751 = vunpack.c.l.b16 %v1534
        %v1752 = vunpack.c.l.b16 %v1536
        %v1753 = vunpack.c.l.b16 %v1537
        %v1754 = vunpack.c.l.b16 %v1539
        %v1755 = vunpack.c.l.b16 %v1540
        %v1756 = vpack.c.b16 %v1741, %v1740
        %v1757 = vpack.c.b16 %v1743, %v1742
        %v1758 = vpack.c.b16 %v1745, %v1744
        %v1759 = vpack.c.b16 %v1747, %v1746
        %v1760 = vpack.c.b16 %v1749, %v1748
        %v1761 = vpack.c.b16 %v1751, %v1750
        %v1762 = vpack.c.b16 %v1753, %v1752
        %v1763 = vpack.c.b16 %v1755, %v1754
        %v1767 = vunpack.c.l.b16 %v1721
        %v1768 = vunpack.c.l.b16 %v1722
        %v1769 = vunpack.c.l.b16 %v1723
        %v1770 = vpack.c.b16 %v1768, %v1767
        %v1771 = vpack.c.b16 %v1769, %v1769
        %vm1773 = vcmask 195584
        %v1775 = vsel %vm1773, %v1756, 0
        %v1778 = vsel %vm1773, %v1757, 0
        %v1781 = vsel %vm1773, %v1758, 0
        %v1784 = vsel %vm1773, %v1759, 0
        %v1787 = vsel %vm1773, %v1760, 0
        %v1790 = vsel %vm1773, %v1761, 0
        %v1793 = vsel %vm1773, %v1762, 0
        %v1796 = vsel %vm1773, %v1763, 0
        %vm1798 = vcmask 1043456
        %v1800 = vsel %vm1798, %v1771, 0
        %1802 = vmatprep.subr.bf16.mxu0 0
        %1803 = vmatpush1.bf16.msra.mxu0 0
        %1804 = vmatprep.subr.bf16.mxu0 0
        %1805 = vmatpush1.bf16.msra.mxu0 0
        %1806 = vmatprep.subr.bf16.mxu0 0
        %1807 = vmatpush1.bf16.msra.mxu0 0
        %1808 = vmatprep.subr.bf16.mxu0 0
        %1809 = vmatpush1.bf16.msra.mxu0 0
        %1810 = vmatprep.subr.bf16.mxu0 0
        %1811 = vmatpush1.bf16.msra.mxu0 0
        %1812 = vmatprep.subr.bf16.mxu0 0
        %1813 = vmatpush1.bf16.msra.mxu0 0
        %1814 = vmatprep.subr.bf16.mxu0 0
        %1815 = vmatpush1.bf16.msra.mxu0 %v1800
        %1816 = vmatprep.subr.bf16.mxu0 0
        %1817 = vmatpush1.bf16.msra.mxu0 %v1770
        %1818 = vmatprep.subr.bf16.mxu0 0
        %1819 = vmatpush2.bf16.msra.mxu0 0
        %1820 = vmatprep.subr.bf16.mxu0 0
        %1821 = vmatpush2.bf16.msra.mxu0 0
        %1822 = vmatprep.subr.bf16.mxu0 0
        %1823 = vmatpush2.bf16.msra.mxu0 0
        %1824 = vmatprep.subr.bf16.mxu0 0
        %1825 = vmatpush2.bf16.msra.mxu0 0
        %1826 = vmatprep.subr.bf16.mxu0 0
        %1827 = vmatpush2.bf16.msra.mxu0 0
        %1828 = vmatprep.subr.bf16.mxu0 0
        %1829 = vmatpush2.bf16.msra.mxu0 0
        %1830 = vmatprep.subr.bf16.mxu0 0
        %1831 = vmatpush2.bf16.msra.mxu0 0
        %1832 = vmatprep.subr.bf16.mxu0 0
        %1833 = vmatpush2.bf16.msra.mxu0 0
        %1834 = vmatprep.mubr.bf16.mxu0 0
        %1835 = vmatmul.mubr.bf16.gmra.mxu0 %v1775
        %v1836 = vpop.f32.mrf.mxu0
        %v1837 = vadd.f32 0.0, %v1836
        %v1838 = vpop.f32.mrf.mxu0
        %v1839 = vpop.f32.mrf.mxu0
        %v1840 = vpop.f32.mrf.mxu0
        %1841 = vmatprep.mubr.bf16.mxu0 0
        %1842 = vmatmul.mubr.bf16.gmra.mxu0 %v1778
        %v1843 = vpop.f32.mrf.mxu0
        %v1844 = vadd.f32 0.0, %v1843
        %v1845 = vpop.f32.mrf.mxu0
        %v1846 = vpop.f32.mrf.mxu0
        %v1847 = vpop.f32.mrf.mxu0
        %1848 = vmatprep.mubr.bf16.mxu0 0
        %1849 = vmatmul.mubr.bf16.gmra.mxu0 %v1781
        %v1850 = vpop.f32.mrf.mxu0
        %v1851 = vadd.f32 0.0, %v1850
        %v1852 = vpop.f32.mrf.mxu0
        %v1853 = vpop.f32.mrf.mxu0
        %v1854 = vpop.f32.mrf.mxu0
        %1855 = vmatprep.mubr.bf16.mxu0 0
        %1856 = vmatmul.mubr.bf16.gmra.mxu0 %v1784
        %v1857 = vpop.f32.mrf.mxu0
        %v1858 = vadd.f32 0.0, %v1857
        %v1859 = vpop.f32.mrf.mxu0
        %v1860 = vpop.f32.mrf.mxu0
        %v1861 = vpop.f32.mrf.mxu0
        %1862 = vmatprep.mubr.bf16.mxu0 0
        %1863 = vmatmul.mubr.bf16.gmra.mxu0 %v1787
        %v1864 = vpop.f32.mrf.mxu0
        %v1865 = vadd.f32 0.0, %v1864
        %v1866 = vpop.f32.mrf.mxu0
        %v1867 = vpop.f32.mrf.mxu0
        %v1868 = vpop.f32.mrf.mxu0
        %1869 = vmatprep.mubr.bf16.mxu0 0
        %1870 = vmatmul.mubr.bf16.gmra.mxu0 %v1790
        %v1871 = vpop.f32.mrf.mxu0
        %v1872 = vadd.f32 0.0, %v1871
        %v1873 = vpop.f32.mrf.mxu0
        %v1874 = vpop.f32.mrf.mxu0
        %v1875 = vpop.f32.mrf.mxu0
        %1876 = vmatprep.mubr.bf16.mxu0 0
        %1877 = vmatmul.mubr.bf16.gmra.mxu0 %v1793
        %v1878 = vpop.f32.mrf.mxu0
        %v1879 = vadd.f32 0.0, %v1878
        %v1880 = vpop.f32.mrf.mxu0
        %v1881 = vpop.f32.mrf.mxu0
        %v1882 = vpop.f32.mrf.mxu0
        %1883 = vmatprep.mubr.bf16.mxu0 0
        %1884 = vmatmul.mubr.bf16.gmra.mxu0 %v1796
        %v1885 = vpop.f32.mrf.mxu0
        %v1886 = vadd.f32 0.0, %v1885
        %v1887 = vpop.f32.mrf.mxu0
        %v1888 = vpop.f32.mrf.mxu0
        %v1889 = vpop.f32.mrf.mxu0
        %1890 = vdwg.mxu0
        %v1891 = vunpack.c.l.b16 %v1553
        %v1892 = vunpack.c.l.b16 %v1562
        %v1893 = vunpack.c.l.b16 %v1575
        %v1894 = vunpack.c.l.b16 %v1584
        %v1895 = vunpack.c.l.b16 %v1597
        %v1896 = vunpack.c.l.b16 %v1606
        %v1897 = vunpack.c.l.b16 %v1619
        %v1898 = vunpack.c.l.b16 %v1628
        %v1899 = vunpack.c.l.b16 %v1641
        %v1900 = vunpack.c.l.b16 %v1650
        %v1901 = vunpack.c.l.b16 %v1663
        %v1902 = vunpack.c.l.b16 %v1672
        %v1903 = vunpack.c.l.b16 %v1685
        %v1904 = vunpack.c.l.b16 %v1694
        %v1905 = vunpack.c.l.b16 %v1707
        %v1906 = vunpack.c.l.b16 %v1716
        %v1907 = vpack.c.b16 %v1892, %v1891
        %v1908 = vpack.c.b16 %v1894, %v1893
        %v1909 = vpack.c.b16 %v1896, %v1895
        %v1910 = vpack.c.b16 %v1898, %v1897
        %v1911 = vpack.c.b16 %v1900, %v1899
        %v1912 = vpack.c.b16 %v1902, %v1901
        %v1913 = vpack.c.b16 %v1904, %v1903
        %v1914 = vpack.c.b16 %v1906, %v1905
        %v1918 = vunpack.c.l.b16 %v1717
        %v1919 = vunpack.c.l.b16 %v1718
        %v1920 = vunpack.c.l.b16 %v1719
        %v1921 = vpack.c.b16 %v1919, %v1918
        %v1922 = vpack.c.b16 %v1920, %v1920
        %v1925 = vsel %vm1773, %v1907, 0
        %v1928 = vsel %vm1773, %v1908, 0
        %v1931 = vsel %vm1773, %v1909, 0
        %v1934 = vsel %vm1773, %v1910, 0
        %v1937 = vsel %vm1773, %v1911, 0
        %v1940 = vsel %vm1773, %v1912, 0
        %v1943 = vsel %vm1773, %v1913, 0
        %v1946 = vsel %vm1773, %v1914, 0
        %v1949 = vsel %vm1798, %v1922, 0
        %1951 = vmatprep.subr.bf16.mxu0 0
        %1952 = vmatpush1.bf16.msra.mxu0 0
        %1953 = vmatprep.subr.bf16.mxu0 0
        %1954 = vmatpush1.bf16.msra.mxu0 0
        %1955 = vmatprep.subr.bf16.mxu0 0
        %1956 = vmatpush1.bf16.msra.mxu0 0
        %1957 = vmatprep.subr.bf16.mxu0 0
        %1958 = vmatpush1.bf16.msra.mxu0 0
        %1959 = vmatprep.subr.bf16.mxu0 0
        %1960 = vmatpush1.bf16.msra.mxu0 0
        %1961 = vmatprep.subr.bf16.mxu0 0
        %1962 = vmatpush1.bf16.msra.mxu0 0
        %1963 = vmatprep.subr.bf16.mxu0 0
        %1964 = vmatpush1.bf16.msra.mxu0 %v1949
        %1965 = vmatprep.subr.bf16.mxu0 0
        %1966 = vmatpush1.bf16.msra.mxu0 %v1921
        %1967 = vmatprep.subr.bf16.mxu0 0
        %1968 = vmatpush2.bf16.msra.mxu0 0
        %1969 = vmatprep.subr.bf16.mxu0 0
        %1970 = vmatpush2.bf16.msra.mxu0 0
        %1971 = vmatprep.subr.bf16.mxu0 0
        %1972 = vmatpush2.bf16.msra.mxu0 0
        %1973 = vmatprep.subr.bf16.mxu0 0
        %1974 = vmatpush2.bf16.msra.mxu0 0
        %1975 = vmatprep.subr.bf16.mxu0 0
        %1976 = vmatpush2.bf16.msra.mxu0 0
        %1977 = vmatprep.subr.bf16.mxu0 0
        %1978 = vmatpush2.bf16.msra.mxu0 0
        %1979 = vmatprep.subr.bf16.mxu0 0
        %1980 = vmatpush2.bf16.msra.mxu0 0
        %1981 = vmatprep.subr.bf16.mxu0 0
        %1982 = vmatpush2.bf16.msra.mxu0 0
        %1983 = vmatprep.mubr.bf16.mxu0 0
        %1984 = vmatmul.mubr.bf16.gmra.mxu0 %v1925
        %v1985 = vpop.f32.mrf.mxu0
        %v1986 = vadd.f32 %v1837, %v1985
        %v1987 = vpop.f32.mrf.mxu0
        %v1988 = vpop.f32.mrf.mxu0
        %v1989 = vpop.f32.mrf.mxu0
        %1990 = vmatprep.mubr.bf16.mxu0 0
        %1991 = vmatmul.mubr.bf16.gmra.mxu0 %v1928
        %v1992 = vpop.f32.mrf.mxu0
        %v1993 = vadd.f32 %v1844, %v1992
        %v1994 = vpop.f32.mrf.mxu0
        %v1995 = vpop.f32.mrf.mxu0
        %v1996 = vpop.f32.mrf.mxu0
        %1997 = vmatprep.mubr.bf16.mxu0 0
        %1998 = vmatmul.mubr.bf16.gmra.mxu0 %v1931
        %v1999 = vpop.f32.mrf.mxu0
        %v2000 = vadd.f32 %v1851, %v1999
        %v2001 = vpop.f32.mrf.mxu0
        %v2002 = vpop.f32.mrf.mxu0
        %v2003 = vpop.f32.mrf.mxu0
        %2004 = vmatprep.mubr.bf16.mxu0 0
        %2005 = vmatmul.mubr.bf16.gmra.mxu0 %v1934
        %v2006 = vpop.f32.mrf.mxu0
        %v2007 = vadd.f32 %v1858, %v2006
        %v2008 = vpop.f32.mrf.mxu0
        %v2009 = vpop.f32.mrf.mxu0
        %v2010 = vpop.f32.mrf.mxu0
        %2011 = vmatprep.mubr.bf16.mxu0 0
        %2012 = vmatmul.mubr.bf16.gmra.mxu0 %v1937
        %v2013 = vpop.f32.mrf.mxu0
        %v2014 = vadd.f32 %v1865, %v2013
        %v2015 = vpop.f32.mrf.mxu0
        %v2016 = vpop.f32.mrf.mxu0
        %v2017 = vpop.f32.mrf.mxu0
        %2018 = vmatprep.mubr.bf16.mxu0 0
        %2019 = vmatmul.mubr.bf16.gmra.mxu0 %v1940
        %v2020 = vpop.f32.mrf.mxu0
        %v2021 = vadd.f32 %v1872, %v2020
        %v2022 = vpop.f32.mrf.mxu0
        %v2023 = vpop.f32.mrf.mxu0
        %v2024 = vpop.f32.mrf.mxu0
        %2025 = vmatprep.mubr.bf16.mxu0 0
        %2026 = vmatmul.mubr.bf16.gmra.mxu0 %v1943
        %v2027 = vpop.f32.mrf.mxu0
        %v2028 = vadd.f32 %v1879, %v2027
        %v2029 = vpop.f32.mrf.mxu0
        %v2030 = vpop.f32.mrf.mxu0
        %v2031 = vpop.f32.mrf.mxu0
        %2032 = vmatprep.mubr.bf16.mxu0 0
        %2033 = vmatmul.mubr.bf16.gmra.mxu0 %v1946
        %v2034 = vpop.f32.mrf.mxu0
        %v2035 = vadd.f32 %v1886, %v2034
        %v2036 = vpop.f32.mrf.mxu0
        %v2037 = vpop.f32.mrf.mxu0
        %v2038 = vpop.f32.mrf.mxu0
        %2039 = vdwg.mxu0
        %v2040 = vld [vmem:[#allocation3 + $0x4] sm:$0xf]
        %v2041 = vld [vmem:[#allocation3 + $0x8] sm:$0xf]
        %v2042 = vld [vmem:[#allocation3 + $0xc] sm:$0x1]
        %v2043 = vld [vmem:[#allocation3 + $0x14] sm:$0xf]
        %v2044 = vld [vmem:[#allocation3 + $0x18] sm:$0xf]
        %v2045 = vld [vmem:[#allocation3 + $0x1c] sm:$0x1]
        %v2046 = vld [vmem:[#allocation3 + $0x24] sm:$0xf]
        %v2047 = vld [vmem:[#allocation3 + $0x28] sm:$0xf]
        %v2048 = vld [vmem:[#allocation3 + $0x2c] sm:$0x1]
        %v2049 = vld [vmem:[#allocation3 + $0x34] sm:$0xf]
        %v2050 = vld [vmem:[#allocation3 + $0x38] sm:$0xf]
        %v2051 = vld [vmem:[#allocation3 + $0x3c] sm:$0x1]
        %v2052 = vld [vmem:[#allocation3 + $0x44] sm:$0xf]
        %v2053 = vld [vmem:[#allocation3 + $0x48] sm:$0xf]
        %v2054 = vld [vmem:[#allocation3 + $0x4c] sm:$0x1]
        %v2055 = vld [vmem:[#allocation3 + $0x54] sm:$0xf]
        %v2056 = vld [vmem:[#allocation3 + $0x58] sm:$0xf]
        %v2057 = vld [vmem:[#allocation3 + $0x5c] sm:$0x1]
        %v2058 = vld [vmem:[#allocation3 + $0x64] sm:$0xf]
        %v2059 = vld [vmem:[#allocation3 + $0x68] sm:$0xf]
        %v2060 = vld [vmem:[#allocation3 + $0x6c] sm:$0x1]
        %v2061 = vld [vmem:[#allocation3 + $0x74] sm:$0xf]
        %v2062 = vld [vmem:[#allocation3 + $0x78] sm:$0xf]
        %v2063 = vld [vmem:[#allocation3 + $0x7c] sm:$0x1]
        %v2065 = vshrl.u32 %v2040, 16
        %v2067 = vrot.slane %v2065, 4
        %v2068 = vshll.u32 %v2040, 16
        %v2070 = vrot.slane %v2068, 5
        %v2071 = vor.u32 %v2067, %v2070
        %v2072 = vrot.slane %v2071, 4
        %v2074 = vshll.u32 %v2041, 16
        %v2076 = vrot.slane %v2074, 5
        %v2077 = vsel %vm962, %v2072, %v2076
        %v2078 = vshrl.u32 %v2041, 16
        %v2080 = vrot.slane %v2078, 4
        %v2081 = vor.u32 %v2080, %v2076
        %v2082 = vrot.slane %v2081, 4
        %v2084 = vshll.u32 %v2042, 16
        %v2086 = vrot.slane %v2084, 5
        %v2087 = vsel %vm962, %v2082, %v2086
        %v2089 = vshrl.u32 %v2043, 16
        %v2091 = vrot.slane %v2089, 4
        %v2092 = vshll.u32 %v2043, 16
        %v2094 = vrot.slane %v2092, 5
        %v2095 = vor.u32 %v2091, %v2094
        %v2096 = vrot.slane %v2095, 4
        %v2098 = vshll.u32 %v2044, 16
        %v2100 = vrot.slane %v2098, 5
        %v2101 = vsel %vm962, %v2096, %v2100
        %v2102 = vshrl.u32 %v2044, 16
        %v2104 = vrot.slane %v2102, 4
        %v2105 = vor.u32 %v2104, %v2100
        %v2106 = vrot.slane %v2105, 4
        %v2108 = vshll.u32 %v2045, 16
        %v2110 = vrot.slane %v2108, 5
        %v2111 = vsel %vm962, %v2106, %v2110
        %v2113 = vshrl.u32 %v2046, 16
        %v2115 = vrot.slane %v2113, 4
        %v2116 = vshll.u32 %v2046, 16
        %v2118 = vrot.slane %v2116, 5
        %v2119 = vor.u32 %v2115, %v2118
        %v2120 = vrot.slane %v2119, 4
        %v2122 = vshll.u32 %v2047, 16
        %v2124 = vrot.slane %v2122, 5
        %v2125 = vsel %vm962, %v2120, %v2124
        %v2126 = vshrl.u32 %v2047, 16
        %v2128 = vrot.slane %v2126, 4
        %v2129 = vor.u32 %v2128, %v2124
        %v2130 = vrot.slane %v2129, 4
        %v2132 = vshll.u32 %v2048, 16
        %v2134 = vrot.slane %v2132, 5
        %v2135 = vsel %vm962, %v2130, %v2134
        %v2137 = vshrl.u32 %v2049, 16
        %v2139 = vrot.slane %v2137, 4
        %v2140 = vshll.u32 %v2049, 16
        %v2142 = vrot.slane %v2140, 5
        %v2143 = vor.u32 %v2139, %v2142
        %v2144 = vrot.slane %v2143, 4
        %v2146 = vshll.u32 %v2050, 16
        %v2148 = vrot.slane %v2146, 5
        %v2149 = vsel %vm962, %v2144, %v2148
        %v2150 = vshrl.u32 %v2050, 16
        %v2152 = vrot.slane %v2150, 4
        %v2153 = vor.u32 %v2152, %v2148
        %v2154 = vrot.slane %v2153, 4
        %v2156 = vshll.u32 %v2051, 16
        %v2158 = vrot.slane %v2156, 5
        %v2159 = vsel %vm962, %v2154, %v2158
        %v2161 = vshrl.u32 %v2052, 16
        %v2163 = vrot.slane %v2161, 4
        %v2164 = vshll.u32 %v2052, 16
        %v2166 = vrot.slane %v2164, 5
        %v2167 = vor.u32 %v2163, %v2166
        %v2168 = vrot.slane %v2167, 4
        %v2170 = vshll.u32 %v2053, 16
        %v2172 = vrot.slane %v2170, 5
        %v2173 = vsel %vm962, %v2168, %v2172
        %v2174 = vshrl.u32 %v2053, 16
        %v2176 = vrot.slane %v2174, 4
        %v2177 = vor.u32 %v2176, %v2172
        %v2178 = vrot.slane %v2177, 4
        %v2180 = vshll.u32 %v2054, 16
        %v2182 = vrot.slane %v2180, 5
        %v2183 = vsel %vm962, %v2178, %v2182
        %v2185 = vshrl.u32 %v2055, 16
        %v2187 = vrot.slane %v2185, 4
        %v2188 = vshll.u32 %v2055, 16
        %v2190 = vrot.slane %v2188, 5
        %v2191 = vor.u32 %v2187, %v2190
        %v2192 = vrot.slane %v2191, 4
        %v2194 = vshll.u32 %v2056, 16
        %v2196 = vrot.slane %v2194, 5
        %v2197 = vsel %vm962, %v2192, %v2196
        %v2198 = vshrl.u32 %v2056, 16
        %v2200 = vrot.slane %v2198, 4
        %v2201 = vor.u32 %v2200, %v2196
        %v2202 = vrot.slane %v2201, 4
        %v2204 = vshll.u32 %v2057, 16
        %v2206 = vrot.slane %v2204, 5
        %v2207 = vsel %vm962, %v2202, %v2206
        %v2209 = vshrl.u32 %v2058, 16
        %v2211 = vrot.slane %v2209, 4
        %v2212 = vshll.u32 %v2058, 16
        %v2214 = vrot.slane %v2212, 5
        %v2215 = vor.u32 %v2211, %v2214
        %v2216 = vrot.slane %v2215, 4
        %v2218 = vshll.u32 %v2059, 16
        %v2220 = vrot.slane %v2218, 5
        %v2221 = vsel %vm962, %v2216, %v2220
        %v2222 = vshrl.u32 %v2059, 16
        %v2224 = vrot.slane %v2222, 4
        %v2225 = vor.u32 %v2224, %v2220
        %v2226 = vrot.slane %v2225, 4
        %v2228 = vshll.u32 %v2060, 16
        %v2230 = vrot.slane %v2228, 5
        %v2231 = vsel %vm962, %v2226, %v2230
        %v2233 = vshrl.u32 %v2061, 16
        %v2235 = vrot.slane %v2233, 4
        %v2236 = vshll.u32 %v2061, 16
        %v2238 = vrot.slane %v2236, 5
        %v2239 = vor.u32 %v2235, %v2238
        %v2240 = vrot.slane %v2239, 4
        %v2242 = vshll.u32 %v2062, 16
        %v2244 = vrot.slane %v2242, 5
        %v2245 = vsel %vm962, %v2240, %v2244
        %v2246 = vshrl.u32 %v2062, 16
        %v2248 = vrot.slane %v2246, 4
        %v2249 = vor.u32 %v2248, %v2244
        %v2250 = vrot.slane %v2249, 4
        %v2252 = vshll.u32 %v2063, 16
        %v2254 = vrot.slane %v2252, 5
        %v2255 = vsel %vm962, %v2250, %v2254
        %s2256 = scalar_lea.vmem %s3, 24
        %v2257 = vld [vmem:[%s2256] sm:$0xf]
        %v2258 = vld [vmem:[%s2256 + $0x4] sm:$0xf]
        %v2259 = vld [vmem:[%s2256 + $0x8] sm:$0xf]
        %v2260 = vunpack.c.l.b16 %v2077
        %v2261 = vunpack.c.l.b16 %v2087
        %v2262 = vunpack.c.l.b16 %v2101
        %v2263 = vunpack.c.l.b16 %v2111
        %v2264 = vunpack.c.l.b16 %v2125
        %v2265 = vunpack.c.l.b16 %v2135
        %v2266 = vunpack.c.l.b16 %v2149
        %v2267 = vunpack.c.l.b16 %v2159
        %v2268 = vunpack.c.l.b16 %v2173
        %v2269 = vunpack.c.l.b16 %v2183
        %v2270 = vunpack.c.l.b16 %v2197
        %v2271 = vunpack.c.l.b16 %v2207
        %v2272 = vunpack.c.l.b16 %v2221
        %v2273 = vunpack.c.l.b16 %v2231
        %v2274 = vunpack.c.l.b16 %v2245
        %v2275 = vunpack.c.l.b16 %v2255
        %v2276 = vpack.c.b16 %v2261, %v2260
        %v2277 = vpack.c.b16 %v2263, %v2262
        %v2278 = vpack.c.b16 %v2265, %v2264
        %v2279 = vpack.c.b16 %v2267, %v2266
        %v2280 = vpack.c.b16 %v2269, %v2268
        %v2281 = vpack.c.b16 %v2271, %v2270
        %v2282 = vpack.c.b16 %v2273, %v2272
        %v2283 = vpack.c.b16 %v2275, %v2274
        %v2287 = vunpack.c.l.b16 %v2257
        %v2288 = vunpack.c.l.b16 %v2258
        %v2289 = vunpack.c.l.b16 %v2259
        %v2290 = vpack.c.b16 %v2288, %v2287
        %v2291 = vpack.c.b16 %v2289, %v2289
        %v2294 = vsel %vm1773, %v2276, 0
        %v2297 = vsel %vm1773, %v2277, 0
        %v2300 = vsel %vm1773, %v2278, 0
        %v2303 = vsel %vm1773, %v2279, 0
        %v2306 = vsel %vm1773, %v2280, 0
        %v2309 = vsel %vm1773, %v2281, 0
        %v2312 = vsel %vm1773, %v2282, 0
        %v2315 = vsel %vm1773, %v2283, 0
        %v2318 = vsel %vm1798, %v2291, 0
        %2320 = vmatprep.subr.bf16.mxu0 0
        %2321 = vmatpush1.bf16.msra.mxu0 0
        %2322 = vmatprep.subr.bf16.mxu0 0
        %2323 = vmatpush1.bf16.msra.mxu0 0
        %2324 = vmatprep.subr.bf16.mxu0 0
        %2325 = vmatpush1.bf16.msra.mxu0 0
        %2326 = vmatprep.subr.bf16.mxu0 0
        %2327 = vmatpush1.bf16.msra.mxu0 0
        %2328 = vmatprep.subr.bf16.mxu0 0
        %2329 = vmatpush1.bf16.msra.mxu0 0
        %2330 = vmatprep.subr.bf16.mxu0 0
        %2331 = vmatpush1.bf16.msra.mxu0 0
        %2332 = vmatprep.subr.bf16.mxu0 0
        %2333 = vmatpush1.bf16.msra.mxu0 %v2318
        %2334 = vmatprep.subr.bf16.mxu0 0
        %2335 = vmatpush1.bf16.msra.mxu0 %v2290
        %2336 = vmatprep.subr.bf16.mxu0 0
        %2337 = vmatpush2.bf16.msra.mxu0 0
        %2338 = vmatprep.subr.bf16.mxu0 0
        %2339 = vmatpush2.bf16.msra.mxu0 0
        %2340 = vmatprep.subr.bf16.mxu0 0
        %2341 = vmatpush2.bf16.msra.mxu0 0
        %2342 = vmatprep.subr.bf16.mxu0 0
        %2343 = vmatpush2.bf16.msra.mxu0 0
        %2344 = vmatprep.subr.bf16.mxu0 0
        %2345 = vmatpush2.bf16.msra.mxu0 0
        %2346 = vmatprep.subr.bf16.mxu0 0
        %2347 = vmatpush2.bf16.msra.mxu0 0
        %2348 = vmatprep.subr.bf16.mxu0 0
        %2349 = vmatpush2.bf16.msra.mxu0 0
        %2350 = vmatprep.subr.bf16.mxu0 0
        %2351 = vmatpush2.bf16.msra.mxu0 0
        %2352 = vmatprep.mubr.bf16.mxu0 0
        %2353 = vmatmul.mubr.bf16.gmra.mxu0 %v2294
        %v2354 = vpop.f32.mrf.mxu0
        %v2355 = vadd.f32 0.0, %v2354
        %v2356 = vpop.f32.mrf.mxu0
        %v2357 = vpop.f32.mrf.mxu0
        %v2358 = vpop.f32.mrf.mxu0
        %2359 = vmatprep.mubr.bf16.mxu0 0
        %2360 = vmatmul.mubr.bf16.gmra.mxu0 %v2297
        %v2361 = vpop.f32.mrf.mxu0
        %v2362 = vadd.f32 0.0, %v2361
        %v2363 = vpop.f32.mrf.mxu0
        %v2364 = vpop.f32.mrf.mxu0
        %v2365 = vpop.f32.mrf.mxu0
        %2366 = vmatprep.mubr.bf16.mxu0 0
        %2367 = vmatmul.mubr.bf16.gmra.mxu0 %v2300
        %v2368 = vpop.f32.mrf.mxu0
        %v2369 = vadd.f32 0.0, %v2368
        %v2370 = vpop.f32.mrf.mxu0
        %v2371 = vpop.f32.mrf.mxu0
        %v2372 = vpop.f32.mrf.mxu0
        %2373 = vmatprep.mubr.bf16.mxu0 0
        %2374 = vmatmul.mubr.bf16.gmra.mxu0 %v2303
        %v2375 = vpop.f32.mrf.mxu0
        %v2376 = vadd.f32 0.0, %v2375
        %v2377 = vpop.f32.mrf.mxu0
        %v2378 = vpop.f32.mrf.mxu0
        %v2379 = vpop.f32.mrf.mxu0
        %2380 = vmatprep.mubr.bf16.mxu0 0
        %2381 = vmatmul.mubr.bf16.gmra.mxu0 %v2306
        %v2382 = vpop.f32.mrf.mxu0
        %v2383 = vadd.f32 0.0, %v2382
        %v2384 = vpop.f32.mrf.mxu0
        %v2385 = vpop.f32.mrf.mxu0
        %v2386 = vpop.f32.mrf.mxu0
        %2387 = vmatprep.mubr.bf16.mxu0 0
        %2388 = vmatmul.mubr.bf16.gmra.mxu0 %v2309
        %v2389 = vpop.f32.mrf.mxu0
        %v2390 = vadd.f32 0.0, %v2389
        %v2391 = vpop.f32.mrf.mxu0
        %v2392 = vpop.f32.mrf.mxu0
        %v2393 = vpop.f32.mrf.mxu0
        %2394 = vmatprep.mubr.bf16.mxu0 0
        %2395 = vmatmul.mubr.bf16.gmra.mxu0 %v2312
        %v2396 = vpop.f32.mrf.mxu0
        %v2397 = vadd.f32 0.0, %v2396
        %v2398 = vpop.f32.mrf.mxu0
        %v2399 = vpop.f32.mrf.mxu0
        %v2400 = vpop.f32.mrf.mxu0
        %2401 = vmatprep.mubr.bf16.mxu0 0
        %2402 = vmatmul.mubr.bf16.gmra.mxu0 %v2315
        %v2403 = vpop.f32.mrf.mxu0
        %v2404 = vadd.f32 0.0, %v2403
        %v2405 = vpop.f32.mrf.mxu0
        %v2406 = vpop.f32.mrf.mxu0
        %v2407 = vpop.f32.mrf.mxu0
        %2408 = vdwg.mxu0
        %v2409 = vadd.f32 %v1986, %v2355
        %v2410 = vadd.f32 %v1993, %v2362
        %v2411 = vadd.f32 %v2000, %v2369
        %v2412 = vadd.f32 %v2007, %v2376
        %v2413 = vadd.f32 %v2014, %v2383
        %v2414 = vadd.f32 %v2021, %v2390
        %v2415 = vadd.f32 %v2028, %v2397
        %v2416 = vadd.f32 %v2035, %v2404
        %v2417 = vld [vmem:[%s4] sm:$0x1]
        %v2419 = vlaneseq
        %v2420 = vshrl.u32 %v2419, 7
        %v2421 = vsub.s32 0, %v2420
        %v2422 = vrot.slane %v2417, %v2421
        %v2424 = vadd.f32 %v2409, %v2422
        %v2425 = vadd.f32 %v2410, %v2422
        %v2426 = vadd.f32 %v2411, %v2422
        %v2427 = vadd.f32 %v2412, %v2422
        %v2428 = vadd.f32 %v2413, %v2422
        %v2429 = vadd.f32 %v2414, %v2422
        %v2430 = vadd.f32 %v2415, %v2422
        %v2431 = vadd.f32 %v2416, %v2422
        %v2432 = vmul.f32 %v2424, 0.01
        %v2433 = vmul.f32 %v2425, 0.01
        %v2434 = vmul.f32 %v2426, 0.01
        %v2435 = vmul.f32 %v2427, 0.01
        %v2436 = vmul.f32 %v2428, 0.01
        %v2437 = vmul.f32 %v2429, 0.01
        %v2438 = vmul.f32 %v2430, 0.01
        %v2439 = vmul.f32 %v2431, 0.01
        %v2440 = vmax.f32 %v2424, %v2432
        %v2441 = vmax.f32 %v2425, %v2433
        %v2442 = vmax.f32 %v2426, %v2434
        %v2443 = vmax.f32 %v2427, %v2435
        %v2444 = vmax.f32 %v2428, %v2436
        %v2445 = vmax.f32 %v2429, %v2437
        %v2446 = vmax.f32 %v2430, %v2438
        %v2447 = vmax.f32 %v2431, %v2439
        %v2448 = vmax.f32 %v2440, %v2441
        %v2449 = vmax.f32 %v2442, %v2443
        %v2450 = vmax.f32 %v2444, %v2445
        %v2451 = vmax.f32 %v2446, %v2447
        %v2456 = vcombine.high %v2448, %v2448
        %v2458 = vunpack.c.l.s4 1983009808
        %v2459 = vunpack.c.0.s8 %v2458
        %v2460 = vlaneseq
        %v2461 = vshrl.u32 %v2460, 7
        %v2462 = vsub.s32 %v2459, %v2461
        %v2463 = vrot.slane %v2448, %v2462
        %v2465 = vunpack.c.l.s4 1983009808
        %v2466 = vunpack.c.0.s8 %v2465
        %v2467 = vlaneseq
        %v2468 = vshrl.u32 %v2467, 7
        %v2469 = vsub.s32 %v2466, %v2468
        %v2470 = vrot.slane %v2456, %v2469
        %v2471 = vcombine.high %v2463, %v2463
        %v2472 = vcombine.high %v2470, %v2470
        %v2473 = vcombine.high %v2449, %v2449
        %v2475 = vunpack.c.l.s4 1983009808
        %v2476 = vunpack.c.0.s8 %v2475
        %v2477 = vlaneseq
        %v2478 = vshrl.u32 %v2477, 7
        %v2479 = vsub.s32 %v2476, %v2478
        %v2480 = vrot.slane %v2449, %v2479
        %v2482 = vunpack.c.l.s4 1983009808
        %v2483 = vunpack.c.0.s8 %v2482
        %v2484 = vlaneseq
        %v2485 = vshrl.u32 %v2484, 7
        %v2486 = vsub.s32 %v2483, %v2485
        %v2487 = vrot.slane %v2473, %v2486
        %v2488 = vcombine.high %v2480, %v2480
        %v2489 = vcombine.high %v2487, %v2487
        %v2490 = vcombine.high %v2450, %v2450
        %v2492 = vunpack.c.l.s4 1983009808
        %v2493 = vunpack.c.0.s8 %v2492
        %v2494 = vlaneseq
        %v2495 = vshrl.u32 %v2494, 7
        %v2496 = vsub.s32 %v2493, %v2495
        %v2497 = vrot.slane %v2450, %v2496
        %v2499 = vunpack.c.l.s4 1983009808
        %v2500 = vunpack.c.0.s8 %v2499
        %v2501 = vlaneseq
        %v2502 = vshrl.u32 %v2501, 7
        %v2503 = vsub.s32 %v2500, %v2502
        %v2504 = vrot.slane %v2490, %v2503
        %v2505 = vcombine.high %v2497, %v2497
        %v2506 = vcombine.high %v2504, %v2504
        %v2507 = vcombine.high %v2451, %v2451
        %v2509 = vunpack.c.l.s4 1983009808
        %v2510 = vunpack.c.0.s8 %v2509
        %v2511 = vlaneseq
        %v2512 = vshrl.u32 %v2511, 7
        %v2513 = vsub.s32 %v2510, %v2512
        %v2514 = vrot.slane %v2451, %v2513
        %v2516 = vunpack.c.l.s4 1983009808
        %v2517 = vunpack.c.0.s8 %v2516
        %v2518 = vlaneseq
        %v2519 = vshrl.u32 %v2518, 7
        %v2520 = vsub.s32 %v2517, %v2519
        %v2521 = vrot.slane %v2507, %v2520
        %v2522 = vcombine.high %v2514, %v2514
        %v2523 = vcombine.high %v2521, %v2521
        %v2540 = vrot.slane %v2463, 7
        %v2541 = vrot.slane %v2540, 2
        %v2542 = vrot.slane %v2471, 7
        %v2543 = vrot.slane %v2542, 2
        %v2544 = vrot.slane %v2470, 7
        %v2545 = vrot.slane %v2544, 2
        %v2546 = vrot.slane %v2472, 7
        %v2547 = vrot.slane %v2546, 2
        %v2548 = vrot.slane %v2480, 7
        %v2549 = vrot.slane %v2548, 2
        %v2550 = vrot.slane %v2488, 7
        %v2551 = vrot.slane %v2550, 2
        %v2552 = vrot.slane %v2487, 7
        %v2553 = vrot.slane %v2552, 2
        %v2554 = vrot.slane %v2489, 7
        %v2555 = vrot.slane %v2554, 2
        %v2556 = vrot.slane %v2497, 7
        %v2557 = vrot.slane %v2556, 2
        %v2558 = vrot.slane %v2505, 7
        %v2559 = vrot.slane %v2558, 2
        %v2560 = vrot.slane %v2504, 7
        %v2561 = vrot.slane %v2560, 2
        %v2562 = vrot.slane %v2506, 7
        %v2563 = vrot.slane %v2562, 2
        %v2564 = vrot.slane %v2514, 7
        %v2565 = vrot.slane %v2564, 2
        %v2566 = vrot.slane %v2522, 7
        %v2567 = vrot.slane %v2566, 2
        %v2568 = vrot.slane %v2521, 7
        %v2569 = vrot.slane %v2568, 2
        %v2570 = vrot.slane %v2523, 7
        %v2571 = vrot.slane %v2570, 2
        %v2588 = vmax.f32 %v2463, %v2541
        %v2589 = vmax.f32 %v2471, %v2543
        %v2590 = vmax.f32 %v2470, %v2545
        %v2591 = vmax.f32 %v2472, %v2547
        %v2592 = vmax.f32 %v2480, %v2549
        %v2593 = vmax.f32 %v2488, %v2551
        %v2594 = vmax.f32 %v2487, %v2553
        %v2595 = vmax.f32 %v2489, %v2555
        %v2596 = vmax.f32 %v2497, %v2557
        %v2597 = vmax.f32 %v2505, %v2559
        %v2598 = vmax.f32 %v2504, %v2561
        %v2599 = vmax.f32 %v2506, %v2563
        %v2600 = vmax.f32 %v2514, %v2565
        %v2601 = vmax.f32 %v2522, %v2567
        %v2602 = vmax.f32 %v2521, %v2569
        %v2603 = vmax.f32 %v2523, %v2571
        %v2620 = vlaneseq
        %v2621 = vshrl.u32 %v2620, 7
        %v2622 = vsub.s32 0, %v2621
        %v2623 = vrot.slane %v2588, %v2622
        %v2624 = vlaneseq
        %v2625 = vshrl.u32 %v2624, 7
        %v2626 = vsub.s32 0, %v2625
        %v2627 = vrot.slane %v2589, %v2626
        %v2628 = vlaneseq
        %v2629 = vshrl.u32 %v2628, 7
        %v2630 = vsub.s32 0, %v2629
        %v2631 = vrot.slane %v2590, %v2630
        %v2632 = vlaneseq
        %v2633 = vshrl.u32 %v2632, 7
        %v2634 = vsub.s32 0, %v2633
        %v2635 = vrot.slane %v2591, %v2634
        %v2636 = vlaneseq
        %v2637 = vshrl.u32 %v2636, 7
        %v2638 = vsub.s32 0, %v2637
        %v2639 = vrot.slane %v2592, %v2638
        %v2640 = vlaneseq
        %v2641 = vshrl.u32 %v2640, 7
        %v2642 = vsub.s32 0, %v2641
        %v2643 = vrot.slane %v2593, %v2642
        %v2644 = vlaneseq
        %v2645 = vshrl.u32 %v2644, 7
        %v2646 = vsub.s32 0, %v2645
        %v2647 = vrot.slane %v2594, %v2646
        %v2648 = vlaneseq
        %v2649 = vshrl.u32 %v2648, 7
        %v2650 = vsub.s32 0, %v2649
        %v2651 = vrot.slane %v2595, %v2650
        %v2652 = vlaneseq
        %v2653 = vshrl.u32 %v2652, 7
        %v2654 = vsub.s32 0, %v2653
        %v2655 = vrot.slane %v2596, %v2654
        %v2656 = vlaneseq
        %v2657 = vshrl.u32 %v2656, 7
        %v2658 = vsub.s32 0, %v2657
        %v2659 = vrot.slane %v2597, %v2658
        %v2660 = vlaneseq
        %v2661 = vshrl.u32 %v2660, 7
        %v2662 = vsub.s32 0, %v2661
        %v2663 = vrot.slane %v2598, %v2662
        %v2664 = vlaneseq
        %v2665 = vshrl.u32 %v2664, 7
        %v2666 = vsub.s32 0, %v2665
        %v2667 = vrot.slane %v2599, %v2666
        %v2668 = vlaneseq
        %v2669 = vshrl.u32 %v2668, 7
        %v2670 = vsub.s32 0, %v2669
        %v2671 = vrot.slane %v2600, %v2670
        %v2672 = vlaneseq
        %v2673 = vshrl.u32 %v2672, 7
        %v2674 = vsub.s32 0, %v2673
        %v2675 = vrot.slane %v2601, %v2674
        %v2676 = vlaneseq
        %v2677 = vshrl.u32 %v2676, 7
        %v2678 = vsub.s32 0, %v2677
        %v2679 = vrot.slane %v2602, %v2678
        %v2680 = vlaneseq
        %v2681 = vshrl.u32 %v2680, 7
        %v2682 = vsub.s32 0, %v2681
        %v2683 = vrot.slane %v2603, %v2682
        %vm2684 = vcmask 1041409
        %v2685 = vsel %vm2684, %v2627, %v2623
        %vm2686 = vcmask 1042434
        %v2687 = vsel %vm2686, %v2631, %v2685
        %vm2688 = vcmask 1043459
        %v2689 = vsel %vm2688, %v2635, %v2687
        %v2690 = vsel %vm2684, %v2643, %v2639
        %v2691 = vsel %vm2686, %v2647, %v2690
        %v2692 = vsel %vm2688, %v2651, %v2691
        %v2693 = vsel %vm2684, %v2659, %v2655
        %v2694 = vsel %vm2686, %v2663, %v2693
        %v2695 = vsel %vm2688, %v2667, %v2694
        %v2696 = vsel %vm2684, %v2675, %v2671
        %v2697 = vsel %vm2686, %v2679, %v2696
        %v2698 = vsel %vm2688, %v2683, %v2697
        %2703 = vst.msk [vmem:[%s217] sm:$0xf] %vm257, %v2689
        %2704 = vst.msk [vmem:[%s217 + $0x4] sm:$0xf] %vm257, %v2692
        %2705 = vst.msk [vmem:[%s217 + $0x8] sm:$0xf] %vm257, %v2695
        %2706 = vst.msk [vmem:[%s217 + $0xc] sm:$0xf] %vm257, %v2698
        %s2707 = sand.u32 %s137, 1
        %s2708 = scalar_lea.sflag [#allocation5], %s2707
        %s2709 = sand.u32 %s137, 1
        %s2710 = smul.addr %s2709, 16
        %s2711 = scalar_lea.vmem [#allocation4], %s2710
        // Predicated region
        $region41: #{_lambda_.3} parent=39 // pred_check
          %p2712 = pneg %p147
        $region42: #{_lambda_.3} parent=39 // pred_check_branch
          %2714 = sbr.rel (%p2712) target = $region44
        $region43: #{_lambda_.3} parent=39 // pred_region
          %s2716 = ssub.s32 256, 256
          %2717 = vsyncadd %s2708, %s2716
          %s2718 = smul.addr %s19, 4
          %s2719 = smul.addr %s2718, 64
          %s2720 = scalar_lea.hbm %s5, %s2719
          %s2721 = sshll.u32 %s2711, 4
          %s2722 = int_to_ptr.vmem [resolvable:$true] %s2721
          %2727 = dma.vmem_to_hbm [thread:$0]  %s2722, 256, %s2720, %s2708, 64, 64, 4
        $region44: #{_lambda_.3} parent=39 // pred_fallthru
          _
      $region40: #{_lambda_.3} parent=5 // pred_fallthru
        _
      %p2728 = scmp.le.s32.totalorder 2, %s14
      // Predicated region
      $region45: #{_lambda_.3} parent=5 // pred_check
        %p2729 = pneg %p2728
      $region46: #{_lambda_.3} parent=5 // pred_check_branch
        %2731 = sbr.rel (%p2729) target = $region48
      $region47: #{_lambda_.3} parent=5 // pred_region
        %s2732 = ssub.s32 %s14, 2
        // Predicated region
        $region49: #{_lambda_.3} parent=47 // pred_check
          %p2733 = pneg %p153
        $region50: #{_lambda_.3} parent=47 // pred_check_branch
          %2735 = sbr.rel (%p2733) target = $region52
        $region51: #{_lambda_.3} parent=47 // pred_region
          %s2736 = sand.u32 %s138, 1
          %s2737 = scalar_lea.sflag [#allocation5], %s2736
          %s2738 = sand.u32 %s138, 1
          %s2739 = smul.addr %s2738, 16
          %s2740 = scalar_lea.vmem [#allocation4], %s2739
          %2741 = dma.done %s2737, 256
        $region52: #{_lambda_.3} parent=47 // pred_fallthru
          _
      $region48: #{_lambda_.3} parent=5 // pred_fallthru
        _
    $region6: #{_lambda_.3} parent=1 // loop_footer
      %s18 = sadd.s32 1, %s14
    $region7: #{_lambda_.3} parent=1 // loop_footer_branch
      %13 = sbr.rel target = $region3
    $region8: #{_lambda_.3} parent=1 // loop_exit
      _
    %2742 = vsyncpa [#allocation5], 1
    %s2743 = scalar_lea.sflag [#allocation5], 1
    %2744 = vsyncpa %s2743, 1

// kernel: _lambda_.2
$region0: #{_lambda_.2}
  #allocation0 [shape = 'u32[]', space=smem, size = 0x4, offset = 0x4, fixed_abs, tag = 'smem constant byte address 0x4 - core index']
  #allocation1 [shape = 'u32[144,128]{1,0:T(1,128)}', space=vmem, size = 0x12000, scoped, tag = 'internal scratch']
  #allocation2 [shape = 'bf16[16,48,12]{2,1,0:T(8,128)(2,1)}', space=vmem, size = 0x30000, scoped, tag = 'scratch operand']
  #allocation3 [shape = 'bf16[16,48,24]{2,1,0:T(8,128)(2,1)}', space=vmem, size = 0x30000, scoped, tag = 'scratch operand']
  %s0 = inlined_call_operand.vmem [shape: bf16[2,16,16,4], index: 0, kind: input, shape index: {}]
  %s1 = inlined_call_operand.vmem [shape: bf16[3,12,8], index: 1, kind: input, shape index: {}]
  %s2 = inlined_call_operand.vmem [shape: f32[1,8], index: 2, kind: input, shape index: {}]
  %s3 = inlined_call_operand.vmem [shape: bf16[3,24,32], index: 3, kind: input, shape index: {}]
  %s4 = inlined_call_operand.vmem [shape: f32[1,32], index: 4, kind: input, shape index: {}]
  %s5 = inlined_call_operand.vmem [shape: bf16[2,8,8,32], index: 5, kind: output, shape index: {}]
  %s6 = sld [smem:[#allocation0]]
  $region53: #{_lambda_.2} parent=0
    _
  %s8 = ssub.s32 1, %s6
  %s9 = scalar_select 0, %s8, %s6
  loop: start=0, step=1, limit=4
  $region2: #{_lambda_.2} parent=0 // loop_pre_header
    _
  $region3: #{_lambda_.2} parent=0 // loop_header
    %s11 = sphi 0, %s15
    %p12 = scmp.ge.s32.totalorder %s11, 4
    %s21 = sphi 0, %s23
    %s24 = sphi 0, %s21
    %s25 = sphi 0, %s24
    %s41 = sphi 0, %s25
    %s45 = sphi 0, %s45
    %s47 = sphi 0, %s45
    %s48 = sphi 0, %s47
    %s62 = sphi 0, %s48
    %s66 = sphi 0, %s66
    %s68 = sphi 0, %s66
    %s69 = sphi 0, %s68
    %s83 = sphi 0, %s69
    %s87 = sphi 0, %s87
    %s89 = sphi 0, %s87
    %s90 = sphi 0, %s89
    %s104 = sphi 0, %s90
    %s108 = sphi 0, %s108
    %s110 = sphi 0, %s108
    %s111 = sphi 0, %s110
    %s125 = sphi 0, %s111
    %s131 = sphi 0, %s133
    %s134 = sphi 0, %s131
    %s135 = sphi 0, %s134
    %s151 = sphi 0, %s135
  $region4: #{_lambda_.2} parent=0 // loop_header_branch
    %14 = sbr.rel (%p12) target = $region8
  $region5: #{_lambda_.2} parent=0 // loop_body
    %s16 = ssub.s32 %s11, 1
    %s17 = ssub.s32 %s11, 2
    %s18 = sadd.s32 %s11, 1
    %s19 = ssub.s32 %s11, %s18
    %p20 = scmp.eq.s32.totalorder %s19, 0
    %s22 = sadd.s32 %s21, 1
    %s23 = scalar_select %p20, %s21, %s22
    %p26 = pneg %p20
    %p27 = scmp.eq.s32.totalorder %s11, 1
    %p28 = por %p26, %p27
    %p29 = scmp.ne.s32.totalorder %s21, %s24
    %p30 = scmp.eq.s32.totalorder %s11, 0
    %p31 = por %p29, %p30
    %p32 = scmp.ne.s32.totalorder %s21, %s24
    %p33 = scmp.eq.s32.totalorder %s16, 1
    %p34 = por %p32, %p33
    %p35 = scmp.ne.s32.totalorder %s24, %s25
    %p36 = scmp.eq.s32.totalorder %s16, 0
    %p37 = por %p35, %p36
    %p38 = scmp.ne.s32.totalorder %s24, %s25
    %p39 = scmp.eq.s32.totalorder %s17, 1
    %p40 = por %p38, %p39
    %p42 = scmp.ne.s32.totalorder %s25, %s41
    %p43 = scmp.eq.s32.totalorder %s17, 0
    %p44 = por %p42, %p43
    %s46 = sadd.s32 %s45, 1
    %p49 = scmp.eq.s32.totalorder %s11, 1
    %p50 = scmp.ne.s32.totalorder %s45, %s47
    %p51 = scmp.eq.s32.totalorder %s11, 0
    %p52 = por %p50, %p51
    %p53 = scmp.ne.s32.totalorder %s45, %s47
    %p54 = scmp.eq.s32.totalorder %s16, 1
    %p55 = por %p53, %p54
    %p56 = scmp.ne.s32.totalorder %s47, %s48
    %p57 = scmp.eq.s32.totalorder %s16, 0
    %p58 = por %p56, %p57
    %p59 = scmp.ne.s32.totalorder %s47, %s48
    %p60 = scmp.eq.s32.totalorder %s17, 1
    %p61 = por %p59, %p60
    %p63 = scmp.ne.s32.totalorder %s48, %s62
    %p64 = scmp.eq.s32.totalorder %s17, 0
    %p65 = por %p63, %p64
    %s67 = sadd.s32 %s66, 1
    %p70 = scmp.eq.s32.totalorder %s11, 1
    %p71 = scmp.ne.s32.totalorder %s66, %s68
    %p72 = scmp.eq.s32.totalorder %s11, 0
    %p73 = por %p71, %p72
    %p74 = scmp.ne.s32.totalorder %s66, %s68
    %p75 = scmp.eq.s32.totalorder %s16, 1
    %p76 = por %p74, %p75
    %p77 = scmp.ne.s32.totalorder %s68, %s69
    %p78 = scmp.eq.s32.totalorder %s16, 0
    %p79 = por %p77, %p78
    %p80 = scmp.ne.s32.totalorder %s68, %s69
    %p81 = scmp.eq.s32.totalorder %s17, 1
    %p82 = por %p80, %p81
    %p84 = scmp.ne.s32.totalorder %s69, %s83
    %p85 = scmp.eq.s32.totalorder %s17, 0
    %p86 = por %p84, %p85
    %s88 = sadd.s32 %s87, 1
    %p91 = scmp.eq.s32.totalorder %s11, 1
    %p92 = scmp.ne.s32.totalorder %s87, %s89
    %p93 = scmp.eq.s32.totalorder %s11, 0
    %p94 = por %p92, %p93
    %p95 = scmp.ne.s32.totalorder %s87, %s89
    %p96 = scmp.eq.s32.totalorder %s16, 1
    %p97 = por %p95, %p96
    %p98 = scmp.ne.s32.totalorder %s89, %s90
    %p99 = scmp.eq.s32.totalorder %s16, 0
    %p100 = por %p98, %p99
    %p101 = scmp.ne.s32.totalorder %s89, %s90
    %p102 = scmp.eq.s32.totalorder %s17, 1
    %p103 = por %p101, %p102
    %p105 = scmp.ne.s32.totalorder %s90, %s104
    %p106 = scmp.eq.s32.totalorder %s17, 0
    %p107 = por %p105, %p106
    %s109 = sadd.s32 %s108, 1
    %p112 = scmp.eq.s32.totalorder %s11, 1
    %p113 = scmp.ne.s32.totalorder %s108, %s110
    %p114 = scmp.eq.s32.totalorder %s11, 0
    %p115 = por %p113, %p114
    %p116 = scmp.ne.s32.totalorder %s108, %s110
    %p117 = scmp.eq.s32.totalorder %s16, 1
    %p118 = por %p116, %p117
    %p119 = scmp.ne.s32.totalorder %s110, %s111
    %p120 = scmp.eq.s32.totalorder %s16, 0
    %p121 = por %p119, %p120
    %p122 = scmp.ne.s32.totalorder %s110, %s111
    %p123 = scmp.eq.s32.totalorder %s17, 1
    %p124 = por %p122, %p123
    %p126 = scmp.ne.s32.totalorder %s111, %s125
    %p127 = scmp.eq.s32.totalorder %s17, 0
    %p128 = por %p126, %p127
    %s129 = ssub.s32 %s11, %s18
    %p130 = scmp.eq.s32.totalorder %s129, 0
    %s132 = sadd.s32 %s131, 1
    %s133 = scalar_select %p130, %s131, %s132
    %p136 = pneg %p130
    %p137 = scmp.eq.s32.totalorder %s11, 1
    %p138 = por %p136, %p137
    %p139 = scmp.ne.s32.totalorder %s131, %s134
    %p140 = scmp.eq.s32.totalorder %s11, 0
    %p141 = por %p139, %p140
    %p142 = scmp.ne.s32.totalorder %s131, %s134
    %p143 = scmp.eq.s32.totalorder %s16, 1
    %p144 = por %p142, %p143
    %p145 = scmp.ne.s32.totalorder %s134, %s135
    %p146 = scmp.eq.s32.totalorder %s16, 0
    %p147 = por %p145, %p146
    %p148 = scmp.ne.s32.totalorder %s134, %s135
    %p149 = scmp.eq.s32.totalorder %s17, 1
    %p150 = por %p148, %p149
    %p152 = scmp.ne.s32.totalorder %s135, %s151
    %p153 = scmp.eq.s32.totalorder %s17, 0
    %p154 = por %p152, %p153
    %p155 = scmp.le.s32.totalorder 1, %s11
    %p156 = scmp.lt.s32.totalorder %s11, 3
    %p157 = pnand %p155, %p156
    %p158 = pneg %p157
    // Predicated region
    $region9: #{_lambda_.2} parent=5 // pred_check
      _
    $region10: #{_lambda_.2} parent=5 // pred_check_branch
      %160 = sbr.rel (%p157) target = $region12
    $region11: #{_lambda_.2} parent=5 // pred_region
      %s161 = ssub.s32 %s11, 1
      // Predicated region
      $region13: #{_lambda_.2} parent=11 // pred_check
        %p162 = pneg %p58
      $region14: #{_lambda_.2} parent=11 // pred_check_branch
        %164 = sbr.rel (%p162) target = $region16
      $region15: #{_lambda_.2} parent=11 // pred_region
        _
      $region16: #{_lambda_.2} parent=11 // pred_fallthru
        _
      // Predicated region
      $region17: #{_lambda_.2} parent=11 // pred_check
        %p165 = pneg %p79
      $region18: #{_lambda_.2} parent=11 // pred_check_branch
        %167 = sbr.rel (%p165) target = $region20
      $region19: #{_lambda_.2} parent=11 // pred_region
        _
      $region20: #{_lambda_.2} parent=11 // pred_fallthru
        _
      // Predicated region
      $region21: #{_lambda_.2} parent=11 // pred_check
        %p168 = pneg %p100
      $region22: #{_lambda_.2} parent=11 // pred_check_branch
        %170 = sbr.rel (%p168) target = $region24
      $region23: #{_lambda_.2} parent=11 // pred_region
        _
      $region24: #{_lambda_.2} parent=11 // pred_fallthru
        _
      // Predicated region
      $region25: #{_lambda_.2} parent=11 // pred_check
        %p171 = pneg %p121
      $region26: #{_lambda_.2} parent=11 // pred_check_branch
        %173 = sbr.rel (%p171) target = $region28
      $region27: #{_lambda_.2} parent=11 // pred_region
        _
      $region28: #{_lambda_.2} parent=11 // pred_fallthru
        _
    $region12: #{_lambda_.2} parent=5 // pred_fallthru
      _
    %p174 = scmp.lt.s32.totalorder %s11, 2
    // Predicated region
    $region29: #{_lambda_.2} parent=5 // pred_check
      %p175 = pneg %p174
    $region30: #{_lambda_.2} parent=5 // pred_check_branch
      %177 = sbr.rel (%p175) target = $region32
    $region31: #{_lambda_.2} parent=5 // pred_region
      // Predicated region
      $region33: #{_lambda_.2} parent=31 // pred_check
        %p178 = pneg %p31
      $region34: #{_lambda_.2} parent=31 // pred_check_branch
        %180 = sbr.rel (%p178) target = $region36
      $region35: #{_lambda_.2} parent=31 // pred_region
        %p181 = scmp.lt.s32.totalorder %s11, 1
        %s182 = scalar_select %p181, %s11, 1
        %s183 = smul.addr %s182, 32
        %s184 = smul.addr %s183, 4
        %s185 = scalar_lea.vmem %s0, %s184
      $region36: #{_lambda_.2} parent=31 // pred_fallthru
        _
    $region32: #{_lambda_.2} parent=5 // pred_fallthru
      _
    %p186 = scmp.le.s32.totalorder 1, %s11
    %p187 = scmp.lt.s32.totalorder %s11, 3
    %p188 = pnand %p186, %p187
    %p189 = pneg %p188
    // Predicated region
    $region37: #{_lambda_.2} parent=5 // pred_check
      _
    $region38: #{_lambda_.2} parent=5 // pred_check_branch
      %191 = sbr.rel (%p188) target = $region40
    $region39: #{_lambda_.2} parent=5 // pred_region
      %s192 = ssub.s32 %s11, 1
      %p193 = scmp.lt.s32.totalorder %s16, 1
      %s194 = scalar_select %p193, %s16, 1
      %s195 = smul.addr %s194, 32
      %s196 = smul.addr %s195, 4
      %s197 = scalar_lea.vmem %s0, %s196
      %p198 = pneg %p37
      %p199 = pneg %p34
      %p200 = pneg %p58
      %p201 = pneg %p55
      %p202 = pneg %p79
      %p203 = pneg %p76
      %p204 = pneg %p100
      %p205 = pneg %p97
      %p206 = pneg %p121
      %p207 = pneg %p118
      %p208 = pneg %p147
      %p209 = pneg %p144
      %p210 = scmp.lt.s32.totalorder %s16, 1
      %s211 = scalar_select %p210, %s16, 1
      %s212 = smul.addr %s211, 8
      %s213 = smul.addr %s212, 4
      %s214 = scalar_lea.vmem %s5, %s213
      %p215 = scmp.lt.s32.totalorder %s16, 1
      %s216 = scalar_select %p215, %s16, 1
      %s217 = smul.addr %s216, 32
      %s218 = smul.addr %s217, 4
      %s219 = scalar_lea.vmem %s0, %s218
      %p220 = scmp.lt.s32.totalorder %s16, 1
      %s221 = scalar_select %p220, %s16, 1
      %s222 = smul.addr %s221, 8
      %s223 = smul.addr %s222, 4
      %s224 = scalar_lea.vmem %s5, %s223
      %v226 = vld [vmem:[%s219] sm:$0xf]
      %v227 = vld [vmem:[%s219 + $0x4] sm:$0xf]
      %v228 = vld [vmem:[%s219 + $0x8] sm:$0xf]
      %v229 = vld [vmem:[%s219 + $0xc] sm:$0xf]
      %v230 = vld [vmem:[%s219 + $0x10] sm:$0xf]
      %v231 = vld [vmem:[%s219 + $0x14] sm:$0xf]
      %v232 = vld [vmem:[%s219 + $0x18] sm:$0xf]
      %v233 = vld [vmem:[%s219 + $0x1c] sm:$0xf]
      %v234 = vld [vmem:[%s219 + $0x20] sm:$0xf]
      %v235 = vld [vmem:[%s219 + $0x24] sm:$0xf]
      %v236 = vld [vmem:[%s219 + $0x28] sm:$0xf]
      %v237 = vld [vmem:[%s219 + $0x2c] sm:$0xf]
      %v238 = vld [vmem:[%s219 + $0x30] sm:$0xf]
      %v239 = vld [vmem:[%s219 + $0x34] sm:$0xf]
      %v240 = vld [vmem:[%s219 + $0x38] sm:$0xf]
      %v241 = vld [vmem:[%s219 + $0x3c] sm:$0xf]
      %v242 = vld [vmem:[%s219 + $0x40] sm:$0xf]
      %v243 = vld [vmem:[%s219 + $0x44] sm:$0xf]
      %v244 = vld [vmem:[%s219 + $0x48] sm:$0xf]
      %v245 = vld [vmem:[%s219 + $0x4c] sm:$0xf]
      %v246 = vld [vmem:[%s219 + $0x50] sm:$0xf]
      %v247 = vld [vmem:[%s219 + $0x54] sm:$0xf]
      %v248 = vld [vmem:[%s219 + $0x58] sm:$0xf]
      %v249 = vld [vmem:[%s219 + $0x5c] sm:$0xf]
      %v250 = vld [vmem:[%s219 + $0x60] sm:$0xf]
      %v251 = vld [vmem:[%s219 + $0x64] sm:$0xf]
      %v252 = vld [vmem:[%s219 + $0x68] sm:$0xf]
      %v253 = vld [vmem:[%s219 + $0x6c] sm:$0xf]
      %v254 = vld [vmem:[%s219 + $0x70] sm:$0xf]
      %v255 = vld [vmem:[%s219 + $0x74] sm:$0xf]
      %v256 = vld [vmem:[%s219 + $0x78] sm:$0xf]
      %v257 = vld [vmem:[%s219 + $0x7c] sm:$0xf]
      %vm258 = vcmask 93184
      %259 = vst.msk [vmem:[#allocation2] sm:$0xf] %vm258, 0
      %260 = vst.msk [vmem:[#allocation2 + $0x18] sm:$0xf] %vm258, 0
      %261 = vst.msk [vmem:[#allocation2 + $0x30] sm:$0xf] %vm258, 0
      %262 = vst.msk [vmem:[#allocation2 + $0x48] sm:$0xf] %vm258, 0
      %263 = vst.msk [vmem:[#allocation2 + $0x60] sm:$0xf] %vm258, 0
      %264 = vst.msk [vmem:[#allocation2 + $0x78] sm:$0xf] %vm258, 0
      %265 = vst.msk [vmem:[#allocation2 + $0x90] sm:$0xf] %vm258, 0
      %266 = vst.msk [vmem:[#allocation2 + $0xa8] sm:$0xf] %vm258, 0
      %267 = vst.msk [vmem:[#allocation2 + $0xc0] sm:$0xf] %vm258, 0
      %268 = vst.msk [vmem:[#allocation2 + $0xd8] sm:$0xf] %vm258, 0
      %269 = vst.msk [vmem:[#allocation2 + $0xf0] sm:$0xf] %vm258, 0
      %270 = vst.msk [vmem:[#allocation2 + $0x108] sm:$0xf] %vm258, 0
      %271 = vst.msk [vmem:[#allocation2 + $0x120] sm:$0xf] %vm258, 0
      %272 = vst.msk [vmem:[#allocation2 + $0x138] sm:$0xf] %vm258, 0
      %273 = vst.msk [vmem:[#allocation2 + $0x150] sm:$0xf] %vm258, 0
      %274 = vst.msk [vmem:[#allocation2 + $0x168] sm:$0xf] %vm258, 0
      %275 = vst.msk [vmem:[#allocation2 + $0xc] sm:$0xf] %vm258, 0
      %276 = vst.msk [vmem:[#allocation2 + $0x10] sm:$0xf] %vm258, 0
      %277 = vst.msk [vmem:[#allocation2 + $0x14] sm:$0xf] %vm258, 0
      %278 = vst.msk [vmem:[#allocation2 + $0x24] sm:$0xf] %vm258, 0
      %279 = vst.msk [vmem:[#allocation2 + $0x28] sm:$0xf] %vm258, 0
      %280 = vst.msk [vmem:[#allocation2 + $0x2c] sm:$0xf] %vm258, 0
      %281 = vst.msk [vmem:[#allocation2 + $0x3c] sm:$0xf] %vm258, 0
      %282 = vst.msk [vmem:[#allocation2 + $0x40] sm:$0xf] %vm258, 0
      %283 = vst.msk [vmem:[#allocation2 + $0x44] sm:$0xf] %vm258, 0
      %284 = vst.msk [vmem:[#allocation2 + $0x54] sm:$0xf] %vm258, 0
      %285 = vst.msk [vmem:[#allocation2 + $0x58] sm:$0xf] %vm258, 0
      %286 = vst.msk [vmem:[#allocation2 + $0x5c] sm:$0xf] %vm258, 0
      %287 = vst.msk [vmem:[#allocation2 + $0x6c] sm:$0xf] %vm258, 0
      %288 = vst.msk [vmem:[#allocation2 + $0x70] sm:$0xf] %vm258, 0
      %289 = vst.msk [vmem:[#allocation2 + $0x74] sm:$0xf] %vm258, 0
      %290 = vst.msk [vmem:[#allocation2 + $0x84] sm:$0xf] %vm258, 0
      %291 = vst.msk [vmem:[#allocation2 + $0x88] sm:$0xf] %vm258, 0
      %292 = vst.msk [vmem:[#allocation2 + $0x8c] sm:$0xf] %vm258, 0
      %293 = vst.msk [vmem:[#allocation2 + $0x9c] sm:$0xf] %vm258, 0
      %294 = vst.msk [vmem:[#allocation2 + $0xa0] sm:$0xf] %vm258, 0
      %295 = vst.msk [vmem:[#allocation2 + $0xa4] sm:$0xf] %vm258, 0
      %296 = vst.msk [vmem:[#allocation2 + $0xb4] sm:$0xf] %vm258, 0
      %297 = vst.msk [vmem:[#allocation2 + $0xb8] sm:$0xf] %vm258, 0
      %298 = vst.msk [vmem:[#allocation2 + $0xbc] sm:$0xf] %vm258, 0
      %299 = vst.msk [vmem:[#allocation2 + $0xcc] sm:$0xf] %vm258, 0
      %300 = vst.msk [vmem:[#allocation2 + $0xd0] sm:$0xf] %vm258, 0
      %301 = vst.msk [vmem:[#allocation2 + $0xd4] sm:$0xf] %vm258, 0
      %302 = vst.msk [vmem:[#allocation2 + $0xe4] sm:$0xf] %vm258, 0
      %303 = vst.msk [vmem:[#allocation2 + $0xe8] sm:$0xf] %vm258, 0
      %304 = vst.msk [vmem:[#allocation2 + $0xec] sm:$0xf] %vm258, 0
      %305 = vst.msk [vmem:[#allocation2 + $0xfc] sm:$0xf] %vm258, 0
      %306 = vst.msk [vmem:[#allocation2 + $0x100] sm:$0xf] %vm258, 0
      %307 = vst.msk [vmem:[#allocation2 + $0x104] sm:$0xf] %vm258, 0
      %308 = vst.msk [vmem:[#allocation2 + $0x114] sm:$0xf] %vm258, 0
      %309 = vst.msk [vmem:[#allocation2 + $0x118] sm:$0xf] %vm258, 0
      %310 = vst.msk [vmem:[#allocation2 + $0x11c] sm:$0xf] %vm258, 0
      %311 = vst.msk [vmem:[#allocation2 + $0x12c] sm:$0xf] %vm258, 0
      %312 = vst.msk [vmem:[#allocation2 + $0x130] sm:$0xf] %vm258, 0
      %313 = vst.msk [vmem:[#allocation2 + $0x134] sm:$0xf] %vm258, 0
      %314 = vst.msk [vmem:[#allocation2 + $0x144] sm:$0xf] %vm258, 0
      %315 = vst.msk [vmem:[#allocation2 + $0x148] sm:$0xf] %vm258, 0
      %316 = vst.msk [vmem:[#allocation2 + $0x14c] sm:$0xf] %vm258, 0
      %317 = vst.msk [vmem:[#allocation2 + $0x15c] sm:$0xf] %vm258, 0
      %318 = vst.msk [vmem:[#allocation2 + $0x160] sm:$0xf] %vm258, 0
      %319 = vst.msk [vmem:[#allocation2 + $0x164] sm:$0xf] %vm258, 0
      %320 = vst.msk [vmem:[#allocation2 + $0x174] sm:$0xf] %vm258, 0
      %321 = vst.msk [vmem:[#allocation2 + $0x178] sm:$0xf] %vm258, 0
      %322 = vst.msk [vmem:[#allocation2 + $0x17c] sm:$0xf] %vm258, 0
      %vm323 = vcmask 27648
      %324 = vst.msk [vmem:[#allocation2] sm:$0xf] %vm323, 0
      %325 = vst.msk [vmem:[#allocation2 + $0x4] sm:$0xf] %vm323, 0
      %326 = vst.msk [vmem:[#allocation2 + $0x8] sm:$0xf] %vm323, 0
      %327 = vst.msk [vmem:[#allocation2 + $0xc] sm:$0xf] %vm323, 0
      %328 = vst.msk [vmem:[#allocation2 + $0x10] sm:$0xf] %vm323, 0
      %329 = vst.msk [vmem:[#allocation2 + $0x14] sm:$0xf] %vm323, 0
      %s330 = scalar_lea.vmem [#allocation2], 24
      %331 = vst.msk [vmem:[%s330 + $0x4] sm:$0xf] %vm323, %v226
      %332 = vst.msk [vmem:[%s330 + $0x8] sm:$0xf] %vm323, %v227
      %333 = vst.msk [vmem:[%s330 + $0x1c] sm:$0xf] %vm323, %v228
      %334 = vst.msk [vmem:[%s330 + $0x20] sm:$0xf] %vm323, %v229
      %335 = vst.msk [vmem:[%s330 + $0x34] sm:$0xf] %vm323, %v230
      %336 = vst.msk [vmem:[%s330 + $0x38] sm:$0xf] %vm323, %v231
      %337 = vst.msk [vmem:[%s330 + $0x4c] sm:$0xf] %vm323, %v232
      %338 = vst.msk [vmem:[%s330 + $0x50] sm:$0xf] %vm323, %v233
      %339 = vst.msk [vmem:[%s330 + $0x64] sm:$0xf] %vm323, %v234
      %340 = vst.msk [vmem:[%s330 + $0x68] sm:$0xf] %vm323, %v235
      %341 = vst.msk [vmem:[%s330 + $0x7c] sm:$0xf] %vm323, %v236
      %342 = vst.msk [vmem:[%s330 + $0x80] sm:$0xf] %vm323, %v237
      %343 = vst.msk [vmem:[%s330 + $0x94] sm:$0xf] %vm323, %v238
      %344 = vst.msk [vmem:[%s330 + $0x98] sm:$0xf] %vm323, %v239
      %345 = vst.msk [vmem:[%s330 + $0xac] sm:$0xf] %vm323, %v240
      %346 = vst.msk [vmem:[%s330 + $0xb0] sm:$0xf] %vm323, %v241
      %347 = vst.msk [vmem:[%s330 + $0xc4] sm:$0xf] %vm323, %v242
      %348 = vst.msk [vmem:[%s330 + $0xc8] sm:$0xf] %vm323, %v243
      %349 = vst.msk [vmem:[%s330 + $0xdc] sm:$0xf] %vm323, %v244
      %350 = vst.msk [vmem:[%s330 + $0xe0] sm:$0xf] %vm323, %v245
      %351 = vst.msk [vmem:[%s330 + $0xf4] sm:$0xf] %vm323, %v246
      %352 = vst.msk [vmem:[%s330 + $0xf8] sm:$0xf] %vm323, %v247
      %353 = vst.msk [vmem:[%s330 + $0x10c] sm:$0xf] %vm323, %v248
      %354 = vst.msk [vmem:[%s330 + $0x110] sm:$0xf] %vm323, %v249
      %355 = vst.msk [vmem:[%s330 + $0x124] sm:$0xf] %vm323, %v250
      %356 = vst.msk [vmem:[%s330 + $0x128] sm:$0xf] %vm323, %v251
      %357 = vst.msk [vmem:[%s330 + $0x13c] sm:$0xf] %vm323, %v252
      %358 = vst.msk [vmem:[%s330 + $0x140] sm:$0xf] %vm323, %v253
      %359 = vst.msk [vmem:[%s330 + $0x154] sm:$0xf] %vm323, %v254
      %360 = vst.msk [vmem:[%s330 + $0x158] sm:$0xf] %vm323, %v255
      %393 = vrot.lane.b32.xlu0 %v226, 4
      %v394 = vpop.permute.xlu0 %393
      %395 = vrot.lane.b32.xlu0 %v227, 4
      %v396 = vpop.permute.xlu0 %395
      %397 = vrot.lane.b32.xlu0 %v228, 4
      %v398 = vpop.permute.xlu0 %397
      %399 = vrot.lane.b32.xlu0 %v229, 4
      %v400 = vpop.permute.xlu0 %399
      %401 = vrot.lane.b32.xlu0 %v230, 4
      %v402 = vpop.permute.xlu0 %401
      %403 = vrot.lane.b32.xlu0 %v231, 4
      %v404 = vpop.permute.xlu0 %403
      %405 = vrot.lane.b32.xlu0 %v232, 4
      %v406 = vpop.permute.xlu0 %405
      %407 = vrot.lane.b32.xlu0 %v233, 4
      %v408 = vpop.permute.xlu0 %407
      %409 = vrot.lane.b32.xlu0 %v234, 4
      %v410 = vpop.permute.xlu0 %409
      %411 = vrot.lane.b32.xlu0 %v235, 4
      %v412 = vpop.permute.xlu0 %411
      %413 = vrot.lane.b32.xlu0 %v236, 4
      %v414 = vpop.permute.xlu0 %413
      %415 = vrot.lane.b32.xlu0 %v237, 4
      %v416 = vpop.permute.xlu0 %415
      %417 = vrot.lane.b32.xlu0 %v238, 4
      %v418 = vpop.permute.xlu0 %417
      %419 = vrot.lane.b32.xlu0 %v239, 4
      %v420 = vpop.permute.xlu0 %419
      %421 = vrot.lane.b32.xlu0 %v240, 4
      %v422 = vpop.permute.xlu0 %421
      %423 = vrot.lane.b32.xlu0 %v241, 4
      %v424 = vpop.permute.xlu0 %423
      %425 = vrot.lane.b32.xlu0 %v242, 4
      %v426 = vpop.permute.xlu0 %425
      %427 = vrot.lane.b32.xlu0 %v243, 4
      %v428 = vpop.permute.xlu0 %427
      %429 = vrot.lane.b32.xlu0 %v244, 4
      %v430 = vpop.permute.xlu0 %429
      %431 = vrot.lane.b32.xlu0 %v245, 4
      %v432 = vpop.permute.xlu0 %431
      %433 = vrot.lane.b32.xlu0 %v246, 4
      %v434 = vpop.permute.xlu0 %433
      %435 = vrot.lane.b32.xlu0 %v247, 4
      %v436 = vpop.permute.xlu0 %435
      %437 = vrot.lane.b32.xlu0 %v248, 4
      %v438 = vpop.permute.xlu0 %437
      %439 = vrot.lane.b32.xlu0 %v249, 4
      %v440 = vpop.permute.xlu0 %439
      %441 = vrot.lane.b32.xlu0 %v250, 4
      %v442 = vpop.permute.xlu0 %441
      %443 = vrot.lane.b32.xlu0 %v251, 4
      %v444 = vpop.permute.xlu0 %443
      %445 = vrot.lane.b32.xlu0 %v252, 4
      %v446 = vpop.permute.xlu0 %445
      %447 = vrot.lane.b32.xlu0 %v253, 4
      %v448 = vpop.permute.xlu0 %447
      %449 = vrot.lane.b32.xlu0 %v254, 4
      %v450 = vpop.permute.xlu0 %449
      %451 = vrot.lane.b32.xlu0 %v255, 4
      %v452 = vpop.permute.xlu0 %451
      %453 = vrot.lane.b32.xlu0 %v256, 4
      %v454 = vpop.permute.xlu0 %453
      %455 = vrot.lane.b32.xlu0 %v257, 4
      %v456 = vpop.permute.xlu0 %455
      %vm489 = vcmask 60448
      %490 = vst.msk [vmem:[#allocation2 + $0x4] sm:$0xf] %vm489, %v394
      %491 = vst.msk [vmem:[#allocation2 + $0x8] sm:$0xf] %vm489, %v396
      %492 = vst.msk [vmem:[#allocation2 + $0x1c] sm:$0xf] %vm489, %v398
      %493 = vst.msk [vmem:[#allocation2 + $0x20] sm:$0xf] %vm489, %v400
      %494 = vst.msk [vmem:[#allocation2 + $0x34] sm:$0xf] %vm489, %v402
      %495 = vst.msk [vmem:[#allocation2 + $0x38] sm:$0xf] %vm489, %v404
      %496 = vst.msk [vmem:[#allocation2 + $0x4c] sm:$0xf] %vm489, %v406
      %497 = vst.msk [vmem:[#allocation2 + $0x50] sm:$0xf] %vm489, %v408
      %498 = vst.msk [vmem:[#allocation2 + $0x64] sm:$0xf] %vm489, %v410
      %499 = vst.msk [vmem:[#allocation2 + $0x68] sm:$0xf] %vm489, %v412
      %500 = vst.msk [vmem:[#allocation2 + $0x7c] sm:$0xf] %vm489, %v414
      %501 = vst.msk [vmem:[#allocation2 + $0x80] sm:$0xf] %vm489, %v416
      %502 = vst.msk [vmem:[#allocation2 + $0x94] sm:$0xf] %vm489, %v418
      %503 = vst.msk [vmem:[#allocation2 + $0x98] sm:$0xf] %vm489, %v420
      %504 = vst.msk [vmem:[#allocation2 + $0xac] sm:$0xf] %vm489, %v422
      %505 = vst.msk [vmem:[#allocation2 + $0xb0] sm:$0xf] %vm489, %v424
      %506 = vst.msk [vmem:[#allocation2 + $0xc4] sm:$0xf] %vm489, %v426
      %507 = vst.msk [vmem:[#allocation2 + $0xc8] sm:$0xf] %vm489, %v428
      %508 = vst.msk [vmem:[#allocation2 + $0xdc] sm:$0xf] %vm489, %v430
      %509 = vst.msk [vmem:[#allocation2 + $0xe0] sm:$0xf] %vm489, %v432
      %510 = vst.msk [vmem:[#allocation2 + $0xf4] sm:$0xf] %vm489, %v434
      %511 = vst.msk [vmem:[#allocation2 + $0xf8] sm:$0xf] %vm489, %v436
      %512 = vst.msk [vmem:[#allocation2 + $0x10c] sm:$0xf] %vm489, %v438
      %513 = vst.msk [vmem:[#allocation2 + $0x110] sm:$0xf] %vm489, %v440
      %514 = vst.msk [vmem:[#allocation2 + $0x124] sm:$0xf] %vm489, %v442
      %515 = vst.msk [vmem:[#allocation2 + $0x128] sm:$0xf] %vm489, %v444
      %516 = vst.msk [vmem:[#allocation2 + $0x13c] sm:$0xf] %vm489, %v446
      %517 = vst.msk [vmem:[#allocation2 + $0x140] sm:$0xf] %vm489, %v448
      %518 = vst.msk [vmem:[#allocation2 + $0x154] sm:$0xf] %vm489, %v450
      %519 = vst.msk [vmem:[#allocation2 + $0x158] sm:$0xf] %vm489, %v452
      %520 = vst.msk [vmem:[#allocation2 + $0x16c] sm:$0xf] %vm489, %v454
      %521 = vst.msk [vmem:[#allocation2 + $0x170] sm:$0xf] %vm489, %v456
      %522 = vrot.lane.b32.xlu0 %v228, 8
      %v523 = vpop.permute.xlu0 %522
      %524 = vrot.lane.b32.xlu0 %v229, 8
      %v525 = vpop.permute.xlu0 %524
      %526 = vrot.lane.b32.xlu0 %v230, 8
      %v527 = vpop.permute.xlu0 %526
      %528 = vrot.lane.b32.xlu0 %v231, 8
      %v529 = vpop.permute.xlu0 %528
      %530 = vrot.lane.b32.xlu0 %v232, 8
      %v531 = vpop.permute.xlu0 %530
      %532 = vrot.lane.b32.xlu0 %v233, 8
      %v533 = vpop.permute.xlu0 %532
      %534 = vrot.lane.b32.xlu0 %v234, 8
      %v535 = vpop.permute.xlu0 %534
      %536 = vrot.lane.b32.xlu0 %v235, 8
      %v537 = vpop.permute.xlu0 %536
      %538 = vrot.lane.b32.xlu0 %v236, 8
      %v539 = vpop.permute.xlu0 %538
      %540 = vrot.lane.b32.xlu0 %v237, 8
      %v541 = vpop.permute.xlu0 %540
      %542 = vrot.lane.b32.xlu0 %v238, 8
      %v543 = vpop.permute.xlu0 %542
      %544 = vrot.lane.b32.xlu0 %v239, 8
      %v545 = vpop.permute.xlu0 %544
      %546 = vrot.lane.b32.xlu0 %v240, 8
      %v547 = vpop.permute.xlu0 %546
      %548 = vrot.lane.b32.xlu0 %v241, 8
      %v549 = vpop.permute.xlu0 %548
      %550 = vrot.lane.b32.xlu0 %v242, 8
      %v551 = vpop.permute.xlu0 %550
      %552 = vrot.lane.b32.xlu0 %v243, 8
      %v553 = vpop.permute.xlu0 %552
      %554 = vrot.lane.b32.xlu0 %v244, 8
      %v555 = vpop.permute.xlu0 %554
      %556 = vrot.lane.b32.xlu0 %v245, 8
      %v557 = vpop.permute.xlu0 %556
      %558 = vrot.lane.b32.xlu0 %v246, 8
      %v559 = vpop.permute.xlu0 %558
      %560 = vrot.lane.b32.xlu0 %v247, 8
      %v561 = vpop.permute.xlu0 %560
      %562 = vrot.lane.b32.xlu0 %v248, 8
      %v563 = vpop.permute.xlu0 %562
      %564 = vrot.lane.b32.xlu0 %v249, 8
      %v565 = vpop.permute.xlu0 %564
      %566 = vrot.lane.b32.xlu0 %v250, 8
      %v567 = vpop.permute.xlu0 %566
      %568 = vrot.lane.b32.xlu0 %v251, 8
      %v569 = vpop.permute.xlu0 %568
      %570 = vrot.lane.b32.xlu0 %v252, 8
      %v571 = vpop.permute.xlu0 %570
      %572 = vrot.lane.b32.xlu0 %v253, 8
      %v573 = vpop.permute.xlu0 %572
      %574 = vrot.lane.b32.xlu0 %v254, 8
      %v575 = vpop.permute.xlu0 %574
      %576 = vrot.lane.b32.xlu0 %v255, 8
      %v577 = vpop.permute.xlu0 %576
      %578 = vrot.lane.b32.xlu0 %v256, 8
      %v579 = vpop.permute.xlu0 %578
      %580 = vrot.lane.b32.xlu0 %v257, 8
      %v581 = vpop.permute.xlu0 %580
      %vm612 = vcmask 93248
      %613 = vst.msk [vmem:[#allocation2 + $0x4] sm:$0xf] %vm612, %v523
      %614 = vst.msk [vmem:[#allocation2 + $0x8] sm:$0xf] %vm612, %v525
      %615 = vst.msk [vmem:[#allocation2 + $0x1c] sm:$0xf] %vm612, %v527
      %616 = vst.msk [vmem:[#allocation2 + $0x20] sm:$0xf] %vm612, %v529
      %617 = vst.msk [vmem:[#allocation2 + $0x34] sm:$0xf] %vm612, %v531
      %618 = vst.msk [vmem:[#allocation2 + $0x38] sm:$0xf] %vm612, %v533
      %619 = vst.msk [vmem:[#allocation2 + $0x4c] sm:$0xf] %vm612, %v535
      %620 = vst.msk [vmem:[#allocation2 + $0x50] sm:$0xf] %vm612, %v537
      %621 = vst.msk [vmem:[#allocation2 + $0x64] sm:$0xf] %vm612, %v539
      %622 = vst.msk [vmem:[#allocation2 + $0x68] sm:$0xf] %vm612, %v541
      %623 = vst.msk [vmem:[#allocation2 + $0x7c] sm:$0xf] %vm612, %v543
      %624 = vst.msk [vmem:[#allocation2 + $0x80] sm:$0xf] %vm612, %v545
      %625 = vst.msk [vmem:[#allocation2 + $0x94] sm:$0xf] %vm612, %v547
      %626 = vst.msk [vmem:[#allocation2 + $0x98] sm:$0xf] %vm612, %v549
      %627 = vst.msk [vmem:[#allocation2 + $0xac] sm:$0xf] %vm612, %v551
      %628 = vst.msk [vmem:[#allocation2 + $0xb0] sm:$0xf] %vm612, %v553
      %629 = vst.msk [vmem:[#allocation2 + $0xc4] sm:$0xf] %vm612, %v555
      %630 = vst.msk [vmem:[#allocation2 + $0xc8] sm:$0xf] %vm612, %v557
      %631 = vst.msk [vmem:[#allocation2 + $0xdc] sm:$0xf] %vm612, %v559
      %632 = vst.msk [vmem:[#allocation2 + $0xe0] sm:$0xf] %vm612, %v561
      %633 = vst.msk [vmem:[#allocation2 + $0xf4] sm:$0xf] %vm612, %v563
      %634 = vst.msk [vmem:[#allocation2 + $0xf8] sm:$0xf] %vm612, %v565
      %635 = vst.msk [vmem:[#allocation2 + $0x10c] sm:$0xf] %vm612, %v567
      %636 = vst.msk [vmem:[#allocation2 + $0x110] sm:$0xf] %vm612, %v569
      %637 = vst.msk [vmem:[#allocation2 + $0x124] sm:$0xf] %vm612, %v571
      %638 = vst.msk [vmem:[#allocation2 + $0x128] sm:$0xf] %vm612, %v573
      %639 = vst.msk [vmem:[#allocation2 + $0x13c] sm:$0xf] %vm612, %v575
      %640 = vst.msk [vmem:[#allocation2 + $0x140] sm:$0xf] %vm612, %v577
      %641 = vst.msk [vmem:[#allocation2 + $0x154] sm:$0xf] %vm612, %v579
      %642 = vst.msk [vmem:[#allocation2 + $0x158] sm:$0xf] %vm612, %v581
      %s643 = scalar_lea.vmem [#allocation2], 360
      %644 = vst.msk [vmem:[%s643] sm:$0xf] %vm612, 0
      %645 = vst.msk [vmem:[%s643 + $0x4] sm:$0xf] %vm612, 0
      %646 = vst.msk [vmem:[%s643 + $0x8] sm:$0xf] %vm612, 0
      %647 = vst.msk [vmem:[%s643 + $0xc] sm:$0xf] %vm612, 0
      %648 = vst.msk [vmem:[%s643 + $0x10] sm:$0xf] %vm612, 0
      %649 = vst.msk [vmem:[%s643 + $0x14] sm:$0xf] %vm612, 0
      %v650 = vld [vmem:[#allocation2] sm:$0x8]
      %v651 = vld [vmem:[#allocation2 + $0x4] sm:$0xf]
      %v652 = vld [vmem:[#allocation2 + $0x8] sm:$0xf]
      %v653 = vld [vmem:[#allocation2 + $0xc] sm:$0xf]
      %v654 = vld [vmem:[#allocation2 + $0x10] sm:$0xf]
      %v655 = vld [vmem:[#allocation2 + $0x18] sm:$0x8]
      %v656 = vld [vmem:[#allocation2 + $0x1c] sm:$0xf]
      %v657 = vld [vmem:[#allocation2 + $0x20] sm:$0xf]
      %v658 = vld [vmem:[#allocation2 + $0x24] sm:$0xf]
      %v659 = vld [vmem:[#allocation2 + $0x28] sm:$0xf]
      %v660 = vld [vmem:[#allocation2 + $0x30] sm:$0x8]
      %v661 = vld [vmem:[#allocation2 + $0x34] sm:$0xf]
      %v662 = vld [vmem:[#allocation2 + $0x38] sm:$0xf]
      %v663 = vld [vmem:[#allocation2 + $0x3c] sm:$0xf]
      %v664 = vld [vmem:[#allocation2 + $0x40] sm:$0xf]
      %v665 = vld [vmem:[#allocation2 + $0x48] sm:$0x8]
      %v666 = vld [vmem:[#allocation2 + $0x4c] sm:$0xf]
      %v667 = vld [vmem:[#allocation2 + $0x50] sm:$0xf]
      %v668 = vld [vmem:[#allocation2 + $0x54] sm:$0xf]
      %v669 = vld [vmem:[#allocation2 + $0x58] sm:$0xf]
      %v670 = vld [vmem:[#allocation2 + $0x60] sm:$0x8]
      %v671 = vld [vmem:[#allocation2 + $0x64] sm:$0xf]
      %v672 = vld [vmem:[#allocation2 + $0x68] sm:$0xf]
      %v673 = vld [vmem:[#allocation2 + $0x6c] sm:$0xf]
      %v674 = vld [vmem:[#allocation2 + $0x70] sm:$0xf]
      %v675 = vld [vmem:[#allocation2 + $0x78] sm:$0x8]
      %v676 = vld [vmem:[#allocation2 + $0x7c] sm:$0xf]
      %v677 = vld [vmem:[#allocation2 + $0x80] sm:$0xf]
      %v678 = vld [vmem:[#allocation2 + $0x84] sm:$0xf]
      %v679 = vld [vmem:[#allocation2 + $0x88] sm:$0xf]
      %v680 = vld [vmem:[#allocation2 + $0x90] sm:$0x8]
      %v681 = vld [vmem:[#allocation2 + $0x94] sm:$0xf]
      %v682 = vld [vmem:[#allocation2 + $0x98] sm:$0xf]
      %v683 = vld [vmem:[#allocation2 + $0x9c] sm:$0xf]
      %v684 = vld [vmem:[#allocation2 + $0xa0] sm:$0xf]
      %v685 = vld [vmem:[#allocation2 + $0xa8] sm:$0x8]
      %v686 = vld [vmem:[#allocation2 + $0xac] sm:$0xf]
      %v687 = vld [vmem:[#allocation2 + $0xb0] sm:$0xf]
      %v688 = vld [vmem:[#allocation2 + $0xb4] sm:$0xf]
      %v689 = vld [vmem:[#allocation2 + $0xb8] sm:$0xf]
      %v690 = vld [vmem:[#allocation2 + $0xc0] sm:$0x8]
      %v691 = vld [vmem:[#allocation2 + $0xc4] sm:$0xf]
      %v692 = vld [vmem:[#allocation2 + $0xc8] sm:$0xf]
      %v693 = vld [vmem:[#allocation2 + $0xcc] sm:$0xf]
      %v694 = vld [vmem:[#allocation2 + $0xd0] sm:$0xf]
      %v695 = vld [vmem:[#allocation2 + $0xd8] sm:$0x8]
      %v696 = vld [vmem:[#allocation2 + $0xdc] sm:$0xf]
      %v697 = vld [vmem:[#allocation2 + $0xe0] sm:$0xf]
      %v698 = vld [vmem:[#allocation2 + $0xe4] sm:$0xf]
      %v699 = vld [vmem:[#allocation2 + $0xe8] sm:$0xf]
      %v700 = vld [vmem:[#allocation2 + $0xf0] sm:$0x8]
      %v701 = vld [vmem:[#allocation2 + $0xf4] sm:$0xf]
      %v702 = vld [vmem:[#allocation2 + $0xf8] sm:$0xf]
      %v703 = vld [vmem:[#allocation2 + $0xfc] sm:$0xf]
      %v704 = vld [vmem:[#allocation2 + $0x100] sm:$0xf]
      %v705 = vld [vmem:[#allocation2 + $0x108] sm:$0x8]
      %v706 = vld [vmem:[#allocation2 + $0x10c] sm:$0xf]
      %v707 = vld [vmem:[#allocation2 + $0x110] sm:$0xf]
      %v708 = vld [vmem:[#allocation2 + $0x114] sm:$0xf]
      %v709 = vld [vmem:[#allocation2 + $0x118] sm:$0xf]
      %v710 = vld [vmem:[#allocation2 + $0x120] sm:$0x8]
      %v711 = vld [vmem:[#allocation2 + $0x124] sm:$0xf]
      %v712 = vld [vmem:[#allocation2 + $0x128] sm:$0xf]
      %v713 = vld [vmem:[#allocation2 + $0x12c] sm:$0xf]
      %v714 = vld [vmem:[#allocation2 + $0x130] sm:$0xf]
      %v715 = vld [vmem:[#allocation2 + $0x138] sm:$0x8]
      %v716 = vld [vmem:[#allocation2 + $0x13c] sm:$0xf]
      %v717 = vld [vmem:[#allocation2 + $0x140] sm:$0xf]
      %v718 = vld [vmem:[#allocation2 + $0x144] sm:$0xf]
      %v719 = vld [vmem:[#allocation2 + $0x148] sm:$0xf]
      %v720 = vld [vmem:[#allocation2 + $0x150] sm:$0x8]
      %v721 = vld [vmem:[#allocation2 + $0x154] sm:$0xf]
      %v722 = vld [vmem:[#allocation2 + $0x158] sm:$0xf]
      %v723 = vld [vmem:[#allocation2 + $0x15c] sm:$0xf]
      %v724 = vld [vmem:[#allocation2 + $0x160] sm:$0xf]
      %v725 = vld [vmem:[#allocation2 + $0x168] sm:$0x8]
      %v726 = vld [vmem:[#allocation2 + $0x16c] sm:$0xf]
      %v727 = vld [vmem:[#allocation2 + $0x170] sm:$0xf]
      %v728 = vld [vmem:[#allocation2 + $0x174] sm:$0xf]
      %v729 = vld [vmem:[#allocation2 + $0x178] sm:$0xf]
      %vm730 = vsmask.f32 256
      %vm731 = vsmask.f32 4368
      %vm732 = vmor %vm730, %vm731
      %v734 = vshrl.u32 %v650, 16
      %v736 = vrot.slane %v734, 7
      %v737 = vrot.slane %v736, 4
      %v739 = vshrl.u32 %v651, 16
      %v741 = vrot.slane %v739, 7
      %v742 = vshll.u32 %v651, 16
      %v744 = vor.u32 %v741, %v742
      %v745 = vsel %vm732, %v737, %v744
      %v746 = vrot.slane %v741, 4
      %v748 = vshrl.u32 %v652, 16
      %v750 = vrot.slane %v748, 7
      %v751 = vshll.u32 %v652, 16
      %v753 = vor.u32 %v750, %v751
      %v754 = vsel %vm732, %v746, %v753
      %v755 = vrot.slane %v750, 4
      %v757 = vshrl.u32 %v653, 16
      %v759 = vrot.slane %v757, 7
      %v760 = vshll.u32 %v653, 16
      %v762 = vor.u32 %v759, %v760
      %v763 = vsel %vm732, %v755, %v762
      %v764 = vrot.slane %v759, 4
      %v766 = vshrl.u32 %v654, 16
      %v768 = vrot.slane %v766, 7
      %v769 = vshll.u32 %v654, 16
      %v771 = vor.u32 %v768, %v769
      %v772 = vsel %vm732, %v764, %v771
      %v774 = vshrl.u32 %v655, 16
      %v776 = vrot.slane %v774, 7
      %v777 = vrot.slane %v776, 4
      %v779 = vshrl.u32 %v656, 16
      %v781 = vrot.slane %v779, 7
      %v782 = vshll.u32 %v656, 16
      %v784 = vor.u32 %v781, %v782
      %v785 = vsel %vm732, %v777, %v784
      %v786 = vrot.slane %v781, 4
      %v788 = vshrl.u32 %v657, 16
      %v790 = vrot.slane %v788, 7
      %v791 = vshll.u32 %v657, 16
      %v793 = vor.u32 %v790, %v791
      %v794 = vsel %vm732, %v786, %v793
      %v795 = vrot.slane %v790, 4
      %v797 = vshrl.u32 %v658, 16
      %v799 = vrot.slane %v797, 7
      %v800 = vshll.u32 %v658, 16
      %v802 = vor.u32 %v799, %v800
      %v803 = vsel %vm732, %v795, %v802
      %v804 = vrot.slane %v799, 4
      %v806 = vshrl.u32 %v659, 16
      %v808 = vrot.slane %v806, 7
      %v809 = vshll.u32 %v659, 16
      %v811 = vor.u32 %v808, %v809
      %v812 = vsel %vm732, %v804, %v811
      %v814 = vshrl.u32 %v660, 16
      %v816 = vrot.slane %v814, 7
      %v817 = vrot.slane %v816, 4
      %v819 = vshrl.u32 %v661, 16
      %v821 = vrot.slane %v819, 7
      %v822 = vshll.u32 %v661, 16
      %v824 = vor.u32 %v821, %v822
      %v825 = vsel %vm732, %v817, %v824
      %v826 = vrot.slane %v821, 4
      %v828 = vshrl.u32 %v662, 16
      %v830 = vrot.slane %v828, 7
      %v831 = vshll.u32 %v662, 16
      %v833 = vor.u32 %v830, %v831
      %v834 = vsel %vm732, %v826, %v833
      %v835 = vrot.slane %v830, 4
      %v837 = vshrl.u32 %v663, 16
      %v839 = vrot.slane %v837, 7
      %v840 = vshll.u32 %v663, 16
      %v842 = vor.u32 %v839, %v840
      %v843 = vsel %vm732, %v835, %v842
      %v844 = vrot.slane %v839, 4
      %v846 = vshrl.u32 %v664, 16
      %v848 = vrot.slane %v846, 7
      %v849 = vshll.u32 %v664, 16
      %v851 = vor.u32 %v848, %v849
      %v852 = vsel %vm732, %v844, %v851
      %v854 = vshrl.u32 %v665, 16
      %v856 = vrot.slane %v854, 7
      %v857 = vrot.slane %v856, 4
      %v859 = vshrl.u32 %v666, 16
      %v861 = vrot.slane %v859, 7
      %v862 = vshll.u32 %v666, 16
      %v864 = vor.u32 %v861, %v862
      %v865 = vsel %vm732, %v857, %v864
      %v866 = vrot.slane %v861, 4
      %v868 = vshrl.u32 %v667, 16
      %v870 = vrot.slane %v868, 7
      %v871 = vshll.u32 %v667, 16
      %v873 = vor.u32 %v870, %v871
      %v874 = vsel %vm732, %v866, %v873
      %v875 = vrot.slane %v870, 4
      %v877 = vshrl.u32 %v668, 16
      %v879 = vrot.slane %v877, 7
      %v880 = vshll.u32 %v668, 16
      %v882 = vor.u32 %v879, %v880
      %v883 = vsel %vm732, %v875, %v882
      %v884 = vrot.slane %v879, 4
      %v886 = vshrl.u32 %v669, 16
      %v888 = vrot.slane %v886, 7
      %v889 = vshll.u32 %v669, 16
      %v891 = vor.u32 %v888, %v889
      %v892 = vsel %vm732, %v884, %v891
      %v894 = vshrl.u32 %v670, 16
      %v896 = vrot.slane %v894, 7
      %v897 = vrot.slane %v896, 4
      %v899 = vshrl.u32 %v671, 16
      %v901 = vrot.slane %v899, 7
      %v902 = vshll.u32 %v671, 16
      %v904 = vor.u32 %v901, %v902
      %v905 = vsel %vm732, %v897, %v904
      %v906 = vrot.slane %v901, 4
      %v908 = vshrl.u32 %v672, 16
      %v910 = vrot.slane %v908, 7
      %v911 = vshll.u32 %v672, 16
      %v913 = vor.u32 %v910, %v911
      %v914 = vsel %vm732, %v906, %v913
      %v915 = vrot.slane %v910, 4
      %v917 = vshrl.u32 %v673, 16
      %v919 = vrot.slane %v917, 7
      %v920 = vshll.u32 %v673, 16
      %v922 = vor.u32 %v919, %v920
      %v923 = vsel %vm732, %v915, %v922
      %v924 = vrot.slane %v919, 4
      %v926 = vshrl.u32 %v674, 16
      %v928 = vrot.slane %v926, 7
      %v929 = vshll.u32 %v674, 16
      %v931 = vor.u32 %v928, %v929
      %v932 = vsel %vm732, %v924, %v931
      %v934 = vshrl.u32 %v675, 16
      %v936 = vrot.slane %v934, 7
      %v937 = vrot.slane %v936, 4
      %v939 = vshrl.u32 %v676, 16
      %v941 = vrot.slane %v939, 7
      %v942 = vshll.u32 %v676, 16
      %v944 = vor.u32 %v941, %v942
      %v945 = vsel %vm732, %v937, %v944
      %v946 = vrot.slane %v941, 4
      %v948 = vshrl.u32 %v677, 16
      %v950 = vrot.slane %v948, 7
      %v951 = vshll.u32 %v677, 16
      %v953 = vor.u32 %v950, %v951
      %v954 = vsel %vm732, %v946, %v953
      %v955 = vrot.slane %v950, 4
      %v957 = vshrl.u32 %v678, 16
      %v959 = vrot.slane %v957, 7
      %v960 = vshll.u32 %v678, 16
      %v962 = vor.u32 %v959, %v960
      %v963 = vsel %vm732, %v955, %v962
      %v964 = vrot.slane %v959, 4
      %v966 = vshrl.u32 %v679, 16
      %v968 = vrot.slane %v966, 7
      %v969 = vshll.u32 %v679, 16
      %v971 = vor.u32 %v968, %v969
      %v972 = vsel %vm732, %v964, %v971
      %v974 = vshrl.u32 %v680, 16
      %v976 = vrot.slane %v974, 7
      %v977 = vrot.slane %v976, 4
      %v979 = vshrl.u32 %v681, 16
      %v981 = vrot.slane %v979, 7
      %v982 = vshll.u32 %v681, 16
      %v984 = vor.u32 %v981, %v982
      %v985 = vsel %vm732, %v977, %v984
      %v986 = vrot.slane %v981, 4
      %v988 = vshrl.u32 %v682, 16
      %v990 = vrot.slane %v988, 7
      %v991 = vshll.u32 %v682, 16
      %v993 = vor.u32 %v990, %v991
      %v994 = vsel %vm732, %v986, %v993
      %v995 = vrot.slane %v990, 4
      %v997 = vshrl.u32 %v683, 16
      %v999 = vrot.slane %v997, 7
      %v1000 = vshll.u32 %v683, 16
      %v1002 = vor.u32 %v999, %v1000
      %v1003 = vsel %vm732, %v995, %v1002
      %v1004 = vrot.slane %v999, 4
      %v1006 = vshrl.u32 %v684, 16
      %v1008 = vrot.slane %v1006, 7
      %v1009 = vshll.u32 %v684, 16
      %v1011 = vor.u32 %v1008, %v1009
      %v1012 = vsel %vm732, %v1004, %v1011
      %v1014 = vshrl.u32 %v685, 16
      %v1016 = vrot.slane %v1014, 7
      %v1017 = vrot.slane %v1016, 4
      %v1019 = vshrl.u32 %v686, 16
      %v1021 = vrot.slane %v1019, 7
      %v1022 = vshll.u32 %v686, 16
      %v1024 = vor.u32 %v1021, %v1022
      %v1025 = vsel %vm732, %v1017, %v1024
      %v1026 = vrot.slane %v1021, 4
      %v1028 = vshrl.u32 %v687, 16
      %v1030 = vrot.slane %v1028, 7
      %v1031 = vshll.u32 %v687, 16
      %v1033 = vor.u32 %v1030, %v1031
      %v1034 = vsel %vm732, %v1026, %v1033
      %v1035 = vrot.slane %v1030, 4
      %v1037 = vshrl.u32 %v688, 16
      %v1039 = vrot.slane %v1037, 7
      %v1040 = vshll.u32 %v688, 16
      %v1042 = vor.u32 %v1039, %v1040
      %v1043 = vsel %vm732, %v1035, %v1042
      %v1044 = vrot.slane %v1039, 4
      %v1046 = vshrl.u32 %v689, 16
      %v1048 = vrot.slane %v1046, 7
      %v1049 = vshll.u32 %v689, 16
      %v1051 = vor.u32 %v1048, %v1049
      %v1052 = vsel %vm732, %v1044, %v1051
      %v1054 = vshrl.u32 %v690, 16
      %v1056 = vrot.slane %v1054, 7
      %v1057 = vrot.slane %v1056, 4
      %v1059 = vshrl.u32 %v691, 16
      %v1061 = vrot.slane %v1059, 7
      %v1062 = vshll.u32 %v691, 16
      %v1064 = vor.u32 %v1061, %v1062
      %v1065 = vsel %vm732, %v1057, %v1064
      %v1066 = vrot.slane %v1061, 4
      %v1068 = vshrl.u32 %v692, 16
      %v1070 = vrot.slane %v1068, 7
      %v1071 = vshll.u32 %v692, 16
      %v1073 = vor.u32 %v1070, %v1071
      %v1074 = vsel %vm732, %v1066, %v1073
      %v1075 = vrot.slane %v1070, 4
      %v1077 = vshrl.u32 %v693, 16
      %v1079 = vrot.slane %v1077, 7
      %v1080 = vshll.u32 %v693, 16
      %v1082 = vor.u32 %v1079, %v1080
      %v1083 = vsel %vm732, %v1075, %v1082
      %v1084 = vrot.slane %v1079, 4
      %v1086 = vshrl.u32 %v694, 16
      %v1088 = vrot.slane %v1086, 7
      %v1089 = vshll.u32 %v694, 16
      %v1091 = vor.u32 %v1088, %v1089
      %v1092 = vsel %vm732, %v1084, %v1091
      %v1094 = vshrl.u32 %v695, 16
      %v1096 = vrot.slane %v1094, 7
      %v1097 = vrot.slane %v1096, 4
      %v1099 = vshrl.u32 %v696, 16
      %v1101 = vrot.slane %v1099, 7
      %v1102 = vshll.u32 %v696, 16
      %v1104 = vor.u32 %v1101, %v1102
      %v1105 = vsel %vm732, %v1097, %v1104
      %v1106 = vrot.slane %v1101, 4
      %v1108 = vshrl.u32 %v697, 16
      %v1110 = vrot.slane %v1108, 7
      %v1111 = vshll.u32 %v697, 16
      %v1113 = vor.u32 %v1110, %v1111
      %v1114 = vsel %vm732, %v1106, %v1113
      %v1115 = vrot.slane %v1110, 4
      %v1117 = vshrl.u32 %v698, 16
      %v1119 = vrot.slane %v1117, 7
      %v1120 = vshll.u32 %v698, 16
      %v1122 = vor.u32 %v1119, %v1120
      %v1123 = vsel %vm732, %v1115, %v1122
      %v1124 = vrot.slane %v1119, 4
      %v1126 = vshrl.u32 %v699, 16
      %v1128 = vrot.slane %v1126, 7
      %v1129 = vshll.u32 %v699, 16
      %v1131 = vor.u32 %v1128, %v1129
      %v1132 = vsel %vm732, %v1124, %v1131
      %v1134 = vshrl.u32 %v700, 16
      %v1136 = vrot.slane %v1134, 7
      %v1137 = vrot.slane %v1136, 4
      %v1139 = vshrl.u32 %v701, 16
      %v1141 = vrot.slane %v1139, 7
      %v1142 = vshll.u32 %v701, 16
      %v1144 = vor.u32 %v1141, %v1142
      %v1145 = vsel %vm732, %v1137, %v1144
      %v1146 = vrot.slane %v1141, 4
      %v1148 = vshrl.u32 %v702, 16
      %v1150 = vrot.slane %v1148, 7
      %v1151 = vshll.u32 %v702, 16
      %v1153 = vor.u32 %v1150, %v1151
      %v1154 = vsel %vm732, %v1146, %v1153
      %v1155 = vrot.slane %v1150, 4
      %v1157 = vshrl.u32 %v703, 16
      %v1159 = vrot.slane %v1157, 7
      %v1160 = vshll.u32 %v703, 16
      %v1162 = vor.u32 %v1159, %v1160
      %v1163 = vsel %vm732, %v1155, %v1162
      %v1164 = vrot.slane %v1159, 4
      %v1166 = vshrl.u32 %v704, 16
      %v1168 = vrot.slane %v1166, 7
      %v1169 = vshll.u32 %v704, 16
      %v1171 = vor.u32 %v1168, %v1169
      %v1172 = vsel %vm732, %v1164, %v1171
      %v1174 = vshrl.u32 %v705, 16
      %v1176 = vrot.slane %v1174, 7
      %v1177 = vrot.slane %v1176, 4
      %v1179 = vshrl.u32 %v706, 16
      %v1181 = vrot.slane %v1179, 7
      %v1182 = vshll.u32 %v706, 16
      %v1184 = vor.u32 %v1181, %v1182
      %v1185 = vsel %vm732, %v1177, %v1184
      %v1186 = vrot.slane %v1181, 4
      %v1188 = vshrl.u32 %v707, 16
      %v1190 = vrot.slane %v1188, 7
      %v1191 = vshll.u32 %v707, 16
      %v1193 = vor.u32 %v1190, %v1191
      %v1194 = vsel %vm732, %v1186, %v1193
      %v1195 = vrot.slane %v1190, 4
      %v1197 = vshrl.u32 %v708, 16
      %v1199 = vrot.slane %v1197, 7
      %v1200 = vshll.u32 %v708, 16
      %v1202 = vor.u32 %v1199, %v1200
      %v1203 = vsel %vm732, %v1195, %v1202
      %v1204 = vrot.slane %v1199, 4
      %v1206 = vshrl.u32 %v709, 16
      %v1208 = vrot.slane %v1206, 7
      %v1209 = vshll.u32 %v709, 16
      %v1211 = vor.u32 %v1208, %v1209
      %v1212 = vsel %vm732, %v1204, %v1211
      %v1214 = vshrl.u32 %v710, 16
      %v1216 = vrot.slane %v1214, 7
      %v1217 = vrot.slane %v1216, 4
      %v1219 = vshrl.u32 %v711, 16
      %v1221 = vrot.slane %v1219, 7
      %v1222 = vshll.u32 %v711, 16
      %v1224 = vor.u32 %v1221, %v1222
      %v1225 = vsel %vm732, %v1217, %v1224
      %v1226 = vrot.slane %v1221, 4
      %v1228 = vshrl.u32 %v712, 16
      %v1230 = vrot.slane %v1228, 7
      %v1231 = vshll.u32 %v712, 16
      %v1233 = vor.u32 %v1230, %v1231
      %v1234 = vsel %vm732, %v1226, %v1233
      %v1235 = vrot.slane %v1230, 4
      %v1237 = vshrl.u32 %v713, 16
      %v1239 = vrot.slane %v1237, 7
      %v1240 = vshll.u32 %v713, 16
      %v1242 = vor.u32 %v1239, %v1240
      %v1243 = vsel %vm732, %v1235, %v1242
      %v1244 = vrot.slane %v1239, 4
      %v1246 = vshrl.u32 %v714, 16
      %v1248 = vrot.slane %v1246, 7
      %v1249 = vshll.u32 %v714, 16
      %v1251 = vor.u32 %v1248, %v1249
      %v1252 = vsel %vm732, %v1244, %v1251
      %v1254 = vshrl.u32 %v715, 16
      %v1256 = vrot.slane %v1254, 7
      %v1257 = vrot.slane %v1256, 4
      %v1259 = vshrl.u32 %v716, 16
      %v1261 = vrot.slane %v1259, 7
      %v1262 = vshll.u32 %v716, 16
      %v1264 = vor.u32 %v1261, %v1262
      %v1265 = vsel %vm732, %v1257, %v1264
      %v1266 = vrot.slane %v1261, 4
      %v1268 = vshrl.u32 %v717, 16
      %v1270 = vrot.slane %v1268, 7
      %v1271 = vshll.u32 %v717, 16
      %v1273 = vor.u32 %v1270, %v1271
      %v1274 = vsel %vm732, %v1266, %v1273
      %v1275 = vrot.slane %v1270, 4
      %v1277 = vshrl.u32 %v718, 16
      %v1279 = vrot.slane %v1277, 7
      %v1280 = vshll.u32 %v718, 16
      %v1282 = vor.u32 %v1279, %v1280
      %v1283 = vsel %vm732, %v1275, %v1282
      %v1284 = vrot.slane %v1279, 4
      %v1286 = vshrl.u32 %v719, 16
      %v1288 = vrot.slane %v1286, 7
      %v1289 = vshll.u32 %v719, 16
      %v1291 = vor.u32 %v1288, %v1289
      %v1292 = vsel %vm732, %v1284, %v1291
      %v1294 = vshrl.u32 %v720, 16
      %v1296 = vrot.slane %v1294, 7
      %v1297 = vrot.slane %v1296, 4
      %v1299 = vshrl.u32 %v721, 16
      %v1301 = vrot.slane %v1299, 7
      %v1302 = vshll.u32 %v721, 16
      %v1304 = vor.u32 %v1301, %v1302
      %v1305 = vsel %vm732, %v1297, %v1304
      %v1306 = vrot.slane %v1301, 4
      %v1308 = vshrl.u32 %v722, 16
      %v1310 = vrot.slane %v1308, 7
      %v1311 = vshll.u32 %v722, 16
      %v1313 = vor.u32 %v1310, %v1311
      %v1314 = vsel %vm732, %v1306, %v1313
      %v1315 = vrot.slane %v1310, 4
      %v1317 = vshrl.u32 %v723, 16
      %v1319 = vrot.slane %v1317, 7
      %v1320 = vshll.u32 %v723, 16
      %v1322 = vor.u32 %v1319, %v1320
      %v1323 = vsel %vm732, %v1315, %v1322
      %v1324 = vrot.slane %v1319, 4
      %v1326 = vshrl.u32 %v724, 16
      %v1328 = vrot.slane %v1326, 7
      %v1329 = vshll.u32 %v724, 16
      %v1331 = vor.u32 %v1328, %v1329
      %v1332 = vsel %vm732, %v1324, %v1331
      %v1334 = vshrl.u32 %v725, 16
      %v1336 = vrot.slane %v1334, 7
      %v1337 = vrot.slane %v1336, 4
      %v1339 = vshrl.u32 %v726, 16
      %v1341 = vrot.slane %v1339, 7
      %v1342 = vshll.u32 %v726, 16
      %v1344 = vor.u32 %v1341, %v1342
      %v1345 = vsel %vm732, %v1337, %v1344
      %v1346 = vrot.slane %v1341, 4
      %v1348 = vshrl.u32 %v727, 16
      %v1350 = vrot.slane %v1348, 7
      %v1351 = vshll.u32 %v727, 16
      %v1353 = vor.u32 %v1350, %v1351
      %v1354 = vsel %vm732, %v1346, %v1353
      %v1355 = vrot.slane %v1350, 4
      %v1357 = vshrl.u32 %v728, 16
      %v1359 = vrot.slane %v1357, 7
      %v1360 = vshll.u32 %v728, 16
      %v1362 = vor.u32 %v1359, %v1360
      %v1363 = vsel %vm732, %v1355, %v1362
      %v1364 = vrot.slane %v1359, 4
      %v1366 = vshrl.u32 %v729, 16
      %v1368 = vrot.slane %v1366, 7
      %v1369 = vshll.u32 %v729, 16
      %v1371 = vor.u32 %v1368, %v1369
      %v1372 = vsel %vm732, %v1364, %v1371
      %v1373 = vld [vmem:[%s1] sm:$0xf]
      %v1374 = vld [vmem:[%s1 + $0x4] sm:$0x3]
      %s1375 = scalar_lea.vmem %s1, 8
      %v1376 = vld [vmem:[%s1375] sm:$0xf]
      %v1377 = vld [vmem:[%s1375 + $0x4] sm:$0x3]
      %v1442 = vunpack.c.l.b16 %v651
      %v1443 = vunpack.c.l.b16 %v652
      %v1444 = vunpack.c.l.b16 %v653
      %v1445 = vunpack.c.l.b16 %v654
      %v1446 = vunpack.c.l.b16 %v656
      %v1447 = vunpack.c.l.b16 %v657
      %v1448 = vunpack.c.l.b16 %v658
      %v1449 = vunpack.c.l.b16 %v659
      %v1450 = vunpack.c.l.b16 %v661
      %v1451 = vunpack.c.l.b16 %v662
      %v1452 = vunpack.c.l.b16 %v663
      %v1453 = vunpack.c.l.b16 %v664
      %v1454 = vunpack.c.l.b16 %v666
      %v1455 = vunpack.c.l.b16 %v667
      %v1456 = vunpack.c.l.b16 %v668
      %v1457 = vunpack.c.l.b16 %v669
      %v1458 = vunpack.c.l.b16 %v671
      %v1459 = vunpack.c.l.b16 %v672
      %v1460 = vunpack.c.l.b16 %v673
      %v1461 = vunpack.c.l.b16 %v674
      %v1462 = vunpack.c.l.b16 %v676
      %v1463 = vunpack.c.l.b16 %v677
      %v1464 = vunpack.c.l.b16 %v678
      %v1465 = vunpack.c.l.b16 %v679
      %v1466 = vunpack.c.l.b16 %v681
      %v1467 = vunpack.c.l.b16 %v682
      %v1468 = vunpack.c.l.b16 %v683
      %v1469 = vunpack.c.l.b16 %v684
      %v1470 = vunpack.c.l.b16 %v686
      %v1471 = vunpack.c.l.b16 %v687
      %v1472 = vunpack.c.l.b16 %v688
      %v1473 = vunpack.c.l.b16 %v689
      %v1474 = vunpack.c.l.b16 %v691
      %v1475 = vunpack.c.l.b16 %v692
      %v1476 = vunpack.c.l.b16 %v693
      %v1477 = vunpack.c.l.b16 %v694
      %v1478 = vunpack.c.l.b16 %v696
      %v1479 = vunpack.c.l.b16 %v697
      %v1480 = vunpack.c.l.b16 %v698
      %v1481 = vunpack.c.l.b16 %v699
      %v1482 = vunpack.c.l.b16 %v701
      %v1483 = vunpack.c.l.b16 %v702
      %v1484 = vunpack.c.l.b16 %v703
      %v1485 = vunpack.c.l.b16 %v704
      %v1486 = vunpack.c.l.b16 %v706
      %v1487 = vunpack.c.l.b16 %v707
      %v1488 = vunpack.c.l.b16 %v708
      %v1489 = vunpack.c.l.b16 %v709
      %v1490 = vunpack.c.l.b16 %v711
      %v1491 = vunpack.c.l.b16 %v712
      %v1492 = vunpack.c.l.b16 %v713
      %v1493 = vunpack.c.l.b16 %v714
      %v1494 = vunpack.c.l.b16 %v716
      %v1495 = vunpack.c.l.b16 %v717
      %v1496 = vunpack.c.l.b16 %v718
      %v1497 = vunpack.c.l.b16 %v719
      %v1498 = vunpack.c.l.b16 %v721
      %v1499 = vunpack.c.l.b16 %v722
      %v1500 = vunpack.c.l.b16 %v723
      %v1501 = vunpack.c.l.b16 %v724
      %v1502 = vunpack.c.l.b16 %v726
      %v1503 = vunpack.c.l.b16 %v727
      %v1504 = vunpack.c.l.b16 %v728
      %v1505 = vunpack.c.l.b16 %v729
      %v1506 = vpack.c.b16 %v1443, %v1442
      %v1507 = vpack.c.b16 %v1445, %v1444
      %v1508 = vpack.c.b16 %v1447, %v1446
      %v1509 = vpack.c.b16 %v1449, %v1448
      %v1510 = vpack.c.b16 %v1451, %v1450
      %v1511 = vpack.c.b16 %v1453, %v1452
      %v1512 = vpack.c.b16 %v1455, %v1454
      %v1513 = vpack.c.b16 %v1457, %v1456
      %v1514 = vpack.c.b16 %v1459, %v1458
      %v1515 = vpack.c.b16 %v1461, %v1460
      %v1516 = vpack.c.b16 %v1463, %v1462
      %v1517 = vpack.c.b16 %v1465, %v1464
      %v1518 = vpack.c.b16 %v1467, %v1466
      %v1519 = vpack.c.b16 %v1469, %v1468
      %v1520 = vpack.c.b16 %v1471, %v1470
      %v1521 = vpack.c.b16 %v1473, %v1472
      %v1522 = vpack.c.b16 %v1475, %v1474
      %v1523 = vpack.c.b16 %v1477, %v1476
      %v1524 = vpack.c.b16 %v1479, %v1478
      %v1525 = vpack.c.b16 %v1481, %v1480
      %v1526 = vpack.c.b16 %v1483, %v1482
      %v1527 = vpack.c.b16 %v1485, %v1484
      %v1528 = vpack.c.b16 %v1487, %v1486
      %v1529 = vpack.c.b16 %v1489, %v1488
      %v1530 = vpack.c.b16 %v1491, %v1490
      %v1531 = vpack.c.b16 %v1493, %v1492
      %v1532 = vpack.c.b16 %v1495, %v1494
      %v1533 = vpack.c.b16 %v1497, %v1496
      %v1534 = vpack.c.b16 %v1499, %v1498
      %v1535 = vpack.c.b16 %v1501, %v1500
      %v1536 = vpack.c.b16 %v1503, %v1502
      %v1537 = vpack.c.b16 %v1505, %v1504
      %v1540 = vunpack.c.l.b16 %v1376
      %v1541 = vunpack.c.l.b16 %v1377
      %v1542 = vpack.c.b16 %v1541, %v1540
      %vm1543 = vcmask 97280
      %v1545 = vsel %vm1543, %v1506, 0
      %v1548 = vsel %vm1543, %v1507, 0
      %v1551 = vsel %vm1543, %v1508, 0
      %v1554 = vsel %vm1543, %v1509, 0
      %v1557 = vsel %vm1543, %v1510, 0
      %v1560 = vsel %vm1543, %v1511, 0
      %v1563 = vsel %vm1543, %v1512, 0
      %v1566 = vsel %vm1543, %v1513, 0
      %v1569 = vsel %vm1543, %v1514, 0
      %v1572 = vsel %vm1543, %v1515, 0
      %v1575 = vsel %vm1543, %v1516, 0
      %v1578 = vsel %vm1543, %v1517, 0
      %v1581 = vsel %vm1543, %v1518, 0
      %v1584 = vsel %vm1543, %v1519, 0
      %v1587 = vsel %vm1543, %v1520, 0
      %v1590 = vsel %vm1543, %v1521, 0
      %v1593 = vsel %vm1543, %v1522, 0
      %v1596 = vsel %vm1543, %v1523, 0
      %v1599 = vsel %vm1543, %v1524, 0
      %v1602 = vsel %vm1543, %v1525, 0
      %v1605 = vsel %vm1543, %v1526, 0
      %v1608 = vsel %vm1543, %v1527, 0
      %v1611 = vsel %vm1543, %v1528, 0
      %v1614 = vsel %vm1543, %v1529, 0
      %v1617 = vsel %vm1543, %v1530, 0
      %v1620 = vsel %vm1543, %v1531, 0
      %v1623 = vsel %vm1543, %v1532, 0
      %v1626 = vsel %vm1543, %v1533, 0
      %v1629 = vsel %vm1543, %v1534, 0
      %v1632 = vsel %vm1543, %v1535, 0
      %v1635 = vsel %vm1543, %v1536, 0
      %v1638 = vsel %vm1543, %v1537, 0
      %vm1640 = vcmask 1045504
      %v1642 = vsel %vm1640, %v1542, 0
      %1644 = vmatprep.subr.bf16.mxu0 0
      %1645 = vmatpush1.bf16.msra.mxu0 0
      %1646 = vmatprep.subr.bf16.mxu0 0
      %1647 = vmatpush1.bf16.msra.mxu0 0
      %1648 = vmatprep.subr.bf16.mxu0 0
      %1649 = vmatpush1.bf16.msra.mxu0 0
      %1650 = vmatprep.subr.bf16.mxu0 0
      %1651 = vmatpush1.bf16.msra.mxu0 0
      %1652 = vmatprep.subr.bf16.mxu0 0
      %1653 = vmatpush1.bf16.msra.mxu0 0
      %1654 = vmatprep.subr.bf16.mxu0 0
      %1655 = vmatpush1.bf16.msra.mxu0 0
      %1656 = vmatprep.subr.bf16.mxu0 0
      %1657 = vmatpush1.bf16.msra.mxu0 0
      %1658 = vmatprep.subr.bf16.mxu0 0
      %1659 = vmatpush1.bf16.msra.mxu0 %v1642
      %1660 = vmatprep.subr.bf16.mxu0 0
      %1661 = vmatpush2.bf16.msra.mxu0 0
      %1662 = vmatprep.subr.bf16.mxu0 0
      %1663 = vmatpush2.bf16.msra.mxu0 0
      %1664 = vmatprep.subr.bf16.mxu0 0
      %1665 = vmatpush2.bf16.msra.mxu0 0
      %1666 = vmatprep.subr.bf16.mxu0 0
      %1667 = vmatpush2.bf16.msra.mxu0 0
      %1668 = vmatprep.subr.bf16.mxu0 0
      %1669 = vmatpush2.bf16.msra.mxu0 0
      %1670 = vmatprep.subr.bf16.mxu0 0
      %1671 = vmatpush2.bf16.msra.mxu0 0
      %1672 = vmatprep.subr.bf16.mxu0 0
      %1673 = vmatpush2.bf16.msra.mxu0 0
      %1674 = vmatprep.subr.bf16.mxu0 0
      %1675 = vmatpush2.bf16.msra.mxu0 0
      %1676 = vmatprep.mubr.bf16.mxu0 0
      %1677 = vmatmul.mubr.bf16.gmra.mxu0 %v1545
      %v1678 = vpop.f32.mrf.mxu0
      %v1679 = vadd.f32 0.0, %v1678
      %v1680 = vpop.f32.mrf.mxu0
      %v1681 = vpop.f32.mrf.mxu0
      %v1682 = vadd.f32 0.0, %v1681
      %v1683 = vpop.f32.mrf.mxu0
      %1684 = vmatprep.mubr.bf16.mxu0 0
      %1685 = vmatmul.mubr.bf16.gmra.mxu0 %v1548
      %v1686 = vpop.f32.mrf.mxu0
      %v1687 = vpop.f32.mrf.mxu0
      %v1688 = vpop.f32.mrf.mxu0
      %v1689 = vpop.f32.mrf.mxu0
      %1690 = vmatprep.mubr.bf16.mxu0 0
      %1691 = vmatmul.mubr.bf16.gmra.mxu0 %v1551
      %v1692 = vpop.f32.mrf.mxu0
      %v1693 = vadd.f32 0.0, %v1692
      %v1694 = vpop.f32.mrf.mxu0
      %v1695 = vpop.f32.mrf.mxu0
      %v1696 = vadd.f32 0.0, %v1695
      %v1697 = vpop.f32.mrf.mxu0
      %1698 = vmatprep.mubr.bf16.mxu0 0
      %1699 = vmatmul.mubr.bf16.gmra.mxu0 %v1554
      %v1700 = vpop.f32.mrf.mxu0
      %v1701 = vpop.f32.mrf.mxu0
      %v1702 = vpop.f32.mrf.mxu0
      %v1703 = vpop.f32.mrf.mxu0
      %1704 = vmatprep.mubr.bf16.mxu0 0
      %1705 = vmatmul.mubr.bf16.gmra.mxu0 %v1557
      %v1706 = vpop.f32.mrf.mxu0
      %v1707 = vadd.f32 0.0, %v1706
      %v1708 = vpop.f32.mrf.mxu0
      %v1709 = vpop.f32.mrf.mxu0
      %v1710 = vadd.f32 0.0, %v1709
      %v1711 = vpop.f32.mrf.mxu0
      %1712 = vmatprep.mubr.bf16.mxu0 0
      %1713 = vmatmul.mubr.bf16.gmra.mxu0 %v1560
      %v1714 = vpop.f32.mrf.mxu0
      %v1715 = vpop.f32.mrf.mxu0
      %v1716 = vpop.f32.mrf.mxu0
      %v1717 = vpop.f32.mrf.mxu0
      %1718 = vmatprep.mubr.bf16.mxu0 0
      %1719 = vmatmul.mubr.bf16.gmra.mxu0 %v1563
      %v1720 = vpop.f32.mrf.mxu0
      %v1721 = vadd.f32 0.0, %v1720
      %v1722 = vpop.f32.mrf.mxu0
      %v1723 = vpop.f32.mrf.mxu0
      %v1724 = vadd.f32 0.0, %v1723
      %v1725 = vpop.f32.mrf.mxu0
      %1726 = vmatprep.mubr.bf16.mxu0 0
      %1727 = vmatmul.mubr.bf16.gmra.mxu0 %v1566
      %v1728 = vpop.f32.mrf.mxu0
      %v1729 = vpop.f32.mrf.mxu0
      %v1730 = vpop.f32.mrf.mxu0
      %v1731 = vpop.f32.mrf.mxu0
      %1732 = vmatprep.mubr.bf16.mxu0 0
      %1733 = vmatmul.mubr.bf16.gmra.mxu0 %v1569
      %v1734 = vpop.f32.mrf.mxu0
      %v1735 = vadd.f32 0.0, %v1734
      %v1736 = vpop.f32.mrf.mxu0
      %v1737 = vpop.f32.mrf.mxu0
      %v1738 = vadd.f32 0.0, %v1737
      %v1739 = vpop.f32.mrf.mxu0
      %1740 = vmatprep.mubr.bf16.mxu0 0
      %1741 = vmatmul.mubr.bf16.gmra.mxu0 %v1572
      %v1742 = vpop.f32.mrf.mxu0
      %v1743 = vpop.f32.mrf.mxu0
      %v1744 = vpop.f32.mrf.mxu0
      %v1745 = vpop.f32.mrf.mxu0
      %1746 = vmatprep.mubr.bf16.mxu0 0
      %1747 = vmatmul.mubr.bf16.gmra.mxu0 %v1575
      %v1748 = vpop.f32.mrf.mxu0
      %v1749 = vadd.f32 0.0, %v1748
      %v1750 = vpop.f32.mrf.mxu0
      %v1751 = vpop.f32.mrf.mxu0
      %v1752 = vadd.f32 0.0, %v1751
      %v1753 = vpop.f32.mrf.mxu0
      %1754 = vmatprep.mubr.bf16.mxu0 0
      %1755 = vmatmul.mubr.bf16.gmra.mxu0 %v1578
      %v1756 = vpop.f32.mrf.mxu0
      %v1757 = vpop.f32.mrf.mxu0
      %v1758 = vpop.f32.mrf.mxu0
      %v1759 = vpop.f32.mrf.mxu0
      %1760 = vmatprep.mubr.bf16.mxu0 0
      %1761 = vmatmul.mubr.bf16.gmra.mxu0 %v1581
      %v1762 = vpop.f32.mrf.mxu0
      %v1763 = vadd.f32 0.0, %v1762
      %v1764 = vpop.f32.mrf.mxu0
      %v1765 = vpop.f32.mrf.mxu0
      %v1766 = vadd.f32 0.0, %v1765
      %v1767 = vpop.f32.mrf.mxu0
      %1768 = vmatprep.mubr.bf16.mxu0 0
      %1769 = vmatmul.mubr.bf16.gmra.mxu0 %v1584
      %v1770 = vpop.f32.mrf.mxu0
      %v1771 = vpop.f32.mrf.mxu0
      %v1772 = vpop.f32.mrf.mxu0
      %v1773 = vpop.f32.mrf.mxu0
      %1774 = vmatprep.mubr.bf16.mxu0 0
      %1775 = vmatmul.mubr.bf16.gmra.mxu0 %v1587
      %v1776 = vpop.f32.mrf.mxu0
      %v1777 = vadd.f32 0.0, %v1776
      %v1778 = vpop.f32.mrf.mxu0
      %v1779 = vpop.f32.mrf.mxu0
      %v1780 = vadd.f32 0.0, %v1779
      %v1781 = vpop.f32.mrf.mxu0
      %1782 = vmatprep.mubr.bf16.mxu0 0
      %1783 = vmatmul.mubr.bf16.gmra.mxu0 %v1590
      %v1784 = vpop.f32.mrf.mxu0
      %v1785 = vpop.f32.mrf.mxu0
      %v1786 = vpop.f32.mrf.mxu0
      %v1787 = vpop.f32.mrf.mxu0
      %1788 = vmatprep.mubr.bf16.mxu0 0
      %1789 = vmatmul.mubr.bf16.gmra.mxu0 %v1593
      %v1790 = vpop.f32.mrf.mxu0
      %v1791 = vadd.f32 0.0, %v1790
      %v1792 = vpop.f32.mrf.mxu0
      %v1793 = vpop.f32.mrf.mxu0
      %v1794 = vadd.f32 0.0, %v1793
      %v1795 = vpop.f32.mrf.mxu0
      %1796 = vmatprep.mubr.bf16.mxu0 0
      %1797 = vmatmul.mubr.bf16.gmra.mxu0 %v1596
      %v1798 = vpop.f32.mrf.mxu0
      %v1799 = vpop.f32.mrf.mxu0
      %v1800 = vpop.f32.mrf.mxu0
      %v1801 = vpop.f32.mrf.mxu0
      %1802 = vmatprep.mubr.bf16.mxu0 0
      %1803 = vmatmul.mubr.bf16.gmra.mxu0 %v1599
      %v1804 = vpop.f32.mrf.mxu0
      %v1805 = vadd.f32 0.0, %v1804
      %v1806 = vpop.f32.mrf.mxu0
      %v1807 = vpop.f32.mrf.mxu0
      %v1808 = vadd.f32 0.0, %v1807
      %v1809 = vpop.f32.mrf.mxu0
      %1810 = vmatprep.mubr.bf16.mxu0 0
      %1811 = vmatmul.mubr.bf16.gmra.mxu0 %v1602
      %v1812 = vpop.f32.mrf.mxu0
      %v1813 = vpop.f32.mrf.mxu0
      %v1814 = vpop.f32.mrf.mxu0
      %v1815 = vpop.f32.mrf.mxu0
      %1816 = vmatprep.mubr.bf16.mxu0 0
      %1817 = vmatmul.mubr.bf16.gmra.mxu0 %v1605
      %v1818 = vpop.f32.mrf.mxu0
      %v1819 = vadd.f32 0.0, %v1818
      %v1820 = vpop.f32.mrf.mxu0
      %v1821 = vpop.f32.mrf.mxu0
      %v1822 = vadd.f32 0.0, %v1821
      %v1823 = vpop.f32.mrf.mxu0
      %1824 = vmatprep.mubr.bf16.mxu0 0
      %1825 = vmatmul.mubr.bf16.gmra.mxu0 %v1608
      %v1826 = vpop.f32.mrf.mxu0
      %v1827 = vpop.f32.mrf.mxu0
      %v1828 = vpop.f32.mrf.mxu0
      %v1829 = vpop.f32.mrf.mxu0
      %1830 = vmatprep.mubr.bf16.mxu0 0
      %1831 = vmatmul.mubr.bf16.gmra.mxu0 %v1611
      %v1832 = vpop.f32.mrf.mxu0
      %v1833 = vadd.f32 0.0, %v1832
      %v1834 = vpop.f32.mrf.mxu0
      %v1835 = vpop.f32.mrf.mxu0
      %v1836 = vadd.f32 0.0, %v1835
      %v1837 = vpop.f32.mrf.mxu0
      %1838 = vmatprep.mubr.bf16.mxu0 0
      %1839 = vmatmul.mubr.bf16.gmra.mxu0 %v1614
      %v1840 = vpop.f32.mrf.mxu0
      %v1841 = vpop.f32.mrf.mxu0
      %v1842 = vpop.f32.mrf.mxu0
      %v1843 = vpop.f32.mrf.mxu0
      %1844 = vmatprep.mubr.bf16.mxu0 0
      %1845 = vmatmul.mubr.bf16.gmra.mxu0 %v1617
      %v1846 = vpop.f32.mrf.mxu0
      %v1847 = vadd.f32 0.0, %v1846
      %v1848 = vpop.f32.mrf.mxu0
      %v1849 = vpop.f32.mrf.mxu0
      %v1850 = vadd.f32 0.0, %v1849
      %v1851 = vpop.f32.mrf.mxu0
      %1852 = vmatprep.mubr.bf16.mxu0 0
      %1853 = vmatmul.mubr.bf16.gmra.mxu0 %v1620
      %v1854 = vpop.f32.mrf.mxu0
      %v1855 = vpop.f32.mrf.mxu0
      %v1856 = vpop.f32.mrf.mxu0
      %v1857 = vpop.f32.mrf.mxu0
      %1858 = vmatprep.mubr.bf16.mxu0 0
      %1859 = vmatmul.mubr.bf16.gmra.mxu0 %v1623
      %v1860 = vpop.f32.mrf.mxu0
      %v1861 = vadd.f32 0.0, %v1860
      %v1862 = vpop.f32.mrf.mxu0
      %v1863 = vpop.f32.mrf.mxu0
      %v1864 = vadd.f32 0.0, %v1863
      %v1865 = vpop.f32.mrf.mxu0
      %1866 = vmatprep.mubr.bf16.mxu0 0
      %1867 = vmatmul.mubr.bf16.gmra.mxu0 %v1626
      %v1868 = vpop.f32.mrf.mxu0
      %v1869 = vpop.f32.mrf.mxu0
      %v1870 = vpop.f32.mrf.mxu0
      %v1871 = vpop.f32.mrf.mxu0
      %1872 = vmatprep.mubr.bf16.mxu0 0
      %1873 = vmatmul.mubr.bf16.gmra.mxu0 %v1629
      %v1874 = vpop.f32.mrf.mxu0
      %v1875 = vadd.f32 0.0, %v1874
      %v1876 = vpop.f32.mrf.mxu0
      %v1877 = vpop.f32.mrf.mxu0
      %v1878 = vadd.f32 0.0, %v1877
      %v1879 = vpop.f32.mrf.mxu0
      %1880 = vmatprep.mubr.bf16.mxu0 0
      %1881 = vmatmul.mubr.bf16.gmra.mxu0 %v1632
      %v1882 = vpop.f32.mrf.mxu0
      %v1883 = vpop.f32.mrf.mxu0
      %v1884 = vpop.f32.mrf.mxu0
      %v1885 = vpop.f32.mrf.mxu0
      %1886 = vmatprep.mubr.bf16.mxu0 0
      %1887 = vmatmul.mubr.bf16.gmra.mxu0 %v1635
      %v1888 = vpop.f32.mrf.mxu0
      %v1889 = vadd.f32 0.0, %v1888
      %v1890 = vpop.f32.mrf.mxu0
      %v1891 = vpop.f32.mrf.mxu0
      %v1892 = vadd.f32 0.0, %v1891
      %v1893 = vpop.f32.mrf.mxu0
      %1894 = vmatprep.mubr.bf16.mxu0 0
      %1895 = vmatmul.mubr.bf16.gmra.mxu0 %v1638
      %v1896 = vpop.f32.mrf.mxu0
      %v1897 = vpop.f32.mrf.mxu0
      %v1898 = vpop.f32.mrf.mxu0
      %v1899 = vpop.f32.mrf.mxu0
      %1900 = vdwg.mxu0
      %v1901 = vunpack.c.l.b16 %v745
      %v1902 = vunpack.c.l.b16 %v754
      %v1903 = vunpack.c.l.b16 %v763
      %v1904 = vunpack.c.l.b16 %v772
      %v1905 = vunpack.c.l.b16 %v785
      %v1906 = vunpack.c.l.b16 %v794
      %v1907 = vunpack.c.l.b16 %v803
      %v1908 = vunpack.c.l.b16 %v812
      %v1909 = vunpack.c.l.b16 %v825
      %v1910 = vunpack.c.l.b16 %v834
      %v1911 = vunpack.c.l.b16 %v843
      %v1912 = vunpack.c.l.b16 %v852
      %v1913 = vunpack.c.l.b16 %v865
      %v1914 = vunpack.c.l.b16 %v874
      %v1915 = vunpack.c.l.b16 %v883
      %v1916 = vunpack.c.l.b16 %v892
      %v1917 = vunpack.c.l.b16 %v905
      %v1918 = vunpack.c.l.b16 %v914
      %v1919 = vunpack.c.l.b16 %v923
      %v1920 = vunpack.c.l.b16 %v932
      %v1921 = vunpack.c.l.b16 %v945
      %v1922 = vunpack.c.l.b16 %v954
      %v1923 = vunpack.c.l.b16 %v963
      %v1924 = vunpack.c.l.b16 %v972
      %v1925 = vunpack.c.l.b16 %v985
      %v1926 = vunpack.c.l.b16 %v994
      %v1927 = vunpack.c.l.b16 %v1003
      %v1928 = vunpack.c.l.b16 %v1012
      %v1929 = vunpack.c.l.b16 %v1025
      %v1930 = vunpack.c.l.b16 %v1034
      %v1931 = vunpack.c.l.b16 %v1043
      %v1932 = vunpack.c.l.b16 %v1052
      %v1933 = vunpack.c.l.b16 %v1065
      %v1934 = vunpack.c.l.b16 %v1074
      %v1935 = vunpack.c.l.b16 %v1083
      %v1936 = vunpack.c.l.b16 %v1092
      %v1937 = vunpack.c.l.b16 %v1105
      %v1938 = vunpack.c.l.b16 %v1114
      %v1939 = vunpack.c.l.b16 %v1123
      %v1940 = vunpack.c.l.b16 %v1132
      %v1941 = vunpack.c.l.b16 %v1145
      %v1942 = vunpack.c.l.b16 %v1154
      %v1943 = vunpack.c.l.b16 %v1163
      %v1944 = vunpack.c.l.b16 %v1172
      %v1945 = vunpack.c.l.b16 %v1185
      %v1946 = vunpack.c.l.b16 %v1194
      %v1947 = vunpack.c.l.b16 %v1203
      %v1948 = vunpack.c.l.b16 %v1212
      %v1949 = vunpack.c.l.b16 %v1225
      %v1950 = vunpack.c.l.b16 %v1234
      %v1951 = vunpack.c.l.b16 %v1243
      %v1952 = vunpack.c.l.b16 %v1252
      %v1953 = vunpack.c.l.b16 %v1265
      %v1954 = vunpack.c.l.b16 %v1274
      %v1955 = vunpack.c.l.b16 %v1283
      %v1956 = vunpack.c.l.b16 %v1292
      %v1957 = vunpack.c.l.b16 %v1305
      %v1958 = vunpack.c.l.b16 %v1314
      %v1959 = vunpack.c.l.b16 %v1323
      %v1960 = vunpack.c.l.b16 %v1332
      %v1961 = vunpack.c.l.b16 %v1345
      %v1962 = vunpack.c.l.b16 %v1354
      %v1963 = vunpack.c.l.b16 %v1363
      %v1964 = vunpack.c.l.b16 %v1372
      %v1965 = vpack.c.b16 %v1902, %v1901
      %v1966 = vpack.c.b16 %v1904, %v1903
      %v1967 = vpack.c.b16 %v1906, %v1905
      %v1968 = vpack.c.b16 %v1908, %v1907
      %v1969 = vpack.c.b16 %v1910, %v1909
      %v1970 = vpack.c.b16 %v1912, %v1911
      %v1971 = vpack.c.b16 %v1914, %v1913
      %v1972 = vpack.c.b16 %v1916, %v1915
      %v1973 = vpack.c.b16 %v1918, %v1917
      %v1974 = vpack.c.b16 %v1920, %v1919
      %v1975 = vpack.c.b16 %v1922, %v1921
      %v1976 = vpack.c.b16 %v1924, %v1923
      %v1977 = vpack.c.b16 %v1926, %v1925
      %v1978 = vpack.c.b16 %v1928, %v1927
      %v1979 = vpack.c.b16 %v1930, %v1929
      %v1980 = vpack.c.b16 %v1932, %v1931
      %v1981 = vpack.c.b16 %v1934, %v1933
      %v1982 = vpack.c.b16 %v1936, %v1935
      %v1983 = vpack.c.b16 %v1938, %v1937
      %v1984 = vpack.c.b16 %v1940, %v1939
      %v1985 = vpack.c.b16 %v1942, %v1941
      %v1986 = vpack.c.b16 %v1944, %v1943
      %v1987 = vpack.c.b16 %v1946, %v1945
      %v1988 = vpack.c.b16 %v1948, %v1947
      %v1989 = vpack.c.b16 %v1950, %v1949
      %v1990 = vpack.c.b16 %v1952, %v1951
      %v1991 = vpack.c.b16 %v1954, %v1953
      %v1992 = vpack.c.b16 %v1956, %v1955
      %v1993 = vpack.c.b16 %v1958, %v1957
      %v1994 = vpack.c.b16 %v1960, %v1959
      %v1995 = vpack.c.b16 %v1962, %v1961
      %v1996 = vpack.c.b16 %v1964, %v1963
      %v1999 = vunpack.c.l.b16 %v1373
      %v2000 = vunpack.c.l.b16 %v1374
      %v2001 = vpack.c.b16 %v2000, %v1999
      %v2003 = vsel %vm1543, %v1965, 0
      %v2006 = vsel %vm1543, %v1966, 0
      %v2009 = vsel %vm1543, %v1967, 0
      %v2012 = vsel %vm1543, %v1968, 0
      %v2015 = vsel %vm1543, %v1969, 0
      %v2018 = vsel %vm1543, %v1970, 0
      %v2021 = vsel %vm1543, %v1971, 0
      %v2024 = vsel %vm1543, %v1972, 0
      %v2027 = vsel %vm1543, %v1973, 0
      %v2030 = vsel %vm1543, %v1974, 0
      %v2033 = vsel %vm1543, %v1975, 0
      %v2036 = vsel %vm1543, %v1976, 0
      %v2039 = vsel %vm1543, %v1977, 0
      %v2042 = vsel %vm1543, %v1978, 0
      %v2045 = vsel %vm1543, %v1979, 0
      %v2048 = vsel %vm1543, %v1980, 0
      %v2051 = vsel %vm1543, %v1981, 0
      %v2054 = vsel %vm1543, %v1982, 0
      %v2057 = vsel %vm1543, %v1983, 0
      %v2060 = vsel %vm1543, %v1984, 0
      %v2063 = vsel %vm1543, %v1985, 0
      %v2066 = vsel %vm1543, %v1986, 0
      %v2069 = vsel %vm1543, %v1987, 0
      %v2072 = vsel %vm1543, %v1988, 0
      %v2075 = vsel %vm1543, %v1989, 0
      %v2078 = vsel %vm1543, %v1990, 0
      %v2081 = vsel %vm1543, %v1991, 0
      %v2084 = vsel %vm1543, %v1992, 0
      %v2087 = vsel %vm1543, %v1993, 0
      %v2090 = vsel %vm1543, %v1994, 0
      %v2093 = vsel %vm1543, %v1995, 0
      %v2096 = vsel %vm1543, %v1996, 0
      %v2099 = vsel %vm1640, %v2001, 0
      %2101 = vmatprep.subr.bf16.mxu0 0
      %2102 = vmatpush1.bf16.msra.mxu0 0
      %2103 = vmatprep.subr.bf16.mxu0 0
      %2104 = vmatpush1.bf16.msra.mxu0 0
      %2105 = vmatprep.subr.bf16.mxu0 0
      %2106 = vmatpush1.bf16.msra.mxu0 0
      %2107 = vmatprep.subr.bf16.mxu0 0
      %2108 = vmatpush1.bf16.msra.mxu0 0
      %2109 = vmatprep.subr.bf16.mxu0 0
      %2110 = vmatpush1.bf16.msra.mxu0 0
      %2111 = vmatprep.subr.bf16.mxu0 0
      %2112 = vmatpush1.bf16.msra.mxu0 0
      %2113 = vmatprep.subr.bf16.mxu0 0
      %2114 = vmatpush1.bf16.msra.mxu0 0
      %2115 = vmatprep.subr.bf16.mxu0 0
      %2116 = vmatpush1.bf16.msra.mxu0 %v2099
      %2117 = vmatprep.subr.bf16.mxu0 0
      %2118 = vmatpush2.bf16.msra.mxu0 0
      %2119 = vmatprep.subr.bf16.mxu0 0
      %2120 = vmatpush2.bf16.msra.mxu0 0
      %2121 = vmatprep.subr.bf16.mxu0 0
      %2122 = vmatpush2.bf16.msra.mxu0 0
      %2123 = vmatprep.subr.bf16.mxu0 0
      %2124 = vmatpush2.bf16.msra.mxu0 0
      %2125 = vmatprep.subr.bf16.mxu0 0
      %2126 = vmatpush2.bf16.msra.mxu0 0
      %2127 = vmatprep.subr.bf16.mxu0 0
      %2128 = vmatpush2.bf16.msra.mxu0 0
      %2129 = vmatprep.subr.bf16.mxu0 0
      %2130 = vmatpush2.bf16.msra.mxu0 0
      %2131 = vmatprep.subr.bf16.mxu0 0
      %2132 = vmatpush2.bf16.msra.mxu0 0
      %2133 = vmatprep.mubr.bf16.mxu0 0
      %2134 = vmatmul.mubr.bf16.gmra.mxu0 %v2003
      %v2135 = vpop.f32.mrf.mxu0
      %v2136 = vadd.f32 %v1679, %v2135
      %v2137 = vpop.f32.mrf.mxu0
      %v2138 = vpop.f32.mrf.mxu0
      %v2139 = vadd.f32 %v1682, %v2138
      %v2140 = vpop.f32.mrf.mxu0
      %2141 = vmatprep.mubr.bf16.mxu0 0
      %2142 = vmatmul.mubr.bf16.gmra.mxu0 %v2006
      %v2143 = vpop.f32.mrf.mxu0
      %v2144 = vpop.f32.mrf.mxu0
      %v2145 = vpop.f32.mrf.mxu0
      %v2146 = vpop.f32.mrf.mxu0
      %2147 = vmatprep.mubr.bf16.mxu0 0
      %2148 = vmatmul.mubr.bf16.gmra.mxu0 %v2009
      %v2149 = vpop.f32.mrf.mxu0
      %v2150 = vadd.f32 %v1693, %v2149
      %v2151 = vpop.f32.mrf.mxu0
      %v2152 = vpop.f32.mrf.mxu0
      %v2153 = vadd.f32 %v1696, %v2152
      %v2154 = vpop.f32.mrf.mxu0
      %2155 = vmatprep.mubr.bf16.mxu0 0
      %2156 = vmatmul.mubr.bf16.gmra.mxu0 %v2012
      %v2157 = vpop.f32.mrf.mxu0
      %v2158 = vpop.f32.mrf.mxu0
      %v2159 = vpop.f32.mrf.mxu0
      %v2160 = vpop.f32.mrf.mxu0
      %2161 = vmatprep.mubr.bf16.mxu0 0
      %2162 = vmatmul.mubr.bf16.gmra.mxu0 %v2015
      %v2163 = vpop.f32.mrf.mxu0
      %v2164 = vadd.f32 %v1707, %v2163
      %v2165 = vpop.f32.mrf.mxu0
      %v2166 = vpop.f32.mrf.mxu0
      %v2167 = vadd.f32 %v1710, %v2166
      %v2168 = vpop.f32.mrf.mxu0
      %2169 = vmatprep.mubr.bf16.mxu0 0
      %2170 = vmatmul.mubr.bf16.gmra.mxu0 %v2018
      %v2171 = vpop.f32.mrf.mxu0
      %v2172 = vpop.f32.mrf.mxu0
      %v2173 = vpop.f32.mrf.mxu0
      %v2174 = vpop.f32.mrf.mxu0
      %2175 = vmatprep.mubr.bf16.mxu0 0
      %2176 = vmatmul.mubr.bf16.gmra.mxu0 %v2021
      %v2177 = vpop.f32.mrf.mxu0
      %v2178 = vadd.f32 %v1721, %v2177
      %v2179 = vpop.f32.mrf.mxu0
      %v2180 = vpop.f32.mrf.mxu0
      %v2181 = vadd.f32 %v1724, %v2180
      %v2182 = vpop.f32.mrf.mxu0
      %2183 = vmatprep.mubr.bf16.mxu0 0
      %2184 = vmatmul.mubr.bf16.gmra.mxu0 %v2024
      %v2185 = vpop.f32.mrf.mxu0
      %v2186 = vpop.f32.mrf.mxu0
      %v2187 = vpop.f32.mrf.mxu0
      %v2188 = vpop.f32.mrf.mxu0
      %2189 = vmatprep.mubr.bf16.mxu0 0
      %2190 = vmatmul.mubr.bf16.gmra.mxu0 %v2027
      %v2191 = vpop.f32.mrf.mxu0
      %v2192 = vadd.f32 %v1735, %v2191
      %v2193 = vpop.f32.mrf.mxu0
      %v2194 = vpop.f32.mrf.mxu0
      %v2195 = vadd.f32 %v1738, %v2194
      %v2196 = vpop.f32.mrf.mxu0
      %2197 = vmatprep.mubr.bf16.mxu0 0
      %2198 = vmatmul.mubr.bf16.gmra.mxu0 %v2030
      %v2199 = vpop.f32.mrf.mxu0
      %v2200 = vpop.f32.mrf.mxu0
      %v2201 = vpop.f32.mrf.mxu0
      %v2202 = vpop.f32.mrf.mxu0
      %2203 = vmatprep.mubr.bf16.mxu0 0
      %2204 = vmatmul.mubr.bf16.gmra.mxu0 %v2033
      %v2205 = vpop.f32.mrf.mxu0
      %v2206 = vadd.f32 %v1749, %v2205
      %v2207 = vpop.f32.mrf.mxu0
      %v2208 = vpop.f32.mrf.mxu0
      %v2209 = vadd.f32 %v1752, %v2208
      %v2210 = vpop.f32.mrf.mxu0
      %2211 = vmatprep.mubr.bf16.mxu0 0
      %2212 = vmatmul.mubr.bf16.gmra.mxu0 %v2036
      %v2213 = vpop.f32.mrf.mxu0
      %v2214 = vpop.f32.mrf.mxu0
      %v2215 = vpop.f32.mrf.mxu0
      %v2216 = vpop.f32.mrf.mxu0
      %2217 = vmatprep.mubr.bf16.mxu0 0
      %2218 = vmatmul.mubr.bf16.gmra.mxu0 %v2039
      %v2219 = vpop.f32.mrf.mxu0
      %v2220 = vadd.f32 %v1763, %v2219
      %v2221 = vpop.f32.mrf.mxu0
      %v2222 = vpop.f32.mrf.mxu0
      %v2223 = vadd.f32 %v1766, %v2222
      %v2224 = vpop.f32.mrf.mxu0
      %2225 = vmatprep.mubr.bf16.mxu0 0
      %2226 = vmatmul.mubr.bf16.gmra.mxu0 %v2042
      %v2227 = vpop.f32.mrf.mxu0
      %v2228 = vpop.f32.mrf.mxu0
      %v2229 = vpop.f32.mrf.mxu0
      %v2230 = vpop.f32.mrf.mxu0
      %2231 = vmatprep.mubr.bf16.mxu0 0
      %2232 = vmatmul.mubr.bf16.gmra.mxu0 %v2045
      %v2233 = vpop.f32.mrf.mxu0
      %v2234 = vadd.f32 %v1777, %v2233
      %v2235 = vpop.f32.mrf.mxu0
      %v2236 = vpop.f32.mrf.mxu0
      %v2237 = vadd.f32 %v1780, %v2236
      %v2238 = vpop.f32.mrf.mxu0
      %2239 = vmatprep.mubr.bf16.mxu0 0
      %2240 = vmatmul.mubr.bf16.gmra.mxu0 %v2048
      %v2241 = vpop.f32.mrf.mxu0
      %v2242 = vpop.f32.mrf.mxu0
      %v2243 = vpop.f32.mrf.mxu0
      %v2244 = vpop.f32.mrf.mxu0
      %2245 = vmatprep.mubr.bf16.mxu0 0
      %2246 = vmatmul.mubr.bf16.gmra.mxu0 %v2051
      %v2247 = vpop.f32.mrf.mxu0
      %v2248 = vadd.f32 %v1791, %v2247
      %v2249 = vpop.f32.mrf.mxu0
      %v2250 = vpop.f32.mrf.mxu0
      %v2251 = vadd.f32 %v1794, %v2250
      %v2252 = vpop.f32.mrf.mxu0
      %2253 = vmatprep.mubr.bf16.mxu0 0
      %2254 = vmatmul.mubr.bf16.gmra.mxu0 %v2054
      %v2255 = vpop.f32.mrf.mxu0
      %v2256 = vpop.f32.mrf.mxu0
      %v2257 = vpop.f32.mrf.mxu0
      %v2258 = vpop.f32.mrf.mxu0
      %2259 = vmatprep.mubr.bf16.mxu0 0
      %2260 = vmatmul.mubr.bf16.gmra.mxu0 %v2057
      %v2261 = vpop.f32.mrf.mxu0
      %v2262 = vadd.f32 %v1805, %v2261
      %v2263 = vpop.f32.mrf.mxu0
      %v2264 = vpop.f32.mrf.mxu0
      %v2265 = vadd.f32 %v1808, %v2264
      %v2266 = vpop.f32.mrf.mxu0
      %2267 = vmatprep.mubr.bf16.mxu0 0
      %2268 = vmatmul.mubr.bf16.gmra.mxu0 %v2060
      %v2269 = vpop.f32.mrf.mxu0
      %v2270 = vpop.f32.mrf.mxu0
      %v2271 = vpop.f32.mrf.mxu0
      %v2272 = vpop.f32.mrf.mxu0
      %2273 = vmatprep.mubr.bf16.mxu0 0
      %2274 = vmatmul.mubr.bf16.gmra.mxu0 %v2063
      %v2275 = vpop.f32.mrf.mxu0
      %v2276 = vadd.f32 %v1819, %v2275
      %v2277 = vpop.f32.mrf.mxu0
      %v2278 = vpop.f32.mrf.mxu0
      %v2279 = vadd.f32 %v1822, %v2278
      %v2280 = vpop.f32.mrf.mxu0
      %2281 = vmatprep.mubr.bf16.mxu0 0
      %2282 = vmatmul.mubr.bf16.gmra.mxu0 %v2066
      %v2283 = vpop.f32.mrf.mxu0
      %v2284 = vpop.f32.mrf.mxu0
      %v2285 = vpop.f32.mrf.mxu0
      %v2286 = vpop.f32.mrf.mxu0
      %2287 = vmatprep.mubr.bf16.mxu0 0
      %2288 = vmatmul.mubr.bf16.gmra.mxu0 %v2069
      %v2289 = vpop.f32.mrf.mxu0
      %v2290 = vadd.f32 %v1833, %v2289
      %v2291 = vpop.f32.mrf.mxu0
      %v2292 = vpop.f32.mrf.mxu0
      %v2293 = vadd.f32 %v1836, %v2292
      %v2294 = vpop.f32.mrf.mxu0
      %2295 = vmatprep.mubr.bf16.mxu0 0
      %2296 = vmatmul.mubr.bf16.gmra.mxu0 %v2072
      %v2297 = vpop.f32.mrf.mxu0
      %v2298 = vpop.f32.mrf.mxu0
      %v2299 = vpop.f32.mrf.mxu0
      %v2300 = vpop.f32.mrf.mxu0
      %2301 = vmatprep.mubr.bf16.mxu0 0
      %2302 = vmatmul.mubr.bf16.gmra.mxu0 %v2075
      %v2303 = vpop.f32.mrf.mxu0
      %v2304 = vadd.f32 %v1847, %v2303
      %v2305 = vpop.f32.mrf.mxu0
      %v2306 = vpop.f32.mrf.mxu0
      %v2307 = vadd.f32 %v1850, %v2306
      %v2308 = vpop.f32.mrf.mxu0
      %2309 = vmatprep.mubr.bf16.mxu0 0
      %2310 = vmatmul.mubr.bf16.gmra.mxu0 %v2078
      %v2311 = vpop.f32.mrf.mxu0
      %v2312 = vpop.f32.mrf.mxu0
      %v2313 = vpop.f32.mrf.mxu0
      %v2314 = vpop.f32.mrf.mxu0
      %2315 = vmatprep.mubr.bf16.mxu0 0
      %2316 = vmatmul.mubr.bf16.gmra.mxu0 %v2081
      %v2317 = vpop.f32.mrf.mxu0
      %v2318 = vadd.f32 %v1861, %v2317
      %v2319 = vpop.f32.mrf.mxu0
      %v2320 = vpop.f32.mrf.mxu0
      %v2321 = vadd.f32 %v1864, %v2320
      %v2322 = vpop.f32.mrf.mxu0
      %2323 = vmatprep.mubr.bf16.mxu0 0
      %2324 = vmatmul.mubr.bf16.gmra.mxu0 %v2084
      %v2325 = vpop.f32.mrf.mxu0
      %v2326 = vpop.f32.mrf.mxu0
      %v2327 = vpop.f32.mrf.mxu0
      %v2328 = vpop.f32.mrf.mxu0
      %2329 = vmatprep.mubr.bf16.mxu0 0
      %2330 = vmatmul.mubr.bf16.gmra.mxu0 %v2087
      %v2331 = vpop.f32.mrf.mxu0
      %v2332 = vadd.f32 %v1875, %v2331
      %v2333 = vpop.f32.mrf.mxu0
      %v2334 = vpop.f32.mrf.mxu0
      %v2335 = vadd.f32 %v1878, %v2334
      %v2336 = vpop.f32.mrf.mxu0
      %2337 = vmatprep.mubr.bf16.mxu0 0
      %2338 = vmatmul.mubr.bf16.gmra.mxu0 %v2090
      %v2339 = vpop.f32.mrf.mxu0
      %v2340 = vpop.f32.mrf.mxu0
      %v2341 = vpop.f32.mrf.mxu0
      %v2342 = vpop.f32.mrf.mxu0
      %2343 = vmatprep.mubr.bf16.mxu0 0
      %2344 = vmatmul.mubr.bf16.gmra.mxu0 %v2093
      %v2345 = vpop.f32.mrf.mxu0
      %v2346 = vadd.f32 %v1889, %v2345
      %v2347 = vpop.f32.mrf.mxu0
      %v2348 = vpop.f32.mrf.mxu0
      %v2349 = vadd.f32 %v1892, %v2348
      %v2350 = vpop.f32.mrf.mxu0
      %2351 = vmatprep.mubr.bf16.mxu0 0
      %2352 = vmatmul.mubr.bf16.gmra.mxu0 %v2096
      %v2353 = vpop.f32.mrf.mxu0
      %v2354 = vpop.f32.mrf.mxu0
      %v2355 = vpop.f32.mrf.mxu0
      %v2356 = vpop.f32.mrf.mxu0
      %2357 = vdwg.mxu0
      %v2358 = vld [vmem:[#allocation2 + $0x4] sm:$0xf]
      %v2359 = vld [vmem:[#allocation2 + $0x8] sm:$0xf]
      %v2360 = vld [vmem:[#allocation2 + $0xc] sm:$0xf]
      %v2361 = vld [vmem:[#allocation2 + $0x10] sm:$0xf]
      %v2362 = vld [vmem:[#allocation2 + $0x14] sm:$0x1]
      %v2363 = vld [vmem:[#allocation2 + $0x1c] sm:$0xf]
      %v2364 = vld [vmem:[#allocation2 + $0x20] sm:$0xf]
      %v2365 = vld [vmem:[#allocation2 + $0x24] sm:$0xf]
      %v2366 = vld [vmem:[#allocation2 + $0x28] sm:$0xf]
      %v2367 = vld [vmem:[#allocation2 + $0x2c] sm:$0x1]
      %v2368 = vld [vmem:[#allocation2 + $0x34] sm:$0xf]
      %v2369 = vld [vmem:[#allocation2 + $0x38] sm:$0xf]
      %v2370 = vld [vmem:[#allocation2 + $0x3c] sm:$0xf]
      %v2371 = vld [vmem:[#allocation2 + $0x40] sm:$0xf]
      %v2372 = vld [vmem:[#allocation2 + $0x44] sm:$0x1]
      %v2373 = vld [vmem:[#allocation2 + $0x4c] sm:$0xf]
      %v2374 = vld [vmem:[#allocation2 + $0x50] sm:$0xf]
      %v2375 = vld [vmem:[#allocation2 + $0x54] sm:$0xf]
      %v2376 = vld [vmem:[#allocation2 + $0x58] sm:$0xf]
      %v2377 = vld [vmem:[#allocation2 + $0x5c] sm:$0x1]
      %v2378 = vld [vmem:[#allocation2 + $0x64] sm:$0xf]
      %v2379 = vld [vmem:[#allocation2 + $0x68] sm:$0xf]
      %v2380 = vld [vmem:[#allocation2 + $0x6c] sm:$0xf]
      %v2381 = vld [vmem:[#allocation2 + $0x70] sm:$0xf]
      %v2382 = vld [vmem:[#allocation2 + $0x74] sm:$0x1]
      %v2383 = vld [vmem:[#allocation2 + $0x7c] sm:$0xf]
      %v2384 = vld [vmem:[#allocation2 + $0x80] sm:$0xf]
      %v2385 = vld [vmem:[#allocation2 + $0x84] sm:$0xf]
      %v2386 = vld [vmem:[#allocation2 + $0x88] sm:$0xf]
      %v2387 = vld [vmem:[#allocation2 + $0x8c] sm:$0x1]
      %v2388 = vld [vmem:[#allocation2 + $0x94] sm:$0xf]
      %v2389 = vld [vmem:[#allocation2 + $0x98] sm:$0xf]
      %v2390 = vld [vmem:[#allocation2 + $0x9c] sm:$0xf]
      %v2391 = vld [vmem:[#allocation2 + $0xa0] sm:$0xf]
      %v2392 = vld [vmem:[#allocation2 + $0xa4] sm:$0x1]
      %v2393 = vld [vmem:[#allocation2 + $0xac] sm:$0xf]
      %v2394 = vld [vmem:[#allocation2 + $0xb0] sm:$0xf]
      %v2395 = vld [vmem:[#allocation2 + $0xb4] sm:$0xf]
      %v2396 = vld [vmem:[#allocation2 + $0xb8] sm:$0xf]
      %v2397 = vld [vmem:[#allocation2 + $0xbc] sm:$0x1]
      %v2398 = vld [vmem:[#allocation2 + $0xc4] sm:$0xf]
      %v2399 = vld [vmem:[#allocation2 + $0xc8] sm:$0xf]
      %v2400 = vld [vmem:[#allocation2 + $0xcc] sm:$0xf]
      %v2401 = vld [vmem:[#allocation2 + $0xd0] sm:$0xf]
      %v2402 = vld [vmem:[#allocation2 + $0xd4] sm:$0x1]
      %v2403 = vld [vmem:[#allocation2 + $0xdc] sm:$0xf]
      %v2404 = vld [vmem:[#allocation2 + $0xe0] sm:$0xf]
      %v2405 = vld [vmem:[#allocation2 + $0xe4] sm:$0xf]
      %v2406 = vld [vmem:[#allocation2 + $0xe8] sm:$0xf]
      %v2407 = vld [vmem:[#allocation2 + $0xec] sm:$0x1]
      %v2408 = vld [vmem:[#allocation2 + $0xf4] sm:$0xf]
      %v2409 = vld [vmem:[#allocation2 + $0xf8] sm:$0xf]
      %v2410 = vld [vmem:[#allocation2 + $0xfc] sm:$0xf]
      %v2411 = vld [vmem:[#allocation2 + $0x100] sm:$0xf]
      %v2412 = vld [vmem:[#allocation2 + $0x104] sm:$0x1]
      %v2413 = vld [vmem:[#allocation2 + $0x10c] sm:$0xf]
      %v2414 = vld [vmem:[#allocation2 + $0x110] sm:$0xf]
      %v2415 = vld [vmem:[#allocation2 + $0x114] sm:$0xf]
      %v2416 = vld [vmem:[#allocation2 + $0x118] sm:$0xf]
      %v2417 = vld [vmem:[#allocation2 + $0x11c] sm:$0x1]
      %v2418 = vld [vmem:[#allocation2 + $0x124] sm:$0xf]
      %v2419 = vld [vmem:[#allocation2 + $0x128] sm:$0xf]
      %v2420 = vld [vmem:[#allocation2 + $0x12c] sm:$0xf]
      %v2421 = vld [vmem:[#allocation2 + $0x130] sm:$0xf]
      %v2422 = vld [vmem:[#allocation2 + $0x134] sm:$0x1]
      %v2423 = vld [vmem:[#allocation2 + $0x13c] sm:$0xf]
      %v2424 = vld [vmem:[#allocation2 + $0x140] sm:$0xf]
      %v2425 = vld [vmem:[#allocation2 + $0x144] sm:$0xf]
      %v2426 = vld [vmem:[#allocation2 + $0x148] sm:$0xf]
      %v2427 = vld [vmem:[#allocation2 + $0x14c] sm:$0x1]
      %v2428 = vld [vmem:[#allocation2 + $0x154] sm:$0xf]
      %v2429 = vld [vmem:[#allocation2 + $0x158] sm:$0xf]
      %v2430 = vld [vmem:[#allocation2 + $0x15c] sm:$0xf]
      %v2431 = vld [vmem:[#allocation2 + $0x160] sm:$0xf]
      %v2432 = vld [vmem:[#allocation2 + $0x164] sm:$0x1]
      %v2433 = vld [vmem:[#allocation2 + $0x16c] sm:$0xf]
      %v2434 = vld [vmem:[#allocation2 + $0x170] sm:$0xf]
      %v2435 = vld [vmem:[#allocation2 + $0x174] sm:$0xf]
      %v2436 = vld [vmem:[#allocation2 + $0x178] sm:$0xf]
      %v2437 = vld [vmem:[#allocation2 + $0x17c] sm:$0x1]
      %vm2438 = vsmask.f32 3328
      %vm2439 = vsmask.f32 7440
      %vm2440 = vmor %vm2438, %vm2439
      %v2442 = vshrl.u32 %v2358, 16
      %v2444 = vrot.slane %v2442, 4
      %v2445 = vshll.u32 %v2358, 16
      %v2447 = vrot.slane %v2445, 5
      %v2448 = vor.u32 %v2444, %v2447
      %v2449 = vrot.slane %v2448, 4
      %v2451 = vshll.u32 %v2359, 16
      %v2453 = vrot.slane %v2451, 5
      %v2454 = vsel %vm2440, %v2449, %v2453
      %v2455 = vshrl.u32 %v2359, 16
      %v2457 = vrot.slane %v2455, 4
      %v2458 = vor.u32 %v2457, %v2453
      %v2459 = vrot.slane %v2458, 4
      %v2461 = vshll.u32 %v2360, 16
      %v2463 = vrot.slane %v2461, 5
      %v2464 = vsel %vm2440, %v2459, %v2463
      %v2465 = vshrl.u32 %v2360, 16
      %v2467 = vrot.slane %v2465, 4
      %v2468 = vor.u32 %v2467, %v2463
      %v2469 = vrot.slane %v2468, 4
      %v2471 = vshll.u32 %v2361, 16
      %v2473 = vrot.slane %v2471, 5
      %v2474 = vsel %vm2440, %v2469, %v2473
      %v2475 = vshrl.u32 %v2361, 16
      %v2477 = vrot.slane %v2475, 4
      %v2478 = vor.u32 %v2477, %v2473
      %v2479 = vrot.slane %v2478, 4
      %v2481 = vshll.u32 %v2362, 16
      %v2483 = vrot.slane %v2481, 5
      %v2484 = vsel %vm2440, %v2479, %v2483
      %v2486 = vshrl.u32 %v2363, 16
      %v2488 = vrot.slane %v2486, 4
      %v2489 = vshll.u32 %v2363, 16
      %v2491 = vrot.slane %v2489, 5
      %v2492 = vor.u32 %v2488, %v2491
      %v2493 = vrot.slane %v2492, 4
      %v2495 = vshll.u32 %v2364, 16
      %v2497 = vrot.slane %v2495, 5
      %v2498 = vsel %vm2440, %v2493, %v2497
      %v2499 = vshrl.u32 %v2364, 16
      %v2501 = vrot.slane %v2499, 4
      %v2502 = vor.u32 %v2501, %v2497
      %v2503 = vrot.slane %v2502, 4
      %v2505 = vshll.u32 %v2365, 16
      %v2507 = vrot.slane %v2505, 5
      %v2508 = vsel %vm2440, %v2503, %v2507
      %v2509 = vshrl.u32 %v2365, 16
      %v2511 = vrot.slane %v2509, 4
      %v2512 = vor.u32 %v2511, %v2507
      %v2513 = vrot.slane %v2512, 4
      %v2515 = vshll.u32 %v2366, 16
      %v2517 = vrot.slane %v2515, 5
      %v2518 = vsel %vm2440, %v2513, %v2517
      %v2519 = vshrl.u32 %v2366, 16
      %v2521 = vrot.slane %v2519, 4
      %v2522 = vor.u32 %v2521, %v2517
      %v2523 = vrot.slane %v2522, 4
      %v2525 = vshll.u32 %v2367, 16
      %v2527 = vrot.slane %v2525, 5
      %v2528 = vsel %vm2440, %v2523, %v2527
      %v2530 = vshrl.u32 %v2368, 16
      %v2532 = vrot.slane %v2530, 4
      %v2533 = vshll.u32 %v2368, 16
      %v2535 = vrot.slane %v2533, 5
      %v2536 = vor.u32 %v2532, %v2535
      %v2537 = vrot.slane %v2536, 4
      %v2539 = vshll.u32 %v2369, 16
      %v2541 = vrot.slane %v2539, 5
      %v2542 = vsel %vm2440, %v2537, %v2541
      %v2543 = vshrl.u32 %v2369, 16
      %v2545 = vrot.slane %v2543, 4
      %v2546 = vor.u32 %v2545, %v2541
      %v2547 = vrot.slane %v2546, 4
      %v2549 = vshll.u32 %v2370, 16
      %v2551 = vrot.slane %v2549, 5
      %v2552 = vsel %vm2440, %v2547, %v2551
      %v2553 = vshrl.u32 %v2370, 16
      %v2555 = vrot.slane %v2553, 4
      %v2556 = vor.u32 %v2555, %v2551
      %v2557 = vrot.slane %v2556, 4
      %v2559 = vshll.u32 %v2371, 16
      %v2561 = vrot.slane %v2559, 5
      %v2562 = vsel %vm2440, %v2557, %v2561
      %v2563 = vshrl.u32 %v2371, 16
      %v2565 = vrot.slane %v2563, 4
      %v2566 = vor.u32 %v2565, %v2561
      %v2567 = vrot.slane %v2566, 4
      %v2569 = vshll.u32 %v2372, 16
      %v2571 = vrot.slane %v2569, 5
      %v2572 = vsel %vm2440, %v2567, %v2571
      %v2574 = vshrl.u32 %v2373, 16
      %v2576 = vrot.slane %v2574, 4
      %v2577 = vshll.u32 %v2373, 16
      %v2579 = vrot.slane %v2577, 5
      %v2580 = vor.u32 %v2576, %v2579
      %v2581 = vrot.slane %v2580, 4
      %v2583 = vshll.u32 %v2374, 16
      %v2585 = vrot.slane %v2583, 5
      %v2586 = vsel %vm2440, %v2581, %v2585
      %v2587 = vshrl.u32 %v2374, 16
      %v2589 = vrot.slane %v2587, 4
      %v2590 = vor.u32 %v2589, %v2585
      %v2591 = vrot.slane %v2590, 4
      %v2593 = vshll.u32 %v2375, 16
      %v2595 = vrot.slane %v2593, 5
      %v2596 = vsel %vm2440, %v2591, %v2595
      %v2597 = vshrl.u32 %v2375, 16
      %v2599 = vrot.slane %v2597, 4
      %v2600 = vor.u32 %v2599, %v2595
      %v2601 = vrot.slane %v2600, 4
      %v2603 = vshll.u32 %v2376, 16
      %v2605 = vrot.slane %v2603, 5
      %v2606 = vsel %vm2440, %v2601, %v2605
      %v2607 = vshrl.u32 %v2376, 16
      %v2609 = vrot.slane %v2607, 4
      %v2610 = vor.u32 %v2609, %v2605
      %v2611 = vrot.slane %v2610, 4
      %v2613 = vshll.u32 %v2377, 16
      %v2615 = vrot.slane %v2613, 5
      %v2616 = vsel %vm2440, %v2611, %v2615
      %v2618 = vshrl.u32 %v2378, 16
      %v2620 = vrot.slane %v2618, 4
      %v2621 = vshll.u32 %v2378, 16
      %v2623 = vrot.slane %v2621, 5
      %v2624 = vor.u32 %v2620, %v2623
      %v2625 = vrot.slane %v2624, 4
      %v2627 = vshll.u32 %v2379, 16
      %v2629 = vrot.slane %v2627, 5
      %v2630 = vsel %vm2440, %v2625, %v2629
      %v2631 = vshrl.u32 %v2379, 16
      %v2633 = vrot.slane %v2631, 4
      %v2634 = vor.u32 %v2633, %v2629
      %v2635 = vrot.slane %v2634, 4
      %v2637 = vshll.u32 %v2380, 16
      %v2639 = vrot.slane %v2637, 5
      %v2640 = vsel %vm2440, %v2635, %v2639
      %v2641 = vshrl.u32 %v2380, 16
      %v2643 = vrot.slane %v2641, 4
      %v2644 = vor.u32 %v2643, %v2639
      %v2645 = vrot.slane %v2644, 4
      %v2647 = vshll.u32 %v2381, 16
      %v2649 = vrot.slane %v2647, 5
      %v2650 = vsel %vm2440, %v2645, %v2649
      %v2651 = vshrl.u32 %v2381, 16
      %v2653 = vrot.slane %v2651, 4
      %v2654 = vor.u32 %v2653, %v2649
      %v2655 = vrot.slane %v2654, 4
      %v2657 = vshll.u32 %v2382, 16
      %v2659 = vrot.slane %v2657, 5
      %v2660 = vsel %vm2440, %v2655, %v2659
      %v2662 = vshrl.u32 %v2383, 16
      %v2664 = vrot.slane %v2662, 4
      %v2665 = vshll.u32 %v2383, 16
      %v2667 = vrot.slane %v2665, 5
      %v2668 = vor.u32 %v2664, %v2667
      %v2669 = vrot.slane %v2668, 4
      %v2671 = vshll.u32 %v2384, 16
      %v2673 = vrot.slane %v2671, 5
      %v2674 = vsel %vm2440, %v2669, %v2673
      %v2675 = vshrl.u32 %v2384, 16
      %v2677 = vrot.slane %v2675, 4
      %v2678 = vor.u32 %v2677, %v2673
      %v2679 = vrot.slane %v2678, 4
      %v2681 = vshll.u32 %v2385, 16
      %v2683 = vrot.slane %v2681, 5
      %v2684 = vsel %vm2440, %v2679, %v2683
      %v2685 = vshrl.u32 %v2385, 16
      %v2687 = vrot.slane %v2685, 4
      %v2688 = vor.u32 %v2687, %v2683
      %v2689 = vrot.slane %v2688, 4
      %v2691 = vshll.u32 %v2386, 16
      %v2693 = vrot.slane %v2691, 5
      %v2694 = vsel %vm2440, %v2689, %v2693
      %v2695 = vshrl.u32 %v2386, 16
      %v2697 = vrot.slane %v2695, 4
      %v2698 = vor.u32 %v2697, %v2693
      %v2699 = vrot.slane %v2698, 4
      %v2701 = vshll.u32 %v2387, 16
      %v2703 = vrot.slane %v2701, 5
      %v2704 = vsel %vm2440, %v2699, %v2703
      %v2706 = vshrl.u32 %v2388, 16
      %v2708 = vrot.slane %v2706, 4
      %v2709 = vshll.u32 %v2388, 16
      %v2711 = vrot.slane %v2709, 5
      %v2712 = vor.u32 %v2708, %v2711
      %v2713 = vrot.slane %v2712, 4
      %v2715 = vshll.u32 %v2389, 16
      %v2717 = vrot.slane %v2715, 5
      %v2718 = vsel %vm2440, %v2713, %v2717
      %v2719 = vshrl.u32 %v2389, 16
      %v2721 = vrot.slane %v2719, 4
      %v2722 = vor.u32 %v2721, %v2717
      %v2723 = vrot.slane %v2722, 4
      %v2725 = vshll.u32 %v2390, 16
      %v2727 = vrot.slane %v2725, 5
      %v2728 = vsel %vm2440, %v2723, %v2727
      %v2729 = vshrl.u32 %v2390, 16
      %v2731 = vrot.slane %v2729, 4
      %v2732 = vor.u32 %v2731, %v2727
      %v2733 = vrot.slane %v2732, 4
      %v2735 = vshll.u32 %v2391, 16
      %v2737 = vrot.slane %v2735, 5
      %v2738 = vsel %vm2440, %v2733, %v2737
      %v2739 = vshrl.u32 %v2391, 16
      %v2741 = vrot.slane %v2739, 4
      %v2742 = vor.u32 %v2741, %v2737
      %v2743 = vrot.slane %v2742, 4
      %v2745 = vshll.u32 %v2392, 16
      %v2747 = vrot.slane %v2745, 5
      %v2748 = vsel %vm2440, %v2743, %v2747
      %v2750 = vshrl.u32 %v2393, 16
      %v2752 = vrot.slane %v2750, 4
      %v2753 = vshll.u32 %v2393, 16
      %v2755 = vrot.slane %v2753, 5
      %v2756 = vor.u32 %v2752, %v2755
      %v2757 = vrot.slane %v2756, 4
      %v2759 = vshll.u32 %v2394, 16
      %v2761 = vrot.slane %v2759, 5
      %v2762 = vsel %vm2440, %v2757, %v2761
      %v2763 = vshrl.u32 %v2394, 16
      %v2765 = vrot.slane %v2763, 4
      %v2766 = vor.u32 %v2765, %v2761
      %v2767 = vrot.slane %v2766, 4
      %v2769 = vshll.u32 %v2395, 16
      %v2771 = vrot.slane %v2769, 5
      %v2772 = vsel %vm2440, %v2767, %v2771
      %v2773 = vshrl.u32 %v2395, 16
      %v2775 = vrot.slane %v2773, 4
      %v2776 = vor.u32 %v2775, %v2771
      %v2777 = vrot.slane %v2776, 4
      %v2779 = vshll.u32 %v2396, 16
      %v2781 = vrot.slane %v2779, 5
      %v2782 = vsel %vm2440, %v2777, %v2781
      %v2783 = vshrl.u32 %v2396, 16
      %v2785 = vrot.slane %v2783, 4
      %v2786 = vor.u32 %v2785, %v2781
      %v2787 = vrot.slane %v2786, 4
      %v2789 = vshll.u32 %v2397, 16
      %v2791 = vrot.slane %v2789, 5
      %v2792 = vsel %vm2440, %v2787, %v2791
      %v2794 = vshrl.u32 %v2398, 16
      %v2796 = vrot.slane %v2794, 4
      %v2797 = vshll.u32 %v2398, 16
      %v2799 = vrot.slane %v2797, 5
      %v2800 = vor.u32 %v2796, %v2799
      %v2801 = vrot.slane %v2800, 4
      %v2803 = vshll.u32 %v2399, 16
      %v2805 = vrot.slane %v2803, 5
      %v2806 = vsel %vm2440, %v2801, %v2805
      %v2807 = vshrl.u32 %v2399, 16
      %v2809 = vrot.slane %v2807, 4
      %v2810 = vor.u32 %v2809, %v2805
      %v2811 = vrot.slane %v2810, 4
      %v2813 = vshll.u32 %v2400, 16
      %v2815 = vrot.slane %v2813, 5
      %v2816 = vsel %vm2440, %v2811, %v2815
      %v2817 = vshrl.u32 %v2400, 16
      %v2819 = vrot.slane %v2817, 4
      %v2820 = vor.u32 %v2819, %v2815
      %v2821 = vrot.slane %v2820, 4
      %v2823 = vshll.u32 %v2401, 16
      %v2825 = vrot.slane %v2823, 5
      %v2826 = vsel %vm2440, %v2821, %v2825
      %v2827 = vshrl.u32 %v2401, 16
      %v2829 = vrot.slane %v2827, 4
      %v2830 = vor.u32 %v2829, %v2825
      %v2831 = vrot.slane %v2830, 4
      %v2833 = vshll.u32 %v2402, 16
      %v2835 = vrot.slane %v2833, 5
      %v2836 = vsel %vm2440, %v2831, %v2835
      %v2838 = vshrl.u32 %v2403, 16
      %v2840 = vrot.slane %v2838, 4
      %v2841 = vshll.u32 %v2403, 16
      %v2843 = vrot.slane %v2841, 5
      %v2844 = vor.u32 %v2840, %v2843
      %v2845 = vrot.slane %v2844, 4
      %v2847 = vshll.u32 %v2404, 16
      %v2849 = vrot.slane %v2847, 5
      %v2850 = vsel %vm2440, %v2845, %v2849
      %v2851 = vshrl.u32 %v2404, 16
      %v2853 = vrot.slane %v2851, 4
      %v2854 = vor.u32 %v2853, %v2849
      %v2855 = vrot.slane %v2854, 4
      %v2857 = vshll.u32 %v2405, 16
      %v2859 = vrot.slane %v2857, 5
      %v2860 = vsel %vm2440, %v2855, %v2859
      %v2861 = vshrl.u32 %v2405, 16
      %v2863 = vrot.slane %v2861, 4
      %v2864 = vor.u32 %v2863, %v2859
      %v2865 = vrot.slane %v2864, 4
      %v2867 = vshll.u32 %v2406, 16
      %v2869 = vrot.slane %v2867, 5
      %v2870 = vsel %vm2440, %v2865, %v2869
      %v2871 = vshrl.u32 %v2406, 16
      %v2873 = vrot.slane %v2871, 4
      %v2874 = vor.u32 %v2873, %v2869
      %v2875 = vrot.slane %v2874, 4
      %v2877 = vshll.u32 %v2407, 16
      %v2879 = vrot.slane %v2877, 5
      %v2880 = vsel %vm2440, %v2875, %v2879
      %v2882 = vshrl.u32 %v2408, 16
      %v2884 = vrot.slane %v2882, 4
      %v2885 = vshll.u32 %v2408, 16
      %v2887 = vrot.slane %v2885, 5
      %v2888 = vor.u32 %v2884, %v2887
      %v2889 = vrot.slane %v2888, 4
      %v2891 = vshll.u32 %v2409, 16
      %v2893 = vrot.slane %v2891, 5
      %v2894 = vsel %vm2440, %v2889, %v2893
      %v2895 = vshrl.u32 %v2409, 16
      %v2897 = vrot.slane %v2895, 4
      %v2898 = vor.u32 %v2897, %v2893
      %v2899 = vrot.slane %v2898, 4
      %v2901 = vshll.u32 %v2410, 16
      %v2903 = vrot.slane %v2901, 5
      %v2904 = vsel %vm2440, %v2899, %v2903
      %v2905 = vshrl.u32 %v2410, 16
      %v2907 = vrot.slane %v2905, 4
      %v2908 = vor.u32 %v2907, %v2903
      %v2909 = vrot.slane %v2908, 4
      %v2911 = vshll.u32 %v2411, 16
      %v2913 = vrot.slane %v2911, 5
      %v2914 = vsel %vm2440, %v2909, %v2913
      %v2915 = vshrl.u32 %v2411, 16
      %v2917 = vrot.slane %v2915, 4
      %v2918 = vor.u32 %v2917, %v2913
      %v2919 = vrot.slane %v2918, 4
      %v2921 = vshll.u32 %v2412, 16
      %v2923 = vrot.slane %v2921, 5
      %v2924 = vsel %vm2440, %v2919, %v2923
      %v2926 = vshrl.u32 %v2413, 16
      %v2928 = vrot.slane %v2926, 4
      %v2929 = vshll.u32 %v2413, 16
      %v2931 = vrot.slane %v2929, 5
      %v2932 = vor.u32 %v2928, %v2931
      %v2933 = vrot.slane %v2932, 4
      %v2935 = vshll.u32 %v2414, 16
      %v2937 = vrot.slane %v2935, 5
      %v2938 = vsel %vm2440, %v2933, %v2937
      %v2939 = vshrl.u32 %v2414, 16
      %v2941 = vrot.slane %v2939, 4
      %v2942 = vor.u32 %v2941, %v2937
      %v2943 = vrot.slane %v2942, 4
      %v2945 = vshll.u32 %v2415, 16
      %v2947 = vrot.slane %v2945, 5
      %v2948 = vsel %vm2440, %v2943, %v2947
      %v2949 = vshrl.u32 %v2415, 16
      %v2951 = vrot.slane %v2949, 4
      %v2952 = vor.u32 %v2951, %v2947
      %v2953 = vrot.slane %v2952, 4
      %v2955 = vshll.u32 %v2416, 16
      %v2957 = vrot.slane %v2955, 5
      %v2958 = vsel %vm2440, %v2953, %v2957
      %v2959 = vshrl.u32 %v2416, 16
      %v2961 = vrot.slane %v2959, 4
      %v2962 = vor.u32 %v2961, %v2957
      %v2963 = vrot.slane %v2962, 4
      %v2965 = vshll.u32 %v2417, 16
      %v2967 = vrot.slane %v2965, 5
      %v2968 = vsel %vm2440, %v2963, %v2967
      %v2970 = vshrl.u32 %v2418, 16
      %v2972 = vrot.slane %v2970, 4
      %v2973 = vshll.u32 %v2418, 16
      %v2975 = vrot.slane %v2973, 5
      %v2976 = vor.u32 %v2972, %v2975
      %v2977 = vrot.slane %v2976, 4
      %v2979 = vshll.u32 %v2419, 16
      %v2981 = vrot.slane %v2979, 5
      %v2982 = vsel %vm2440, %v2977, %v2981
      %v2983 = vshrl.u32 %v2419, 16
      %v2985 = vrot.slane %v2983, 4
      %v2986 = vor.u32 %v2985, %v2981
      %v2987 = vrot.slane %v2986, 4
      %v2989 = vshll.u32 %v2420, 16
      %v2991 = vrot.slane %v2989, 5
      %v2992 = vsel %vm2440, %v2987, %v2991
      %v2993 = vshrl.u32 %v2420, 16
      %v2995 = vrot.slane %v2993, 4
      %v2996 = vor.u32 %v2995, %v2991
      %v2997 = vrot.slane %v2996, 4
      %v2999 = vshll.u32 %v2421, 16
      %v3001 = vrot.slane %v2999, 5
      %v3002 = vsel %vm2440, %v2997, %v3001
      %v3003 = vshrl.u32 %v2421, 16
      %v3005 = vrot.slane %v3003, 4
      %v3006 = vor.u32 %v3005, %v3001
      %v3007 = vrot.slane %v3006, 4
      %v3009 = vshll.u32 %v2422, 16
      %v3011 = vrot.slane %v3009, 5
      %v3012 = vsel %vm2440, %v3007, %v3011
      %v3014 = vshrl.u32 %v2423, 16
      %v3016 = vrot.slane %v3014, 4
      %v3017 = vshll.u32 %v2423, 16
      %v3019 = vrot.slane %v3017, 5
      %v3020 = vor.u32 %v3016, %v3019
      %v3021 = vrot.slane %v3020, 4
      %v3023 = vshll.u32 %v2424, 16
      %v3025 = vrot.slane %v3023, 5
      %v3026 = vsel %vm2440, %v3021, %v3025
      %v3027 = vshrl.u32 %v2424, 16
      %v3029 = vrot.slane %v3027, 4
      %v3030 = vor.u32 %v3029, %v3025
      %v3031 = vrot.slane %v3030, 4
      %v3033 = vshll.u32 %v2425, 16
      %v3035 = vrot.slane %v3033, 5
      %v3036 = vsel %vm2440, %v3031, %v3035
      %v3037 = vshrl.u32 %v2425, 16
      %v3039 = vrot.slane %v3037, 4
      %v3040 = vor.u32 %v3039, %v3035
      %v3041 = vrot.slane %v3040, 4
      %v3043 = vshll.u32 %v2426, 16
      %v3045 = vrot.slane %v3043, 5
      %v3046 = vsel %vm2440, %v3041, %v3045
      %v3047 = vshrl.u32 %v2426, 16
      %v3049 = vrot.slane %v3047, 4
      %v3050 = vor.u32 %v3049, %v3045
      %v3051 = vrot.slane %v3050, 4
      %v3053 = vshll.u32 %v2427, 16
      %v3055 = vrot.slane %v3053, 5
      %v3056 = vsel %vm2440, %v3051, %v3055
      %v3058 = vshrl.u32 %v2428, 16
      %v3060 = vrot.slane %v3058, 4
      %v3061 = vshll.u32 %v2428, 16
      %v3063 = vrot.slane %v3061, 5
      %v3064 = vor.u32 %v3060, %v3063
      %v3065 = vrot.slane %v3064, 4
      %v3067 = vshll.u32 %v2429, 16
      %v3069 = vrot.slane %v3067, 5
      %v3070 = vsel %vm2440, %v3065, %v3069
      %v3071 = vshrl.u32 %v2429, 16
      %v3073 = vrot.slane %v3071, 4
      %v3074 = vor.u32 %v3073, %v3069
      %v3075 = vrot.slane %v3074, 4
      %v3077 = vshll.u32 %v2430, 16
      %v3079 = vrot.slane %v3077, 5
      %v3080 = vsel %vm2440, %v3075, %v3079
      %v3081 = vshrl.u32 %v2430, 16
      %v3083 = vrot.slane %v3081, 4
      %v3084 = vor.u32 %v3083, %v3079
      %v3085 = vrot.slane %v3084, 4
      %v3087 = vshll.u32 %v2431, 16
      %v3089 = vrot.slane %v3087, 5
      %v3090 = vsel %vm2440, %v3085, %v3089
      %v3091 = vshrl.u32 %v2431, 16
      %v3093 = vrot.slane %v3091, 4
      %v3094 = vor.u32 %v3093, %v3089
      %v3095 = vrot.slane %v3094, 4
      %v3097 = vshll.u32 %v2432, 16
      %v3099 = vrot.slane %v3097, 5
      %v3100 = vsel %vm2440, %v3095, %v3099
      %v3102 = vshrl.u32 %v2433, 16
      %v3104 = vrot.slane %v3102, 4
      %v3105 = vshll.u32 %v2433, 16
      %v3107 = vrot.slane %v3105, 5
      %v3108 = vor.u32 %v3104, %v3107
      %v3109 = vrot.slane %v3108, 4
      %v3111 = vshll.u32 %v2434, 16
      %v3113 = vrot.slane %v3111, 5
      %v3114 = vsel %vm2440, %v3109, %v3113
      %v3115 = vshrl.u32 %v2434, 16
      %v3117 = vrot.slane %v3115, 4
      %v3118 = vor.u32 %v3117, %v3113
      %v3119 = vrot.slane %v3118, 4
      %v3121 = vshll.u32 %v2435, 16
      %v3123 = vrot.slane %v3121, 5
      %v3124 = vsel %vm2440, %v3119, %v3123
      %v3125 = vshrl.u32 %v2435, 16
      %v3127 = vrot.slane %v3125, 4
      %v3128 = vor.u32 %v3127, %v3123
      %v3129 = vrot.slane %v3128, 4
      %v3131 = vshll.u32 %v2436, 16
      %v3133 = vrot.slane %v3131, 5
      %v3134 = vsel %vm2440, %v3129, %v3133
      %v3135 = vshrl.u32 %v2436, 16
      %v3137 = vrot.slane %v3135, 4
      %v3138 = vor.u32 %v3137, %v3133
      %v3139 = vrot.slane %v3138, 4
      %v3141 = vshll.u32 %v2437, 16
      %v3143 = vrot.slane %v3141, 5
      %v3144 = vsel %vm2440, %v3139, %v3143
      %s3145 = scalar_lea.vmem %s1, 16
      %v3146 = vld [vmem:[%s3145] sm:$0xf]
      %v3147 = vld [vmem:[%s3145 + $0x4] sm:$0x3]
      %v3148 = vunpack.c.l.b16 %v2454
      %v3149 = vunpack.c.l.b16 %v2464
      %v3150 = vunpack.c.l.b16 %v2474
      %v3151 = vunpack.c.l.b16 %v2484
      %v3152 = vunpack.c.l.b16 %v2498
      %v3153 = vunpack.c.l.b16 %v2508
      %v3154 = vunpack.c.l.b16 %v2518
      %v3155 = vunpack.c.l.b16 %v2528
      %v3156 = vunpack.c.l.b16 %v2542
      %v3157 = vunpack.c.l.b16 %v2552
      %v3158 = vunpack.c.l.b16 %v2562
      %v3159 = vunpack.c.l.b16 %v2572
      %v3160 = vunpack.c.l.b16 %v2586
      %v3161 = vunpack.c.l.b16 %v2596
      %v3162 = vunpack.c.l.b16 %v2606
      %v3163 = vunpack.c.l.b16 %v2616
      %v3164 = vunpack.c.l.b16 %v2630
      %v3165 = vunpack.c.l.b16 %v2640
      %v3166 = vunpack.c.l.b16 %v2650
      %v3167 = vunpack.c.l.b16 %v2660
      %v3168 = vunpack.c.l.b16 %v2674
      %v3169 = vunpack.c.l.b16 %v2684
      %v3170 = vunpack.c.l.b16 %v2694
      %v3171 = vunpack.c.l.b16 %v2704
      %v3172 = vunpack.c.l.b16 %v2718
      %v3173 = vunpack.c.l.b16 %v2728
      %v3174 = vunpack.c.l.b16 %v2738
      %v3175 = vunpack.c.l.b16 %v2748
      %v3176 = vunpack.c.l.b16 %v2762
      %v3177 = vunpack.c.l.b16 %v2772
      %v3178 = vunpack.c.l.b16 %v2782
      %v3179 = vunpack.c.l.b16 %v2792
      %v3180 = vunpack.c.l.b16 %v2806
      %v3181 = vunpack.c.l.b16 %v2816
      %v3182 = vunpack.c.l.b16 %v2826
      %v3183 = vunpack.c.l.b16 %v2836
      %v3184 = vunpack.c.l.b16 %v2850
      %v3185 = vunpack.c.l.b16 %v2860
      %v3186 = vunpack.c.l.b16 %v2870
      %v3187 = vunpack.c.l.b16 %v2880
      %v3188 = vunpack.c.l.b16 %v2894
      %v3189 = vunpack.c.l.b16 %v2904
      %v3190 = vunpack.c.l.b16 %v2914
      %v3191 = vunpack.c.l.b16 %v2924
      %v3192 = vunpack.c.l.b16 %v2938
      %v3193 = vunpack.c.l.b16 %v2948
      %v3194 = vunpack.c.l.b16 %v2958
      %v3195 = vunpack.c.l.b16 %v2968
      %v3196 = vunpack.c.l.b16 %v2982
      %v3197 = vunpack.c.l.b16 %v2992
      %v3198 = vunpack.c.l.b16 %v3002
      %v3199 = vunpack.c.l.b16 %v3012
      %v3200 = vunpack.c.l.b16 %v3026
      %v3201 = vunpack.c.l.b16 %v3036
      %v3202 = vunpack.c.l.b16 %v3046
      %v3203 = vunpack.c.l.b16 %v3056
      %v3204 = vunpack.c.l.b16 %v3070
      %v3205 = vunpack.c.l.b16 %v3080
      %v3206 = vunpack.c.l.b16 %v3090
      %v3207 = vunpack.c.l.b16 %v3100
      %v3208 = vunpack.c.l.b16 %v3114
      %v3209 = vunpack.c.l.b16 %v3124
      %v3210 = vunpack.c.l.b16 %v3134
      %v3211 = vunpack.c.l.b16 %v3144
      %v3212 = vpack.c.b16 %v3149, %v3148
      %v3213 = vpack.c.b16 %v3151, %v3150
      %v3214 = vpack.c.b16 %v3153, %v3152
      %v3215 = vpack.c.b16 %v3155, %v3154
      %v3216 = vpack.c.b16 %v3157, %v3156
      %v3217 = vpack.c.b16 %v3159, %v3158
      %v3218 = vpack.c.b16 %v3161, %v3160
      %v3219 = vpack.c.b16 %v3163, %v3162
      %v3220 = vpack.c.b16 %v3165, %v3164
      %v3221 = vpack.c.b16 %v3167, %v3166
      %v3222 = vpack.c.b16 %v3169, %v3168
      %v3223 = vpack.c.b16 %v3171, %v3170
      %v3224 = vpack.c.b16 %v3173, %v3172
      %v3225 = vpack.c.b16 %v3175, %v3174
      %v3226 = vpack.c.b16 %v3177, %v3176
      %v3227 = vpack.c.b16 %v3179, %v3178
      %v3228 = vpack.c.b16 %v3181, %v3180
      %v3229 = vpack.c.b16 %v3183, %v3182
      %v3230 = vpack.c.b16 %v3185, %v3184
      %v3231 = vpack.c.b16 %v3187, %v3186
      %v3232 = vpack.c.b16 %v3189, %v3188
      %v3233 = vpack.c.b16 %v3191, %v3190
      %v3234 = vpack.c.b16 %v3193, %v3192
      %v3235 = vpack.c.b16 %v3195, %v3194
      %v3236 = vpack.c.b16 %v3197, %v3196
      %v3237 = vpack.c.b16 %v3199, %v3198
      %v3238 = vpack.c.b16 %v3201, %v3200
      %v3239 = vpack.c.b16 %v3203, %v3202
      %v3240 = vpack.c.b16 %v3205, %v3204
      %v3241 = vpack.c.b16 %v3207, %v3206
      %v3242 = vpack.c.b16 %v3209, %v3208
      %v3243 = vpack.c.b16 %v3211, %v3210
      %v3246 = vunpack.c.l.b16 %v3146
      %v3247 = vunpack.c.l.b16 %v3147
      %v3248 = vpack.c.b16 %v3247, %v3246
      %v3250 = vsel %vm1543, %v3212, 0
      %v3253 = vsel %vm1543, %v3213, 0
      %v3256 = vsel %vm1543, %v3214, 0
      %v3259 = vsel %vm1543, %v3215, 0
      %v3262 = vsel %vm1543, %v3216, 0
      %v3265 = vsel %vm1543, %v3217, 0
      %v3268 = vsel %vm1543, %v3218, 0
      %v3271 = vsel %vm1543, %v3219, 0
      %v3274 = vsel %vm1543, %v3220, 0
      %v3277 = vsel %vm1543, %v3221, 0
      %v3280 = vsel %vm1543, %v3222, 0
      %v3283 = vsel %vm1543, %v3223, 0
      %v3286 = vsel %vm1543, %v3224, 0
      %v3289 = vsel %vm1543, %v3225, 0
      %v3292 = vsel %vm1543, %v3226, 0
      %v3295 = vsel %vm1543, %v3227, 0
      %v3298 = vsel %vm1543, %v3228, 0
      %v3301 = vsel %vm1543, %v3229, 0
      %v3304 = vsel %vm1543, %v3230, 0
      %v3307 = vsel %vm1543, %v3231, 0
      %v3310 = vsel %vm1543, %v3232, 0
      %v3313 = vsel %vm1543, %v3233, 0
      %v3316 = vsel %vm1543, %v3234, 0
      %v3319 = vsel %vm1543, %v3235, 0
      %v3322 = vsel %vm1543, %v3236, 0
      %v3325 = vsel %vm1543, %v3237, 0
      %v3328 = vsel %vm1543, %v3238, 0
      %v3331 = vsel %vm1543, %v3239, 0
      %v3334 = vsel %vm1543, %v3240, 0
      %v3337 = vsel %vm1543, %v3241, 0
      %v3340 = vsel %vm1543, %v3242, 0
      %v3343 = vsel %vm1543, %v3243, 0
      %v3346 = vsel %vm1640, %v3248, 0
      %3348 = vmatprep.subr.bf16.mxu0 0
      %3349 = vmatpush1.bf16.msra.mxu0 0
      %3350 = vmatprep.subr.bf16.mxu0 0
      %3351 = vmatpush1.bf16.msra.mxu0 0
      %3352 = vmatprep.subr.bf16.mxu0 0
      %3353 = vmatpush1.bf16.msra.mxu0 0
      %3354 = vmatprep.subr.bf16.mxu0 0
      %3355 = vmatpush1.bf16.msra.mxu0 0
      %3356 = vmatprep.subr.bf16.mxu0 0
      %3357 = vmatpush1.bf16.msra.mxu0 0
      %3358 = vmatprep.subr.bf16.mxu0 0
      %3359 = vmatpush1.bf16.msra.mxu0 0
      %3360 = vmatprep.subr.bf16.mxu0 0
      %3361 = vmatpush1.bf16.msra.mxu0 0
      %3362 = vmatprep.subr.bf16.mxu0 0
      %3363 = vmatpush1.bf16.msra.mxu0 %v3346
      %3364 = vmatprep.subr.bf16.mxu0 0
      %3365 = vmatpush2.bf16.msra.mxu0 0
      %3366 = vmatprep.subr.bf16.mxu0 0
      %3367 = vmatpush2.bf16.msra.mxu0 0
      %3368 = vmatprep.subr.bf16.mxu0 0
      %3369 = vmatpush2.bf16.msra.mxu0 0
      %3370 = vmatprep.subr.bf16.mxu0 0
      %3371 = vmatpush2.bf16.msra.mxu0 0
      %3372 = vmatprep.subr.bf16.mxu0 0
      %3373 = vmatpush2.bf16.msra.mxu0 0
      %3374 = vmatprep.subr.bf16.mxu0 0
      %3375 = vmatpush2.bf16.msra.mxu0 0
      %3376 = vmatprep.subr.bf16.mxu0 0
      %3377 = vmatpush2.bf16.msra.mxu0 0
      %3378 = vmatprep.subr.bf16.mxu0 0
      %3379 = vmatpush2.bf16.msra.mxu0 0
      %3380 = vmatprep.mubr.bf16.mxu0 0
      %3381 = vmatmul.mubr.bf16.gmra.mxu0 %v3250
      %v3382 = vpop.f32.mrf.mxu0
      %v3383 = vadd.f32 0.0, %v3382
      %v3384 = vpop.f32.mrf.mxu0
      %v3385 = vpop.f32.mrf.mxu0
      %v3386 = vadd.f32 0.0, %v3385
      %v3387 = vpop.f32.mrf.mxu0
      %3388 = vmatprep.mubr.bf16.mxu0 0
      %3389 = vmatmul.mubr.bf16.gmra.mxu0 %v3253
      %v3390 = vpop.f32.mrf.mxu0
      %v3391 = vpop.f32.mrf.mxu0
      %v3392 = vpop.f32.mrf.mxu0
      %v3393 = vpop.f32.mrf.mxu0
      %3394 = vmatprep.mubr.bf16.mxu0 0
      %3395 = vmatmul.mubr.bf16.gmra.mxu0 %v3256
      %v3396 = vpop.f32.mrf.mxu0
      %v3397 = vadd.f32 0.0, %v3396
      %v3398 = vpop.f32.mrf.mxu0
      %v3399 = vpop.f32.mrf.mxu0
      %v3400 = vadd.f32 0.0, %v3399
      %v3401 = vpop.f32.mrf.mxu0
      %3402 = vmatprep.mubr.bf16.mxu0 0
      %3403 = vmatmul.mubr.bf16.gmra.mxu0 %v3259
      %v3404 = vpop.f32.mrf.mxu0
      %v3405 = vpop.f32.mrf.mxu0
      %v3406 = vpop.f32.mrf.mxu0
      %v3407 = vpop.f32.mrf.mxu0
      %3408 = vmatprep.mubr.bf16.mxu0 0
      %3409 = vmatmul.mubr.bf16.gmra.mxu0 %v3262
      %v3410 = vpop.f32.mrf.mxu0
      %v3411 = vadd.f32 0.0, %v3410
      %v3412 = vpop.f32.mrf.mxu0
      %v3413 = vpop.f32.mrf.mxu0
      %v3414 = vadd.f32 0.0, %v3413
      %v3415 = vpop.f32.mrf.mxu0
      %3416 = vmatprep.mubr.bf16.mxu0 0
      %3417 = vmatmul.mubr.bf16.gmra.mxu0 %v3265
      %v3418 = vpop.f32.mrf.mxu0
      %v3419 = vpop.f32.mrf.mxu0
      %v3420 = vpop.f32.mrf.mxu0
      %v3421 = vpop.f32.mrf.mxu0
      %3422 = vmatprep.mubr.bf16.mxu0 0
      %3423 = vmatmul.mubr.bf16.gmra.mxu0 %v3268
      %v3424 = vpop.f32.mrf.mxu0
      %v3425 = vadd.f32 0.0, %v3424
      %v3426 = vpop.f32.mrf.mxu0
      %v3427 = vpop.f32.mrf.mxu0
      %v3428 = vadd.f32 0.0, %v3427
      %v3429 = vpop.f32.mrf.mxu0
      %3430 = vmatprep.mubr.bf16.mxu0 0
      %3431 = vmatmul.mubr.bf16.gmra.mxu0 %v3271
      %v3432 = vpop.f32.mrf.mxu0
      %v3433 = vpop.f32.mrf.mxu0
      %v3434 = vpop.f32.mrf.mxu0
      %v3435 = vpop.f32.mrf.mxu0
      %3436 = vmatprep.mubr.bf16.mxu0 0
      %3437 = vmatmul.mubr.bf16.gmra.mxu0 %v3274
      %v3438 = vpop.f32.mrf.mxu0
      %v3439 = vadd.f32 0.0, %v3438
      %v3440 = vpop.f32.mrf.mxu0
      %v3441 = vpop.f32.mrf.mxu0
      %v3442 = vadd.f32 0.0, %v3441
      %v3443 = vpop.f32.mrf.mxu0
      %3444 = vmatprep.mubr.bf16.mxu0 0
      %3445 = vmatmul.mubr.bf16.gmra.mxu0 %v3277
      %v3446 = vpop.f32.mrf.mxu0
      %v3447 = vpop.f32.mrf.mxu0
      %v3448 = vpop.f32.mrf.mxu0
      %v3449 = vpop.f32.mrf.mxu0
      %3450 = vmatprep.mubr.bf16.mxu0 0
      %3451 = vmatmul.mubr.bf16.gmra.mxu0 %v3280
      %v3452 = vpop.f32.mrf.mxu0
      %v3453 = vadd.f32 0.0, %v3452
      %v3454 = vpop.f32.mrf.mxu0
      %v3455 = vpop.f32.mrf.mxu0
      %v3456 = vadd.f32 0.0, %v3455
      %v3457 = vpop.f32.mrf.mxu0
      %3458 = vmatprep.mubr.bf16.mxu0 0
      %3459 = vmatmul.mubr.bf16.gmra.mxu0 %v3283
      %v3460 = vpop.f32.mrf.mxu0
      %v3461 = vpop.f32.mrf.mxu0
      %v3462 = vpop.f32.mrf.mxu0
      %v3463 = vpop.f32.mrf.mxu0
      %3464 = vmatprep.mubr.bf16.mxu0 0
      %3465 = vmatmul.mubr.bf16.gmra.mxu0 %v3286
      %v3466 = vpop.f32.mrf.mxu0
      %v3467 = vadd.f32 0.0, %v3466
      %v3468 = vpop.f32.mrf.mxu0
      %v3469 = vpop.f32.mrf.mxu0
      %v3470 = vadd.f32 0.0, %v3469
      %v3471 = vpop.f32.mrf.mxu0
      %3472 = vmatprep.mubr.bf16.mxu0 0
      %3473 = vmatmul.mubr.bf16.gmra.mxu0 %v3289
      %v3474 = vpop.f32.mrf.mxu0
      %v3475 = vpop.f32.mrf.mxu0
      %v3476 = vpop.f32.mrf.mxu0
      %v3477 = vpop.f32.mrf.mxu0
      %3478 = vmatprep.mubr.bf16.mxu0 0
      %3479 = vmatmul.mubr.bf16.gmra.mxu0 %v3292
      %v3480 = vpop.f32.mrf.mxu0
      %v3481 = vadd.f32 0.0, %v3480
      %v3482 = vpop.f32.mrf.mxu0
      %v3483 = vpop.f32.mrf.mxu0
      %v3484 = vadd.f32 0.0, %v3483
      %v3485 = vpop.f32.mrf.mxu0
      %3486 = vmatprep.mubr.bf16.mxu0 0
      %3487 = vmatmul.mubr.bf16.gmra.mxu0 %v3295
      %v3488 = vpop.f32.mrf.mxu0
      %v3489 = vpop.f32.mrf.mxu0
      %v3490 = vpop.f32.mrf.mxu0
      %v3491 = vpop.f32.mrf.mxu0
      %3492 = vmatprep.mubr.bf16.mxu0 0
      %3493 = vmatmul.mubr.bf16.gmra.mxu0 %v3298
      %v3494 = vpop.f32.mrf.mxu0
      %v3495 = vadd.f32 0.0, %v3494
      %v3496 = vpop.f32.mrf.mxu0
      %v3497 = vpop.f32.mrf.mxu0
      %v3498 = vadd.f32 0.0, %v3497
      %v3499 = vpop.f32.mrf.mxu0
      %3500 = vmatprep.mubr.bf16.mxu0 0
      %3501 = vmatmul.mubr.bf16.gmra.mxu0 %v3301
      %v3502 = vpop.f32.mrf.mxu0
      %v3503 = vpop.f32.mrf.mxu0
      %v3504 = vpop.f32.mrf.mxu0
      %v3505 = vpop.f32.mrf.mxu0
      %3506 = vmatprep.mubr.bf16.mxu0 0
      %3507 = vmatmul.mubr.bf16.gmra.mxu0 %v3304
      %v3508 = vpop.f32.mrf.mxu0
      %v3509 = vadd.f32 0.0, %v3508
      %v3510 = vpop.f32.mrf.mxu0
      %v3511 = vpop.f32.mrf.mxu0
      %v3512 = vadd.f32 0.0, %v3511
      %v3513 = vpop.f32.mrf.mxu0
      %3514 = vmatprep.mubr.bf16.mxu0 0
      %3515 = vmatmul.mubr.bf16.gmra.mxu0 %v3307
      %v3516 = vpop.f32.mrf.mxu0
      %v3517 = vpop.f32.mrf.mxu0
      %v3518 = vpop.f32.mrf.mxu0
      %v3519 = vpop.f32.mrf.mxu0
      %3520 = vmatprep.mubr.bf16.mxu0 0
      %3521 = vmatmul.mubr.bf16.gmra.mxu0 %v3310
      %v3522 = vpop.f32.mrf.mxu0
      %v3523 = vadd.f32 0.0, %v3522
      %v3524 = vpop.f32.mrf.mxu0
      %v3525 = vpop.f32.mrf.mxu0
      %v3526 = vadd.f32 0.0, %v3525
      %v3527 = vpop.f32.mrf.mxu0
      %3528 = vmatprep.mubr.bf16.mxu0 0
      %3529 = vmatmul.mubr.bf16.gmra.mxu0 %v3313
      %v3530 = vpop.f32.mrf.mxu0
      %v3531 = vpop.f32.mrf.mxu0
      %v3532 = vpop.f32.mrf.mxu0
      %v3533 = vpop.f32.mrf.mxu0
      %3534 = vmatprep.mubr.bf16.mxu0 0
      %3535 = vmatmul.mubr.bf16.gmra.mxu0 %v3316
      %v3536 = vpop.f32.mrf.mxu0
      %v3537 = vadd.f32 0.0, %v3536
      %v3538 = vpop.f32.mrf.mxu0
      %v3539 = vpop.f32.mrf.mxu0
      %v3540 = vadd.f32 0.0, %v3539
      %v3541 = vpop.f32.mrf.mxu0
      %3542 = vmatprep.mubr.bf16.mxu0 0
      %3543 = vmatmul.mubr.bf16.gmra.mxu0 %v3319
      %v3544 = vpop.f32.mrf.mxu0
      %v3545 = vpop.f32.mrf.mxu0
      %v3546 = vpop.f32.mrf.mxu0
      %v3547 = vpop.f32.mrf.mxu0
      %3548 = vmatprep.mubr.bf16.mxu0 0
      %3549 = vmatmul.mubr.bf16.gmra.mxu0 %v3322
      %v3550 = vpop.f32.mrf.mxu0
      %v3551 = vadd.f32 0.0, %v3550
      %v3552 = vpop.f32.mrf.mxu0
      %v3553 = vpop.f32.mrf.mxu0
      %v3554 = vadd.f32 0.0, %v3553
      %v3555 = vpop.f32.mrf.mxu0
      %3556 = vmatprep.mubr.bf16.mxu0 0
      %3557 = vmatmul.mubr.bf16.gmra.mxu0 %v3325
      %v3558 = vpop.f32.mrf.mxu0
      %v3559 = vpop.f32.mrf.mxu0
      %v3560 = vpop.f32.mrf.mxu0
      %v3561 = vpop.f32.mrf.mxu0
      %3562 = vmatprep.mubr.bf16.mxu0 0
      %3563 = vmatmul.mubr.bf16.gmra.mxu0 %v3328
      %v3564 = vpop.f32.mrf.mxu0
      %v3565 = vadd.f32 0.0, %v3564
      %v3566 = vpop.f32.mrf.mxu0
      %v3567 = vpop.f32.mrf.mxu0
      %v3568 = vadd.f32 0.0, %v3567
      %v3569 = vpop.f32.mrf.mxu0
      %3570 = vmatprep.mubr.bf16.mxu0 0
      %3571 = vmatmul.mubr.bf16.gmra.mxu0 %v3331
      %v3572 = vpop.f32.mrf.mxu0
      %v3573 = vpop.f32.mrf.mxu0
      %v3574 = vpop.f32.mrf.mxu0
      %v3575 = vpop.f32.mrf.mxu0
      %3576 = vmatprep.mubr.bf16.mxu0 0
      %3577 = vmatmul.mubr.bf16.gmra.mxu0 %v3334
      %v3578 = vpop.f32.mrf.mxu0
      %v3579 = vadd.f32 0.0, %v3578
      %v3580 = vpop.f32.mrf.mxu0
      %v3581 = vpop.f32.mrf.mxu0
      %v3582 = vadd.f32 0.0, %v3581
      %v3583 = vpop.f32.mrf.mxu0
      %3584 = vmatprep.mubr.bf16.mxu0 0
      %3585 = vmatmul.mubr.bf16.gmra.mxu0 %v3337
      %v3586 = vpop.f32.mrf.mxu0
      %v3587 = vpop.f32.mrf.mxu0
      %v3588 = vpop.f32.mrf.mxu0
      %v3589 = vpop.f32.mrf.mxu0
      %3590 = vmatprep.mubr.bf16.mxu0 0
      %3591 = vmatmul.mubr.bf16.gmra.mxu0 %v3340
      %v3592 = vpop.f32.mrf.mxu0
      %v3593 = vadd.f32 0.0, %v3592
      %v3594 = vpop.f32.mrf.mxu0
      %v3595 = vpop.f32.mrf.mxu0
      %v3596 = vadd.f32 0.0, %v3595
      %v3597 = vpop.f32.mrf.mxu0
      %3598 = vmatprep.mubr.bf16.mxu0 0
      %3599 = vmatmul.mubr.bf16.gmra.mxu0 %v3343
      %v3600 = vpop.f32.mrf.mxu0
      %v3601 = vpop.f32.mrf.mxu0
      %v3602 = vpop.f32.mrf.mxu0
      %v3603 = vpop.f32.mrf.mxu0
      %3604 = vdwg.mxu0
      %v3605 = vadd.f32 %v2136, %v3383
      %v3606 = vadd.f32 %v2139, %v3386
      %v3607 = vadd.f32 %v2150, %v3397
      %v3608 = vadd.f32 %v2153, %v3400
      %v3609 = vadd.f32 %v2164, %v3411
      %v3610 = vadd.f32 %v2167, %v3414
      %v3611 = vadd.f32 %v2178, %v3425
      %v3612 = vadd.f32 %v2181, %v3428
      %v3613 = vadd.f32 %v2192, %v3439
      %v3614 = vadd.f32 %v2195, %v3442
      %v3615 = vadd.f32 %v2206, %v3453
      %v3616 = vadd.f32 %v2209, %v3456
      %v3617 = vadd.f32 %v2220, %v3467
      %v3618 = vadd.f32 %v2223, %v3470
      %v3619 = vadd.f32 %v2234, %v3481
      %v3620 = vadd.f32 %v2237, %v3484
      %v3621 = vadd.f32 %v2248, %v3495
      %v3622 = vadd.f32 %v2251, %v3498
      %v3623 = vadd.f32 %v2262, %v3509
      %v3624 = vadd.f32 %v2265, %v3512
      %v3625 = vadd.f32 %v2276, %v3523
      %v3626 = vadd.f32 %v2279, %v3526
      %v3627 = vadd.f32 %v2290, %v3537
      %v3628 = vadd.f32 %v2293, %v3540
      %v3629 = vadd.f32 %v2304, %v3551
      %v3630 = vadd.f32 %v2307, %v3554
      %v3631 = vadd.f32 %v2318, %v3565
      %v3632 = vadd.f32 %v2321, %v3568
      %v3633 = vadd.f32 %v2332, %v3579
      %v3634 = vadd.f32 %v2335, %v3582
      %v3635 = vadd.f32 %v2346, %v3593
      %v3636 = vadd.f32 %v2349, %v3596
      %v3637 = vld [vmem:[%s2] sm:$0x1]
      %v3639 = vlaneseq
      %v3640 = vshrl.u32 %v3639, 7
      %v3641 = vsub.s32 0, %v3640
      %v3642 = vrot.slane %v3637, %v3641
      %v3644 = vadd.f32 %v3605, %v3642
      %v3645 = vadd.f32 %v3606, %v3642
      %v3646 = vadd.f32 %v3607, %v3642
      %v3647 = vadd.f32 %v3608, %v3642
      %v3648 = vadd.f32 %v3609, %v3642
      %v3649 = vadd.f32 %v3610, %v3642
      %v3650 = vadd.f32 %v3611, %v3642
      %v3651 = vadd.f32 %v3612, %v3642
      %v3652 = vadd.f32 %v3613, %v3642
      %v3653 = vadd.f32 %v3614, %v3642
      %v3654 = vadd.f32 %v3615, %v3642
      %v3655 = vadd.f32 %v3616, %v3642
      %v3656 = vadd.f32 %v3617, %v3642
      %v3657 = vadd.f32 %v3618, %v3642
      %v3658 = vadd.f32 %v3619, %v3642
      %v3659 = vadd.f32 %v3620, %v3642
      %v3660 = vadd.f32 %v3621, %v3642
      %v3661 = vadd.f32 %v3622, %v3642
      %v3662 = vadd.f32 %v3623, %v3642
      %v3663 = vadd.f32 %v3624, %v3642
      %v3664 = vadd.f32 %v3625, %v3642
      %v3665 = vadd.f32 %v3626, %v3642
      %v3666 = vadd.f32 %v3627, %v3642
      %v3667 = vadd.f32 %v3628, %v3642
      %v3668 = vadd.f32 %v3629, %v3642
      %v3669 = vadd.f32 %v3630, %v3642
      %v3670 = vadd.f32 %v3631, %v3642
      %v3671 = vadd.f32 %v3632, %v3642
      %v3672 = vadd.f32 %v3633, %v3642
      %v3673 = vadd.f32 %v3634, %v3642
      %v3674 = vadd.f32 %v3635, %v3642
      %v3675 = vadd.f32 %v3636, %v3642
      %v3676 = vmul.f32 %v3644, 0.01
      %v3677 = vmul.f32 %v3645, 0.01
      %v3678 = vmul.f32 %v3646, 0.01
      %v3679 = vmul.f32 %v3647, 0.01
      %v3680 = vmul.f32 %v3648, 0.01
      %v3681 = vmul.f32 %v3649, 0.01
      %v3682 = vmul.f32 %v3650, 0.01
      %v3683 = vmul.f32 %v3651, 0.01
      %v3684 = vmul.f32 %v3652, 0.01
      %v3685 = vmul.f32 %v3653, 0.01
      %v3686 = vmul.f32 %v3654, 0.01
      %v3687 = vmul.f32 %v3655, 0.01
      %v3688 = vmul.f32 %v3656, 0.01
      %v3689 = vmul.f32 %v3657, 0.01
      %v3690 = vmul.f32 %v3658, 0.01
      %v3691 = vmul.f32 %v3659, 0.01
      %v3692 = vmul.f32 %v3660, 0.01
      %v3693 = vmul.f32 %v3661, 0.01
      %v3694 = vmul.f32 %v3662, 0.01
      %v3695 = vmul.f32 %v3663, 0.01
      %v3696 = vmul.f32 %v3664, 0.01
      %v3697 = vmul.f32 %v3665, 0.01
      %v3698 = vmul.f32 %v3666, 0.01
      %v3699 = vmul.f32 %v3667, 0.01
      %v3700 = vmul.f32 %v3668, 0.01
      %v3701 = vmul.f32 %v3669, 0.01
      %v3702 = vmul.f32 %v3670, 0.01
      %v3703 = vmul.f32 %v3671, 0.01
      %v3704 = vmul.f32 %v3672, 0.01
      %v3705 = vmul.f32 %v3673, 0.01
      %v3706 = vmul.f32 %v3674, 0.01
      %v3707 = vmul.f32 %v3675, 0.01
      %v3708 = vmax.f32 %v3644, %v3676
      %v3709 = vmax.f32 %v3645, %v3677
      %v3710 = vmax.f32 %v3646, %v3678
      %v3711 = vmax.f32 %v3647, %v3679
      %v3712 = vmax.f32 %v3648, %v3680
      %v3713 = vmax.f32 %v3649, %v3681
      %v3714 = vmax.f32 %v3650, %v3682
      %v3715 = vmax.f32 %v3651, %v3683
      %v3716 = vmax.f32 %v3652, %v3684
      %v3717 = vmax.f32 %v3653, %v3685
      %v3718 = vmax.f32 %v3654, %v3686
      %v3719 = vmax.f32 %v3655, %v3687
      %v3720 = vmax.f32 %v3656, %v3688
      %v3721 = vmax.f32 %v3657, %v3689
      %v3722 = vmax.f32 %v3658, %v3690
      %v3723 = vmax.f32 %v3659, %v3691
      %v3724 = vmax.f32 %v3660, %v3692
      %v3725 = vmax.f32 %v3661, %v3693
      %v3726 = vmax.f32 %v3662, %v3694
      %v3727 = vmax.f32 %v3663, %v3695
      %v3728 = vmax.f32 %v3664, %v3696
      %v3729 = vmax.f32 %v3665, %v3697
      %v3730 = vmax.f32 %v3666, %v3698
      %v3731 = vmax.f32 %v3667, %v3699
      %v3732 = vmax.f32 %v3668, %v3700
      %v3733 = vmax.f32 %v3669, %v3701
      %v3734 = vmax.f32 %v3670, %v3702
      %v3735 = vmax.f32 %v3671, %v3703
      %v3736 = vmax.f32 %v3672, %v3704
      %v3737 = vmax.f32 %v3673, %v3705
      %v3738 = vmax.f32 %v3674, %v3706
      %v3739 = vmax.f32 %v3675, %v3707
      %v3740 = vpack.c.bf16 %v3709, %v3708
      %v3741 = vpack.c.bf16 %v3711, %v3710
      %v3742 = vpack.c.bf16 %v3713, %v3712
      %v3743 = vpack.c.bf16 %v3715, %v3714
      %v3744 = vpack.c.bf16 %v3717, %v3716
      %v3745 = vpack.c.bf16 %v3719, %v3718
      %v3746 = vpack.c.bf16 %v3721, %v3720
      %v3747 = vpack.c.bf16 %v3723, %v3722
      %v3748 = vpack.c.bf16 %v3725, %v3724
      %v3749 = vpack.c.bf16 %v3727, %v3726
      %v3750 = vpack.c.bf16 %v3729, %v3728
      %v3751 = vpack.c.bf16 %v3731, %v3730
      %v3752 = vpack.c.bf16 %v3733, %v3732
      %v3753 = vpack.c.bf16 %v3735, %v3734
      %v3754 = vpack.c.bf16 %v3737, %v3736
      %v3755 = vpack.c.bf16 %v3739, %v3738
      %vm3756 = vcmask 191488
      %3757 = vst.msk [vmem:[#allocation3] sm:$0xf] %vm3756, 0
      %3758 = vst.msk [vmem:[#allocation3 + $0x18] sm:$0xf] %vm3756, 0
      %3759 = vst.msk [vmem:[#allocation3 + $0x30] sm:$0xf] %vm3756, 0
      %3760 = vst.msk [vmem:[#allocation3 + $0x48] sm:$0xf] %vm3756, 0
      %3761 = vst.msk [vmem:[#allocation3 + $0x60] sm:$0xf] %vm3756, 0
      %3762 = vst.msk [vmem:[#allocation3 + $0x78] sm:$0xf] %vm3756, 0
      %3763 = vst.msk [vmem:[#allocation3 + $0x90] sm:$0xf] %vm3756, 0
      %3764 = vst.msk [vmem:[#allocation3 + $0xa8] sm:$0xf] %vm3756, 0
      %3765 = vst.msk [vmem:[#allocation3 + $0xc0] sm:$0xf] %vm3756, 0
      %3766 = vst.msk [vmem:[#allocation3 + $0xd8] sm:$0xf] %vm3756, 0
      %3767 = vst.msk [vmem:[#allocation3 + $0xf0] sm:$0xf] %vm3756, 0
      %3768 = vst.msk [vmem:[#allocation3 + $0x108] sm:$0xf] %vm3756, 0
      %3769 = vst.msk [vmem:[#allocation3 + $0x120] sm:$0xf] %vm3756, 0
      %3770 = vst.msk [vmem:[#allocation3 + $0x138] sm:$0xf] %vm3756, 0
      %3771 = vst.msk [vmem:[#allocation3 + $0x150] sm:$0xf] %vm3756, 0
      %3772 = vst.msk [vmem:[#allocation3 + $0x168] sm:$0xf] %vm3756, 0
      %3773 = vst.msk [vmem:[#allocation3 + $0xc] sm:$0xf] %vm3756, 0
      %3774 = vst.msk [vmem:[#allocation3 + $0x10] sm:$0xf] %vm3756, 0
      %3775 = vst.msk [vmem:[#allocation3 + $0x14] sm:$0xf] %vm3756, 0
      %3776 = vst.msk [vmem:[#allocation3 + $0x24] sm:$0xf] %vm3756, 0
      %3777 = vst.msk [vmem:[#allocation3 + $0x28] sm:$0xf] %vm3756, 0
      %3778 = vst.msk [vmem:[#allocation3 + $0x2c] sm:$0xf] %vm3756, 0
      %3779 = vst.msk [vmem:[#allocation3 + $0x3c] sm:$0xf] %vm3756, 0
      %3780 = vst.msk [vmem:[#allocation3 + $0x40] sm:$0xf] %vm3756, 0
      %3781 = vst.msk [vmem:[#allocation3 + $0x44] sm:$0xf] %vm3756, 0
      %3782 = vst.msk [vmem:[#allocation3 + $0x54] sm:$0xf] %vm3756, 0
      %3783 = vst.msk [vmem:[#allocation3 + $0x58] sm:$0xf] %vm3756, 0
      %3784 = vst.msk [vmem:[#allocation3 + $0x5c] sm:$0xf] %vm3756, 0
      %3785 = vst.msk [vmem:[#allocation3 + $0x6c] sm:$0xf] %vm3756, 0
      %3786 = vst.msk [vmem:[#allocation3 + $0x70] sm:$0xf] %vm3756, 0
      %3787 = vst.msk [vmem:[#allocation3 + $0x74] sm:$0xf] %vm3756, 0
      %3788 = vst.msk [vmem:[#allocation3 + $0x84] sm:$0xf] %vm3756, 0
      %3789 = vst.msk [vmem:[#allocation3 + $0x88] sm:$0xf] %vm3756, 0
      %3790 = vst.msk [vmem:[#allocation3 + $0x8c] sm:$0xf] %vm3756, 0
      %3791 = vst.msk [vmem:[#allocation3 + $0x9c] sm:$0xf] %vm3756, 0
      %3792 = vst.msk [vmem:[#allocation3 + $0xa0] sm:$0xf] %vm3756, 0
      %3793 = vst.msk [vmem:[#allocation3 + $0xa4] sm:$0xf] %vm3756, 0
      %3794 = vst.msk [vmem:[#allocation3 + $0xb4] sm:$0xf] %vm3756, 0
      %3795 = vst.msk [vmem:[#allocation3 + $0xb8] sm:$0xf] %vm3756, 0
      %3796 = vst.msk [vmem:[#allocation3 + $0xbc] sm:$0xf] %vm3756, 0
      %3797 = vst.msk [vmem:[#allocation3 + $0xcc] sm:$0xf] %vm3756, 0
      %3798 = vst.msk [vmem:[#allocation3 + $0xd0] sm:$0xf] %vm3756, 0
      %3799 = vst.msk [vmem:[#allocation3 + $0xd4] sm:$0xf] %vm3756, 0
      %3800 = vst.msk [vmem:[#allocation3 + $0xe4] sm:$0xf] %vm3756, 0
      %3801 = vst.msk [vmem:[#allocation3 + $0xe8] sm:$0xf] %vm3756, 0
      %3802 = vst.msk [vmem:[#allocation3 + $0xec] sm:$0xf] %vm3756, 0
      %3803 = vst.msk [vmem:[#allocation3 + $0xfc] sm:$0xf] %vm3756, 0
      %3804 = vst.msk [vmem:[#allocation3 + $0x100] sm:$0xf] %vm3756, 0
      %3805 = vst.msk [vmem:[#allocation3 + $0x104] sm:$0xf] %vm3756, 0
      %3806 = vst.msk [vmem:[#allocation3 + $0x114] sm:$0xf] %vm3756, 0
      %3807 = vst.msk [vmem:[#allocation3 + $0x118] sm:$0xf] %vm3756, 0
      %3808 = vst.msk [vmem:[#allocation3 + $0x11c] sm:$0xf] %vm3756, 0
      %3809 = vst.msk [vmem:[#allocation3 + $0x12c] sm:$0xf] %vm3756, 0
      %3810 = vst.msk [vmem:[#allocation3 + $0x130] sm:$0xf] %vm3756, 0
      %3811 = vst.msk [vmem:[#allocation3 + $0x134] sm:$0xf] %vm3756, 0
      %3812 = vst.msk [vmem:[#allocation3 + $0x144] sm:$0xf] %vm3756, 0
      %3813 = vst.msk [vmem:[#allocation3 + $0x148] sm:$0xf] %vm3756, 0
      %3814 = vst.msk [vmem:[#allocation3 + $0x14c] sm:$0xf] %vm3756, 0
      %3815 = vst.msk [vmem:[#allocation3 + $0x15c] sm:$0xf] %vm3756, 0
      %3816 = vst.msk [vmem:[#allocation3 + $0x160] sm:$0xf] %vm3756, 0
      %3817 = vst.msk [vmem:[#allocation3 + $0x164] sm:$0xf] %vm3756, 0
      %3818 = vst.msk [vmem:[#allocation3 + $0x174] sm:$0xf] %vm3756, 0
      %3819 = vst.msk [vmem:[#allocation3 + $0x178] sm:$0xf] %vm3756, 0
      %3820 = vst.msk [vmem:[#allocation3 + $0x17c] sm:$0xf] %vm3756, 0
      %vm3821 = vcmask 60416
      %3822 = vst.msk [vmem:[#allocation3] sm:$0xf] %vm3821, 0
      %3823 = vst.msk [vmem:[#allocation3 + $0x4] sm:$0xf] %vm3821, 0
      %3824 = vst.msk [vmem:[#allocation3 + $0x8] sm:$0xf] %vm3821, 0
      %3825 = vst.msk [vmem:[#allocation3 + $0xc] sm:$0xf] %vm3821, 0
      %3826 = vst.msk [vmem:[#allocation3 + $0x10] sm:$0xf] %vm3821, 0
      %3827 = vst.msk [vmem:[#allocation3 + $0x14] sm:$0xf] %vm3821, 0
      %v3843 = vunpack.c.l.b16 %v3740
      %v3844 = vunpack.c.h.b16 %v3740
      %v3845 = vunpack.c.l.b16 %v3741
      %v3846 = vunpack.c.h.b16 %v3741
      %v3847 = vunpack.c.l.b16 %v3742
      %v3848 = vunpack.c.h.b16 %v3742
      %v3849 = vunpack.c.l.b16 %v3743
      %v3850 = vunpack.c.h.b16 %v3743
      %v3851 = vunpack.c.l.b16 %v3744
      %v3852 = vunpack.c.h.b16 %v3744
      %v3853 = vunpack.c.l.b16 %v3745
      %v3854 = vunpack.c.h.b16 %v3745
      %v3855 = vunpack.c.l.b16 %v3746
      %v3856 = vunpack.c.h.b16 %v3746
      %v3857 = vunpack.c.l.b16 %v3747
      %v3858 = vunpack.c.h.b16 %v3747
      %v3859 = vunpack.c.l.b16 %v3748
      %v3860 = vunpack.c.h.b16 %v3748
      %v3861 = vunpack.c.l.b16 %v3749
      %v3862 = vunpack.c.h.b16 %v3749
      %v3863 = vunpack.c.l.b16 %v3750
      %v3864 = vunpack.c.h.b16 %v3750
      %v3865 = vunpack.c.l.b16 %v3751
      %v3866 = vunpack.c.h.b16 %v3751
      %v3867 = vunpack.c.l.b16 %v3752
      %v3868 = vunpack.c.h.b16 %v3752
      %v3869 = vunpack.c.l.b16 %v3753
      %v3870 = vunpack.c.h.b16 %v3753
      %v3871 = vunpack.c.l.b16 %v3754
      %v3872 = vunpack.c.h.b16 %v3754
      %v3873 = vpack.c.b16 %v3843, %v3843
      %v3874 = vpack.c.b16 %v3844, %v3844
      %v3875 = vpack.c.b16 %v3845, %v3845
      %v3876 = vpack.c.b16 %v3846, %v3846
      %v3877 = vpack.c.b16 %v3847, %v3847
      %v3878 = vpack.c.b16 %v3848, %v3848
      %v3879 = vpack.c.b16 %v3849, %v3849
      %v3880 = vpack.c.b16 %v3850, %v3850
      %v3881 = vpack.c.b16 %v3851, %v3851
      %v3882 = vpack.c.b16 %v3852, %v3852
      %v3883 = vpack.c.b16 %v3853, %v3853
      %v3884 = vpack.c.b16 %v3854, %v3854
      %v3885 = vpack.c.b16 %v3855, %v3855
      %v3886 = vpack.c.b16 %v3856, %v3856
      %v3887 = vpack.c.b16 %v3857, %v3857
      %v3888 = vpack.c.b16 %v3858, %v3858
      %v3889 = vpack.c.b16 %v3859, %v3859
      %v3890 = vpack.c.b16 %v3860, %v3860
      %v3891 = vpack.c.b16 %v3861, %v3861
      %v3892 = vpack.c.b16 %v3862, %v3862
      %v3893 = vpack.c.b16 %v3863, %v3863
      %v3894 = vpack.c.b16 %v3864, %v3864
      %v3895 = vpack.c.b16 %v3865, %v3865
      %v3896 = vpack.c.b16 %v3866, %v3866
      %v3897 = vpack.c.b16 %v3867, %v3867
      %v3898 = vpack.c.b16 %v3868, %v3868
      %v3899 = vpack.c.b16 %v3869, %v3869
      %v3900 = vpack.c.b16 %v3870, %v3870
      %v3901 = vpack.c.b16 %v3871, %v3871
      %v3902 = vpack.c.b16 %v3872, %v3872
      %s3933 = scalar_lea.vmem [#allocation3], 24
      %3934 = vst.msk [vmem:[%s3933 + $0x4] sm:$0xf] %vm3821, %v3873
      %3935 = vst.msk [vmem:[%s3933 + $0x8] sm:$0xf] %vm3821, %v3874
      %3936 = vst.msk [vmem:[%s3933 + $0x1c] sm:$0xf] %vm3821, %v3875
      %3937 = vst.msk [vmem:[%s3933 + $0x20] sm:$0xf] %vm3821, %v3876
      %3938 = vst.msk [vmem:[%s3933 + $0x34] sm:$0xf] %vm3821, %v3877
      %3939 = vst.msk [vmem:[%s3933 + $0x38] sm:$0xf] %vm3821, %v3878
      %3940 = vst.msk [vmem:[%s3933 + $0x4c] sm:$0xf] %vm3821, %v3879
      %3941 = vst.msk [vmem:[%s3933 + $0x50] sm:$0xf] %vm3821, %v3880
      %3942 = vst.msk [vmem:[%s3933 + $0x64] sm:$0xf] %vm3821, %v3881
      %3943 = vst.msk [vmem:[%s3933 + $0x68] sm:$0xf] %vm3821, %v3882
      %3944 = vst.msk [vmem:[%s3933 + $0x7c] sm:$0xf] %vm3821, %v3883
      %3945 = vst.msk [vmem:[%s3933 + $0x80] sm:$0xf] %vm3821, %v3884
      %3946 = vst.msk [vmem:[%s3933 + $0x94] sm:$0xf] %vm3821, %v3885
      %3947 = vst.msk [vmem:[%s3933 + $0x98] sm:$0xf] %vm3821, %v3886
      %3948 = vst.msk [vmem:[%s3933 + $0xac] sm:$0xf] %vm3821, %v3887
      %3949 = vst.msk [vmem:[%s3933 + $0xb0] sm:$0xf] %vm3821, %v3888
      %3950 = vst.msk [vmem:[%s3933 + $0xc4] sm:$0xf] %vm3821, %v3889
      %3951 = vst.msk [vmem:[%s3933 + $0xc8] sm:$0xf] %vm3821, %v3890
      %3952 = vst.msk [vmem:[%s3933 + $0xdc] sm:$0xf] %vm3821, %v3891
      %3953 = vst.msk [vmem:[%s3933 + $0xe0] sm:$0xf] %vm3821, %v3892
      %3954 = vst.msk [vmem:[%s3933 + $0xf4] sm:$0xf] %vm3821, %v3893
      %3955 = vst.msk [vmem:[%s3933 + $0xf8] sm:$0xf] %vm3821, %v3894
      %3956 = vst.msk [vmem:[%s3933 + $0x10c] sm:$0xf] %vm3821, %v3895
      %3957 = vst.msk [vmem:[%s3933 + $0x110] sm:$0xf] %vm3821, %v3896
      %3958 = vst.msk [vmem:[%s3933 + $0x124] sm:$0xf] %vm3821, %v3897
      %3959 = vst.msk [vmem:[%s3933 + $0x128] sm:$0xf] %vm3821, %v3898
      %3960 = vst.msk [vmem:[%s3933 + $0x13c] sm:$0xf] %vm3821, %v3899
      %3961 = vst.msk [vmem:[%s3933 + $0x140] sm:$0xf] %vm3821, %v3900
      %3962 = vst.msk [vmem:[%s3933 + $0x154] sm:$0xf] %vm3821, %v3901
      %3963 = vst.msk [vmem:[%s3933 + $0x158] sm:$0xf] %vm3821, %v3902
      %v3965 = vunpack.c.l.b16 %v3755
      %v3966 = vunpack.c.h.b16 %v3755
      %v3967 = vpack.c.b16 %v3965, %v3965
      %v3968 = vpack.c.b16 %v3966, %v3966
      %3969 = vrot.lane.b32.xlu0 %v3873, 8
      %v3970 = vpop.permute.xlu0 %3969
      %3971 = vrot.lane.b32.xlu0 %v3874, 8
      %v3972 = vpop.permute.xlu0 %3971
      %3973 = vrot.lane.b32.xlu0 %v3875, 8
      %v3974 = vpop.permute.xlu0 %3973
      %3975 = vrot.lane.b32.xlu0 %v3876, 8
      %v3976 = vpop.permute.xlu0 %3975
      %3977 = vrot.lane.b32.xlu0 %v3877, 8
      %v3978 = vpop.permute.xlu0 %3977
      %3979 = vrot.lane.b32.xlu0 %v3878, 8
      %v3980 = vpop.permute.xlu0 %3979
      %3981 = vrot.lane.b32.xlu0 %v3879, 8
      %v3982 = vpop.permute.xlu0 %3981
      %3983 = vrot.lane.b32.xlu0 %v3880, 8
      %v3984 = vpop.permute.xlu0 %3983
      %3985 = vrot.lane.b32.xlu0 %v3881, 8
      %v3986 = vpop.permute.xlu0 %3985
      %3987 = vrot.lane.b32.xlu0 %v3882, 8
      %v3988 = vpop.permute.xlu0 %3987
      %3989 = vrot.lane.b32.xlu0 %v3883, 8
      %v3990 = vpop.permute.xlu0 %3989
      %3991 = vrot.lane.b32.xlu0 %v3884, 8
      %v3992 = vpop.permute.xlu0 %3991
      %3993 = vrot.lane.b32.xlu0 %v3885, 8
      %v3994 = vpop.permute.xlu0 %3993
      %3995 = vrot.lane.b32.xlu0 %v3886, 8
      %v3996 = vpop.permute.xlu0 %3995
      %3997 = vrot.lane.b32.xlu0 %v3887, 8
      %v3998 = vpop.permute.xlu0 %3997
      %3999 = vrot.lane.b32.xlu0 %v3888, 8
      %v4000 = vpop.permute.xlu0 %3999
      %4001 = vrot.lane.b32.xlu0 %v3889, 8
      %v4002 = vpop.permute.xlu0 %4001
      %4003 = vrot.lane.b32.xlu0 %v3890, 8
      %v4004 = vpop.permute.xlu0 %4003
      %4005 = vrot.lane.b32.xlu0 %v3891, 8
      %v4006 = vpop.permute.xlu0 %4005
      %4007 = vrot.lane.b32.xlu0 %v3892, 8
      %v4008 = vpop.permute.xlu0 %4007
      %4009 = vrot.lane.b32.xlu0 %v3893, 8
      %v4010 = vpop.permute.xlu0 %4009
      %4011 = vrot.lane.b32.xlu0 %v3894, 8
      %v4012 = vpop.permute.xlu0 %4011
      %4013 = vrot.lane.b32.xlu0 %v3895, 8
      %v4014 = vpop.permute.xlu0 %4013
      %4015 = vrot.lane.b32.xlu0 %v3896, 8
      %v4016 = vpop.permute.xlu0 %4015
      %4017 = vrot.lane.b32.xlu0 %v3897, 8
      %v4018 = vpop.permute.xlu0 %4017
      %4019 = vrot.lane.b32.xlu0 %v3898, 8
      %v4020 = vpop.permute.xlu0 %4019
      %4021 = vrot.lane.b32.xlu0 %v3899, 8
      %v4022 = vpop.permute.xlu0 %4021
      %4023 = vrot.lane.b32.xlu0 %v3900, 8
      %v4024 = vpop.permute.xlu0 %4023
      %4025 = vrot.lane.b32.xlu0 %v3901, 8
      %v4026 = vpop.permute.xlu0 %4025
      %4027 = vrot.lane.b32.xlu0 %v3902, 8
      %v4028 = vpop.permute.xlu0 %4027
      %4029 = vrot.lane.b32.xlu0 %v3967, 8
      %v4030 = vpop.permute.xlu0 %4029
      %4031 = vrot.lane.b32.xlu0 %v3968, 8
      %v4032 = vpop.permute.xlu0 %4031
      %vm4065 = vcmask 126016
      %4066 = vst.msk [vmem:[#allocation3 + $0x4] sm:$0xf] %vm4065, %v3970
      %4067 = vst.msk [vmem:[#allocation3 + $0x8] sm:$0xf] %vm4065, %v3972
      %4068 = vst.msk [vmem:[#allocation3 + $0x1c] sm:$0xf] %vm4065, %v3974
      %4069 = vst.msk [vmem:[#allocation3 + $0x20] sm:$0xf] %vm4065, %v3976
      %4070 = vst.msk [vmem:[#allocation3 + $0x34] sm:$0xf] %vm4065, %v3978
      %4071 = vst.msk [vmem:[#allocation3 + $0x38] sm:$0xf] %vm4065, %v3980
      %4072 = vst.msk [vmem:[#allocation3 + $0x4c] sm:$0xf] %vm4065, %v3982
      %4073 = vst.msk [vmem:[#allocation3 + $0x50] sm:$0xf] %vm4065, %v3984
      %4074 = vst.msk [vmem:[#allocation3 + $0x64] sm:$0xf] %vm4065, %v3986
      %4075 = vst.msk [vmem:[#allocation3 + $0x68] sm:$0xf] %vm4065, %v3988
      %4076 = vst.msk [vmem:[#allocation3 + $0x7c] sm:$0xf] %vm4065, %v3990
      %4077 = vst.msk [vmem:[#allocation3 + $0x80] sm:$0xf] %vm4065, %v3992
      %4078 = vst.msk [vmem:[#allocation3 + $0x94] sm:$0xf] %vm4065, %v3994
      %4079 = vst.msk [vmem:[#allocation3 + $0x98] sm:$0xf] %vm4065, %v3996
      %4080 = vst.msk [vmem:[#allocation3 + $0xac] sm:$0xf] %vm4065, %v3998
      %4081 = vst.msk [vmem:[#allocation3 + $0xb0] sm:$0xf] %vm4065, %v4000
      %4082 = vst.msk [vmem:[#allocation3 + $0xc4] sm:$0xf] %vm4065, %v4002
      %4083 = vst.msk [vmem:[#allocation3 + $0xc8] sm:$0xf] %vm4065, %v4004
      %4084 = vst.msk [vmem:[#allocation3 + $0xdc] sm:$0xf] %vm4065, %v4006
      %4085 = vst.msk [vmem:[#allocation3 + $0xe0] sm:$0xf] %vm4065, %v4008
      %4086 = vst.msk [vmem:[#allocation3 + $0xf4] sm:$0xf] %vm4065, %v4010
      %4087 = vst.msk [vmem:[#allocation3 + $0xf8] sm:$0xf] %vm4065, %v4012
      %4088 = vst.msk [vmem:[#allocation3 + $0x10c] sm:$0xf] %vm4065, %v4014
      %4089 = vst.msk [vmem:[#allocation3 + $0x110] sm:$0xf] %vm4065, %v4016
      %4090 = vst.msk [vmem:[#allocation3 + $0x124] sm:$0xf] %vm4065, %v4018
      %4091 = vst.msk [vmem:[#allocation3 + $0x128] sm:$0xf] %vm4065, %v4020
      %4092 = vst.msk [vmem:[#allocation3 + $0x13c] sm:$0xf] %vm4065, %v4022
      %4093 = vst.msk [vmem:[#allocation3 + $0x140] sm:$0xf] %vm4065, %v4024
      %4094 = vst.msk [vmem:[#allocation3 + $0x154] sm:$0xf] %vm4065, %v4026
      %4095 = vst.msk [vmem:[#allocation3 + $0x158] sm:$0xf] %vm4065, %v4028
      %4096 = vst.msk [vmem:[#allocation3 + $0x16c] sm:$0xf] %vm4065, %v4030
      %4097 = vst.msk [vmem:[#allocation3 + $0x170] sm:$0xf] %vm4065, %v4032
      %4098 = vrot.lane.b32.xlu0 %v3875, 16
      %v4099 = vpop.permute.xlu0 %4098
      %4100 = vrot.lane.b32.xlu0 %v3876, 16
      %v4101 = vpop.permute.xlu0 %4100
      %4102 = vrot.lane.b32.xlu0 %v3877, 16
      %v4103 = vpop.permute.xlu0 %4102
      %4104 = vrot.lane.b32.xlu0 %v3878, 16
      %v4105 = vpop.permute.xlu0 %4104
      %4106 = vrot.lane.b32.xlu0 %v3879, 16
      %v4107 = vpop.permute.xlu0 %4106
      %4108 = vrot.lane.b32.xlu0 %v3880, 16
      %v4109 = vpop.permute.xlu0 %4108
      %4110 = vrot.lane.b32.xlu0 %v3881, 16
      %v4111 = vpop.permute.xlu0 %4110
      %4112 = vrot.lane.b32.xlu0 %v3882, 16
      %v4113 = vpop.permute.xlu0 %4112
      %4114 = vrot.lane.b32.xlu0 %v3883, 16
      %v4115 = vpop.permute.xlu0 %4114
      %4116 = vrot.lane.b32.xlu0 %v3884, 16
      %v4117 = vpop.permute.xlu0 %4116
      %4118 = vrot.lane.b32.xlu0 %v3885, 16
      %v4119 = vpop.permute.xlu0 %4118
      %4120 = vrot.lane.b32.xlu0 %v3886, 16
      %v4121 = vpop.permute.xlu0 %4120
      %4122 = vrot.lane.b32.xlu0 %v3887, 16
      %v4123 = vpop.permute.xlu0 %4122
      %4124 = vrot.lane.b32.xlu0 %v3888, 16
      %v4125 = vpop.permute.xlu0 %4124
      %4126 = vrot.lane.b32.xlu0 %v3889, 16
      %v4127 = vpop.permute.xlu0 %4126
      %4128 = vrot.lane.b32.xlu0 %v3890, 16
      %v4129 = vpop.permute.xlu0 %4128
      %4130 = vrot.lane.b32.xlu0 %v3891, 16
      %v4131 = vpop.permute.xlu0 %4130
      %4132 = vrot.lane.b32.xlu0 %v3892, 16
      %v4133 = vpop.permute.xlu0 %4132
      %4134 = vrot.lane.b32.xlu0 %v3893, 16
      %v4135 = vpop.permute.xlu0 %4134
      %4136 = vrot.lane.b32.xlu0 %v3894, 16
      %v4137 = vpop.permute.xlu0 %4136
      %4138 = vrot.lane.b32.xlu0 %v3895, 16
      %v4139 = vpop.permute.xlu0 %4138
      %4140 = vrot.lane.b32.xlu0 %v3896, 16
      %v4141 = vpop.permute.xlu0 %4140
      %4142 = vrot.lane.b32.xlu0 %v3897, 16
      %v4143 = vpop.permute.xlu0 %4142
      %4144 = vrot.lane.b32.xlu0 %v3898, 16
      %v4145 = vpop.permute.xlu0 %4144
      %4146 = vrot.lane.b32.xlu0 %v3899, 16
      %v4147 = vpop.permute.xlu0 %4146
      %4148 = vrot.lane.b32.xlu0 %v3900, 16
      %v4149 = vpop.permute.xlu0 %4148
      %4150 = vrot.lane.b32.xlu0 %v3901, 16
      %v4151 = vpop.permute.xlu0 %4150
      %4152 = vrot.lane.b32.xlu0 %v3902, 16
      %v4153 = vpop.permute.xlu0 %4152
      %4154 = vrot.lane.b32.xlu0 %v3967, 16
      %v4155 = vpop.permute.xlu0 %4154
      %4156 = vrot.lane.b32.xlu0 %v3968, 16
      %v4157 = vpop.permute.xlu0 %4156
      %vm4188 = vcmask 191616
      %4189 = vst.msk [vmem:[#allocation3 + $0x4] sm:$0xf] %vm4188, %v4099
      %4190 = vst.msk [vmem:[#allocation3 + $0x8] sm:$0xf] %vm4188, %v4101
      %4191 = vst.msk [vmem:[#allocation3 + $0x1c] sm:$0xf] %vm4188, %v4103
      %4192 = vst.msk [vmem:[#allocation3 + $0x20] sm:$0xf] %vm4188, %v4105
      %4193 = vst.msk [vmem:[#allocation3 + $0x34] sm:$0xf] %vm4188, %v4107
      %4194 = vst.msk [vmem:[#allocation3 + $0x38] sm:$0xf] %vm4188, %v4109
      %4195 = vst.msk [vmem:[#allocation3 + $0x4c] sm:$0xf] %vm4188, %v4111
      %4196 = vst.msk [vmem:[#allocation3 + $0x50] sm:$0xf] %vm4188, %v4113
      %4197 = vst.msk [vmem:[#allocation3 + $0x64] sm:$0xf] %vm4188, %v4115
      %4198 = vst.msk [vmem:[#allocation3 + $0x68] sm:$0xf] %vm4188, %v4117
      %4199 = vst.msk [vmem:[#allocation3 + $0x7c] sm:$0xf] %vm4188, %v4119
      %4200 = vst.msk [vmem:[#allocation3 + $0x80] sm:$0xf] %vm4188, %v4121
      %4201 = vst.msk [vmem:[#allocation3 + $0x94] sm:$0xf] %vm4188, %v4123
      %4202 = vst.msk [vmem:[#allocation3 + $0x98] sm:$0xf] %vm4188, %v4125
      %4203 = vst.msk [vmem:[#allocation3 + $0xac] sm:$0xf] %vm4188, %v4127
      %4204 = vst.msk [vmem:[#allocation3 + $0xb0] sm:$0xf] %vm4188, %v4129
      %4205 = vst.msk [vmem:[#allocation3 + $0xc4] sm:$0xf] %vm4188, %v4131
      %4206 = vst.msk [vmem:[#allocation3 + $0xc8] sm:$0xf] %vm4188, %v4133
      %4207 = vst.msk [vmem:[#allocation3 + $0xdc] sm:$0xf] %vm4188, %v4135
      %4208 = vst.msk [vmem:[#allocation3 + $0xe0] sm:$0xf] %vm4188, %v4137
      %4209 = vst.msk [vmem:[#allocation3 + $0xf4] sm:$0xf] %vm4188, %v4139
      %4210 = vst.msk [vmem:[#allocation3 + $0xf8] sm:$0xf] %vm4188, %v4141
      %4211 = vst.msk [vmem:[#allocation3 + $0x10c] sm:$0xf] %vm4188, %v4143
      %4212 = vst.msk [vmem:[#allocation3 + $0x110] sm:$0xf] %vm4188, %v4145
      %4213 = vst.msk [vmem:[#allocation3 + $0x124] sm:$0xf] %vm4188, %v4147
      %4214 = vst.msk [vmem:[#allocation3 + $0x128] sm:$0xf] %vm4188, %v4149
      %4215 = vst.msk [vmem:[#allocation3 + $0x13c] sm:$0xf] %vm4188, %v4151
      %4216 = vst.msk [vmem:[#allocation3 + $0x140] sm:$0xf] %vm4188, %v4153
      %4217 = vst.msk [vmem:[#allocation3 + $0x154] sm:$0xf] %vm4188, %v4155
      %4218 = vst.msk [vmem:[#allocation3 + $0x158] sm:$0xf] %vm4188, %v4157
      %s4219 = scalar_lea.vmem [#allocation3], 360
      %4220 = vst.msk [vmem:[%s4219] sm:$0xf] %vm4188, 0
      %4221 = vst.msk [vmem:[%s4219 + $0x4] sm:$0xf] %vm4188, 0
      %4222 = vst.msk [vmem:[%s4219 + $0x8] sm:$0xf] %vm4188, 0
      %4223 = vst.msk [vmem:[%s4219 + $0xc] sm:$0xf] %vm4188, 0
      %4224 = vst.msk [vmem:[%s4219 + $0x10] sm:$0xf] %vm4188, 0
      %4225 = vst.msk [vmem:[%s4219 + $0x14] sm:$0xf] %vm4188, 0
      %v4226 = vld [vmem:[#allocation3] sm:$0x8]
      %v4227 = vld [vmem:[#allocation3 + $0x4] sm:$0xf]
      %v4228 = vld [vmem:[#allocation3 + $0x8] sm:$0xf]
      %v4229 = vld [vmem:[#allocation3 + $0xc] sm:$0xf]
      %v4230 = vld [vmem:[#allocation3 + $0x10] sm:$0xf]
      %v4231 = vld [vmem:[#allocation3 + $0x18] sm:$0x8]
      %v4232 = vld [vmem:[#allocation3 + $0x1c] sm:$0xf]
      %v4233 = vld [vmem:[#allocation3 + $0x20] sm:$0xf]
      %v4234 = vld [vmem:[#allocation3 + $0x24] sm:$0xf]
      %v4235 = vld [vmem:[#allocation3 + $0x28] sm:$0xf]
      %v4236 = vld [vmem:[#allocation3 + $0x30] sm:$0x8]
      %v4237 = vld [vmem:[#allocation3 + $0x34] sm:$0xf]
      %v4238 = vld [vmem:[#allocation3 + $0x38] sm:$0xf]
      %v4239 = vld [vmem:[#allocation3 + $0x3c] sm:$0xf]
      %v4240 = vld [vmem:[#allocation3 + $0x40] sm:$0xf]
      %v4241 = vld [vmem:[#allocation3 + $0x48] sm:$0x8]
      %v4242 = vld [vmem:[#allocation3 + $0x4c] sm:$0xf]
      %v4243 = vld [vmem:[#allocation3 + $0x50] sm:$0xf]
      %v4244 = vld [vmem:[#allocation3 + $0x54] sm:$0xf]
      %v4245 = vld [vmem:[#allocation3 + $0x58] sm:$0xf]
      %v4246 = vld [vmem:[#allocation3 + $0x60] sm:$0x8]
      %v4247 = vld [vmem:[#allocation3 + $0x64] sm:$0xf]
      %v4248 = vld [vmem:[#allocation3 + $0x68] sm:$0xf]
      %v4249 = vld [vmem:[#allocation3 + $0x6c] sm:$0xf]
      %v4250 = vld [vmem:[#allocation3 + $0x70] sm:$0xf]
      %v4251 = vld [vmem:[#allocation3 + $0x78] sm:$0x8]
      %v4252 = vld [vmem:[#allocation3 + $0x7c] sm:$0xf]
      %v4253 = vld [vmem:[#allocation3 + $0x80] sm:$0xf]
      %v4254 = vld [vmem:[#allocation3 + $0x84] sm:$0xf]
      %v4255 = vld [vmem:[#allocation3 + $0x88] sm:$0xf]
      %v4256 = vld [vmem:[#allocation3 + $0x90] sm:$0x8]
      %v4257 = vld [vmem:[#allocation3 + $0x94] sm:$0xf]
      %v4258 = vld [vmem:[#allocation3 + $0x98] sm:$0xf]
      %v4259 = vld [vmem:[#allocation3 + $0x9c] sm:$0xf]
      %v4260 = vld [vmem:[#allocation3 + $0xa0] sm:$0xf]
      %v4261 = vld [vmem:[#allocation3 + $0xa8] sm:$0x8]
      %v4262 = vld [vmem:[#allocation3 + $0xac] sm:$0xf]
      %v4263 = vld [vmem:[#allocation3 + $0xb0] sm:$0xf]
      %v4264 = vld [vmem:[#allocation3 + $0xb4] sm:$0xf]
      %v4265 = vld [vmem:[#allocation3 + $0xb8] sm:$0xf]
      %v4266 = vld [vmem:[#allocation3 + $0xc0] sm:$0x8]
      %v4267 = vld [vmem:[#allocation3 + $0xc4] sm:$0xf]
      %v4268 = vld [vmem:[#allocation3 + $0xc8] sm:$0xf]
      %v4269 = vld [vmem:[#allocation3 + $0xcc] sm:$0xf]
      %v4270 = vld [vmem:[#allocation3 + $0xd0] sm:$0xf]
      %v4271 = vld [vmem:[#allocation3 + $0xd8] sm:$0x8]
      %v4272 = vld [vmem:[#allocation3 + $0xdc] sm:$0xf]
      %v4273 = vld [vmem:[#allocation3 + $0xe0] sm:$0xf]
      %v4274 = vld [vmem:[#allocation3 + $0xe4] sm:$0xf]
      %v4275 = vld [vmem:[#allocation3 + $0xe8] sm:$0xf]
      %v4276 = vld [vmem:[#allocation3 + $0xf0] sm:$0x8]
      %v4277 = vld [vmem:[#allocation3 + $0xf4] sm:$0xf]
      %v4278 = vld [vmem:[#allocation3 + $0xf8] sm:$0xf]
      %v4279 = vld [vmem:[#allocation3 + $0xfc] sm:$0xf]
      %v4280 = vld [vmem:[#allocation3 + $0x100] sm:$0xf]
      %v4281 = vld [vmem:[#allocation3 + $0x108] sm:$0x8]
      %v4282 = vld [vmem:[#allocation3 + $0x10c] sm:$0xf]
      %v4283 = vld [vmem:[#allocation3 + $0x110] sm:$0xf]
      %v4284 = vld [vmem:[#allocation3 + $0x114] sm:$0xf]
      %v4285 = vld [vmem:[#allocation3 + $0x118] sm:$0xf]
      %v4286 = vld [vmem:[#allocation3 + $0x120] sm:$0x8]
      %v4287 = vld [vmem:[#allocation3 + $0x124] sm:$0xf]
      %v4288 = vld [vmem:[#allocation3 + $0x128] sm:$0xf]
      %v4289 = vld [vmem:[#allocation3 + $0x12c] sm:$0xf]
      %v4290 = vld [vmem:[#allocation3 + $0x130] sm:$0xf]
      %v4291 = vld [vmem:[#allocation3 + $0x138] sm:$0x8]
      %v4292 = vld [vmem:[#allocation3 + $0x13c] sm:$0xf]
      %v4293 = vld [vmem:[#allocation3 + $0x140] sm:$0xf]
      %v4294 = vld [vmem:[#allocation3 + $0x144] sm:$0xf]
      %v4295 = vld [vmem:[#allocation3 + $0x148] sm:$0xf]
      %v4296 = vld [vmem:[#allocation3 + $0x150] sm:$0x8]
      %v4297 = vld [vmem:[#allocation3 + $0x154] sm:$0xf]
      %v4298 = vld [vmem:[#allocation3 + $0x158] sm:$0xf]
      %v4299 = vld [vmem:[#allocation3 + $0x15c] sm:$0xf]
      %v4300 = vld [vmem:[#allocation3 + $0x160] sm:$0xf]
      %v4301 = vld [vmem:[#allocation3 + $0x168] sm:$0x8]
      %v4302 = vld [vmem:[#allocation3 + $0x16c] sm:$0xf]
      %v4303 = vld [vmem:[#allocation3 + $0x170] sm:$0xf]
      %v4304 = vld [vmem:[#allocation3 + $0x174] sm:$0xf]
      %v4305 = vld [vmem:[#allocation3 + $0x178] sm:$0xf]
      %v4307 = vshrl.u32 %v4226, 16
      %v4309 = vrot.slane %v4307, 7
      %v4310 = vrot.slane %v4309, 4
      %v4312 = vshrl.u32 %v4227, 16
      %v4314 = vrot.slane %v4312, 7
      %v4315 = vshll.u32 %v4227, 16
      %v4317 = vor.u32 %v4314, %v4315
      %v4318 = vsel %vm732, %v4310, %v4317
      %v4319 = vrot.slane %v4314, 4
      %v4321 = vshrl.u32 %v4228, 16
      %v4323 = vrot.slane %v4321, 7
      %v4324 = vshll.u32 %v4228, 16
      %v4326 = vor.u32 %v4323, %v4324
      %v4327 = vsel %vm732, %v4319, %v4326
      %v4328 = vrot.slane %v4323, 4
      %v4330 = vshrl.u32 %v4229, 16
      %v4332 = vrot.slane %v4330, 7
      %v4333 = vshll.u32 %v4229, 16
      %v4335 = vor.u32 %v4332, %v4333
      %v4336 = vsel %vm732, %v4328, %v4335
      %v4337 = vrot.slane %v4332, 4
      %v4339 = vshrl.u32 %v4230, 16
      %v4341 = vrot.slane %v4339, 7
      %v4342 = vshll.u32 %v4230, 16
      %v4344 = vor.u32 %v4341, %v4342
      %v4345 = vsel %vm732, %v4337, %v4344
      %v4347 = vshrl.u32 %v4231, 16
      %v4349 = vrot.slane %v4347, 7
      %v4350 = vrot.slane %v4349, 4
      %v4352 = vshrl.u32 %v4232, 16
      %v4354 = vrot.slane %v4352, 7
      %v4355 = vshll.u32 %v4232, 16
      %v4357 = vor.u32 %v4354, %v4355
      %v4358 = vsel %vm732, %v4350, %v4357
      %v4359 = vrot.slane %v4354, 4
      %v4361 = vshrl.u32 %v4233, 16
      %v4363 = vrot.slane %v4361, 7
      %v4364 = vshll.u32 %v4233, 16
      %v4366 = vor.u32 %v4363, %v4364
      %v4367 = vsel %vm732, %v4359, %v4366
      %v4368 = vrot.slane %v4363, 4
      %v4370 = vshrl.u32 %v4234, 16
      %v4372 = vrot.slane %v4370, 7
      %v4373 = vshll.u32 %v4234, 16
      %v4375 = vor.u32 %v4372, %v4373
      %v4376 = vsel %vm732, %v4368, %v4375
      %v4377 = vrot.slane %v4372, 4
      %v4379 = vshrl.u32 %v4235, 16
      %v4381 = vrot.slane %v4379, 7
      %v4382 = vshll.u32 %v4235, 16
      %v4384 = vor.u32 %v4381, %v4382
      %v4385 = vsel %vm732, %v4377, %v4384
      %v4387 = vshrl.u32 %v4236, 16
      %v4389 = vrot.slane %v4387, 7
      %v4390 = vrot.slane %v4389, 4
      %v4392 = vshrl.u32 %v4237, 16
      %v4394 = vrot.slane %v4392, 7
      %v4395 = vshll.u32 %v4237, 16
      %v4397 = vor.u32 %v4394, %v4395
      %v4398 = vsel %vm732, %v4390, %v4397
      %v4399 = vrot.slane %v4394, 4
      %v4401 = vshrl.u32 %v4238, 16
      %v4403 = vrot.slane %v4401, 7
      %v4404 = vshll.u32 %v4238, 16
      %v4406 = vor.u32 %v4403, %v4404
      %v4407 = vsel %vm732, %v4399, %v4406
      %v4408 = vrot.slane %v4403, 4
      %v4410 = vshrl.u32 %v4239, 16
      %v4412 = vrot.slane %v4410, 7
      %v4413 = vshll.u32 %v4239, 16
      %v4415 = vor.u32 %v4412, %v4413
      %v4416 = vsel %vm732, %v4408, %v4415
      %v4417 = vrot.slane %v4412, 4
      %v4419 = vshrl.u32 %v4240, 16
      %v4421 = vrot.slane %v4419, 7
      %v4422 = vshll.u32 %v4240, 16
      %v4424 = vor.u32 %v4421, %v4422
      %v4425 = vsel %vm732, %v4417, %v4424
      %v4427 = vshrl.u32 %v4241, 16
      %v4429 = vrot.slane %v4427, 7
      %v4430 = vrot.slane %v4429, 4
      %v4432 = vshrl.u32 %v4242, 16
      %v4434 = vrot.slane %v4432, 7
      %v4435 = vshll.u32 %v4242, 16
      %v4437 = vor.u32 %v4434, %v4435
      %v4438 = vsel %vm732, %v4430, %v4437
      %v4439 = vrot.slane %v4434, 4
      %v4441 = vshrl.u32 %v4243, 16
      %v4443 = vrot.slane %v4441, 7
      %v4444 = vshll.u32 %v4243, 16
      %v4446 = vor.u32 %v4443, %v4444
      %v4447 = vsel %vm732, %v4439, %v4446
      %v4448 = vrot.slane %v4443, 4
      %v4450 = vshrl.u32 %v4244, 16
      %v4452 = vrot.slane %v4450, 7
      %v4453 = vshll.u32 %v4244, 16
      %v4455 = vor.u32 %v4452, %v4453
      %v4456 = vsel %vm732, %v4448, %v4455
      %v4457 = vrot.slane %v4452, 4
      %v4459 = vshrl.u32 %v4245, 16
      %v4461 = vrot.slane %v4459, 7
      %v4462 = vshll.u32 %v4245, 16
      %v4464 = vor.u32 %v4461, %v4462
      %v4465 = vsel %vm732, %v4457, %v4464
      %v4467 = vshrl.u32 %v4246, 16
      %v4469 = vrot.slane %v4467, 7
      %v4470 = vrot.slane %v4469, 4
      %v4472 = vshrl.u32 %v4247, 16
      %v4474 = vrot.slane %v4472, 7
      %v4475 = vshll.u32 %v4247, 16
      %v4477 = vor.u32 %v4474, %v4475
      %v4478 = vsel %vm732, %v4470, %v4477
      %v4479 = vrot.slane %v4474, 4
      %v4481 = vshrl.u32 %v4248, 16
      %v4483 = vrot.slane %v4481, 7
      %v4484 = vshll.u32 %v4248, 16
      %v4486 = vor.u32 %v4483, %v4484
      %v4487 = vsel %vm732, %v4479, %v4486
      %v4488 = vrot.slane %v4483, 4
      %v4490 = vshrl.u32 %v4249, 16
      %v4492 = vrot.slane %v4490, 7
      %v4493 = vshll.u32 %v4249, 16
      %v4495 = vor.u32 %v4492, %v4493
      %v4496 = vsel %vm732, %v4488, %v4495
      %v4497 = vrot.slane %v4492, 4
      %v4499 = vshrl.u32 %v4250, 16
      %v4501 = vrot.slane %v4499, 7
      %v4502 = vshll.u32 %v4250, 16
      %v4504 = vor.u32 %v4501, %v4502
      %v4505 = vsel %vm732, %v4497, %v4504
      %v4507 = vshrl.u32 %v4251, 16
      %v4509 = vrot.slane %v4507, 7
      %v4510 = vrot.slane %v4509, 4
      %v4512 = vshrl.u32 %v4252, 16
      %v4514 = vrot.slane %v4512, 7
      %v4515 = vshll.u32 %v4252, 16
      %v4517 = vor.u32 %v4514, %v4515
      %v4518 = vsel %vm732, %v4510, %v4517
      %v4519 = vrot.slane %v4514, 4
      %v4521 = vshrl.u32 %v4253, 16
      %v4523 = vrot.slane %v4521, 7
      %v4524 = vshll.u32 %v4253, 16
      %v4526 = vor.u32 %v4523, %v4524
      %v4527 = vsel %vm732, %v4519, %v4526
      %v4528 = vrot.slane %v4523, 4
      %v4530 = vshrl.u32 %v4254, 16
      %v4532 = vrot.slane %v4530, 7
      %v4533 = vshll.u32 %v4254, 16
      %v4535 = vor.u32 %v4532, %v4533
      %v4536 = vsel %vm732, %v4528, %v4535
      %v4537 = vrot.slane %v4532, 4
      %v4539 = vshrl.u32 %v4255, 16
      %v4541 = vrot.slane %v4539, 7
      %v4542 = vshll.u32 %v4255, 16
      %v4544 = vor.u32 %v4541, %v4542
      %v4545 = vsel %vm732, %v4537, %v4544
      %v4547 = vshrl.u32 %v4256, 16
      %v4549 = vrot.slane %v4547, 7
      %v4550 = vrot.slane %v4549, 4
      %v4552 = vshrl.u32 %v4257, 16
      %v4554 = vrot.slane %v4552, 7
      %v4555 = vshll.u32 %v4257, 16
      %v4557 = vor.u32 %v4554, %v4555
      %v4558 = vsel %vm732, %v4550, %v4557
      %v4559 = vrot.slane %v4554, 4
      %v4561 = vshrl.u32 %v4258, 16
      %v4563 = vrot.slane %v4561, 7
      %v4564 = vshll.u32 %v4258, 16
      %v4566 = vor.u32 %v4563, %v4564
      %v4567 = vsel %vm732, %v4559, %v4566
      %v4568 = vrot.slane %v4563, 4
      %v4570 = vshrl.u32 %v4259, 16
      %v4572 = vrot.slane %v4570, 7
      %v4573 = vshll.u32 %v4259, 16
      %v4575 = vor.u32 %v4572, %v4573
      %v4576 = vsel %vm732, %v4568, %v4575
      %v4577 = vrot.slane %v4572, 4
      %v4579 = vshrl.u32 %v4260, 16
      %v4581 = vrot.slane %v4579, 7
      %v4582 = vshll.u32 %v4260, 16
      %v4584 = vor.u32 %v4581, %v4582
      %v4585 = vsel %vm732, %v4577, %v4584
      %v4587 = vshrl.u32 %v4261, 16
      %v4589 = vrot.slane %v4587, 7
      %v4590 = vrot.slane %v4589, 4
      %v4592 = vshrl.u32 %v4262, 16
      %v4594 = vrot.slane %v4592, 7
      %v4595 = vshll.u32 %v4262, 16
      %v4597 = vor.u32 %v4594, %v4595
      %v4598 = vsel %vm732, %v4590, %v4597
      %v4599 = vrot.slane %v4594, 4
      %v4601 = vshrl.u32 %v4263, 16
      %v4603 = vrot.slane %v4601, 7
      %v4604 = vshll.u32 %v4263, 16
      %v4606 = vor.u32 %v4603, %v4604
      %v4607 = vsel %vm732, %v4599, %v4606
      %v4608 = vrot.slane %v4603, 4
      %v4610 = vshrl.u32 %v4264, 16
      %v4612 = vrot.slane %v4610, 7
      %v4613 = vshll.u32 %v4264, 16
      %v4615 = vor.u32 %v4612, %v4613
      %v4616 = vsel %vm732, %v4608, %v4615
      %v4617 = vrot.slane %v4612, 4
      %v4619 = vshrl.u32 %v4265, 16
      %v4621 = vrot.slane %v4619, 7
      %v4622 = vshll.u32 %v4265, 16
      %v4624 = vor.u32 %v4621, %v4622
      %v4625 = vsel %vm732, %v4617, %v4624
      %v4627 = vshrl.u32 %v4266, 16
      %v4629 = vrot.slane %v4627, 7
      %v4630 = vrot.slane %v4629, 4
      %v4632 = vshrl.u32 %v4267, 16
      %v4634 = vrot.slane %v4632, 7
      %v4635 = vshll.u32 %v4267, 16
      %v4637 = vor.u32 %v4634, %v4635
      %v4638 = vsel %vm732, %v4630, %v4637
      %v4639 = vrot.slane %v4634, 4
      %v4641 = vshrl.u32 %v4268, 16
      %v4643 = vrot.slane %v4641, 7
      %v4644 = vshll.u32 %v4268, 16
      %v4646 = vor.u32 %v4643, %v4644
      %v4647 = vsel %vm732, %v4639, %v4646
      %v4648 = vrot.slane %v4643, 4
      %v4650 = vshrl.u32 %v4269, 16
      %v4652 = vrot.slane %v4650, 7
      %v4653 = vshll.u32 %v4269, 16
      %v4655 = vor.u32 %v4652, %v4653
      %v4656 = vsel %vm732, %v4648, %v4655
      %v4657 = vrot.slane %v4652, 4
      %v4659 = vshrl.u32 %v4270, 16
      %v4661 = vrot.slane %v4659, 7
      %v4662 = vshll.u32 %v4270, 16
      %v4664 = vor.u32 %v4661, %v4662
      %v4665 = vsel %vm732, %v4657, %v4664
      %v4667 = vshrl.u32 %v4271, 16
      %v4669 = vrot.slane %v4667, 7
      %v4670 = vrot.slane %v4669, 4
      %v4672 = vshrl.u32 %v4272, 16
      %v4674 = vrot.slane %v4672, 7
      %v4675 = vshll.u32 %v4272, 16
      %v4677 = vor.u32 %v4674, %v4675
      %v4678 = vsel %vm732, %v4670, %v4677
      %v4679 = vrot.slane %v4674, 4
      %v4681 = vshrl.u32 %v4273, 16
      %v4683 = vrot.slane %v4681, 7
      %v4684 = vshll.u32 %v4273, 16
      %v4686 = vor.u32 %v4683, %v4684
      %v4687 = vsel %vm732, %v4679, %v4686
      %v4688 = vrot.slane %v4683, 4
      %v4690 = vshrl.u32 %v4274, 16
      %v4692 = vrot.slane %v4690, 7
      %v4693 = vshll.u32 %v4274, 16
      %v4695 = vor.u32 %v4692, %v4693
      %v4696 = vsel %vm732, %v4688, %v4695
      %v4697 = vrot.slane %v4692, 4
      %v4699 = vshrl.u32 %v4275, 16
      %v4701 = vrot.slane %v4699, 7
      %v4702 = vshll.u32 %v4275, 16
      %v4704 = vor.u32 %v4701, %v4702
      %v4705 = vsel %vm732, %v4697, %v4704
      %v4707 = vshrl.u32 %v4276, 16
      %v4709 = vrot.slane %v4707, 7
      %v4710 = vrot.slane %v4709, 4
      %v4712 = vshrl.u32 %v4277, 16
      %v4714 = vrot.slane %v4712, 7
      %v4715 = vshll.u32 %v4277, 16
      %v4717 = vor.u32 %v4714, %v4715
      %v4718 = vsel %vm732, %v4710, %v4717
      %v4719 = vrot.slane %v4714, 4
      %v4721 = vshrl.u32 %v4278, 16
      %v4723 = vrot.slane %v4721, 7
      %v4724 = vshll.u32 %v4278, 16
      %v4726 = vor.u32 %v4723, %v4724
      %v4727 = vsel %vm732, %v4719, %v4726
      %v4728 = vrot.slane %v4723, 4
      %v4730 = vshrl.u32 %v4279, 16
      %v4732 = vrot.slane %v4730, 7
      %v4733 = vshll.u32 %v4279, 16
      %v4735 = vor.u32 %v4732, %v4733
      %v4736 = vsel %vm732, %v4728, %v4735
      %v4737 = vrot.slane %v4732, 4
      %v4739 = vshrl.u32 %v4280, 16
      %v4741 = vrot.slane %v4739, 7
      %v4742 = vshll.u32 %v4280, 16
      %v4744 = vor.u32 %v4741, %v4742
      %v4745 = vsel %vm732, %v4737, %v4744
      %v4747 = vshrl.u32 %v4281, 16
      %v4749 = vrot.slane %v4747, 7
      %v4750 = vrot.slane %v4749, 4
      %v4752 = vshrl.u32 %v4282, 16
      %v4754 = vrot.slane %v4752, 7
      %v4755 = vshll.u32 %v4282, 16
      %v4757 = vor.u32 %v4754, %v4755
      %v4758 = vsel %vm732, %v4750, %v4757
      %v4759 = vrot.slane %v4754, 4
      %v4761 = vshrl.u32 %v4283, 16
      %v4763 = vrot.slane %v4761, 7
      %v4764 = vshll.u32 %v4283, 16
      %v4766 = vor.u32 %v4763, %v4764
      %v4767 = vsel %vm732, %v4759, %v4766
      %v4768 = vrot.slane %v4763, 4
      %v4770 = vshrl.u32 %v4284, 16
      %v4772 = vrot.slane %v4770, 7
      %v4773 = vshll.u32 %v4284, 16
      %v4775 = vor.u32 %v4772, %v4773
      %v4776 = vsel %vm732, %v4768, %v4775
      %v4777 = vrot.slane %v4772, 4
      %v4779 = vshrl.u32 %v4285, 16
      %v4781 = vrot.slane %v4779, 7
      %v4782 = vshll.u32 %v4285, 16
      %v4784 = vor.u32 %v4781, %v4782
      %v4785 = vsel %vm732, %v4777, %v4784
      %v4787 = vshrl.u32 %v4286, 16
      %v4789 = vrot.slane %v4787, 7
      %v4790 = vrot.slane %v4789, 4
      %v4792 = vshrl.u32 %v4287, 16
      %v4794 = vrot.slane %v4792, 7
      %v4795 = vshll.u32 %v4287, 16
      %v4797 = vor.u32 %v4794, %v4795
      %v4798 = vsel %vm732, %v4790, %v4797
      %v4799 = vrot.slane %v4794, 4
      %v4801 = vshrl.u32 %v4288, 16
      %v4803 = vrot.slane %v4801, 7
      %v4804 = vshll.u32 %v4288, 16
      %v4806 = vor.u32 %v4803, %v4804
      %v4807 = vsel %vm732, %v4799, %v4806
      %v4808 = vrot.slane %v4803, 4
      %v4810 = vshrl.u32 %v4289, 16
      %v4812 = vrot.slane %v4810, 7
      %v4813 = vshll.u32 %v4289, 16
      %v4815 = vor.u32 %v4812, %v4813
      %v4816 = vsel %vm732, %v4808, %v4815
      %v4817 = vrot.slane %v4812, 4
      %v4819 = vshrl.u32 %v4290, 16
      %v4821 = vrot.slane %v4819, 7
      %v4822 = vshll.u32 %v4290, 16
      %v4824 = vor.u32 %v4821, %v4822
      %v4825 = vsel %vm732, %v4817, %v4824
      %v4827 = vshrl.u32 %v4291, 16
      %v4829 = vrot.slane %v4827, 7
      %v4830 = vrot.slane %v4829, 4
      %v4832 = vshrl.u32 %v4292, 16
      %v4834 = vrot.slane %v4832, 7
      %v4835 = vshll.u32 %v4292, 16
      %v4837 = vor.u32 %v4834, %v4835
      %v4838 = vsel %vm732, %v4830, %v4837
      %v4839 = vrot.slane %v4834, 4
      %v4841 = vshrl.u32 %v4293, 16
      %v4843 = vrot.slane %v4841, 7
      %v4844 = vshll.u32 %v4293, 16
      %v4846 = vor.u32 %v4843, %v4844
      %v4847 = vsel %vm732, %v4839, %v4846
      %v4848 = vrot.slane %v4843, 4
      %v4850 = vshrl.u32 %v4294, 16
      %v4852 = vrot.slane %v4850, 7
      %v4853 = vshll.u32 %v4294, 16
      %v4855 = vor.u32 %v4852, %v4853
      %v4856 = vsel %vm732, %v4848, %v4855
      %v4857 = vrot.slane %v4852, 4
      %v4859 = vshrl.u32 %v4295, 16
      %v4861 = vrot.slane %v4859, 7
      %v4862 = vshll.u32 %v4295, 16
      %v4864 = vor.u32 %v4861, %v4862
      %v4865 = vsel %vm732, %v4857, %v4864
      %v4867 = vshrl.u32 %v4296, 16
      %v4869 = vrot.slane %v4867, 7
      %v4870 = vrot.slane %v4869, 4
      %v4872 = vshrl.u32 %v4297, 16
      %v4874 = vrot.slane %v4872, 7
      %v4875 = vshll.u32 %v4297, 16
      %v4877 = vor.u32 %v4874, %v4875
      %v4878 = vsel %vm732, %v4870, %v4877
      %v4879 = vrot.slane %v4874, 4
      %v4881 = vshrl.u32 %v4298, 16
      %v4883 = vrot.slane %v4881, 7
      %v4884 = vshll.u32 %v4298, 16
      %v4886 = vor.u32 %v4883, %v4884
      %v4887 = vsel %vm732, %v4879, %v4886
      %v4888 = vrot.slane %v4883, 4
      %v4890 = vshrl.u32 %v4299, 16
      %v4892 = vrot.slane %v4890, 7
      %v4893 = vshll.u32 %v4299, 16
      %v4895 = vor.u32 %v4892, %v4893
      %v4896 = vsel %vm732, %v4888, %v4895
      %v4897 = vrot.slane %v4892, 4
      %v4899 = vshrl.u32 %v4300, 16
      %v4901 = vrot.slane %v4899, 7
      %v4902 = vshll.u32 %v4300, 16
      %v4904 = vor.u32 %v4901, %v4902
      %v4905 = vsel %vm732, %v4897, %v4904
      %v4907 = vshrl.u32 %v4301, 16
      %v4909 = vrot.slane %v4907, 7
      %v4910 = vrot.slane %v4909, 4
      %v4912 = vshrl.u32 %v4302, 16
      %v4914 = vrot.slane %v4912, 7
      %v4915 = vshll.u32 %v4302, 16
      %v4917 = vor.u32 %v4914, %v4915
      %v4918 = vsel %vm732, %v4910, %v4917
      %v4919 = vrot.slane %v4914, 4
      %v4921 = vshrl.u32 %v4303, 16
      %v4923 = vrot.slane %v4921, 7
      %v4924 = vshll.u32 %v4303, 16
      %v4926 = vor.u32 %v4923, %v4924
      %v4927 = vsel %vm732, %v4919, %v4926
      %v4928 = vrot.slane %v4923, 4
      %v4930 = vshrl.u32 %v4304, 16
      %v4932 = vrot.slane %v4930, 7
      %v4933 = vshll.u32 %v4304, 16
      %v4935 = vor.u32 %v4932, %v4933
      %v4936 = vsel %vm732, %v4928, %v4935
      %v4937 = vrot.slane %v4932, 4
      %v4939 = vshrl.u32 %v4305, 16
      %v4941 = vrot.slane %v4939, 7
      %v4942 = vshll.u32 %v4305, 16
      %v4944 = vor.u32 %v4941, %v4942
      %v4945 = vsel %vm732, %v4937, %v4944
      %v4946 = vld [vmem:[%s3] sm:$0xf]
      %v4947 = vld [vmem:[%s3 + $0x4] sm:$0xf]
      %v4948 = vld [vmem:[%s3 + $0x8] sm:$0xf]
      %s4949 = scalar_lea.vmem %s3, 12
      %v4950 = vld [vmem:[%s4949] sm:$0xf]
      %v4951 = vld [vmem:[%s4949 + $0x4] sm:$0xf]
      %v4952 = vld [vmem:[%s4949 + $0x8] sm:$0xf]
      %v5017 = vunpack.c.l.b16 %v4227
      %v5018 = vunpack.c.l.b16 %v4228
      %v5019 = vunpack.c.l.b16 %v4229
      %v5020 = vunpack.c.l.b16 %v4230
      %v5021 = vunpack.c.l.b16 %v4232
      %v5022 = vunpack.c.l.b16 %v4233
      %v5023 = vunpack.c.l.b16 %v4234
      %v5024 = vunpack.c.l.b16 %v4235
      %v5025 = vunpack.c.l.b16 %v4237
      %v5026 = vunpack.c.l.b16 %v4238
      %v5027 = vunpack.c.l.b16 %v4239
      %v5028 = vunpack.c.l.b16 %v4240
      %v5029 = vunpack.c.l.b16 %v4242
      %v5030 = vunpack.c.l.b16 %v4243
      %v5031 = vunpack.c.l.b16 %v4244
      %v5032 = vunpack.c.l.b16 %v4245
      %v5033 = vunpack.c.l.b16 %v4247
      %v5034 = vunpack.c.l.b16 %v4248
      %v5035 = vunpack.c.l.b16 %v4249
      %v5036 = vunpack.c.l.b16 %v4250
      %v5037 = vunpack.c.l.b16 %v4252
      %v5038 = vunpack.c.l.b16 %v4253
      %v5039 = vunpack.c.l.b16 %v4254
      %v5040 = vunpack.c.l.b16 %v4255
      %v5041 = vunpack.c.l.b16 %v4257
      %v5042 = vunpack.c.l.b16 %v4258
      %v5043 = vunpack.c.l.b16 %v4259
      %v5044 = vunpack.c.l.b16 %v4260
      %v5045 = vunpack.c.l.b16 %v4262
      %v5046 = vunpack.c.l.b16 %v4263
      %v5047 = vunpack.c.l.b16 %v4264
      %v5048 = vunpack.c.l.b16 %v4265
      %v5049 = vunpack.c.l.b16 %v4267
      %v5050 = vunpack.c.l.b16 %v4268
      %v5051 = vunpack.c.l.b16 %v4269
      %v5052 = vunpack.c.l.b16 %v4270
      %v5053 = vunpack.c.l.b16 %v4272
      %v5054 = vunpack.c.l.b16 %v4273
      %v5055 = vunpack.c.l.b16 %v4274
      %v5056 = vunpack.c.l.b16 %v4275
      %v5057 = vunpack.c.l.b16 %v4277
      %v5058 = vunpack.c.l.b16 %v4278
      %v5059 = vunpack.c.l.b16 %v4279
      %v5060 = vunpack.c.l.b16 %v4280
      %v5061 = vunpack.c.l.b16 %v4282
      %v5062 = vunpack.c.l.b16 %v4283
      %v5063 = vunpack.c.l.b16 %v4284
      %v5064 = vunpack.c.l.b16 %v4285
      %v5065 = vunpack.c.l.b16 %v4287
      %v5066 = vunpack.c.l.b16 %v4288
      %v5067 = vunpack.c.l.b16 %v4289
      %v5068 = vunpack.c.l.b16 %v4290
      %v5069 = vunpack.c.l.b16 %v4292
      %v5070 = vunpack.c.l.b16 %v4293
      %v5071 = vunpack.c.l.b16 %v4294
      %v5072 = vunpack.c.l.b16 %v4295
      %v5073 = vunpack.c.l.b16 %v4297
      %v5074 = vunpack.c.l.b16 %v4298
      %v5075 = vunpack.c.l.b16 %v4299
      %v5076 = vunpack.c.l.b16 %v4300
      %v5077 = vunpack.c.l.b16 %v4302
      %v5078 = vunpack.c.l.b16 %v4303
      %v5079 = vunpack.c.l.b16 %v4304
      %v5080 = vunpack.c.l.b16 %v4305
      %v5081 = vpack.c.b16 %v5018, %v5017
      %v5082 = vpack.c.b16 %v5020, %v5019
      %v5083 = vpack.c.b16 %v5022, %v5021
      %v5084 = vpack.c.b16 %v5024, %v5023
      %v5085 = vpack.c.b16 %v5026, %v5025
      %v5086 = vpack.c.b16 %v5028, %v5027
      %v5087 = vpack.c.b16 %v5030, %v5029
      %v5088 = vpack.c.b16 %v5032, %v5031
      %v5089 = vpack.c.b16 %v5034, %v5033
      %v5090 = vpack.c.b16 %v5036, %v5035
      %v5091 = vpack.c.b16 %v5038, %v5037
      %v5092 = vpack.c.b16 %v5040, %v5039
      %v5093 = vpack.c.b16 %v5042, %v5041
      %v5094 = vpack.c.b16 %v5044, %v5043
      %v5095 = vpack.c.b16 %v5046, %v5045
      %v5096 = vpack.c.b16 %v5048, %v5047
      %v5097 = vpack.c.b16 %v5050, %v5049
      %v5098 = vpack.c.b16 %v5052, %v5051
      %v5099 = vpack.c.b16 %v5054, %v5053
      %v5100 = vpack.c.b16 %v5056, %v5055
      %v5101 = vpack.c.b16 %v5058, %v5057
      %v5102 = vpack.c.b16 %v5060, %v5059
      %v5103 = vpack.c.b16 %v5062, %v5061
      %v5104 = vpack.c.b16 %v5064, %v5063
      %v5105 = vpack.c.b16 %v5066, %v5065
      %v5106 = vpack.c.b16 %v5068, %v5067
      %v5107 = vpack.c.b16 %v5070, %v5069
      %v5108 = vpack.c.b16 %v5072, %v5071
      %v5109 = vpack.c.b16 %v5074, %v5073
      %v5110 = vpack.c.b16 %v5076, %v5075
      %v5111 = vpack.c.b16 %v5078, %v5077
      %v5112 = vpack.c.b16 %v5080, %v5079
      %v5116 = vunpack.c.l.b16 %v4950
      %v5117 = vunpack.c.l.b16 %v4951
      %v5118 = vunpack.c.l.b16 %v4952
      %v5119 = vpack.c.b16 %v5117, %v5116
      %v5120 = vpack.c.b16 %v5118, %v5118
      %vm5122 = vcmask 195584
      %v5124 = vsel %vm5122, %v5081, 0
      %v5127 = vsel %vm5122, %v5082, 0
      %v5130 = vsel %vm5122, %v5083, 0
      %v5133 = vsel %vm5122, %v5084, 0
      %v5136 = vsel %vm5122, %v5085, 0
      %v5139 = vsel %vm5122, %v5086, 0
      %v5142 = vsel %vm5122, %v5087, 0
      %v5145 = vsel %vm5122, %v5088, 0
      %v5148 = vsel %vm5122, %v5089, 0
      %v5151 = vsel %vm5122, %v5090, 0
      %v5154 = vsel %vm5122, %v5091, 0
      %v5157 = vsel %vm5122, %v5092, 0
      %v5160 = vsel %vm5122, %v5093, 0
      %v5163 = vsel %vm5122, %v5094, 0
      %v5166 = vsel %vm5122, %v5095, 0
      %v5169 = vsel %vm5122, %v5096, 0
      %v5172 = vsel %vm5122, %v5097, 0
      %v5175 = vsel %vm5122, %v5098, 0
      %v5178 = vsel %vm5122, %v5099, 0
      %v5181 = vsel %vm5122, %v5100, 0
      %v5184 = vsel %vm5122, %v5101, 0
      %v5187 = vsel %vm5122, %v5102, 0
      %v5190 = vsel %vm5122, %v5103, 0
      %v5193 = vsel %vm5122, %v5104, 0
      %v5196 = vsel %vm5122, %v5105, 0
      %v5199 = vsel %vm5122, %v5106, 0
      %v5202 = vsel %vm5122, %v5107, 0
      %v5205 = vsel %vm5122, %v5108, 0
      %v5208 = vsel %vm5122, %v5109, 0
      %v5211 = vsel %vm5122, %v5110, 0
      %v5214 = vsel %vm5122, %v5111, 0
      %v5217 = vsel %vm5122, %v5112, 0
      %vm5219 = vcmask 1043456
      %v5221 = vsel %vm5219, %v5120, 0
      %5223 = vmatprep.subr.bf16.mxu0 0
      %5224 = vmatpush1.bf16.msra.mxu0 0
      %5225 = vmatprep.subr.bf16.mxu0 0
      %5226 = vmatpush1.bf16.msra.mxu0 0
      %5227 = vmatprep.subr.bf16.mxu0 0
      %5228 = vmatpush1.bf16.msra.mxu0 0
      %5229 = vmatprep.subr.bf16.mxu0 0
      %5230 = vmatpush1.bf16.msra.mxu0 0
      %5231 = vmatprep.subr.bf16.mxu0 0
      %5232 = vmatpush1.bf16.msra.mxu0 0
      %5233 = vmatprep.subr.bf16.mxu0 0
      %5234 = vmatpush1.bf16.msra.mxu0 0
      %5235 = vmatprep.subr.bf16.mxu0 0
      %5236 = vmatpush1.bf16.msra.mxu0 %v5221
      %5237 = vmatprep.subr.bf16.mxu0 0
      %5238 = vmatpush1.bf16.msra.mxu0 %v5119
      %5239 = vmatprep.subr.bf16.mxu0 0
      %5240 = vmatpush2.bf16.msra.mxu0 0
      %5241 = vmatprep.subr.bf16.mxu0 0
      %5242 = vmatpush2.bf16.msra.mxu0 0
      %5243 = vmatprep.subr.bf16.mxu0 0
      %5244 = vmatpush2.bf16.msra.mxu0 0
      %5245 = vmatprep.subr.bf16.mxu0 0
      %5246 = vmatpush2.bf16.msra.mxu0 0
      %5247 = vmatprep.subr.bf16.mxu0 0
      %5248 = vmatpush2.bf16.msra.mxu0 0
      %5249 = vmatprep.subr.bf16.mxu0 0
      %5250 = vmatpush2.bf16.msra.mxu0 0
      %5251 = vmatprep.subr.bf16.mxu0 0
      %5252 = vmatpush2.bf16.msra.mxu0 0
      %5253 = vmatprep.subr.bf16.mxu0 0
      %5254 = vmatpush2.bf16.msra.mxu0 0
      %5255 = vmatprep.mubr.bf16.mxu0 0
      %5256 = vmatmul.mubr.bf16.gmra.mxu0 %v5124
      %v5257 = vpop.f32.mrf.mxu0
      %v5258 = vadd.f32 0.0, %v5257
      %v5259 = vpop.f32.mrf.mxu0
      %v5260 = vpop.f32.mrf.mxu0
      %v5261 = vadd.f32 0.0, %v5260
      %v5262 = vpop.f32.mrf.mxu0
      %5263 = vmatprep.mubr.bf16.mxu0 0
      %5264 = vmatmul.mubr.bf16.gmra.mxu0 %v5127
      %v5265 = vpop.f32.mrf.mxu0
      %v5266 = vpop.f32.mrf.mxu0
      %v5267 = vpop.f32.mrf.mxu0
      %v5268 = vpop.f32.mrf.mxu0
      %5269 = vmatprep.mubr.bf16.mxu0 0
      %5270 = vmatmul.mubr.bf16.gmra.mxu0 %v5130
      %v5271 = vpop.f32.mrf.mxu0
      %v5272 = vadd.f32 0.0, %v5271
      %v5273 = vpop.f32.mrf.mxu0
      %v5274 = vpop.f32.mrf.mxu0
      %v5275 = vadd.f32 0.0, %v5274
      %v5276 = vpop.f32.mrf.mxu0
      %5277 = vmatprep.mubr.bf16.mxu0 0
      %5278 = vmatmul.mubr.bf16.gmra.mxu0 %v5133
      %v5279 = vpop.f32.mrf.mxu0
      %v5280 = vpop.f32.mrf.mxu0
      %v5281 = vpop.f32.mrf.mxu0
      %v5282 = vpop.f32.mrf.mxu0
      %5283 = vmatprep.mubr.bf16.mxu0 0
      %5284 = vmatmul.mubr.bf16.gmra.mxu0 %v5136
      %v5285 = vpop.f32.mrf.mxu0
      %v5286 = vadd.f32 0.0, %v5285
      %v5287 = vpop.f32.mrf.mxu0
      %v5288 = vpop.f32.mrf.mxu0
      %v5289 = vadd.f32 0.0, %v5288
      %v5290 = vpop.f32.mrf.mxu0
      %5291 = vmatprep.mubr.bf16.mxu0 0
      %5292 = vmatmul.mubr.bf16.gmra.mxu0 %v5139
      %v5293 = vpop.f32.mrf.mxu0
      %v5294 = vpop.f32.mrf.mxu0
      %v5295 = vpop.f32.mrf.mxu0
      %v5296 = vpop.f32.mrf.mxu0
      %5297 = vmatprep.mubr.bf16.mxu0 0
      %5298 = vmatmul.mubr.bf16.gmra.mxu0 %v5142
      %v5299 = vpop.f32.mrf.mxu0
      %v5300 = vadd.f32 0.0, %v5299
      %v5301 = vpop.f32.mrf.mxu0
      %v5302 = vpop.f32.mrf.mxu0
      %v5303 = vadd.f32 0.0, %v5302
      %v5304 = vpop.f32.mrf.mxu0
      %5305 = vmatprep.mubr.bf16.mxu0 0
      %5306 = vmatmul.mubr.bf16.gmra.mxu0 %v5145
      %v5307 = vpop.f32.mrf.mxu0
      %v5308 = vpop.f32.mrf.mxu0
      %v5309 = vpop.f32.mrf.mxu0
      %v5310 = vpop.f32.mrf.mxu0
      %5311 = vmatprep.mubr.bf16.mxu0 0
      %5312 = vmatmul.mubr.bf16.gmra.mxu0 %v5148
      %v5313 = vpop.f32.mrf.mxu0
      %v5314 = vadd.f32 0.0, %v5313
      %v5315 = vpop.f32.mrf.mxu0
      %v5316 = vpop.f32.mrf.mxu0
      %v5317 = vadd.f32 0.0, %v5316
      %v5318 = vpop.f32.mrf.mxu0
      %5319 = vmatprep.mubr.bf16.mxu0 0
      %5320 = vmatmul.mubr.bf16.gmra.mxu0 %v5151
      %v5321 = vpop.f32.mrf.mxu0
      %v5322 = vpop.f32.mrf.mxu0
      %v5323 = vpop.f32.mrf.mxu0
      %v5324 = vpop.f32.mrf.mxu0
      %5325 = vmatprep.mubr.bf16.mxu0 0
      %5326 = vmatmul.mubr.bf16.gmra.mxu0 %v5154
      %v5327 = vpop.f32.mrf.mxu0
      %v5328 = vadd.f32 0.0, %v5327
      %v5329 = vpop.f32.mrf.mxu0
      %v5330 = vpop.f32.mrf.mxu0
      %v5331 = vadd.f32 0.0, %v5330
      %v5332 = vpop.f32.mrf.mxu0
      %5333 = vmatprep.mubr.bf16.mxu0 0
      %5334 = vmatmul.mubr.bf16.gmra.mxu0 %v5157
      %v5335 = vpop.f32.mrf.mxu0
      %v5336 = vpop.f32.mrf.mxu0
      %v5337 = vpop.f32.mrf.mxu0
      %v5338 = vpop.f32.mrf.mxu0
      %5339 = vmatprep.mubr.bf16.mxu0 0
      %5340 = vmatmul.mubr.bf16.gmra.mxu0 %v5160
      %v5341 = vpop.f32.mrf.mxu0
      %v5342 = vadd.f32 0.0, %v5341
      %v5343 = vpop.f32.mrf.mxu0
      %v5344 = vpop.f32.mrf.mxu0
      %v5345 = vadd.f32 0.0, %v5344
      %v5346 = vpop.f32.mrf.mxu0
      %5347 = vmatprep.mubr.bf16.mxu0 0
      %5348 = vmatmul.mubr.bf16.gmra.mxu0 %v5163
      %v5349 = vpop.f32.mrf.mxu0
      %v5350 = vpop.f32.mrf.mxu0
      %v5351 = vpop.f32.mrf.mxu0
      %v5352 = vpop.f32.mrf.mxu0
      %5353 = vmatprep.mubr.bf16.mxu0 0
      %5354 = vmatmul.mubr.bf16.gmra.mxu0 %v5166
      %v5355 = vpop.f32.mrf.mxu0
      %v5356 = vadd.f32 0.0, %v5355
      %v5357 = vpop.f32.mrf.mxu0
      %v5358 = vpop.f32.mrf.mxu0
      %v5359 = vadd.f32 0.0, %v5358
      %v5360 = vpop.f32.mrf.mxu0
      %5361 = vmatprep.mubr.bf16.mxu0 0
      %5362 = vmatmul.mubr.bf16.gmra.mxu0 %v5169
      %v5363 = vpop.f32.mrf.mxu0
      %v5364 = vpop.f32.mrf.mxu0
      %v5365 = vpop.f32.mrf.mxu0
      %v5366 = vpop.f32.mrf.mxu0
      %5367 = vmatprep.mubr.bf16.mxu0 0
      %5368 = vmatmul.mubr.bf16.gmra.mxu0 %v5172
      %v5369 = vpop.f32.mrf.mxu0
      %v5370 = vadd.f32 0.0, %v5369
      %v5371 = vpop.f32.mrf.mxu0
      %v5372 = vpop.f32.mrf.mxu0
      %v5373 = vadd.f32 0.0, %v5372
      %v5374 = vpop.f32.mrf.mxu0
      %5375 = vmatprep.mubr.bf16.mxu0 0
      %5376 = vmatmul.mubr.bf16.gmra.mxu0 %v5175
      %v5377 = vpop.f32.mrf.mxu0
      %v5378 = vpop.f32.mrf.mxu0
      %v5379 = vpop.f32.mrf.mxu0
      %v5380 = vpop.f32.mrf.mxu0
      %5381 = vmatprep.mubr.bf16.mxu0 0
      %5382 = vmatmul.mubr.bf16.gmra.mxu0 %v5178
      %v5383 = vpop.f32.mrf.mxu0
      %v5384 = vadd.f32 0.0, %v5383
      %v5385 = vpop.f32.mrf.mxu0
      %v5386 = vpop.f32.mrf.mxu0
      %v5387 = vadd.f32 0.0, %v5386
      %v5388 = vpop.f32.mrf.mxu0
      %5389 = vmatprep.mubr.bf16.mxu0 0
      %5390 = vmatmul.mubr.bf16.gmra.mxu0 %v5181
      %v5391 = vpop.f32.mrf.mxu0
      %v5392 = vpop.f32.mrf.mxu0
      %v5393 = vpop.f32.mrf.mxu0
      %v5394 = vpop.f32.mrf.mxu0
      %5395 = vmatprep.mubr.bf16.mxu0 0
      %5396 = vmatmul.mubr.bf16.gmra.mxu0 %v5184
      %v5397 = vpop.f32.mrf.mxu0
      %v5398 = vadd.f32 0.0, %v5397
      %v5399 = vpop.f32.mrf.mxu0
      %v5400 = vpop.f32.mrf.mxu0
      %v5401 = vadd.f32 0.0, %v5400
      %v5402 = vpop.f32.mrf.mxu0
      %5403 = vmatprep.mubr.bf16.mxu0 0
      %5404 = vmatmul.mubr.bf16.gmra.mxu0 %v5187
      %v5405 = vpop.f32.mrf.mxu0
      %v5406 = vpop.f32.mrf.mxu0
      %v5407 = vpop.f32.mrf.mxu0
      %v5408 = vpop.f32.mrf.mxu0
      %5409 = vmatprep.mubr.bf16.mxu0 0
      %5410 = vmatmul.mubr.bf16.gmra.mxu0 %v5190
      %v5411 = vpop.f32.mrf.mxu0
      %v5412 = vadd.f32 0.0, %v5411
      %v5413 = vpop.f32.mrf.mxu0
      %v5414 = vpop.f32.mrf.mxu0
      %v5415 = vadd.f32 0.0, %v5414
      %v5416 = vpop.f32.mrf.mxu0
      %5417 = vmatprep.mubr.bf16.mxu0 0
      %5418 = vmatmul.mubr.bf16.gmra.mxu0 %v5193
      %v5419 = vpop.f32.mrf.mxu0
      %v5420 = vpop.f32.mrf.mxu0
      %v5421 = vpop.f32.mrf.mxu0
      %v5422 = vpop.f32.mrf.mxu0
      %5423 = vmatprep.mubr.bf16.mxu0 0
      %5424 = vmatmul.mubr.bf16.gmra.mxu0 %v5196
      %v5425 = vpop.f32.mrf.mxu0
      %v5426 = vadd.f32 0.0, %v5425
      %v5427 = vpop.f32.mrf.mxu0
      %v5428 = vpop.f32.mrf.mxu0
      %v5429 = vadd.f32 0.0, %v5428
      %v5430 = vpop.f32.mrf.mxu0
      %5431 = vmatprep.mubr.bf16.mxu0 0
      %5432 = vmatmul.mubr.bf16.gmra.mxu0 %v5199
      %v5433 = vpop.f32.mrf.mxu0
      %v5434 = vpop.f32.mrf.mxu0
      %v5435 = vpop.f32.mrf.mxu0
      %v5436 = vpop.f32.mrf.mxu0
      %5437 = vmatprep.mubr.bf16.mxu0 0
      %5438 = vmatmul.mubr.bf16.gmra.mxu0 %v5202
      %v5439 = vpop.f32.mrf.mxu0
      %v5440 = vadd.f32 0.0, %v5439
      %v5441 = vpop.f32.mrf.mxu0
      %v5442 = vpop.f32.mrf.mxu0
      %v5443 = vadd.f32 0.0, %v5442
      %v5444 = vpop.f32.mrf.mxu0
      %5445 = vmatprep.mubr.bf16.mxu0 0
      %5446 = vmatmul.mubr.bf16.gmra.mxu0 %v5205
      %v5447 = vpop.f32.mrf.mxu0
      %v5448 = vpop.f32.mrf.mxu0
      %v5449 = vpop.f32.mrf.mxu0
      %v5450 = vpop.f32.mrf.mxu0
      %5451 = vmatprep.mubr.bf16.mxu0 0
      %5452 = vmatmul.mubr.bf16.gmra.mxu0 %v5208
      %v5453 = vpop.f32.mrf.mxu0
      %v5454 = vadd.f32 0.0, %v5453
      %v5455 = vpop.f32.mrf.mxu0
      %v5456 = vpop.f32.mrf.mxu0
      %v5457 = vadd.f32 0.0, %v5456
      %v5458 = vpop.f32.mrf.mxu0
      %5459 = vmatprep.mubr.bf16.mxu0 0
      %5460 = vmatmul.mubr.bf16.gmra.mxu0 %v5211
      %v5461 = vpop.f32.mrf.mxu0
      %v5462 = vpop.f32.mrf.mxu0
      %v5463 = vpop.f32.mrf.mxu0
      %v5464 = vpop.f32.mrf.mxu0
      %5465 = vmatprep.mubr.bf16.mxu0 0
      %5466 = vmatmul.mubr.bf16.gmra.mxu0 %v5214
      %v5467 = vpop.f32.mrf.mxu0
      %v5468 = vadd.f32 0.0, %v5467
      %v5469 = vpop.f32.mrf.mxu0
      %v5470 = vpop.f32.mrf.mxu0
      %v5471 = vadd.f32 0.0, %v5470
      %v5472 = vpop.f32.mrf.mxu0
      %5473 = vmatprep.mubr.bf16.mxu0 0
      %5474 = vmatmul.mubr.bf16.gmra.mxu0 %v5217
      %v5475 = vpop.f32.mrf.mxu0
      %v5476 = vpop.f32.mrf.mxu0
      %v5477 = vpop.f32.mrf.mxu0
      %v5478 = vpop.f32.mrf.mxu0
      %5479 = vdwg.mxu0
      %v5480 = vunpack.c.l.b16 %v4318
      %v5481 = vunpack.c.l.b16 %v4327
      %v5482 = vunpack.c.l.b16 %v4336
      %v5483 = vunpack.c.l.b16 %v4345
      %v5484 = vunpack.c.l.b16 %v4358
      %v5485 = vunpack.c.l.b16 %v4367
      %v5486 = vunpack.c.l.b16 %v4376
      %v5487 = vunpack.c.l.b16 %v4385
      %v5488 = vunpack.c.l.b16 %v4398
      %v5489 = vunpack.c.l.b16 %v4407
      %v5490 = vunpack.c.l.b16 %v4416
      %v5491 = vunpack.c.l.b16 %v4425
      %v5492 = vunpack.c.l.b16 %v4438
      %v5493 = vunpack.c.l.b16 %v4447
      %v5494 = vunpack.c.l.b16 %v4456
      %v5495 = vunpack.c.l.b16 %v4465
      %v5496 = vunpack.c.l.b16 %v4478
      %v5497 = vunpack.c.l.b16 %v4487
      %v5498 = vunpack.c.l.b16 %v4496
      %v5499 = vunpack.c.l.b16 %v4505
      %v5500 = vunpack.c.l.b16 %v4518
      %v5501 = vunpack.c.l.b16 %v4527
      %v5502 = vunpack.c.l.b16 %v4536
      %v5503 = vunpack.c.l.b16 %v4545
      %v5504 = vunpack.c.l.b16 %v4558
      %v5505 = vunpack.c.l.b16 %v4567
      %v5506 = vunpack.c.l.b16 %v4576
      %v5507 = vunpack.c.l.b16 %v4585
      %v5508 = vunpack.c.l.b16 %v4598
      %v5509 = vunpack.c.l.b16 %v4607
      %v5510 = vunpack.c.l.b16 %v4616
      %v5511 = vunpack.c.l.b16 %v4625
      %v5512 = vunpack.c.l.b16 %v4638
      %v5513 = vunpack.c.l.b16 %v4647
      %v5514 = vunpack.c.l.b16 %v4656
      %v5515 = vunpack.c.l.b16 %v4665
      %v5516 = vunpack.c.l.b16 %v4678
      %v5517 = vunpack.c.l.b16 %v4687
      %v5518 = vunpack.c.l.b16 %v4696
      %v5519 = vunpack.c.l.b16 %v4705
      %v5520 = vunpack.c.l.b16 %v4718
      %v5521 = vunpack.c.l.b16 %v4727
      %v5522 = vunpack.c.l.b16 %v4736
      %v5523 = vunpack.c.l.b16 %v4745
      %v5524 = vunpack.c.l.b16 %v4758
      %v5525 = vunpack.c.l.b16 %v4767
      %v5526 = vunpack.c.l.b16 %v4776
      %v5527 = vunpack.c.l.b16 %v4785
      %v5528 = vunpack.c.l.b16 %v4798
      %v5529 = vunpack.c.l.b16 %v4807
      %v5530 = vunpack.c.l.b16 %v4816
      %v5531 = vunpack.c.l.b16 %v4825
      %v5532 = vunpack.c.l.b16 %v4838
      %v5533 = vunpack.c.l.b16 %v4847
      %v5534 = vunpack.c.l.b16 %v4856
      %v5535 = vunpack.c.l.b16 %v4865
      %v5536 = vunpack.c.l.b16 %v4878
      %v5537 = vunpack.c.l.b16 %v4887
      %v5538 = vunpack.c.l.b16 %v4896
      %v5539 = vunpack.c.l.b16 %v4905
      %v5540 = vunpack.c.l.b16 %v4918
      %v5541 = vunpack.c.l.b16 %v4927
      %v5542 = vunpack.c.l.b16 %v4936
      %v5543 = vunpack.c.l.b16 %v4945
      %v5544 = vpack.c.b16 %v5481, %v5480
      %v5545 = vpack.c.b16 %v5483, %v5482
      %v5546 = vpack.c.b16 %v5485, %v5484
      %v5547 = vpack.c.b16 %v5487, %v5486
      %v5548 = vpack.c.b16 %v5489, %v5488
      %v5549 = vpack.c.b16 %v5491, %v5490
      %v5550 = vpack.c.b16 %v5493, %v5492
      %v5551 = vpack.c.b16 %v5495, %v5494
      %v5552 = vpack.c.b16 %v5497, %v5496
      %v5553 = vpack.c.b16 %v5499, %v5498
      %v5554 = vpack.c.b16 %v5501, %v5500
      %v5555 = vpack.c.b16 %v5503, %v5502
      %v5556 = vpack.c.b16 %v5505, %v5504
      %v5557 = vpack.c.b16 %v5507, %v5506
      %v5558 = vpack.c.b16 %v5509, %v5508
      %v5559 = vpack.c.b16 %v5511, %v5510
      %v5560 = vpack.c.b16 %v5513, %v5512
      %v5561 = vpack.c.b16 %v5515, %v5514
      %v5562 = vpack.c.b16 %v5517, %v5516
      %v5563 = vpack.c.b16 %v5519, %v5518
      %v5564 = vpack.c.b16 %v5521, %v5520
      %v5565 = vpack.c.b16 %v5523, %v5522
      %v5566 = vpack.c.b16 %v5525, %v5524
      %v5567 = vpack.c.b16 %v5527, %v5526
      %v5568 = vpack.c.b16 %v5529, %v5528
      %v5569 = vpack.c.b16 %v5531, %v5530
      %v5570 = vpack.c.b16 %v5533, %v5532
      %v5571 = vpack.c.b16 %v5535, %v5534
      %v5572 = vpack.c.b16 %v5537, %v5536
      %v5573 = vpack.c.b16 %v5539, %v5538
      %v5574 = vpack.c.b16 %v5541, %v5540
      %v5575 = vpack.c.b16 %v5543, %v5542
      %v5579 = vunpack.c.l.b16 %v4946
      %v5580 = vunpack.c.l.b16 %v4947
      %v5581 = vunpack.c.l.b16 %v4948
      %v5582 = vpack.c.b16 %v5580, %v5579
      %v5583 = vpack.c.b16 %v5581, %v5581
      %v5586 = vsel %vm5122, %v5544, 0
      %v5589 = vsel %vm5122, %v5545, 0
      %v5592 = vsel %vm5122, %v5546, 0
      %v5595 = vsel %vm5122, %v5547, 0
      %v5598 = vsel %vm5122, %v5548, 0
      %v5601 = vsel %vm5122, %v5549, 0
      %v5604 = vsel %vm5122, %v5550, 0
      %v5607 = vsel %vm5122, %v5551, 0
      %v5610 = vsel %vm5122, %v5552, 0
      %v5613 = vsel %vm5122, %v5553, 0
      %v5616 = vsel %vm5122, %v5554, 0
      %v5619 = vsel %vm5122, %v5555, 0
      %v5622 = vsel %vm5122, %v5556, 0
      %v5625 = vsel %vm5122, %v5557, 0
      %v5628 = vsel %vm5122, %v5558, 0
      %v5631 = vsel %vm5122, %v5559, 0
      %v5634 = vsel %vm5122, %v5560, 0
      %v5637 = vsel %vm5122, %v5561, 0
      %v5640 = vsel %vm5122, %v5562, 0
      %v5643 = vsel %vm5122, %v5563, 0
      %v5646 = vsel %vm5122, %v5564, 0
      %v5649 = vsel %vm5122, %v5565, 0
      %v5652 = vsel %vm5122, %v5566, 0
      %v5655 = vsel %vm5122, %v5567, 0
      %v5658 = vsel %vm5122, %v5568, 0
      %v5661 = vsel %vm5122, %v5569, 0
      %v5664 = vsel %vm5122, %v5570, 0
      %v5667 = vsel %vm5122, %v5571, 0
      %v5670 = vsel %vm5122, %v5572, 0
      %v5673 = vsel %vm5122, %v5573, 0
      %v5676 = vsel %vm5122, %v5574, 0
      %v5679 = vsel %vm5122, %v5575, 0
      %v5682 = vsel %vm5219, %v5583, 0
      %5684 = vmatprep.subr.bf16.mxu0 0
      %5685 = vmatpush1.bf16.msra.mxu0 0
      %5686 = vmatprep.subr.bf16.mxu0 0
      %5687 = vmatpush1.bf16.msra.mxu0 0
      %5688 = vmatprep.subr.bf16.mxu0 0
      %5689 = vmatpush1.bf16.msra.mxu0 0
      %5690 = vmatprep.subr.bf16.mxu0 0
      %5691 = vmatpush1.bf16.msra.mxu0 0
      %5692 = vmatprep.subr.bf16.mxu0 0
      %5693 = vmatpush1.bf16.msra.mxu0 0
      %5694 = vmatprep.subr.bf16.mxu0 0
      %5695 = vmatpush1.bf16.msra.mxu0 0
      %5696 = vmatprep.subr.bf16.mxu0 0
      %5697 = vmatpush1.bf16.msra.mxu0 %v5682
      %5698 = vmatprep.subr.bf16.mxu0 0
      %5699 = vmatpush1.bf16.msra.mxu0 %v5582
      %5700 = vmatprep.subr.bf16.mxu0 0
      %5701 = vmatpush2.bf16.msra.mxu0 0
      %5702 = vmatprep.subr.bf16.mxu0 0
      %5703 = vmatpush2.bf16.msra.mxu0 0
      %5704 = vmatprep.subr.bf16.mxu0 0
      %5705 = vmatpush2.bf16.msra.mxu0 0
      %5706 = vmatprep.subr.bf16.mxu0 0
      %5707 = vmatpush2.bf16.msra.mxu0 0
      %5708 = vmatprep.subr.bf16.mxu0 0
      %5709 = vmatpush2.bf16.msra.mxu0 0
      %5710 = vmatprep.subr.bf16.mxu0 0
      %5711 = vmatpush2.bf16.msra.mxu0 0
      %5712 = vmatprep.subr.bf16.mxu0 0
      %5713 = vmatpush2.bf16.msra.mxu0 0
      %5714 = vmatprep.subr.bf16.mxu0 0
      %5715 = vmatpush2.bf16.msra.mxu0 0
      %5716 = vmatprep.mubr.bf16.mxu0 0
      %5717 = vmatmul.mubr.bf16.gmra.mxu0 %v5586
      %v5718 = vpop.f32.mrf.mxu0
      %v5719 = vadd.f32 %v5258, %v5718
      %v5720 = vpop.f32.mrf.mxu0
      %v5721 = vpop.f32.mrf.mxu0
      %v5722 = vadd.f32 %v5261, %v5721
      %v5723 = vpop.f32.mrf.mxu0
      %5724 = vmatprep.mubr.bf16.mxu0 0
      %5725 = vmatmul.mubr.bf16.gmra.mxu0 %v5589
      %v5726 = vpop.f32.mrf.mxu0
      %v5727 = vpop.f32.mrf.mxu0
      %v5728 = vpop.f32.mrf.mxu0
      %v5729 = vpop.f32.mrf.mxu0
      %5730 = vmatprep.mubr.bf16.mxu0 0
      %5731 = vmatmul.mubr.bf16.gmra.mxu0 %v5592
      %v5732 = vpop.f32.mrf.mxu0
      %v5733 = vadd.f32 %v5272, %v5732
      %v5734 = vpop.f32.mrf.mxu0
      %v5735 = vpop.f32.mrf.mxu0
      %v5736 = vadd.f32 %v5275, %v5735
      %v5737 = vpop.f32.mrf.mxu0
      %5738 = vmatprep.mubr.bf16.mxu0 0
      %5739 = vmatmul.mubr.bf16.gmra.mxu0 %v5595
      %v5740 = vpop.f32.mrf.mxu0
      %v5741 = vpop.f32.mrf.mxu0
      %v5742 = vpop.f32.mrf.mxu0
      %v5743 = vpop.f32.mrf.mxu0
      %5744 = vmatprep.mubr.bf16.mxu0 0
      %5745 = vmatmul.mubr.bf16.gmra.mxu0 %v5598
      %v5746 = vpop.f32.mrf.mxu0
      %v5747 = vadd.f32 %v5286, %v5746
      %v5748 = vpop.f32.mrf.mxu0
      %v5749 = vpop.f32.mrf.mxu0
      %v5750 = vadd.f32 %v5289, %v5749
      %v5751 = vpop.f32.mrf.mxu0
      %5752 = vmatprep.mubr.bf16.mxu0 0
      %5753 = vmatmul.mubr.bf16.gmra.mxu0 %v5601
      %v5754 = vpop.f32.mrf.mxu0
      %v5755 = vpop.f32.mrf.mxu0
      %v5756 = vpop.f32.mrf.mxu0
      %v5757 = vpop.f32.mrf.mxu0
      %5758 = vmatprep.mubr.bf16.mxu0 0
      %5759 = vmatmul.mubr.bf16.gmra.mxu0 %v5604
      %v5760 = vpop.f32.mrf.mxu0
      %v5761 = vadd.f32 %v5300, %v5760
      %v5762 = vpop.f32.mrf.mxu0
      %v5763 = vpop.f32.mrf.mxu0
      %v5764 = vadd.f32 %v5303, %v5763
      %v5765 = vpop.f32.mrf.mxu0
      %5766 = vmatprep.mubr.bf16.mxu0 0
      %5767 = vmatmul.mubr.bf16.gmra.mxu0 %v5607
      %v5768 = vpop.f32.mrf.mxu0
      %v5769 = vpop.f32.mrf.mxu0
      %v5770 = vpop.f32.mrf.mxu0
      %v5771 = vpop.f32.mrf.mxu0
      %5772 = vmatprep.mubr.bf16.mxu0 0
      %5773 = vmatmul.mubr.bf16.gmra.mxu0 %v5610
      %v5774 = vpop.f32.mrf.mxu0
      %v5775 = vadd.f32 %v5314, %v5774
      %v5776 = vpop.f32.mrf.mxu0
      %v5777 = vpop.f32.mrf.mxu0
      %v5778 = vadd.f32 %v5317, %v5777
      %v5779 = vpop.f32.mrf.mxu0
      %5780 = vmatprep.mubr.bf16.mxu0 0
      %5781 = vmatmul.mubr.bf16.gmra.mxu0 %v5613
      %v5782 = vpop.f32.mrf.mxu0
      %v5783 = vpop.f32.mrf.mxu0
      %v5784 = vpop.f32.mrf.mxu0
      %v5785 = vpop.f32.mrf.mxu0
      %5786 = vmatprep.mubr.bf16.mxu0 0
      %5787 = vmatmul.mubr.bf16.gmra.mxu0 %v5616
      %v5788 = vpop.f32.mrf.mxu0
      %v5789 = vadd.f32 %v5328, %v5788
      %v5790 = vpop.f32.mrf.mxu0
      %v5791 = vpop.f32.mrf.mxu0
      %v5792 = vadd.f32 %v5331, %v5791
      %v5793 = vpop.f32.mrf.mxu0
      %5794 = vmatprep.mubr.bf16.mxu0 0
      %5795 = vmatmul.mubr.bf16.gmra.mxu0 %v5619
      %v5796 = vpop.f32.mrf.mxu0
      %v5797 = vpop.f32.mrf.mxu0
      %v5798 = vpop.f32.mrf.mxu0
      %v5799 = vpop.f32.mrf.mxu0
      %5800 = vmatprep.mubr.bf16.mxu0 0
      %5801 = vmatmul.mubr.bf16.gmra.mxu0 %v5622
      %v5802 = vpop.f32.mrf.mxu0
      %v5803 = vadd.f32 %v5342, %v5802
      %v5804 = vpop.f32.mrf.mxu0
      %v5805 = vpop.f32.mrf.mxu0
      %v5806 = vadd.f32 %v5345, %v5805
      %v5807 = vpop.f32.mrf.mxu0
      %5808 = vmatprep.mubr.bf16.mxu0 0
      %5809 = vmatmul.mubr.bf16.gmra.mxu0 %v5625
      %v5810 = vpop.f32.mrf.mxu0
      %v5811 = vpop.f32.mrf.mxu0
      %v5812 = vpop.f32.mrf.mxu0
      %v5813 = vpop.f32.mrf.mxu0
      %5814 = vmatprep.mubr.bf16.mxu0 0
      %5815 = vmatmul.mubr.bf16.gmra.mxu0 %v5628
      %v5816 = vpop.f32.mrf.mxu0
      %v5817 = vadd.f32 %v5356, %v5816
      %v5818 = vpop.f32.mrf.mxu0
      %v5819 = vpop.f32.mrf.mxu0
      %v5820 = vadd.f32 %v5359, %v5819
      %v5821 = vpop.f32.mrf.mxu0
      %5822 = vmatprep.mubr.bf16.mxu0 0
      %5823 = vmatmul.mubr.bf16.gmra.mxu0 %v5631
      %v5824 = vpop.f32.mrf.mxu0
      %v5825 = vpop.f32.mrf.mxu0
      %v5826 = vpop.f32.mrf.mxu0
      %v5827 = vpop.f32.mrf.mxu0
      %5828 = vmatprep.mubr.bf16.mxu0 0
      %5829 = vmatmul.mubr.bf16.gmra.mxu0 %v5634
      %v5830 = vpop.f32.mrf.mxu0
      %v5831 = vadd.f32 %v5370, %v5830
      %v5832 = vpop.f32.mrf.mxu0
      %v5833 = vpop.f32.mrf.mxu0
      %v5834 = vadd.f32 %v5373, %v5833
      %v5835 = vpop.f32.mrf.mxu0
      %5836 = vmatprep.mubr.bf16.mxu0 0
      %5837 = vmatmul.mubr.bf16.gmra.mxu0 %v5637
      %v5838 = vpop.f32.mrf.mxu0
      %v5839 = vpop.f32.mrf.mxu0
      %v5840 = vpop.f32.mrf.mxu0
      %v5841 = vpop.f32.mrf.mxu0
      %5842 = vmatprep.mubr.bf16.mxu0 0
      %5843 = vmatmul.mubr.bf16.gmra.mxu0 %v5640
      %v5844 = vpop.f32.mrf.mxu0
      %v5845 = vadd.f32 %v5384, %v5844
      %v5846 = vpop.f32.mrf.mxu0
      %v5847 = vpop.f32.mrf.mxu0
      %v5848 = vadd.f32 %v5387, %v5847
      %v5849 = vpop.f32.mrf.mxu0
      %5850 = vmatprep.mubr.bf16.mxu0 0
      %5851 = vmatmul.mubr.bf16.gmra.mxu0 %v5643
      %v5852 = vpop.f32.mrf.mxu0
      %v5853 = vpop.f32.mrf.mxu0
      %v5854 = vpop.f32.mrf.mxu0
      %v5855 = vpop.f32.mrf.mxu0
      %5856 = vmatprep.mubr.bf16.mxu0 0
      %5857 = vmatmul.mubr.bf16.gmra.mxu0 %v5646
      %v5858 = vpop.f32.mrf.mxu0
      %v5859 = vadd.f32 %v5398, %v5858
      %v5860 = vpop.f32.mrf.mxu0
      %v5861 = vpop.f32.mrf.mxu0
      %v5862 = vadd.f32 %v5401, %v5861
      %v5863 = vpop.f32.mrf.mxu0
      %5864 = vmatprep.mubr.bf16.mxu0 0
      %5865 = vmatmul.mubr.bf16.gmra.mxu0 %v5649
      %v5866 = vpop.f32.mrf.mxu0
      %v5867 = vpop.f32.mrf.mxu0
      %v5868 = vpop.f32.mrf.mxu0
      %v5869 = vpop.f32.mrf.mxu0
      %5870 = vmatprep.mubr.bf16.mxu0 0
      %5871 = vmatmul.mubr.bf16.gmra.mxu0 %v5652
      %v5872 = vpop.f32.mrf.mxu0
      %v5873 = vadd.f32 %v5412, %v5872
      %v5874 = vpop.f32.mrf.mxu0
      %v5875 = vpop.f32.mrf.mxu0
      %v5876 = vadd.f32 %v5415, %v5875
      %v5877 = vpop.f32.mrf.mxu0
      %5878 = vmatprep.mubr.bf16.mxu0 0
      %5879 = vmatmul.mubr.bf16.gmra.mxu0 %v5655
      %v5880 = vpop.f32.mrf.mxu0
      %v5881 = vpop.f32.mrf.mxu0
      %v5882 = vpop.f32.mrf.mxu0
      %v5883 = vpop.f32.mrf.mxu0
      %5884 = vmatprep.mubr.bf16.mxu0 0
      %5885 = vmatmul.mubr.bf16.gmra.mxu0 %v5658
      %v5886 = vpop.f32.mrf.mxu0
      %v5887 = vadd.f32 %v5426, %v5886
      %v5888 = vpop.f32.mrf.mxu0
      %v5889 = vpop.f32.mrf.mxu0
      %v5890 = vadd.f32 %v5429, %v5889
      %v5891 = vpop.f32.mrf.mxu0
      %5892 = vmatprep.mubr.bf16.mxu0 0
      %5893 = vmatmul.mubr.bf16.gmra.mxu0 %v5661
      %v5894 = vpop.f32.mrf.mxu0
      %v5895 = vpop.f32.mrf.mxu0
      %v5896 = vpop.f32.mrf.mxu0
      %v5897 = vpop.f32.mrf.mxu0
      %5898 = vmatprep.mubr.bf16.mxu0 0
      %5899 = vmatmul.mubr.bf16.gmra.mxu0 %v5664
      %v5900 = vpop.f32.mrf.mxu0
      %v5901 = vadd.f32 %v5440, %v5900
      %v5902 = vpop.f32.mrf.mxu0
      %v5903 = vpop.f32.mrf.mxu0
      %v5904 = vadd.f32 %v5443, %v5903
      %v5905 = vpop.f32.mrf.mxu0
      %5906 = vmatprep.mubr.bf16.mxu0 0
      %5907 = vmatmul.mubr.bf16.gmra.mxu0 %v5667
      %v5908 = vpop.f32.mrf.mxu0
      %v5909 = vpop.f32.mrf.mxu0
      %v5910 = vpop.f32.mrf.mxu0
      %v5911 = vpop.f32.mrf.mxu0
      %5912 = vmatprep.mubr.bf16.mxu0 0
      %5913 = vmatmul.mubr.bf16.gmra.mxu0 %v5670
      %v5914 = vpop.f32.mrf.mxu0
      %v5915 = vadd.f32 %v5454, %v5914
      %v5916 = vpop.f32.mrf.mxu0
      %v5917 = vpop.f32.mrf.mxu0
      %v5918 = vadd.f32 %v5457, %v5917
      %v5919 = vpop.f32.mrf.mxu0
      %5920 = vmatprep.mubr.bf16.mxu0 0
      %5921 = vmatmul.mubr.bf16.gmra.mxu0 %v5673
      %v5922 = vpop.f32.mrf.mxu0
      %v5923 = vpop.f32.mrf.mxu0
      %v5924 = vpop.f32.mrf.mxu0
      %v5925 = vpop.f32.mrf.mxu0
      %5926 = vmatprep.mubr.bf16.mxu0 0
      %5927 = vmatmul.mubr.bf16.gmra.mxu0 %v5676
      %v5928 = vpop.f32.mrf.mxu0
      %v5929 = vadd.f32 %v5468, %v5928
      %v5930 = vpop.f32.mrf.mxu0
      %v5931 = vpop.f32.mrf.mxu0
      %v5932 = vadd.f32 %v5471, %v5931
      %v5933 = vpop.f32.mrf.mxu0
      %5934 = vmatprep.mubr.bf16.mxu0 0
      %5935 = vmatmul.mubr.bf16.gmra.mxu0 %v5679
      %v5936 = vpop.f32.mrf.mxu0
      %v5937 = vpop.f32.mrf.mxu0
      %v5938 = vpop.f32.mrf.mxu0
      %v5939 = vpop.f32.mrf.mxu0
      %5940 = vdwg.mxu0
      %v5941 = vld [vmem:[#allocation3 + $0x4] sm:$0xf]
      %v5942 = vld [vmem:[#allocation3 + $0x8] sm:$0xf]
      %v5943 = vld [vmem:[#allocation3 + $0xc] sm:$0xf]
      %v5944 = vld [vmem:[#allocation3 + $0x10] sm:$0xf]
      %v5945 = vld [vmem:[#allocation3 + $0x14] sm:$0x1]
      %v5946 = vld [vmem:[#allocation3 + $0x1c] sm:$0xf]
      %v5947 = vld [vmem:[#allocation3 + $0x20] sm:$0xf]
      %v5948 = vld [vmem:[#allocation3 + $0x24] sm:$0xf]
      %v5949 = vld [vmem:[#allocation3 + $0x28] sm:$0xf]
      %v5950 = vld [vmem:[#allocation3 + $0x2c] sm:$0x1]
      %v5951 = vld [vmem:[#allocation3 + $0x34] sm:$0xf]
      %v5952 = vld [vmem:[#allocation3 + $0x38] sm:$0xf]
      %v5953 = vld [vmem:[#allocation3 + $0x3c] sm:$0xf]
      %v5954 = vld [vmem:[#allocation3 + $0x40] sm:$0xf]
      %v5955 = vld [vmem:[#allocation3 + $0x44] sm:$0x1]
      %v5956 = vld [vmem:[#allocation3 + $0x4c] sm:$0xf]
      %v5957 = vld [vmem:[#allocation3 + $0x50] sm:$0xf]
      %v5958 = vld [vmem:[#allocation3 + $0x54] sm:$0xf]
      %v5959 = vld [vmem:[#allocation3 + $0x58] sm:$0xf]
      %v5960 = vld [vmem:[#allocation3 + $0x5c] sm:$0x1]
      %v5961 = vld [vmem:[#allocation3 + $0x64] sm:$0xf]
      %v5962 = vld [vmem:[#allocation3 + $0x68] sm:$0xf]
      %v5963 = vld [vmem:[#allocation3 + $0x6c] sm:$0xf]
      %v5964 = vld [vmem:[#allocation3 + $0x70] sm:$0xf]
      %v5965 = vld [vmem:[#allocation3 + $0x74] sm:$0x1]
      %v5966 = vld [vmem:[#allocation3 + $0x7c] sm:$0xf]
      %v5967 = vld [vmem:[#allocation3 + $0x80] sm:$0xf]
      %v5968 = vld [vmem:[#allocation3 + $0x84] sm:$0xf]
      %v5969 = vld [vmem:[#allocation3 + $0x88] sm:$0xf]
      %v5970 = vld [vmem:[#allocation3 + $0x8c] sm:$0x1]
      %v5971 = vld [vmem:[#allocation3 + $0x94] sm:$0xf]
      %v5972 = vld [vmem:[#allocation3 + $0x98] sm:$0xf]
      %v5973 = vld [vmem:[#allocation3 + $0x9c] sm:$0xf]
      %v5974 = vld [vmem:[#allocation3 + $0xa0] sm:$0xf]
      %v5975 = vld [vmem:[#allocation3 + $0xa4] sm:$0x1]
      %v5976 = vld [vmem:[#allocation3 + $0xac] sm:$0xf]
      %v5977 = vld [vmem:[#allocation3 + $0xb0] sm:$0xf]
      %v5978 = vld [vmem:[#allocation3 + $0xb4] sm:$0xf]
      %v5979 = vld [vmem:[#allocation3 + $0xb8] sm:$0xf]
      %v5980 = vld [vmem:[#allocation3 + $0xbc] sm:$0x1]
      %v5981 = vld [vmem:[#allocation3 + $0xc4] sm:$0xf]
      %v5982 = vld [vmem:[#allocation3 + $0xc8] sm:$0xf]
      %v5983 = vld [vmem:[#allocation3 + $0xcc] sm:$0xf]
      %v5984 = vld [vmem:[#allocation3 + $0xd0] sm:$0xf]
      %v5985 = vld [vmem:[#allocation3 + $0xd4] sm:$0x1]
      %v5986 = vld [vmem:[#allocation3 + $0xdc] sm:$0xf]
      %v5987 = vld [vmem:[#allocation3 + $0xe0] sm:$0xf]
      %v5988 = vld [vmem:[#allocation3 + $0xe4] sm:$0xf]
      %v5989 = vld [vmem:[#allocation3 + $0xe8] sm:$0xf]
      %v5990 = vld [vmem:[#allocation3 + $0xec] sm:$0x1]
      %v5991 = vld [vmem:[#allocation3 + $0xf4] sm:$0xf]
      %v5992 = vld [vmem:[#allocation3 + $0xf8] sm:$0xf]
      %v5993 = vld [vmem:[#allocation3 + $0xfc] sm:$0xf]
      %v5994 = vld [vmem:[#allocation3 + $0x100] sm:$0xf]
      %v5995 = vld [vmem:[#allocation3 + $0x104] sm:$0x1]
      %v5996 = vld [vmem:[#allocation3 + $0x10c] sm:$0xf]
      %v5997 = vld [vmem:[#allocation3 + $0x110] sm:$0xf]
      %v5998 = vld [vmem:[#allocation3 + $0x114] sm:$0xf]
      %v5999 = vld [vmem:[#allocation3 + $0x118] sm:$0xf]
      %v6000 = vld [vmem:[#allocation3 + $0x11c] sm:$0x1]
      %v6001 = vld [vmem:[#allocation3 + $0x124] sm:$0xf]
      %v6002 = vld [vmem:[#allocation3 + $0x128] sm:$0xf]
      %v6003 = vld [vmem:[#allocation3 + $0x12c] sm:$0xf]
      %v6004 = vld [vmem:[#allocation3 + $0x130] sm:$0xf]
      %v6005 = vld [vmem:[#allocation3 + $0x134] sm:$0x1]
      %v6006 = vld [vmem:[#allocation3 + $0x13c] sm:$0xf]
      %v6007 = vld [vmem:[#allocation3 + $0x140] sm:$0xf]
      %v6008 = vld [vmem:[#allocation3 + $0x144] sm:$0xf]
      %v6009 = vld [vmem:[#allocation3 + $0x148] sm:$0xf]
      %v6010 = vld [vmem:[#allocation3 + $0x14c] sm:$0x1]
      %v6011 = vld [vmem:[#allocation3 + $0x154] sm:$0xf]
      %v6012 = vld [vmem:[#allocation3 + $0x158] sm:$0xf]
      %v6013 = vld [vmem:[#allocation3 + $0x15c] sm:$0xf]
      %v6014 = vld [vmem:[#allocation3 + $0x160] sm:$0xf]
      %v6015 = vld [vmem:[#allocation3 + $0x164] sm:$0x1]
      %v6016 = vld [vmem:[#allocation3 + $0x16c] sm:$0xf]
      %v6017 = vld [vmem:[#allocation3 + $0x170] sm:$0xf]
      %v6018 = vld [vmem:[#allocation3 + $0x174] sm:$0xf]
      %v6019 = vld [vmem:[#allocation3 + $0x178] sm:$0xf]
      %v6020 = vld [vmem:[#allocation3 + $0x17c] sm:$0x1]
      %v6022 = vshrl.u32 %v5941, 16
      %v6024 = vrot.slane %v6022, 4
      %v6025 = vshll.u32 %v5941, 16
      %v6027 = vrot.slane %v6025, 5
      %v6028 = vor.u32 %v6024, %v6027
      %v6029 = vrot.slane %v6028, 4
      %v6031 = vshll.u32 %v5942, 16
      %v6033 = vrot.slane %v6031, 5
      %v6034 = vsel %vm2440, %v6029, %v6033
      %v6035 = vshrl.u32 %v5942, 16
      %v6037 = vrot.slane %v6035, 4
      %v6038 = vor.u32 %v6037, %v6033
      %v6039 = vrot.slane %v6038, 4
      %v6041 = vshll.u32 %v5943, 16
      %v6043 = vrot.slane %v6041, 5
      %v6044 = vsel %vm2440, %v6039, %v6043
      %v6045 = vshrl.u32 %v5943, 16
      %v6047 = vrot.slane %v6045, 4
      %v6048 = vor.u32 %v6047, %v6043
      %v6049 = vrot.slane %v6048, 4
      %v6051 = vshll.u32 %v5944, 16
      %v6053 = vrot.slane %v6051, 5
      %v6054 = vsel %vm2440, %v6049, %v6053
      %v6055 = vshrl.u32 %v5944, 16
      %v6057 = vrot.slane %v6055, 4
      %v6058 = vor.u32 %v6057, %v6053
      %v6059 = vrot.slane %v6058, 4
      %v6061 = vshll.u32 %v5945, 16
      %v6063 = vrot.slane %v6061, 5
      %v6064 = vsel %vm2440, %v6059, %v6063
      %v6066 = vshrl.u32 %v5946, 16
      %v6068 = vrot.slane %v6066, 4
      %v6069 = vshll.u32 %v5946, 16
      %v6071 = vrot.slane %v6069, 5
      %v6072 = vor.u32 %v6068, %v6071
      %v6073 = vrot.slane %v6072, 4
      %v6075 = vshll.u32 %v5947, 16
      %v6077 = vrot.slane %v6075, 5
      %v6078 = vsel %vm2440, %v6073, %v6077
      %v6079 = vshrl.u32 %v5947, 16
      %v6081 = vrot.slane %v6079, 4
      %v6082 = vor.u32 %v6081, %v6077
      %v6083 = vrot.slane %v6082, 4
      %v6085 = vshll.u32 %v5948, 16
      %v6087 = vrot.slane %v6085, 5
      %v6088 = vsel %vm2440, %v6083, %v6087
      %v6089 = vshrl.u32 %v5948, 16
      %v6091 = vrot.slane %v6089, 4
      %v6092 = vor.u32 %v6091, %v6087
      %v6093 = vrot.slane %v6092, 4
      %v6095 = vshll.u32 %v5949, 16
      %v6097 = vrot.slane %v6095, 5
      %v6098 = vsel %vm2440, %v6093, %v6097
      %v6099 = vshrl.u32 %v5949, 16
      %v6101 = vrot.slane %v6099, 4
      %v6102 = vor.u32 %v6101, %v6097
      %v6103 = vrot.slane %v6102, 4
      %v6105 = vshll.u32 %v5950, 16
      %v6107 = vrot.slane %v6105, 5
      %v6108 = vsel %vm2440, %v6103, %v6107
      %v6110 = vshrl.u32 %v5951, 16
      %v6112 = vrot.slane %v6110, 4
      %v6113 = vshll.u32 %v5951, 16
      %v6115 = vrot.slane %v6113, 5
      %v6116 = vor.u32 %v6112, %v6115
      %v6117 = vrot.slane %v6116, 4
      %v6119 = vshll.u32 %v5952, 16
      %v6121 = vrot.slane %v6119, 5
      %v6122 = vsel %vm2440, %v6117, %v6121
      %v6123 = vshrl.u32 %v5952, 16
      %v6125 = vrot.slane %v6123, 4
      %v6126 = vor.u32 %v6125, %v6121
      %v6127 = vrot.slane %v6126, 4
      %v6129 = vshll.u32 %v5953, 16
      %v6131 = vrot.slane %v6129, 5
      %v6132 = vsel %vm2440, %v6127, %v6131
      %v6133 = vshrl.u32 %v5953, 16
      %v6135 = vrot.slane %v6133, 4
      %v6136 = vor.u32 %v6135, %v6131
      %v6137 = vrot.slane %v6136, 4
      %v6139 = vshll.u32 %v5954, 16
      %v6141 = vrot.slane %v6139, 5
      %v6142 = vsel %vm2440, %v6137, %v6141
      %v6143 = vshrl.u32 %v5954, 16
      %v6145 = vrot.slane %v6143, 4
      %v6146 = vor.u32 %v6145, %v6141
      %v6147 = vrot.slane %v6146, 4
      %v6149 = vshll.u32 %v5955, 16
      %v6151 = vrot.slane %v6149, 5
      %v6152 = vsel %vm2440, %v6147, %v6151
      %v6154 = vshrl.u32 %v5956, 16
      %v6156 = vrot.slane %v6154, 4
      %v6157 = vshll.u32 %v5956, 16
      %v6159 = vrot.slane %v6157, 5
      %v6160 = vor.u32 %v6156, %v6159
      %v6161 = vrot.slane %v6160, 4
      %v6163 = vshll.u32 %v5957, 16
      %v6165 = vrot.slane %v6163, 5
      %v6166 = vsel %vm2440, %v6161, %v6165
      %v6167 = vshrl.u32 %v5957, 16
      %v6169 = vrot.slane %v6167, 4
      %v6170 = vor.u32 %v6169, %v6165
      %v6171 = vrot.slane %v6170, 4
      %v6173 = vshll.u32 %v5958, 16
      %v6175 = vrot.slane %v6173, 5
      %v6176 = vsel %vm2440, %v6171, %v6175
      %v6177 = vshrl.u32 %v5958, 16
      %v6179 = vrot.slane %v6177, 4
      %v6180 = vor.u32 %v6179, %v6175
      %v6181 = vrot.slane %v6180, 4
      %v6183 = vshll.u32 %v5959, 16
      %v6185 = vrot.slane %v6183, 5
      %v6186 = vsel %vm2440, %v6181, %v6185
      %v6187 = vshrl.u32 %v5959, 16
      %v6189 = vrot.slane %v6187, 4
      %v6190 = vor.u32 %v6189, %v6185
      %v6191 = vrot.slane %v6190, 4
      %v6193 = vshll.u32 %v5960, 16
      %v6195 = vrot.slane %v6193, 5
      %v6196 = vsel %vm2440, %v6191, %v6195
      %v6198 = vshrl.u32 %v5961, 16
      %v6200 = vrot.slane %v6198, 4
      %v6201 = vshll.u32 %v5961, 16
      %v6203 = vrot.slane %v6201, 5
      %v6204 = vor.u32 %v6200, %v6203
      %v6205 = vrot.slane %v6204, 4
      %v6207 = vshll.u32 %v5962, 16
      %v6209 = vrot.slane %v6207, 5
      %v6210 = vsel %vm2440, %v6205, %v6209
      %v6211 = vshrl.u32 %v5962, 16
      %v6213 = vrot.slane %v6211, 4
      %v6214 = vor.u32 %v6213, %v6209
      %v6215 = vrot.slane %v6214, 4
      %v6217 = vshll.u32 %v5963, 16
      %v6219 = vrot.slane %v6217, 5
      %v6220 = vsel %vm2440, %v6215, %v6219
      %v6221 = vshrl.u32 %v5963, 16
      %v6223 = vrot.slane %v6221, 4
      %v6224 = vor.u32 %v6223, %v6219
      %v6225 = vrot.slane %v6224, 4
      %v6227 = vshll.u32 %v5964, 16
      %v6229 = vrot.slane %v6227, 5
      %v6230 = vsel %vm2440, %v6225, %v6229
      %v6231 = vshrl.u32 %v5964, 16
      %v6233 = vrot.slane %v6231, 4
      %v6234 = vor.u32 %v6233, %v6229
      %v6235 = vrot.slane %v6234, 4
      %v6237 = vshll.u32 %v5965, 16
      %v6239 = vrot.slane %v6237, 5
      %v6240 = vsel %vm2440, %v6235, %v6239
      %v6242 = vshrl.u32 %v5966, 16
      %v6244 = vrot.slane %v6242, 4
      %v6245 = vshll.u32 %v5966, 16
      %v6247 = vrot.slane %v6245, 5
      %v6248 = vor.u32 %v6244, %v6247
      %v6249 = vrot.slane %v6248, 4
      %v6251 = vshll.u32 %v5967, 16
      %v6253 = vrot.slane %v6251, 5
      %v6254 = vsel %vm2440, %v6249, %v6253
      %v6255 = vshrl.u32 %v5967, 16
      %v6257 = vrot.slane %v6255, 4
      %v6258 = vor.u32 %v6257, %v6253
      %v6259 = vrot.slane %v6258, 4
      %v6261 = vshll.u32 %v5968, 16
      %v6263 = vrot.slane %v6261, 5
      %v6264 = vsel %vm2440, %v6259, %v6263
      %v6265 = vshrl.u32 %v5968, 16
      %v6267 = vrot.slane %v6265, 4
      %v6268 = vor.u32 %v6267, %v6263
      %v6269 = vrot.slane %v6268, 4
      %v6271 = vshll.u32 %v5969, 16
      %v6273 = vrot.slane %v6271, 5
      %v6274 = vsel %vm2440, %v6269, %v6273
      %v6275 = vshrl.u32 %v5969, 16
      %v6277 = vrot.slane %v6275, 4
      %v6278 = vor.u32 %v6277, %v6273
      %v6279 = vrot.slane %v6278, 4
      %v6281 = vshll.u32 %v5970, 16
      %v6283 = vrot.slane %v6281, 5
      %v6284 = vsel %vm2440, %v6279, %v6283
      %v6286 = vshrl.u32 %v5971, 16
      %v6288 = vrot.slane %v6286, 4
      %v6289 = vshll.u32 %v5971, 16
      %v6291 = vrot.slane %v6289, 5
      %v6292 = vor.u32 %v6288, %v6291
      %v6293 = vrot.slane %v6292, 4
      %v6295 = vshll.u32 %v5972, 16
      %v6297 = vrot.slane %v6295, 5
      %v6298 = vsel %vm2440, %v6293, %v6297
      %v6299 = vshrl.u32 %v5972, 16
      %v6301 = vrot.slane %v6299, 4
      %v6302 = vor.u32 %v6301, %v6297
      %v6303 = vrot.slane %v6302, 4
      %v6305 = vshll.u32 %v5973, 16
      %v6307 = vrot.slane %v6305, 5
      %v6308 = vsel %vm2440, %v6303, %v6307
      %v6309 = vshrl.u32 %v5973, 16
      %v6311 = vrot.slane %v6309, 4
      %v6312 = vor.u32 %v6311, %v6307
      %v6313 = vrot.slane %v6312, 4
      %v6315 = vshll.u32 %v5974, 16
      %v6317 = vrot.slane %v6315, 5
      %v6318 = vsel %vm2440, %v6313, %v6317
      %v6319 = vshrl.u32 %v5974, 16
      %v6321 = vrot.slane %v6319, 4
      %v6322 = vor.u32 %v6321, %v6317
      %v6323 = vrot.slane %v6322, 4
      %v6325 = vshll.u32 %v5975, 16
      %v6327 = vrot.slane %v6325, 5
      %v6328 = vsel %vm2440, %v6323, %v6327
      %v6330 = vshrl.u32 %v5976, 16
      %v6332 = vrot.slane %v6330, 4
      %v6333 = vshll.u32 %v5976, 16
      %v6335 = vrot.slane %v6333, 5
      %v6336 = vor.u32 %v6332, %v6335
      %v6337 = vrot.slane %v6336, 4
      %v6339 = vshll.u32 %v5977, 16
      %v6341 = vrot.slane %v6339, 5
      %v6342 = vsel %vm2440, %v6337, %v6341
      %v6343 = vshrl.u32 %v5977, 16
      %v6345 = vrot.slane %v6343, 4
      %v6346 = vor.u32 %v6345, %v6341
      %v6347 = vrot.slane %v6346, 4
      %v6349 = vshll.u32 %v5978, 16
      %v6351 = vrot.slane %v6349, 5
      %v6352 = vsel %vm2440, %v6347, %v6351
      %v6353 = vshrl.u32 %v5978, 16
      %v6355 = vrot.slane %v6353, 4
      %v6356 = vor.u32 %v6355, %v6351
      %v6357 = vrot.slane %v6356, 4
      %v6359 = vshll.u32 %v5979, 16
      %v6361 = vrot.slane %v6359, 5
      %v6362 = vsel %vm2440, %v6357, %v6361
      %v6363 = vshrl.u32 %v5979, 16
      %v6365 = vrot.slane %v6363, 4
      %v6366 = vor.u32 %v6365, %v6361
      %v6367 = vrot.slane %v6366, 4
      %v6369 = vshll.u32 %v5980, 16
      %v6371 = vrot.slane %v6369, 5
      %v6372 = vsel %vm2440, %v6367, %v6371
      %v6374 = vshrl.u32 %v5981, 16
      %v6376 = vrot.slane %v6374, 4
      %v6377 = vshll.u32 %v5981, 16
      %v6379 = vrot.slane %v6377, 5
      %v6380 = vor.u32 %v6376, %v6379
      %v6381 = vrot.slane %v6380, 4
      %v6383 = vshll.u32 %v5982, 16
      %v6385 = vrot.slane %v6383, 5
      %v6386 = vsel %vm2440, %v6381, %v6385
      %v6387 = vshrl.u32 %v5982, 16
      %v6389 = vrot.slane %v6387, 4
      %v6390 = vor.u32 %v6389, %v6385
      %v6391 = vrot.slane %v6390, 4
      %v6393 = vshll.u32 %v5983, 16
      %v6395 = vrot.slane %v6393, 5
      %v6396 = vsel %vm2440, %v6391, %v6395
      %v6397 = vshrl.u32 %v5983, 16
      %v6399 = vrot.slane %v6397, 4
      %v6400 = vor.u32 %v6399, %v6395
      %v6401 = vrot.slane %v6400, 4
      %v6403 = vshll.u32 %v5984, 16
      %v6405 = vrot.slane %v6403, 5
      %v6406 = vsel %vm2440, %v6401, %v6405
      %v6407 = vshrl.u32 %v5984, 16
      %v6409 = vrot.slane %v6407, 4
      %v6410 = vor.u32 %v6409, %v6405
      %v6411 = vrot.slane %v6410, 4
      %v6413 = vshll.u32 %v5985, 16
      %v6415 = vrot.slane %v6413, 5
      %v6416 = vsel %vm2440, %v6411, %v6415
      %v6418 = vshrl.u32 %v5986, 16
      %v6420 = vrot.slane %v6418, 4
      %v6421 = vshll.u32 %v5986, 16
      %v6423 = vrot.slane %v6421, 5
      %v6424 = vor.u32 %v6420, %v6423
      %v6425 = vrot.slane %v6424, 4
      %v6427 = vshll.u32 %v5987, 16
      %v6429 = vrot.slane %v6427, 5
      %v6430 = vsel %vm2440, %v6425, %v6429
      %v6431 = vshrl.u32 %v5987, 16
      %v6433 = vrot.slane %v6431, 4
      %v6434 = vor.u32 %v6433, %v6429
      %v6435 = vrot.slane %v6434, 4
      %v6437 = vshll.u32 %v5988, 16
      %v6439 = vrot.slane %v6437, 5
      %v6440 = vsel %vm2440, %v6435, %v6439
      %v6441 = vshrl.u32 %v5988, 16
      %v6443 = vrot.slane %v6441, 4
      %v6444 = vor.u32 %v6443, %v6439
      %v6445 = vrot.slane %v6444, 4
      %v6447 = vshll.u32 %v5989, 16
      %v6449 = vrot.slane %v6447, 5
      %v6450 = vsel %vm2440, %v6445, %v6449
      %v6451 = vshrl.u32 %v5989, 16
      %v6453 = vrot.slane %v6451, 4
      %v6454 = vor.u32 %v6453, %v6449
      %v6455 = vrot.slane %v6454, 4
      %v6457 = vshll.u32 %v5990, 16
      %v6459 = vrot.slane %v6457, 5
      %v6460 = vsel %vm2440, %v6455, %v6459
      %v6462 = vshrl.u32 %v5991, 16
      %v6464 = vrot.slane %v6462, 4
      %v6465 = vshll.u32 %v5991, 16
      %v6467 = vrot.slane %v6465, 5
      %v6468 = vor.u32 %v6464, %v6467
      %v6469 = vrot.slane %v6468, 4
      %v6471 = vshll.u32 %v5992, 16
      %v6473 = vrot.slane %v6471, 5
      %v6474 = vsel %vm2440, %v6469, %v6473
      %v6475 = vshrl.u32 %v5992, 16
      %v6477 = vrot.slane %v6475, 4
      %v6478 = vor.u32 %v6477, %v6473
      %v6479 = vrot.slane %v6478, 4
      %v6481 = vshll.u32 %v5993, 16
      %v6483 = vrot.slane %v6481, 5
      %v6484 = vsel %vm2440, %v6479, %v6483
      %v6485 = vshrl.u32 %v5993, 16
      %v6487 = vrot.slane %v6485, 4
      %v6488 = vor.u32 %v6487, %v6483
      %v6489 = vrot.slane %v6488, 4
      %v6491 = vshll.u32 %v5994, 16
      %v6493 = vrot.slane %v6491, 5
      %v6494 = vsel %vm2440, %v6489, %v6493
      %v6495 = vshrl.u32 %v5994, 16
      %v6497 = vrot.slane %v6495, 4
      %v6498 = vor.u32 %v6497, %v6493
      %v6499 = vrot.slane %v6498, 4
      %v6501 = vshll.u32 %v5995, 16
      %v6503 = vrot.slane %v6501, 5
      %v6504 = vsel %vm2440, %v6499, %v6503
      %v6506 = vshrl.u32 %v5996, 16
      %v6508 = vrot.slane %v6506, 4
      %v6509 = vshll.u32 %v5996, 16
      %v6511 = vrot.slane %v6509, 5
      %v6512 = vor.u32 %v6508, %v6511
      %v6513 = vrot.slane %v6512, 4
      %v6515 = vshll.u32 %v5997, 16
      %v6517 = vrot.slane %v6515, 5
      %v6518 = vsel %vm2440, %v6513, %v6517
      %v6519 = vshrl.u32 %v5997, 16
      %v6521 = vrot.slane %v6519, 4
      %v6522 = vor.u32 %v6521, %v6517
      %v6523 = vrot.slane %v6522, 4
      %v6525 = vshll.u32 %v5998, 16
      %v6527 = vrot.slane %v6525, 5
      %v6528 = vsel %vm2440, %v6523, %v6527
      %v6529 = vshrl.u32 %v5998, 16
      %v6531 = vrot.slane %v6529, 4
      %v6532 = vor.u32 %v6531, %v6527
      %v6533 = vrot.slane %v6532, 4
      %v6535 = vshll.u32 %v5999, 16
      %v6537 = vrot.slane %v6535, 5
      %v6538 = vsel %vm2440, %v6533, %v6537
      %v6539 = vshrl.u32 %v5999, 16
      %v6541 = vrot.slane %v6539, 4
      %v6542 = vor.u32 %v6541, %v6537
      %v6543 = vrot.slane %v6542, 4
      %v6545 = vshll.u32 %v6000, 16
      %v6547 = vrot.slane %v6545, 5
      %v6548 = vsel %vm2440, %v6543, %v6547
      %v6550 = vshrl.u32 %v6001, 16
      %v6552 = vrot.slane %v6550, 4
      %v6553 = vshll.u32 %v6001, 16
      %v6555 = vrot.slane %v6553, 5
      %v6556 = vor.u32 %v6552, %v6555
      %v6557 = vrot.slane %v6556, 4
      %v6559 = vshll.u32 %v6002, 16
      %v6561 = vrot.slane %v6559, 5
      %v6562 = vsel %vm2440, %v6557, %v6561
      %v6563 = vshrl.u32 %v6002, 16
      %v6565 = vrot.slane %v6563, 4
      %v6566 = vor.u32 %v6565, %v6561
      %v6567 = vrot.slane %v6566, 4
      %v6569 = vshll.u32 %v6003, 16
      %v6571 = vrot.slane %v6569, 5
      %v6572 = vsel %vm2440, %v6567, %v6571
      %v6573 = vshrl.u32 %v6003, 16
      %v6575 = vrot.slane %v6573, 4
      %v6576 = vor.u32 %v6575, %v6571
      %v6577 = vrot.slane %v6576, 4
      %v6579 = vshll.u32 %v6004, 16
      %v6581 = vrot.slane %v6579, 5
      %v6582 = vsel %vm2440, %v6577, %v6581
      %v6583 = vshrl.u32 %v6004, 16
      %v6585 = vrot.slane %v6583, 4
      %v6586 = vor.u32 %v6585, %v6581
      %v6587 = vrot.slane %v6586, 4
      %v6589 = vshll.u32 %v6005, 16
      %v6591 = vrot.slane %v6589, 5
      %v6592 = vsel %vm2440, %v6587, %v6591
      %v6594 = vshrl.u32 %v6006, 16
      %v6596 = vrot.slane %v6594, 4
      %v6597 = vshll.u32 %v6006, 16
      %v6599 = vrot.slane %v6597, 5
      %v6600 = vor.u32 %v6596, %v6599
      %v6601 = vrot.slane %v6600, 4
      %v6603 = vshll.u32 %v6007, 16
      %v6605 = vrot.slane %v6603, 5
      %v6606 = vsel %vm2440, %v6601, %v6605
      %v6607 = vshrl.u32 %v6007, 16
      %v6609 = vrot.slane %v6607, 4
      %v6610 = vor.u32 %v6609, %v6605
      %v6611 = vrot.slane %v6610, 4
      %v6613 = vshll.u32 %v6008, 16
      %v6615 = vrot.slane %v6613, 5
      %v6616 = vsel %vm2440, %v6611, %v6615
      %v6617 = vshrl.u32 %v6008, 16
      %v6619 = vrot.slane %v6617, 4
      %v6620 = vor.u32 %v6619, %v6615
      %v6621 = vrot.slane %v6620, 4
      %v6623 = vshll.u32 %v6009, 16
      %v6625 = vrot.slane %v6623, 5
      %v6626 = vsel %vm2440, %v6621, %v6625
      %v6627 = vshrl.u32 %v6009, 16
      %v6629 = vrot.slane %v6627, 4
      %v6630 = vor.u32 %v6629, %v6625
      %v6631 = vrot.slane %v6630, 4
      %v6633 = vshll.u32 %v6010, 16
      %v6635 = vrot.slane %v6633, 5
      %v6636 = vsel %vm2440, %v6631, %v6635
      %v6638 = vshrl.u32 %v6011, 16
      %v6640 = vrot.slane %v6638, 4
      %v6641 = vshll.u32 %v6011, 16
      %v6643 = vrot.slane %v6641, 5
      %v6644 = vor.u32 %v6640, %v6643
      %v6645 = vrot.slane %v6644, 4
      %v6647 = vshll.u32 %v6012, 16
      %v6649 = vrot.slane %v6647, 5
      %v6650 = vsel %vm2440, %v6645, %v6649
      %v6651 = vshrl.u32 %v6012, 16
      %v6653 = vrot.slane %v6651, 4
      %v6654 = vor.u32 %v6653, %v6649
      %v6655 = vrot.slane %v6654, 4
      %v6657 = vshll.u32 %v6013, 16
      %v6659 = vrot.slane %v6657, 5
      %v6660 = vsel %vm2440, %v6655, %v6659
      %v6661 = vshrl.u32 %v6013, 16
      %v6663 = vrot.slane %v6661, 4
      %v6664 = vor.u32 %v6663, %v6659
      %v6665 = vrot.slane %v6664, 4
      %v6667 = vshll.u32 %v6014, 16
      %v6669 = vrot.slane %v6667, 5
      %v6670 = vsel %vm2440, %v6665, %v6669
      %v6671 = vshrl.u32 %v6014, 16
      %v6673 = vrot.slane %v6671, 4
      %v6674 = vor.u32 %v6673, %v6669
      %v6675 = vrot.slane %v6674, 4
      %v6677 = vshll.u32 %v6015, 16
      %v6679 = vrot.slane %v6677, 5
      %v6680 = vsel %vm2440, %v6675, %v6679
      %v6682 = vshrl.u32 %v6016, 16
      %v6684 = vrot.slane %v6682, 4
      %v6685 = vshll.u32 %v6016, 16
      %v6687 = vrot.slane %v6685, 5
      %v6688 = vor.u32 %v6684, %v6687
      %v6689 = vrot.slane %v6688, 4
      %v6691 = vshll.u32 %v6017, 16
      %v6693 = vrot.slane %v6691, 5
      %v6694 = vsel %vm2440, %v6689, %v6693
      %v6695 = vshrl.u32 %v6017, 16
      %v6697 = vrot.slane %v6695, 4
      %v6698 = vor.u32 %v6697, %v6693
      %v6699 = vrot.slane %v6698, 4
      %v6701 = vshll.u32 %v6018, 16
      %v6703 = vrot.slane %v6701, 5
      %v6704 = vsel %vm2440, %v6699, %v6703
      %v6705 = vshrl.u32 %v6018, 16
      %v6707 = vrot.slane %v6705, 4
      %v6708 = vor.u32 %v6707, %v6703
      %v6709 = vrot.slane %v6708, 4
      %v6711 = vshll.u32 %v6019, 16
      %v6713 = vrot.slane %v6711, 5
      %v6714 = vsel %vm2440, %v6709, %v6713
      %v6715 = vshrl.u32 %v6019, 16
      %v6717 = vrot.slane %v6715, 4
      %v6718 = vor.u32 %v6717, %v6713
      %v6719 = vrot.slane %v6718, 4
      %v6721 = vshll.u32 %v6020, 16
      %v6723 = vrot.slane %v6721, 5
      %v6724 = vsel %vm2440, %v6719, %v6723
      %s6725 = scalar_lea.vmem %s3, 24
      %v6726 = vld [vmem:[%s6725] sm:$0xf]
      %v6727 = vld [vmem:[%s6725 + $0x4] sm:$0xf]
      %v6728 = vld [vmem:[%s6725 + $0x8] sm:$0xf]
      %v6729 = vunpack.c.l.b16 %v6034
      %v6730 = vunpack.c.l.b16 %v6044
      %v6731 = vunpack.c.l.b16 %v6054
      %v6732 = vunpack.c.l.b16 %v6064
      %v6733 = vunpack.c.l.b16 %v6078
      %v6734 = vunpack.c.l.b16 %v6088
      %v6735 = vunpack.c.l.b16 %v6098
      %v6736 = vunpack.c.l.b16 %v6108
      %v6737 = vunpack.c.l.b16 %v6122
      %v6738 = vunpack.c.l.b16 %v6132
      %v6739 = vunpack.c.l.b16 %v6142
      %v6740 = vunpack.c.l.b16 %v6152
      %v6741 = vunpack.c.l.b16 %v6166
      %v6742 = vunpack.c.l.b16 %v6176
      %v6743 = vunpack.c.l.b16 %v6186
      %v6744 = vunpack.c.l.b16 %v6196
      %v6745 = vunpack.c.l.b16 %v6210
      %v6746 = vunpack.c.l.b16 %v6220
      %v6747 = vunpack.c.l.b16 %v6230
      %v6748 = vunpack.c.l.b16 %v6240
      %v6749 = vunpack.c.l.b16 %v6254
      %v6750 = vunpack.c.l.b16 %v6264
      %v6751 = vunpack.c.l.b16 %v6274
      %v6752 = vunpack.c.l.b16 %v6284
      %v6753 = vunpack.c.l.b16 %v6298
      %v6754 = vunpack.c.l.b16 %v6308
      %v6755 = vunpack.c.l.b16 %v6318
      %v6756 = vunpack.c.l.b16 %v6328
      %v6757 = vunpack.c.l.b16 %v6342
      %v6758 = vunpack.c.l.b16 %v6352
      %v6759 = vunpack.c.l.b16 %v6362
      %v6760 = vunpack.c.l.b16 %v6372
      %v6761 = vunpack.c.l.b16 %v6386
      %v6762 = vunpack.c.l.b16 %v6396
      %v6763 = vunpack.c.l.b16 %v6406
      %v6764 = vunpack.c.l.b16 %v6416
      %v6765 = vunpack.c.l.b16 %v6430
      %v6766 = vunpack.c.l.b16 %v6440
      %v6767 = vunpack.c.l.b16 %v6450
      %v6768 = vunpack.c.l.b16 %v6460
      %v6769 = vunpack.c.l.b16 %v6474
      %v6770 = vunpack.c.l.b16 %v6484
      %v6771 = vunpack.c.l.b16 %v6494
      %v6772 = vunpack.c.l.b16 %v6504
      %v6773 = vunpack.c.l.b16 %v6518
      %v6774 = vunpack.c.l.b16 %v6528
      %v6775 = vunpack.c.l.b16 %v6538
      %v6776 = vunpack.c.l.b16 %v6548
      %v6777 = vunpack.c.l.b16 %v6562
      %v6778 = vunpack.c.l.b16 %v6572
      %v6779 = vunpack.c.l.b16 %v6582
      %v6780 = vunpack.c.l.b16 %v6592
      %v6781 = vunpack.c.l.b16 %v6606
      %v6782 = vunpack.c.l.b16 %v6616
      %v6783 = vunpack.c.l.b16 %v6626
      %v6784 = vunpack.c.l.b16 %v6636
      %v6785 = vunpack.c.l.b16 %v6650
      %v6786 = vunpack.c.l.b16 %v6660
      %v6787 = vunpack.c.l.b16 %v6670
      %v6788 = vunpack.c.l.b16 %v6680
      %v6789 = vunpack.c.l.b16 %v6694
      %v6790 = vunpack.c.l.b16 %v6704
      %v6791 = vunpack.c.l.b16 %v6714
      %v6792 = vunpack.c.l.b16 %v6724
      %v6793 = vpack.c.b16 %v6730, %v6729
      %v6794 = vpack.c.b16 %v6732, %v6731
      %v6795 = vpack.c.b16 %v6734, %v6733
      %v6796 = vpack.c.b16 %v6736, %v6735
      %v6797 = vpack.c.b16 %v6738, %v6737
      %v6798 = vpack.c.b16 %v6740, %v6739
      %v6799 = vpack.c.b16 %v6742, %v6741
      %v6800 = vpack.c.b16 %v6744, %v6743
      %v6801 = vpack.c.b16 %v6746, %v6745
      %v6802 = vpack.c.b16 %v6748, %v6747
      %v6803 = vpack.c.b16 %v6750, %v6749
      %v6804 = vpack.c.b16 %v6752, %v6751
      %v6805 = vpack.c.b16 %v6754, %v6753
      %v6806 = vpack.c.b16 %v6756, %v6755
      %v6807 = vpack.c.b16 %v6758, %v6757
      %v6808 = vpack.c.b16 %v6760, %v6759
      %v6809 = vpack.c.b16 %v6762, %v6761
      %v6810 = vpack.c.b16 %v6764, %v6763
      %v6811 = vpack.c.b16 %v6766, %v6765
      %v6812 = vpack.c.b16 %v6768, %v6767
      %v6813 = vpack.c.b16 %v6770, %v6769
      %v6814 = vpack.c.b16 %v6772, %v6771
      %v6815 = vpack.c.b16 %v6774, %v6773
      %v6816 = vpack.c.b16 %v6776, %v6775
      %v6817 = vpack.c.b16 %v6778, %v6777
      %v6818 = vpack.c.b16 %v6780, %v6779
      %v6819 = vpack.c.b16 %v6782, %v6781
      %v6820 = vpack.c.b16 %v6784, %v6783
      %v6821 = vpack.c.b16 %v6786, %v6785
      %v6822 = vpack.c.b16 %v6788, %v6787
      %v6823 = vpack.c.b16 %v6790, %v6789
      %v6824 = vpack.c.b16 %v6792, %v6791
      %v6828 = vunpack.c.l.b16 %v6726
      %v6829 = vunpack.c.l.b16 %v6727
      %v6830 = vunpack.c.l.b16 %v6728
      %v6831 = vpack.c.b16 %v6829, %v6828
      %v6832 = vpack.c.b16 %v6830, %v6830
      %v6835 = vsel %vm5122, %v6793, 0
      %v6838 = vsel %vm5122, %v6794, 0
      %v6841 = vsel %vm5122, %v6795, 0
      %v6844 = vsel %vm5122, %v6796, 0
      %v6847 = vsel %vm5122, %v6797, 0
      %v6850 = vsel %vm5122, %v6798, 0
      %v6853 = vsel %vm5122, %v6799, 0
      %v6856 = vsel %vm5122, %v6800, 0
      %v6859 = vsel %vm5122, %v6801, 0
      %v6862 = vsel %vm5122, %v6802, 0
      %v6865 = vsel %vm5122, %v6803, 0
      %v6868 = vsel %vm5122, %v6804, 0
      %v6871 = vsel %vm5122, %v6805, 0
      %v6874 = vsel %vm5122, %v6806, 0
      %v6877 = vsel %vm5122, %v6807, 0
      %v6880 = vsel %vm5122, %v6808, 0
      %v6883 = vsel %vm5122, %v6809, 0
      %v6886 = vsel %vm5122, %v6810, 0
      %v6889 = vsel %vm5122, %v6811, 0
      %v6892 = vsel %vm5122, %v6812, 0
      %v6895 = vsel %vm5122, %v6813, 0
      %v6898 = vsel %vm5122, %v6814, 0
      %v6901 = vsel %vm5122, %v6815, 0
      %v6904 = vsel %vm5122, %v6816, 0
      %v6907 = vsel %vm5122, %v6817, 0
      %v6910 = vsel %vm5122, %v6818, 0
      %v6913 = vsel %vm5122, %v6819, 0
      %v6916 = vsel %vm5122, %v6820, 0
      %v6919 = vsel %vm5122, %v6821, 0
      %v6922 = vsel %vm5122, %v6822, 0
      %v6925 = vsel %vm5122, %v6823, 0
      %v6928 = vsel %vm5122, %v6824, 0
      %v6931 = vsel %vm5219, %v6832, 0
      %6933 = vmatprep.subr.bf16.mxu0 0
      %6934 = vmatpush1.bf16.msra.mxu0 0
      %6935 = vmatprep.subr.bf16.mxu0 0
      %6936 = vmatpush1.bf16.msra.mxu0 0
      %6937 = vmatprep.subr.bf16.mxu0 0
      %6938 = vmatpush1.bf16.msra.mxu0 0
      %6939 = vmatprep.subr.bf16.mxu0 0
      %6940 = vmatpush1.bf16.msra.mxu0 0
      %6941 = vmatprep.subr.bf16.mxu0 0
      %6942 = vmatpush1.bf16.msra.mxu0 0
      %6943 = vmatprep.subr.bf16.mxu0 0
      %6944 = vmatpush1.bf16.msra.mxu0 0
      %6945 = vmatprep.subr.bf16.mxu0 0
      %6946 = vmatpush1.bf16.msra.mxu0 %v6931
      %6947 = vmatprep.subr.bf16.mxu0 0
      %6948 = vmatpush1.bf16.msra.mxu0 %v6831
      %6949 = vmatprep.subr.bf16.mxu0 0
      %6950 = vmatpush2.bf16.msra.mxu0 0
      %6951 = vmatprep.subr.bf16.mxu0 0
      %6952 = vmatpush2.bf16.msra.mxu0 0
      %6953 = vmatprep.subr.bf16.mxu0 0
      %6954 = vmatpush2.bf16.msra.mxu0 0
      %6955 = vmatprep.subr.bf16.mxu0 0
      %6956 = vmatpush2.bf16.msra.mxu0 0
      %6957 = vmatprep.subr.bf16.mxu0 0
      %6958 = vmatpush2.bf16.msra.mxu0 0
      %6959 = vmatprep.subr.bf16.mxu0 0
      %6960 = vmatpush2.bf16.msra.mxu0 0
      %6961 = vmatprep.subr.bf16.mxu0 0
      %6962 = vmatpush2.bf16.msra.mxu0 0
      %6963 = vmatprep.subr.bf16.mxu0 0
      %6964 = vmatpush2.bf16.msra.mxu0 0
      %6965 = vmatprep.mubr.bf16.mxu0 0
      %6966 = vmatmul.mubr.bf16.gmra.mxu0 %v6835
      %v6967 = vpop.f32.mrf.mxu0
      %v6968 = vadd.f32 0.0, %v6967
      %v6969 = vpop.f32.mrf.mxu0
      %v6970 = vpop.f32.mrf.mxu0
      %v6971 = vadd.f32 0.0, %v6970
      %v6972 = vpop.f32.mrf.mxu0
      %6973 = vmatprep.mubr.bf16.mxu0 0
      %6974 = vmatmul.mubr.bf16.gmra.mxu0 %v6838
      %v6975 = vpop.f32.mrf.mxu0
      %v6976 = vpop.f32.mrf.mxu0
      %v6977 = vpop.f32.mrf.mxu0
      %v6978 = vpop.f32.mrf.mxu0
      %6979 = vmatprep.mubr.bf16.mxu0 0
      %6980 = vmatmul.mubr.bf16.gmra.mxu0 %v6841
      %v6981 = vpop.f32.mrf.mxu0
      %v6982 = vadd.f32 0.0, %v6981
      %v6983 = vpop.f32.mrf.mxu0
      %v6984 = vpop.f32.mrf.mxu0
      %v6985 = vadd.f32 0.0, %v6984
      %v6986 = vpop.f32.mrf.mxu0
      %6987 = vmatprep.mubr.bf16.mxu0 0
      %6988 = vmatmul.mubr.bf16.gmra.mxu0 %v6844
      %v6989 = vpop.f32.mrf.mxu0
      %v6990 = vpop.f32.mrf.mxu0
      %v6991 = vpop.f32.mrf.mxu0
      %v6992 = vpop.f32.mrf.mxu0
      %6993 = vmatprep.mubr.bf16.mxu0 0
      %6994 = vmatmul.mubr.bf16.gmra.mxu0 %v6847
      %v6995 = vpop.f32.mrf.mxu0
      %v6996 = vadd.f32 0.0, %v6995
      %v6997 = vpop.f32.mrf.mxu0
      %v6998 = vpop.f32.mrf.mxu0
      %v6999 = vadd.f32 0.0, %v6998
      %v7000 = vpop.f32.mrf.mxu0
      %7001 = vmatprep.mubr.bf16.mxu0 0
      %7002 = vmatmul.mubr.bf16.gmra.mxu0 %v6850
      %v7003 = vpop.f32.mrf.mxu0
      %v7004 = vpop.f32.mrf.mxu0
      %v7005 = vpop.f32.mrf.mxu0
      %v7006 = vpop.f32.mrf.mxu0
      %7007 = vmatprep.mubr.bf16.mxu0 0
      %7008 = vmatmul.mubr.bf16.gmra.mxu0 %v6853
      %v7009 = vpop.f32.mrf.mxu0
      %v7010 = vadd.f32 0.0, %v7009
      %v7011 = vpop.f32.mrf.mxu0
      %v7012 = vpop.f32.mrf.mxu0
      %v7013 = vadd.f32 0.0, %v7012
      %v7014 = vpop.f32.mrf.mxu0
      %7015 = vmatprep.mubr.bf16.mxu0 0
      %7016 = vmatmul.mubr.bf16.gmra.mxu0 %v6856
      %v7017 = vpop.f32.mrf.mxu0
      %v7018 = vpop.f32.mrf.mxu0
      %v7019 = vpop.f32.mrf.mxu0
      %v7020 = vpop.f32.mrf.mxu0
      %7021 = vmatprep.mubr.bf16.mxu0 0
      %7022 = vmatmul.mubr.bf16.gmra.mxu0 %v6859
      %v7023 = vpop.f32.mrf.mxu0
      %v7024 = vadd.f32 0.0, %v7023
      %v7025 = vpop.f32.mrf.mxu0
      %v7026 = vpop.f32.mrf.mxu0
      %v7027 = vadd.f32 0.0, %v7026
      %v7028 = vpop.f32.mrf.mxu0
      %7029 = vmatprep.mubr.bf16.mxu0 0
      %7030 = vmatmul.mubr.bf16.gmra.mxu0 %v6862
      %v7031 = vpop.f32.mrf.mxu0
      %v7032 = vpop.f32.mrf.mxu0
      %v7033 = vpop.f32.mrf.mxu0
      %v7034 = vpop.f32.mrf.mxu0
      %7035 = vmatprep.mubr.bf16.mxu0 0
      %7036 = vmatmul.mubr.bf16.gmra.mxu0 %v6865
      %v7037 = vpop.f32.mrf.mxu0
      %v7038 = vadd.f32 0.0, %v7037
      %v7039 = vpop.f32.mrf.mxu0
      %v7040 = vpop.f32.mrf.mxu0
      %v7041 = vadd.f32 0.0, %v7040
      %v7042 = vpop.f32.mrf.mxu0
      %7043 = vmatprep.mubr.bf16.mxu0 0
      %7044 = vmatmul.mubr.bf16.gmra.mxu0 %v6868
      %v7045 = vpop.f32.mrf.mxu0
      %v7046 = vpop.f32.mrf.mxu0
      %v7047 = vpop.f32.mrf.mxu0
      %v7048 = vpop.f32.mrf.mxu0
      %7049 = vmatprep.mubr.bf16.mxu0 0
      %7050 = vmatmul.mubr.bf16.gmra.mxu0 %v6871
      %v7051 = vpop.f32.mrf.mxu0
      %v7052 = vadd.f32 0.0, %v7051
      %v7053 = vpop.f32.mrf.mxu0
      %v7054 = vpop.f32.mrf.mxu0
      %v7055 = vadd.f32 0.0, %v7054
      %v7056 = vpop.f32.mrf.mxu0
      %7057 = vmatprep.mubr.bf16.mxu0 0
      %7058 = vmatmul.mubr.bf16.gmra.mxu0 %v6874
      %v7059 = vpop.f32.mrf.mxu0
      %v7060 = vpop.f32.mrf.mxu0
      %v7061 = vpop.f32.mrf.mxu0
      %v7062 = vpop.f32.mrf.mxu0
      %7063 = vmatprep.mubr.bf16.mxu0 0
      %7064 = vmatmul.mubr.bf16.gmra.mxu0 %v6877
      %v7065 = vpop.f32.mrf.mxu0
      %v7066 = vadd.f32 0.0, %v7065
      %v7067 = vpop.f32.mrf.mxu0
      %v7068 = vpop.f32.mrf.mxu0
      %v7069 = vadd.f32 0.0, %v7068
      %v7070 = vpop.f32.mrf.mxu0
      %7071 = vmatprep.mubr.bf16.mxu0 0
      %7072 = vmatmul.mubr.bf16.gmra.mxu0 %v6880
      %v7073 = vpop.f32.mrf.mxu0
      %v7074 = vpop.f32.mrf.mxu0
      %v7075 = vpop.f32.mrf.mxu0
      %v7076 = vpop.f32.mrf.mxu0
      %7077 = vmatprep.mubr.bf16.mxu0 0
      %7078 = vmatmul.mubr.bf16.gmra.mxu0 %v6883
      %v7079 = vpop.f32.mrf.mxu0
      %v7080 = vadd.f32 0.0, %v7079
      %v7081 = vpop.f32.mrf.mxu0
      %v7082 = vpop.f32.mrf.mxu0
      %v7083 = vadd.f32 0.0, %v7082
      %v7084 = vpop.f32.mrf.mxu0
      %7085 = vmatprep.mubr.bf16.mxu0 0
      %7086 = vmatmul.mubr.bf16.gmra.mxu0 %v6886
      %v7087 = vpop.f32.mrf.mxu0
      %v7088 = vpop.f32.mrf.mxu0
      %v7089 = vpop.f32.mrf.mxu0
      %v7090 = vpop.f32.mrf.mxu0
      %7091 = vmatprep.mubr.bf16.mxu0 0
      %7092 = vmatmul.mubr.bf16.gmra.mxu0 %v6889
      %v7093 = vpop.f32.mrf.mxu0
      %v7094 = vadd.f32 0.0, %v7093
      %v7095 = vpop.f32.mrf.mxu0
      %v7096 = vpop.f32.mrf.mxu0
      %v7097 = vadd.f32 0.0, %v7096
      %v7098 = vpop.f32.mrf.mxu0
      %7099 = vmatprep.mubr.bf16.mxu0 0
      %7100 = vmatmul.mubr.bf16.gmra.mxu0 %v6892
      %v7101 = vpop.f32.mrf.mxu0
      %v7102 = vpop.f32.mrf.mxu0
      %v7103 = vpop.f32.mrf.mxu0
      %v7104 = vpop.f32.mrf.mxu0
      %7105 = vmatprep.mubr.bf16.mxu0 0
      %7106 = vmatmul.mubr.bf16.gmra.mxu0 %v6895
      %v7107 = vpop.f32.mrf.mxu0
      %v7108 = vadd.f32 0.0, %v7107
      %v7109 = vpop.f32.mrf.mxu0
      %v7110 = vpop.f32.mrf.mxu0
      %v7111 = vadd.f32 0.0, %v7110
      %v7112 = vpop.f32.mrf.mxu0
      %7113 = vmatprep.mubr.bf16.mxu0 0
      %7114 = vmatmul.mubr.bf16.gmra.mxu0 %v6898
      %v7115 = vpop.f32.mrf.mxu0
      %v7116 = vpop.f32.mrf.mxu0
      %v7117 = vpop.f32.mrf.mxu0
      %v7118 = vpop.f32.mrf.mxu0
      %7119 = vmatprep.mubr.bf16.mxu0 0
      %7120 = vmatmul.mubr.bf16.gmra.mxu0 %v6901
      %v7121 = vpop.f32.mrf.mxu0
      %v7122 = vadd.f32 0.0, %v7121
      %v7123 = vpop.f32.mrf.mxu0
      %v7124 = vpop.f32.mrf.mxu0
      %v7125 = vadd.f32 0.0, %v7124
      %v7126 = vpop.f32.mrf.mxu0
      %7127 = vmatprep.mubr.bf16.mxu0 0
      %7128 = vmatmul.mubr.bf16.gmra.mxu0 %v6904
      %v7129 = vpop.f32.mrf.mxu0
      %v7130 = vpop.f32.mrf.mxu0
      %v7131 = vpop.f32.mrf.mxu0
      %v7132 = vpop.f32.mrf.mxu0
      %7133 = vmatprep.mubr.bf16.mxu0 0
      %7134 = vmatmul.mubr.bf16.gmra.mxu0 %v6907
      %v7135 = vpop.f32.mrf.mxu0
      %v7136 = vadd.f32 0.0, %v7135
      %v7137 = vpop.f32.mrf.mxu0
      %v7138 = vpop.f32.mrf.mxu0
      %v7139 = vadd.f32 0.0, %v7138
      %v7140 = vpop.f32.mrf.mxu0
      %7141 = vmatprep.mubr.bf16.mxu0 0
      %7142 = vmatmul.mubr.bf16.gmra.mxu0 %v6910
      %v7143 = vpop.f32.mrf.mxu0
      %v7144 = vpop.f32.mrf.mxu0
      %v7145 = vpop.f32.mrf.mxu0
      %v7146 = vpop.f32.mrf.mxu0
      %7147 = vmatprep.mubr.bf16.mxu0 0
      %7148 = vmatmul.mubr.bf16.gmra.mxu0 %v6913
      %v7149 = vpop.f32.mrf.mxu0
      %v7150 = vadd.f32 0.0, %v7149
      %v7151 = vpop.f32.mrf.mxu0
      %v7152 = vpop.f32.mrf.mxu0
      %v7153 = vadd.f32 0.0, %v7152
      %v7154 = vpop.f32.mrf.mxu0
      %7155 = vmatprep.mubr.bf16.mxu0 0
      %7156 = vmatmul.mubr.bf16.gmra.mxu0 %v6916
      %v7157 = vpop.f32.mrf.mxu0
      %v7158 = vpop.f32.mrf.mxu0
      %v7159 = vpop.f32.mrf.mxu0
      %v7160 = vpop.f32.mrf.mxu0
      %7161 = vmatprep.mubr.bf16.mxu0 0
      %7162 = vmatmul.mubr.bf16.gmra.mxu0 %v6919
      %v7163 = vpop.f32.mrf.mxu0
      %v7164 = vadd.f32 0.0, %v7163
      %v7165 = vpop.f32.mrf.mxu0
      %v7166 = vpop.f32.mrf.mxu0
      %v7167 = vadd.f32 0.0, %v7166
      %v7168 = vpop.f32.mrf.mxu0
      %7169 = vmatprep.mubr.bf16.mxu0 0
      %7170 = vmatmul.mubr.bf16.gmra.mxu0 %v6922
      %v7171 = vpop.f32.mrf.mxu0
      %v7172 = vpop.f32.mrf.mxu0
      %v7173 = vpop.f32.mrf.mxu0
      %v7174 = vpop.f32.mrf.mxu0
      %7175 = vmatprep.mubr.bf16.mxu0 0
      %7176 = vmatmul.mubr.bf16.gmra.mxu0 %v6925
      %v7177 = vpop.f32.mrf.mxu0
      %v7178 = vadd.f32 0.0, %v7177
      %v7179 = vpop.f32.mrf.mxu0
      %v7180 = vpop.f32.mrf.mxu0
      %v7181 = vadd.f32 0.0, %v7180
      %v7182 = vpop.f32.mrf.mxu0
      %7183 = vmatprep.mubr.bf16.mxu0 0
      %7184 = vmatmul.mubr.bf16.gmra.mxu0 %v6928
      %v7185 = vpop.f32.mrf.mxu0
      %v7186 = vpop.f32.mrf.mxu0
      %v7187 = vpop.f32.mrf.mxu0
      %v7188 = vpop.f32.mrf.mxu0
      %7189 = vdwg.mxu0
      %v7190 = vadd.f32 %v5719, %v6968
      %v7191 = vadd.f32 %v5722, %v6971
      %v7192 = vadd.f32 %v5733, %v6982
      %v7193 = vadd.f32 %v5736, %v6985
      %v7194 = vadd.f32 %v5747, %v6996
      %v7195 = vadd.f32 %v5750, %v6999
      %v7196 = vadd.f32 %v5761, %v7010
      %v7197 = vadd.f32 %v5764, %v7013
      %v7198 = vadd.f32 %v5775, %v7024
      %v7199 = vadd.f32 %v5778, %v7027
      %v7200 = vadd.f32 %v5789, %v7038
      %v7201 = vadd.f32 %v5792, %v7041
      %v7202 = vadd.f32 %v5803, %v7052
      %v7203 = vadd.f32 %v5806, %v7055
      %v7204 = vadd.f32 %v5817, %v7066
      %v7205 = vadd.f32 %v5820, %v7069
      %v7206 = vadd.f32 %v5831, %v7080
      %v7207 = vadd.f32 %v5834, %v7083
      %v7208 = vadd.f32 %v5845, %v7094
      %v7209 = vadd.f32 %v5848, %v7097
      %v7210 = vadd.f32 %v5859, %v7108
      %v7211 = vadd.f32 %v5862, %v7111
      %v7212 = vadd.f32 %v5873, %v7122
      %v7213 = vadd.f32 %v5876, %v7125
      %v7214 = vadd.f32 %v5887, %v7136
      %v7215 = vadd.f32 %v5890, %v7139
      %v7216 = vadd.f32 %v5901, %v7150
      %v7217 = vadd.f32 %v5904, %v7153
      %v7218 = vadd.f32 %v5915, %v7164
      %v7219 = vadd.f32 %v5918, %v7167
      %v7220 = vadd.f32 %v5929, %v7178
      %v7221 = vadd.f32 %v5932, %v7181
      %v7222 = vld [vmem:[%s4] sm:$0x1]
      %v7224 = vlaneseq
      %v7225 = vshrl.u32 %v7224, 7
      %v7226 = vsub.s32 0, %v7225
      %v7227 = vrot.slane %v7222, %v7226
      %v7229 = vadd.f32 %v7190, %v7227
      %v7230 = vadd.f32 %v7191, %v7227
      %v7231 = vadd.f32 %v7192, %v7227
      %v7232 = vadd.f32 %v7193, %v7227
      %v7233 = vadd.f32 %v7194, %v7227
      %v7234 = vadd.f32 %v7195, %v7227
      %v7235 = vadd.f32 %v7196, %v7227
      %v7236 = vadd.f32 %v7197, %v7227
      %v7237 = vadd.f32 %v7198, %v7227
      %v7238 = vadd.f32 %v7199, %v7227
      %v7239 = vadd.f32 %v7200, %v7227
      %v7240 = vadd.f32 %v7201, %v7227
      %v7241 = vadd.f32 %v7202, %v7227
      %v7242 = vadd.f32 %v7203, %v7227
      %v7243 = vadd.f32 %v7204, %v7227
      %v7244 = vadd.f32 %v7205, %v7227
      %v7245 = vadd.f32 %v7206, %v7227
      %v7246 = vadd.f32 %v7207, %v7227
      %v7247 = vadd.f32 %v7208, %v7227
      %v7248 = vadd.f32 %v7209, %v7227
      %v7249 = vadd.f32 %v7210, %v7227
      %v7250 = vadd.f32 %v7211, %v7227
      %v7251 = vadd.f32 %v7212, %v7227
      %v7252 = vadd.f32 %v7213, %v7227
      %v7253 = vadd.f32 %v7214, %v7227
      %v7254 = vadd.f32 %v7215, %v7227
      %v7255 = vadd.f32 %v7216, %v7227
      %v7256 = vadd.f32 %v7217, %v7227
      %v7257 = vadd.f32 %v7218, %v7227
      %v7258 = vadd.f32 %v7219, %v7227
      %v7259 = vadd.f32 %v7220, %v7227
      %v7260 = vadd.f32 %v7221, %v7227
      %v7261 = vmul.f32 %v7229, 0.01
      %v7262 = vmul.f32 %v7230, 0.01
      %v7263 = vmul.f32 %v7231, 0.01
      %v7264 = vmul.f32 %v7232, 0.01
      %v7265 = vmul.f32 %v7233, 0.01
      %v7266 = vmul.f32 %v7234, 0.01
      %v7267 = vmul.f32 %v7235, 0.01
      %v7268 = vmul.f32 %v7236, 0.01
      %v7269 = vmul.f32 %v7237, 0.01
      %v7270 = vmul.f32 %v7238, 0.01
      %v7271 = vmul.f32 %v7239, 0.01
      %v7272 = vmul.f32 %v7240, 0.01
      %v7273 = vmul.f32 %v7241, 0.01
      %v7274 = vmul.f32 %v7242, 0.01
      %v7275 = vmul.f32 %v7243, 0.01
      %v7276 = vmul.f32 %v7244, 0.01
      %v7277 = vmul.f32 %v7245, 0.01
      %v7278 = vmul.f32 %v7246, 0.01
      %v7279 = vmul.f32 %v7247, 0.01
      %v7280 = vmul.f32 %v7248, 0.01
      %v7281 = vmul.f32 %v7249, 0.01
      %v7282 = vmul.f32 %v7250, 0.01
      %v7283 = vmul.f32 %v7251, 0.01
      %v7284 = vmul.f32 %v7252, 0.01
      %v7285 = vmul.f32 %v7253, 0.01
      %v7286 = vmul.f32 %v7254, 0.01
      %v7287 = vmul.f32 %v7255, 0.01
      %v7288 = vmul.f32 %v7256, 0.01
      %v7289 = vmul.f32 %v7257, 0.01
      %v7290 = vmul.f32 %v7258, 0.01
      %v7291 = vmul.f32 %v7259, 0.01
      %v7292 = vmul.f32 %v7260, 0.01
      %v7293 = vmax.f32 %v7229, %v7261
      %v7294 = vmax.f32 %v7230, %v7262
      %v7295 = vmax.f32 %v7231, %v7263
      %v7296 = vmax.f32 %v7232, %v7264
      %v7297 = vmax.f32 %v7233, %v7265
      %v7298 = vmax.f32 %v7234, %v7266
      %v7299 = vmax.f32 %v7235, %v7267
      %v7300 = vmax.f32 %v7236, %v7268
      %v7301 = vmax.f32 %v7237, %v7269
      %v7302 = vmax.f32 %v7238, %v7270
      %v7303 = vmax.f32 %v7239, %v7271
      %v7304 = vmax.f32 %v7240, %v7272
      %v7305 = vmax.f32 %v7241, %v7273
      %v7306 = vmax.f32 %v7242, %v7274
      %v7307 = vmax.f32 %v7243, %v7275
      %v7308 = vmax.f32 %v7244, %v7276
      %v7309 = vmax.f32 %v7245, %v7277
      %v7310 = vmax.f32 %v7246, %v7278
      %v7311 = vmax.f32 %v7247, %v7279
      %v7312 = vmax.f32 %v7248, %v7280
      %v7313 = vmax.f32 %v7249, %v7281
      %v7314 = vmax.f32 %v7250, %v7282
      %v7315 = vmax.f32 %v7251, %v7283
      %v7316 = vmax.f32 %v7252, %v7284
      %v7317 = vmax.f32 %v7253, %v7285
      %v7318 = vmax.f32 %v7254, %v7286
      %v7319 = vmax.f32 %v7255, %v7287
      %v7320 = vmax.f32 %v7256, %v7288
      %v7321 = vmax.f32 %v7257, %v7289
      %v7322 = vmax.f32 %v7258, %v7290
      %v7323 = vmax.f32 %v7259, %v7291
      %v7324 = vmax.f32 %v7260, %v7292
      %v7325 = vmax.f32 %v7293, %v7295
      %v7326 = vmax.f32 %v7294, %v7296
      %v7327 = vmax.f32 %v7297, %v7299
      %v7328 = vmax.f32 %v7298, %v7300
      %v7329 = vmax.f32 %v7301, %v7303
      %v7330 = vmax.f32 %v7302, %v7304
      %v7331 = vmax.f32 %v7305, %v7307
      %v7332 = vmax.f32 %v7306, %v7308
      %v7333 = vmax.f32 %v7309, %v7311
      %v7334 = vmax.f32 %v7310, %v7312
      %v7335 = vmax.f32 %v7313, %v7315
      %v7336 = vmax.f32 %v7314, %v7316
      %v7337 = vmax.f32 %v7317, %v7319
      %v7338 = vmax.f32 %v7318, %v7320
      %v7339 = vmax.f32 %v7321, %v7323
      %v7340 = vmax.f32 %v7322, %v7324
      %v7357 = vcombine.high %v7325, %v7325
      %v7359 = vunpack.c.l.s4 1983009808
      %v7360 = vunpack.c.0.s8 %v7359
      %v7361 = vlaneseq
      %v7362 = vshrl.u32 %v7361, 7
      %v7363 = vsub.s32 %v7360, %v7362
      %v7364 = vrot.slane %v7325, %v7363
      %v7366 = vunpack.c.l.s4 1983009808
      %v7367 = vunpack.c.0.s8 %v7366
      %v7368 = vlaneseq
      %v7369 = vshrl.u32 %v7368, 7
      %v7370 = vsub.s32 %v7367, %v7369
      %v7371 = vrot.slane %v7357, %v7370
      %v7372 = vcombine.high %v7364, %v7364
      %v7373 = vcombine.high %v7371, %v7371
      %v7374 = vcombine.high %v7326, %v7326
      %v7376 = vunpack.c.l.s4 1983009808
      %v7377 = vunpack.c.0.s8 %v7376
      %v7378 = vlaneseq
      %v7379 = vshrl.u32 %v7378, 7
      %v7380 = vsub.s32 %v7377, %v7379
      %v7381 = vrot.slane %v7326, %v7380
      %v7383 = vunpack.c.l.s4 1983009808
      %v7384 = vunpack.c.0.s8 %v7383
      %v7385 = vlaneseq
      %v7386 = vshrl.u32 %v7385, 7
      %v7387 = vsub.s32 %v7384, %v7386
      %v7388 = vrot.slane %v7374, %v7387
      %v7389 = vcombine.high %v7381, %v7381
      %v7390 = vcombine.high %v7388, %v7388
      %v7391 = vcombine.high %v7327, %v7327
      %v7393 = vunpack.c.l.s4 1983009808
      %v7394 = vunpack.c.0.s8 %v7393
      %v7395 = vlaneseq
      %v7396 = vshrl.u32 %v7395, 7
      %v7397 = vsub.s32 %v7394, %v7396
      %v7398 = vrot.slane %v7327, %v7397
      %v7400 = vunpack.c.l.s4 1983009808
      %v7401 = vunpack.c.0.s8 %v7400
      %v7402 = vlaneseq
      %v7403 = vshrl.u32 %v7402, 7
      %v7404 = vsub.s32 %v7401, %v7403
      %v7405 = vrot.slane %v7391, %v7404
      %v7406 = vcombine.high %v7398, %v7398
      %v7407 = vcombine.high %v7405, %v7405
      %v7408 = vcombine.high %v7328, %v7328
      %v7410 = vunpack.c.l.s4 1983009808
      %v7411 = vunpack.c.0.s8 %v7410
      %v7412 = vlaneseq
      %v7413 = vshrl.u32 %v7412, 7
      %v7414 = vsub.s32 %v7411, %v7413
      %v7415 = vrot.slane %v7328, %v7414
      %v7417 = vunpack.c.l.s4 1983009808
      %v7418 = vunpack.c.0.s8 %v7417
      %v7419 = vlaneseq
      %v7420 = vshrl.u32 %v7419, 7
      %v7421 = vsub.s32 %v7418, %v7420
      %v7422 = vrot.slane %v7408, %v7421
      %v7423 = vcombine.high %v7415, %v7415
      %v7424 = vcombine.high %v7422, %v7422
      %v7425 = vcombine.high %v7329, %v7329
      %v7427 = vunpack.c.l.s4 1983009808
      %v7428 = vunpack.c.0.s8 %v7427
      %v7429 = vlaneseq
      %v7430 = vshrl.u32 %v7429, 7
      %v7431 = vsub.s32 %v7428, %v7430
      %v7432 = vrot.slane %v7329, %v7431
      %v7434 = vunpack.c.l.s4 1983009808
      %v7435 = vunpack.c.0.s8 %v7434
      %v7436 = vlaneseq
      %v7437 = vshrl.u32 %v7436, 7
      %v7438 = vsub.s32 %v7435, %v7437
      %v7439 = vrot.slane %v7425, %v7438
      %v7440 = vcombine.high %v7432, %v7432
      %v7441 = vcombine.high %v7439, %v7439
      %v7442 = vcombine.high %v7330, %v7330
      %v7444 = vunpack.c.l.s4 1983009808
      %v7445 = vunpack.c.0.s8 %v7444
      %v7446 = vlaneseq
      %v7447 = vshrl.u32 %v7446, 7
      %v7448 = vsub.s32 %v7445, %v7447
      %v7449 = vrot.slane %v7330, %v7448
      %v7451 = vunpack.c.l.s4 1983009808
      %v7452 = vunpack.c.0.s8 %v7451
      %v7453 = vlaneseq
      %v7454 = vshrl.u32 %v7453, 7
      %v7455 = vsub.s32 %v7452, %v7454
      %v7456 = vrot.slane %v7442, %v7455
      %v7457 = vcombine.high %v7449, %v7449
      %v7458 = vcombine.high %v7456, %v7456
      %v7459 = vcombine.high %v7331, %v7331
      %v7461 = vunpack.c.l.s4 1983009808
      %v7462 = vunpack.c.0.s8 %v7461
      %v7463 = vlaneseq
      %v7464 = vshrl.u32 %v7463, 7
      %v7465 = vsub.s32 %v7462, %v7464
      %v7466 = vrot.slane %v7331, %v7465
      %v7468 = vunpack.c.l.s4 1983009808
      %v7469 = vunpack.c.0.s8 %v7468
      %v7470 = vlaneseq
      %v7471 = vshrl.u32 %v7470, 7
      %v7472 = vsub.s32 %v7469, %v7471
      %v7473 = vrot.slane %v7459, %v7472
      %v7474 = vcombine.high %v7466, %v7466
      %v7475 = vcombine.high %v7473, %v7473
      %v7476 = vcombine.high %v7332, %v7332
      %v7478 = vunpack.c.l.s4 1983009808
      %v7479 = vunpack.c.0.s8 %v7478
      %v7480 = vlaneseq
      %v7481 = vshrl.u32 %v7480, 7
      %v7482 = vsub.s32 %v7479, %v7481
      %v7483 = vrot.slane %v7332, %v7482
      %v7485 = vunpack.c.l.s4 1983009808
      %v7486 = vunpack.c.0.s8 %v7485
      %v7487 = vlaneseq
      %v7488 = vshrl.u32 %v7487, 7
      %v7489 = vsub.s32 %v7486, %v7488
      %v7490 = vrot.slane %v7476, %v7489
      %v7491 = vcombine.high %v7483, %v7483
      %v7492 = vcombine.high %v7490, %v7490
      %v7493 = vcombine.high %v7333, %v7333
      %v7495 = vunpack.c.l.s4 1983009808
      %v7496 = vunpack.c.0.s8 %v7495
      %v7497 = vlaneseq
      %v7498 = vshrl.u32 %v7497, 7
      %v7499 = vsub.s32 %v7496, %v7498
      %v7500 = vrot.slane %v7333, %v7499
      %v7502 = vunpack.c.l.s4 1983009808
      %v7503 = vunpack.c.0.s8 %v7502
      %v7504 = vlaneseq
      %v7505 = vshrl.u32 %v7504, 7
      %v7506 = vsub.s32 %v7503, %v7505
      %v7507 = vrot.slane %v7493, %v7506
      %v7508 = vcombine.high %v7500, %v7500
      %v7509 = vcombine.high %v7507, %v7507
      %v7510 = vcombine.high %v7334, %v7334
      %v7512 = vunpack.c.l.s4 1983009808
      %v7513 = vunpack.c.0.s8 %v7512
      %v7514 = vlaneseq
      %v7515 = vshrl.u32 %v7514, 7
      %v7516 = vsub.s32 %v7513, %v7515
      %v7517 = vrot.slane %v7334, %v7516
      %v7519 = vunpack.c.l.s4 1983009808
      %v7520 = vunpack.c.0.s8 %v7519
      %v7521 = vlaneseq
      %v7522 = vshrl.u32 %v7521, 7
      %v7523 = vsub.s32 %v7520, %v7522
      %v7524 = vrot.slane %v7510, %v7523
      %v7525 = vcombine.high %v7517, %v7517
      %v7526 = vcombine.high %v7524, %v7524
      %v7527 = vcombine.high %v7335, %v7335
      %v7529 = vunpack.c.l.s4 1983009808
      %v7530 = vunpack.c.0.s8 %v7529
      %v7531 = vlaneseq
      %v7532 = vshrl.u32 %v7531, 7
      %v7533 = vsub.s32 %v7530, %v7532
      %v7534 = vrot.slane %v7335, %v7533
      %v7536 = vunpack.c.l.s4 1983009808
      %v7537 = vunpack.c.0.s8 %v7536
      %v7538 = vlaneseq
      %v7539 = vshrl.u32 %v7538, 7
      %v7540 = vsub.s32 %v7537, %v7539
      %v7541 = vrot.slane %v7527, %v7540
      %v7542 = vcombine.high %v7534, %v7534
      %v7543 = vcombine.high %v7541, %v7541
      %v7544 = vcombine.high %v7336, %v7336
      %v7546 = vunpack.c.l.s4 1983009808
      %v7547 = vunpack.c.0.s8 %v7546
      %v7548 = vlaneseq
      %v7549 = vshrl.u32 %v7548, 7
      %v7550 = vsub.s32 %v7547, %v7549
      %v7551 = vrot.slane %v7336, %v7550
      %v7553 = vunpack.c.l.s4 1983009808
      %v7554 = vunpack.c.0.s8 %v7553
      %v7555 = vlaneseq
      %v7556 = vshrl.u32 %v7555, 7
      %v7557 = vsub.s32 %v7554, %v7556
      %v7558 = vrot.slane %v7544, %v7557
      %v7559 = vcombine.high %v7551, %v7551
      %v7560 = vcombine.high %v7558, %v7558
      %v7561 = vcombine.high %v7337, %v7337
      %v7563 = vunpack.c.l.s4 1983009808
      %v7564 = vunpack.c.0.s8 %v7563
      %v7565 = vlaneseq
      %v7566 = vshrl.u32 %v7565, 7
      %v7567 = vsub.s32 %v7564, %v7566
      %v7568 = vrot.slane %v7337, %v7567
      %v7570 = vunpack.c.l.s4 1983009808
      %v7571 = vunpack.c.0.s8 %v7570
      %v7572 = vlaneseq
      %v7573 = vshrl.u32 %v7572, 7
      %v7574 = vsub.s32 %v7571, %v7573
      %v7575 = vrot.slane %v7561, %v7574
      %v7576 = vcombine.high %v7568, %v7568
      %v7577 = vcombine.high %v7575, %v7575
      %v7578 = vcombine.high %v7338, %v7338
      %v7580 = vunpack.c.l.s4 1983009808
      %v7581 = vunpack.c.0.s8 %v7580
      %v7582 = vlaneseq
      %v7583 = vshrl.u32 %v7582, 7
      %v7584 = vsub.s32 %v7581, %v7583
      %v7585 = vrot.slane %v7338, %v7584
      %v7587 = vunpack.c.l.s4 1983009808
      %v7588 = vunpack.c.0.s8 %v7587
      %v7589 = vlaneseq
      %v7590 = vshrl.u32 %v7589, 7
      %v7591 = vsub.s32 %v7588, %v7590
      %v7592 = vrot.slane %v7578, %v7591
      %v7593 = vcombine.high %v7585, %v7585
      %v7594 = vcombine.high %v7592, %v7592
      %v7595 = vcombine.high %v7339, %v7339
      %v7597 = vunpack.c.l.s4 1983009808
      %v7598 = vunpack.c.0.s8 %v7597
      %v7599 = vlaneseq
      %v7600 = vshrl.u32 %v7599, 7
      %v7601 = vsub.s32 %v7598, %v7600
      %v7602 = vrot.slane %v7339, %v7601
      %v7604 = vunpack.c.l.s4 1983009808
      %v7605 = vunpack.c.0.s8 %v7604
      %v7606 = vlaneseq
      %v7607 = vshrl.u32 %v7606, 7
      %v7608 = vsub.s32 %v7605, %v7607
      %v7609 = vrot.slane %v7595, %v7608
      %v7610 = vcombine.high %v7602, %v7602
      %v7611 = vcombine.high %v7609, %v7609
      %v7612 = vcombine.high %v7340, %v7340
      %v7614 = vunpack.c.l.s4 1983009808
      %v7615 = vunpack.c.0.s8 %v7614
      %v7616 = vlaneseq
      %v7617 = vshrl.u32 %v7616, 7
      %v7618 = vsub.s32 %v7615, %v7617
      %v7619 = vrot.slane %v7340, %v7618
      %v7621 = vunpack.c.l.s4 1983009808
      %v7622 = vunpack.c.0.s8 %v7621
      %v7623 = vlaneseq
      %v7624 = vshrl.u32 %v7623, 7
      %v7625 = vsub.s32 %v7622, %v7624
      %v7626 = vrot.slane %v7612, %v7625
      %v7627 = vcombine.high %v7619, %v7619
      %v7628 = vcombine.high %v7626, %v7626
      %v7693 = vrot.slane %v7364, 7
      %v7694 = vrot.slane %v7693, 2
      %v7695 = vrot.slane %v7372, 7
      %v7696 = vrot.slane %v7695, 2
      %v7697 = vrot.slane %v7371, 7
      %v7698 = vrot.slane %v7697, 2
      %v7699 = vrot.slane %v7373, 7
      %v7700 = vrot.slane %v7699, 2
      %v7701 = vrot.slane %v7381, 7
      %v7702 = vrot.slane %v7701, 2
      %v7703 = vrot.slane %v7389, 7
      %v7704 = vrot.slane %v7703, 2
      %v7705 = vrot.slane %v7388, 7
      %v7706 = vrot.slane %v7705, 2
      %v7707 = vrot.slane %v7390, 7
      %v7708 = vrot.slane %v7707, 2
      %v7709 = vrot.slane %v7398, 7
      %v7710 = vrot.slane %v7709, 2
      %v7711 = vrot.slane %v7406, 7
      %v7712 = vrot.slane %v7711, 2
      %v7713 = vrot.slane %v7405, 7
      %v7714 = vrot.slane %v7713, 2
      %v7715 = vrot.slane %v7407, 7
      %v7716 = vrot.slane %v7715, 2
      %v7717 = vrot.slane %v7415, 7
      %v7718 = vrot.slane %v7717, 2
      %v7719 = vrot.slane %v7423, 7
      %v7720 = vrot.slane %v7719, 2
      %v7721 = vrot.slane %v7422, 7
      %v7722 = vrot.slane %v7721, 2
      %v7723 = vrot.slane %v7424, 7
      %v7724 = vrot.slane %v7723, 2
      %v7725 = vrot.slane %v7432, 7
      %v7726 = vrot.slane %v7725, 2
      %v7727 = vrot.slane %v7440, 7
      %v7728 = vrot.slane %v7727, 2
      %v7729 = vrot.slane %v7439, 7
      %v7730 = vrot.slane %v7729, 2
      %v7731 = vrot.slane %v7441, 7
      %v7732 = vrot.slane %v7731, 2
      %v7733 = vrot.slane %v7449, 7
      %v7734 = vrot.slane %v7733, 2
      %v7735 = vrot.slane %v7457, 7
      %v7736 = vrot.slane %v7735, 2
      %v7737 = vrot.slane %v7456, 7
      %v7738 = vrot.slane %v7737, 2
      %v7739 = vrot.slane %v7458, 7
      %v7740 = vrot.slane %v7739, 2
      %v7741 = vrot.slane %v7466, 7
      %v7742 = vrot.slane %v7741, 2
      %v7743 = vrot.slane %v7474, 7
      %v7744 = vrot.slane %v7743, 2
      %v7745 = vrot.slane %v7473, 7
      %v7746 = vrot.slane %v7745, 2
      %v7747 = vrot.slane %v7475, 7
      %v7748 = vrot.slane %v7747, 2
      %v7749 = vrot.slane %v7483, 7
      %v7750 = vrot.slane %v7749, 2
      %v7751 = vrot.slane %v7491, 7
      %v7752 = vrot.slane %v7751, 2
      %v7753 = vrot.slane %v7490, 7
      %v7754 = vrot.slane %v7753, 2
      %v7755 = vrot.slane %v7492, 7
      %v7756 = vrot.slane %v7755, 2
      %v7757 = vrot.slane %v7500, 7
      %v7758 = vrot.slane %v7757, 2
      %v7759 = vrot.slane %v7508, 7
      %v7760 = vrot.slane %v7759, 2
      %v7761 = vrot.slane %v7507, 7
      %v7762 = vrot.slane %v7761, 2
      %v7763 = vrot.slane %v7509, 7
      %v7764 = vrot.slane %v7763, 2
      %v7765 = vrot.slane %v7517, 7
      %v7766 = vrot.slane %v7765, 2
      %v7767 = vrot.slane %v7525, 7
      %v7768 = vrot.slane %v7767, 2
      %v7769 = vrot.slane %v7524, 7
      %v7770 = vrot.slane %v7769, 2
      %v7771 = vrot.slane %v7526, 7
      %v7772 = vrot.slane %v7771, 2
      %v7773 = vrot.slane %v7534, 7
      %v7774 = vrot.slane %v7773, 2
      %v7775 = vrot.slane %v7542, 7
      %v7776 = vrot.slane %v7775, 2
      %v7777 = vrot.slane %v7541, 7
      %v7778 = vrot.slane %v7777, 2
      %v7779 = vrot.slane %v7543, 7
      %v7780 = vrot.slane %v7779, 2
      %v7781 = vrot.slane %v7551, 7
      %v7782 = vrot.slane %v7781, 2
      %v7783 = vrot.slane %v7559, 7
      %v7784 = vrot.slane %v7783, 2
      %v7785 = vrot.slane %v7558, 7
      %v7786 = vrot.slane %v7785, 2
      %v7787 = vrot.slane %v7560, 7
      %v7788 = vrot.slane %v7787, 2
      %v7789 = vrot.slane %v7568, 7
      %v7790 = vrot.slane %v7789, 2
      %v7791 = vrot.slane %v7576, 7
      %v7792 = vrot.slane %v7791, 2
      %v7793 = vrot.slane %v7575, 7
      %v7794 = vrot.slane %v7793, 2
      %v7795 = vrot.slane %v7577, 7
      %v7796 = vrot.slane %v7795, 2
      %v7797 = vrot.slane %v7585, 7
      %v7798 = vrot.slane %v7797, 2
      %v7799 = vrot.slane %v7593, 7
      %v7800 = vrot.slane %v7799, 2
      %v7801 = vrot.slane %v7592, 7
      %v7802 = vrot.slane %v7801, 2
      %v7803 = vrot.slane %v7594, 7
      %v7804 = vrot.slane %v7803, 2
      %v7805 = vrot.slane %v7602, 7
      %v7806 = vrot.slane %v7805, 2
      %v7807 = vrot.slane %v7610, 7
      %v7808 = vrot.slane %v7807, 2
      %v7809 = vrot.slane %v7609, 7
      %v7810 = vrot.slane %v7809, 2
      %v7811 = vrot.slane %v7611, 7
      %v7812 = vrot.slane %v7811, 2
      %v7813 = vrot.slane %v7619, 7
      %v7814 = vrot.slane %v7813, 2
      %v7815 = vrot.slane %v7627, 7
      %v7816 = vrot.slane %v7815, 2
      %v7817 = vrot.slane %v7626, 7
      %v7818 = vrot.slane %v7817, 2
      %v7819 = vrot.slane %v7628, 7
      %v7820 = vrot.slane %v7819, 2
      %v7885 = vmax.f32 %v7364, %v7694
      %v7886 = vmax.f32 %v7372, %v7696
      %v7887 = vmax.f32 %v7371, %v7698
      %v7888 = vmax.f32 %v7373, %v7700
      %v7889 = vmax.f32 %v7381, %v7702
      %v7890 = vmax.f32 %v7389, %v7704
      %v7891 = vmax.f32 %v7388, %v7706
      %v7892 = vmax.f32 %v7390, %v7708
      %v7893 = vmax.f32 %v7398, %v7710
      %v7894 = vmax.f32 %v7406, %v7712
      %v7895 = vmax.f32 %v7405, %v7714
      %v7896 = vmax.f32 %v7407, %v7716
      %v7897 = vmax.f32 %v7415, %v7718
      %v7898 = vmax.f32 %v7423, %v7720
      %v7899 = vmax.f32 %v7422, %v7722
      %v7900 = vmax.f32 %v7424, %v7724
      %v7901 = vmax.f32 %v7432, %v7726
      %v7902 = vmax.f32 %v7440, %v7728
      %v7903 = vmax.f32 %v7439, %v7730
      %v7904 = vmax.f32 %v7441, %v7732
      %v7905 = vmax.f32 %v7449, %v7734
      %v7906 = vmax.f32 %v7457, %v7736
      %v7907 = vmax.f32 %v7456, %v7738
      %v7908 = vmax.f32 %v7458, %v7740
      %v7909 = vmax.f32 %v7466, %v7742
      %v7910 = vmax.f32 %v7474, %v7744
      %v7911 = vmax.f32 %v7473, %v7746
      %v7912 = vmax.f32 %v7475, %v7748
      %v7913 = vmax.f32 %v7483, %v7750
      %v7914 = vmax.f32 %v7491, %v7752
      %v7915 = vmax.f32 %v7490, %v7754
      %v7916 = vmax.f32 %v7492, %v7756
      %v7917 = vmax.f32 %v7500, %v7758
      %v7918 = vmax.f32 %v7508, %v7760
      %v7919 = vmax.f32 %v7507, %v7762
      %v7920 = vmax.f32 %v7509, %v7764
      %v7921 = vmax.f32 %v7517, %v7766
      %v7922 = vmax.f32 %v7525, %v7768
      %v7923 = vmax.f32 %v7524, %v7770
      %v7924 = vmax.f32 %v7526, %v7772
      %v7925 = vmax.f32 %v7534, %v7774
      %v7926 = vmax.f32 %v7542, %v7776
      %v7927 = vmax.f32 %v7541, %v7778
      %v7928 = vmax.f32 %v7543, %v7780
      %v7929 = vmax.f32 %v7551, %v7782
      %v7930 = vmax.f32 %v7559, %v7784
      %v7931 = vmax.f32 %v7558, %v7786
      %v7932 = vmax.f32 %v7560, %v7788
      %v7933 = vmax.f32 %v7568, %v7790
      %v7934 = vmax.f32 %v7576, %v7792
      %v7935 = vmax.f32 %v7575, %v7794
      %v7936 = vmax.f32 %v7577, %v7796
      %v7937 = vmax.f32 %v7585, %v7798
      %v7938 = vmax.f32 %v7593, %v7800
      %v7939 = vmax.f32 %v7592, %v7802
      %v7940 = vmax.f32 %v7594, %v7804
      %v7941 = vmax.f32 %v7602, %v7806
      %v7942 = vmax.f32 %v7610, %v7808
      %v7943 = vmax.f32 %v7609, %v7810
      %v7944 = vmax.f32 %v7611, %v7812
      %v7945 = vmax.f32 %v7619, %v7814
      %v7946 = vmax.f32 %v7627, %v7816
      %v7947 = vmax.f32 %v7626, %v7818
      %v7948 = vmax.f32 %v7628, %v7820
      %v7949 = vpack.c.bf16 %v7885, %v7885
      %v7950 = vpack.c.bf16 %v7886, %v7886
      %v7951 = vpack.c.bf16 %v7887, %v7887
      %v7952 = vpack.c.bf16 %v7888, %v7888
      %v7953 = vpack.c.bf16 %v7889, %v7889
      %v7954 = vpack.c.bf16 %v7890, %v7890
      %v7955 = vpack.c.bf16 %v7891, %v7891
      %v7956 = vpack.c.bf16 %v7892, %v7892
      %v7957 = vpack.c.bf16 %v7893, %v7893
      %v7958 = vpack.c.bf16 %v7894, %v7894
      %v7959 = vpack.c.bf16 %v7895, %v7895
      %v7960 = vpack.c.bf16 %v7896, %v7896
      %v7961 = vpack.c.bf16 %v7897, %v7897
      %v7962 = vpack.c.bf16 %v7898, %v7898
      %v7963 = vpack.c.bf16 %v7899, %v7899
      %v7964 = vpack.c.bf16 %v7900, %v7900
      %v7965 = vpack.c.bf16 %v7901, %v7901
      %v7966 = vpack.c.bf16 %v7902, %v7902
      %v7967 = vpack.c.bf16 %v7903, %v7903
      %v7968 = vpack.c.bf16 %v7904, %v7904
      %v7969 = vpack.c.bf16 %v7905, %v7905
      %v7970 = vpack.c.bf16 %v7906, %v7906
      %v7971 = vpack.c.bf16 %v7907, %v7907
      %v7972 = vpack.c.bf16 %v7908, %v7908
      %v7973 = vpack.c.bf16 %v7909, %v7909
      %v7974 = vpack.c.bf16 %v7910, %v7910
      %v7975 = vpack.c.bf16 %v7911, %v7911
      %v7976 = vpack.c.bf16 %v7912, %v7912
      %v7977 = vpack.c.bf16 %v7913, %v7913
      %v7978 = vpack.c.bf16 %v7914, %v7914
      %v7979 = vpack.c.bf16 %v7915, %v7915
      %v7980 = vpack.c.bf16 %v7916, %v7916
      %v7981 = vpack.c.bf16 %v7917, %v7917
      %v7982 = vpack.c.bf16 %v7918, %v7918
      %v7983 = vpack.c.bf16 %v7919, %v7919
      %v7984 = vpack.c.bf16 %v7920, %v7920
      %v7985 = vpack.c.bf16 %v7921, %v7921
      %v7986 = vpack.c.bf16 %v7922, %v7922
      %v7987 = vpack.c.bf16 %v7923, %v7923
      %v7988 = vpack.c.bf16 %v7924, %v7924
      %v7989 = vpack.c.bf16 %v7925, %v7925
      %v7990 = vpack.c.bf16 %v7926, %v7926
      %v7991 = vpack.c.bf16 %v7927, %v7927
      %v7992 = vpack.c.bf16 %v7928, %v7928
      %v7993 = vpack.c.bf16 %v7929, %v7929
      %v7994 = vpack.c.bf16 %v7930, %v7930
      %v7995 = vpack.c.bf16 %v7931, %v7931
      %v7996 = vpack.c.bf16 %v7932, %v7932
      %v7997 = vpack.c.bf16 %v7933, %v7933
      %v7998 = vpack.c.bf16 %v7934, %v7934
      %v7999 = vpack.c.bf16 %v7935, %v7935
      %v8000 = vpack.c.bf16 %v7936, %v7936
      %v8001 = vpack.c.bf16 %v7937, %v7937
      %v8002 = vpack.c.bf16 %v7938, %v7938
      %v8003 = vpack.c.bf16 %v7939, %v7939
      %v8004 = vpack.c.bf16 %v7940, %v7940
      %v8005 = vpack.c.bf16 %v7941, %v7941
      %v8006 = vpack.c.bf16 %v7942, %v7942
      %v8007 = vpack.c.bf16 %v7943, %v7943
      %v8008 = vpack.c.bf16 %v7944, %v7944
      %v8009 = vpack.c.bf16 %v7945, %v7945
      %v8010 = vpack.c.bf16 %v7946, %v7946
      %v8011 = vpack.c.bf16 %v7947, %v7947
      %v8012 = vpack.c.bf16 %v7948, %v7948
      %v8077 = vunpack.c.l.b16 %v7949
      %v8078 = vunpack.c.l.b16 %v7950
      %v8079 = vunpack.c.l.b16 %v7951
      %v8080 = vunpack.c.l.b16 %v7952
      %v8081 = vunpack.c.l.b16 %v7953
      %v8082 = vunpack.c.l.b16 %v7954
      %v8083 = vunpack.c.l.b16 %v7955
      %v8084 = vunpack.c.l.b16 %v7956
      %v8085 = vunpack.c.l.b16 %v7957
      %v8086 = vunpack.c.l.b16 %v7958
      %v8087 = vunpack.c.l.b16 %v7959
      %v8088 = vunpack.c.l.b16 %v7960
      %v8089 = vunpack.c.l.b16 %v7961
      %v8090 = vunpack.c.l.b16 %v7962
      %v8091 = vunpack.c.l.b16 %v7963
      %v8092 = vunpack.c.l.b16 %v7964
      %v8093 = vunpack.c.l.b16 %v7965
      %v8094 = vunpack.c.l.b16 %v7966
      %v8095 = vunpack.c.l.b16 %v7967
      %v8096 = vunpack.c.l.b16 %v7968
      %v8097 = vunpack.c.l.b16 %v7969
      %v8098 = vunpack.c.l.b16 %v7970
      %v8099 = vunpack.c.l.b16 %v7971
      %v8100 = vunpack.c.l.b16 %v7972
      %v8101 = vunpack.c.l.b16 %v7973
      %v8102 = vunpack.c.l.b16 %v7974
      %v8103 = vunpack.c.l.b16 %v7975
      %v8104 = vunpack.c.l.b16 %v7976
      %v8105 = vunpack.c.l.b16 %v7977
      %v8106 = vunpack.c.l.b16 %v7978
      %v8107 = vunpack.c.l.b16 %v7979
      %v8108 = vunpack.c.l.b16 %v7980
      %v8109 = vunpack.c.l.b16 %v7981
      %v8110 = vunpack.c.l.b16 %v7982
      %v8111 = vunpack.c.l.b16 %v7983
      %v8112 = vunpack.c.l.b16 %v7984
      %v8113 = vunpack.c.l.b16 %v7985
      %v8114 = vunpack.c.l.b16 %v7986
      %v8115 = vunpack.c.l.b16 %v7987
      %v8116 = vunpack.c.l.b16 %v7988
      %v8117 = vunpack.c.l.b16 %v7989
      %v8118 = vunpack.c.l.b16 %v7990
      %v8119 = vunpack.c.l.b16 %v7991
      %v8120 = vunpack.c.l.b16 %v7992
      %v8121 = vunpack.c.l.b16 %v7993
      %v8122 = vunpack.c.l.b16 %v7994
      %v8123 = vunpack.c.l.b16 %v7995
      %v8124 = vunpack.c.l.b16 %v7996
      %v8125 = vunpack.c.l.b16 %v7997
      %v8126 = vunpack.c.l.b16 %v7998
      %v8127 = vunpack.c.l.b16 %v7999
      %v8128 = vunpack.c.l.b16 %v8000
      %v8129 = vunpack.c.l.b16 %v8001
      %v8130 = vunpack.c.l.b16 %v8002
      %v8131 = vunpack.c.l.b16 %v8003
      %v8132 = vunpack.c.l.b16 %v8004
      %v8133 = vunpack.c.l.b16 %v8005
      %v8134 = vunpack.c.l.b16 %v8006
      %v8135 = vunpack.c.l.b16 %v8007
      %v8136 = vunpack.c.l.b16 %v8008
      %v8137 = vunpack.c.l.b16 %v8009
      %v8138 = vunpack.c.l.b16 %v8010
      %v8139 = vunpack.c.l.b16 %v8011
      %v8140 = vunpack.c.l.b16 %v8012
      %v8141 = vpack.c.b16 %v8077, %v8077
      %v8142 = vpack.c.b16 %v8078, %v8078
      %v8143 = vpack.c.b16 %v8079, %v8079
      %v8144 = vpack.c.b16 %v8080, %v8080
      %v8145 = vpack.c.b16 %v8081, %v8081
      %v8146 = vpack.c.b16 %v8082, %v8082
      %v8147 = vpack.c.b16 %v8083, %v8083
      %v8148 = vpack.c.b16 %v8084, %v8084
      %v8149 = vpack.c.b16 %v8085, %v8085
      %v8150 = vpack.c.b16 %v8086, %v8086
      %v8151 = vpack.c.b16 %v8087, %v8087
      %v8152 = vpack.c.b16 %v8088, %v8088
      %v8153 = vpack.c.b16 %v8089, %v8089
      %v8154 = vpack.c.b16 %v8090, %v8090
      %v8155 = vpack.c.b16 %v8091, %v8091
      %v8156 = vpack.c.b16 %v8092, %v8092
      %v8157 = vpack.c.b16 %v8093, %v8093
      %v8158 = vpack.c.b16 %v8094, %v8094
      %v8159 = vpack.c.b16 %v8095, %v8095
      %v8160 = vpack.c.b16 %v8096, %v8096
      %v8161 = vpack.c.b16 %v8097, %v8097
      %v8162 = vpack.c.b16 %v8098, %v8098
      %v8163 = vpack.c.b16 %v8099, %v8099
      %v8164 = vpack.c.b16 %v8100, %v8100
      %v8165 = vpack.c.b16 %v8101, %v8101
      %v8166 = vpack.c.b16 %v8102, %v8102
      %v8167 = vpack.c.b16 %v8103, %v8103
      %v8168 = vpack.c.b16 %v8104, %v8104
      %v8169 = vpack.c.b16 %v8105, %v8105
      %v8170 = vpack.c.b16 %v8106, %v8106
      %v8171 = vpack.c.b16 %v8107, %v8107
      %v8172 = vpack.c.b16 %v8108, %v8108
      %v8173 = vpack.c.b16 %v8109, %v8109
      %v8174 = vpack.c.b16 %v8110, %v8110
      %v8175 = vpack.c.b16 %v8111, %v8111
      %v8176 = vpack.c.b16 %v8112, %v8112
      %v8177 = vpack.c.b16 %v8113, %v8113
      %v8178 = vpack.c.b16 %v8114, %v8114
      %v8179 = vpack.c.b16 %v8115, %v8115
      %v8180 = vpack.c.b16 %v8116, %v8116
      %v8181 = vpack.c.b16 %v8117, %v8117
      %v8182 = vpack.c.b16 %v8118, %v8118
      %v8183 = vpack.c.b16 %v8119, %v8119
      %v8184 = vpack.c.b16 %v8120, %v8120
      %v8185 = vpack.c.b16 %v8121, %v8121
      %v8186 = vpack.c.b16 %v8122, %v8122
      %v8187 = vpack.c.b16 %v8123, %v8123
      %v8188 = vpack.c.b16 %v8124, %v8124
      %v8189 = vpack.c.b16 %v8125, %v8125
      %v8190 = vpack.c.b16 %v8126, %v8126
      %v8191 = vpack.c.b16 %v8127, %v8127
      %v8192 = vpack.c.b16 %v8128, %v8128
      %v8193 = vpack.c.b16 %v8129, %v8129
      %v8194 = vpack.c.b16 %v8130, %v8130
      %v8195 = vpack.c.b16 %v8131, %v8131
      %v8196 = vpack.c.b16 %v8132, %v8132
      %v8197 = vpack.c.b16 %v8133, %v8133
      %v8198 = vpack.c.b16 %v8134, %v8134
      %v8199 = vpack.c.b16 %v8135, %v8135
      %v8200 = vpack.c.b16 %v8136, %v8136
      %v8201 = vpack.c.b16 %v8137, %v8137
      %v8202 = vpack.c.b16 %v8138, %v8138
      %v8203 = vpack.c.b16 %v8139, %v8139
      %v8204 = vpack.c.b16 %v8140, %v8140
      %v8205 = vunpack.c.l.b16 %v8141
      %v8206 = vunpack.c.l.b16 %v8142
      %v8207 = vunpack.c.l.b16 %v8143
      %v8208 = vunpack.c.l.b16 %v8144
      %v8209 = vunpack.c.l.b16 %v8145
      %v8210 = vunpack.c.l.b16 %v8146
      %v8211 = vunpack.c.l.b16 %v8147
      %v8212 = vunpack.c.l.b16 %v8148
      %v8213 = vunpack.c.l.b16 %v8149
      %v8214 = vunpack.c.l.b16 %v8150
      %v8215 = vunpack.c.l.b16 %v8151
      %v8216 = vunpack.c.l.b16 %v8152
      %v8217 = vunpack.c.l.b16 %v8153
      %v8218 = vunpack.c.l.b16 %v8154
      %v8219 = vunpack.c.l.b16 %v8155
      %v8220 = vunpack.c.l.b16 %v8156
      %v8221 = vunpack.c.l.b16 %v8157
      %v8222 = vunpack.c.l.b16 %v8158
      %v8223 = vunpack.c.l.b16 %v8159
      %v8224 = vunpack.c.l.b16 %v8160
      %v8225 = vunpack.c.l.b16 %v8161
      %v8226 = vunpack.c.l.b16 %v8162
      %v8227 = vunpack.c.l.b16 %v8163
      %v8228 = vunpack.c.l.b16 %v8164
      %v8229 = vunpack.c.l.b16 %v8165
      %v8230 = vunpack.c.l.b16 %v8166
      %v8231 = vunpack.c.l.b16 %v8167
      %v8232 = vunpack.c.l.b16 %v8168
      %v8233 = vunpack.c.l.b16 %v8169
      %v8234 = vunpack.c.l.b16 %v8170
      %v8235 = vunpack.c.l.b16 %v8171
      %v8236 = vunpack.c.l.b16 %v8172
      %v8237 = vunpack.c.l.b16 %v8173
      %v8238 = vunpack.c.l.b16 %v8174
      %v8239 = vunpack.c.l.b16 %v8175
      %v8240 = vunpack.c.l.b16 %v8176
      %v8241 = vunpack.c.l.b16 %v8177
      %v8242 = vunpack.c.l.b16 %v8178
      %v8243 = vunpack.c.l.b16 %v8179
      %v8244 = vunpack.c.l.b16 %v8180
      %v8245 = vunpack.c.l.b16 %v8181
      %v8246 = vunpack.c.l.b16 %v8182
      %v8247 = vunpack.c.l.b16 %v8183
      %v8248 = vunpack.c.l.b16 %v8184
      %v8249 = vunpack.c.l.b16 %v8185
      %v8250 = vunpack.c.l.b16 %v8186
      %v8251 = vunpack.c.l.b16 %v8187
      %v8252 = vunpack.c.l.b16 %v8188
      %v8253 = vunpack.c.l.b16 %v8189
      %v8254 = vunpack.c.l.b16 %v8190
      %v8255 = vunpack.c.l.b16 %v8191
      %v8256 = vunpack.c.l.b16 %v8192
      %v8257 = vunpack.c.l.b16 %v8193
      %v8258 = vunpack.c.l.b16 %v8194
      %v8259 = vunpack.c.l.b16 %v8195
      %v8260 = vunpack.c.l.b16 %v8196
      %v8261 = vunpack.c.l.b16 %v8197
      %v8262 = vunpack.c.l.b16 %v8198
      %v8263 = vunpack.c.l.b16 %v8199
      %v8264 = vunpack.c.l.b16 %v8200
      %v8265 = vunpack.c.l.b16 %v8201
      %v8266 = vunpack.c.l.b16 %v8202
      %v8267 = vunpack.c.l.b16 %v8203
      %v8268 = vunpack.c.l.b16 %v8204
      %v8269 = vrot.slane %v8206, 7
      %vm8270 = vcmask 1041409
      %v8271 = vsel %vm8270, %v8269, %v8205
      %v8272 = vrot.slane %v8207, 6
      %vm8273 = vcmask 1042434
      %v8274 = vsel %vm8273, %v8272, %v8271
      %v8275 = vrot.slane %v8208, 5
      %vm8276 = vcmask 1043459
      %v8277 = vsel %vm8276, %v8275, %v8274
      %v8278 = vrot.slane %v8209, 4
      %vm8279 = vcmask 1044484
      %v8280 = vsel %vm8279, %v8278, %v8277
      %v8281 = vrot.slane %v8210, 3
      %vm8282 = vcmask 1045509
      %v8283 = vsel %vm8282, %v8281, %v8280
      %v8284 = vrot.slane %v8211, 2
      %vm8285 = vcmask 1046534
      %v8286 = vsel %vm8285, %v8284, %v8283
      %v8287 = vrot.slane %v8212, 1
      %vm8288 = vcmask 1047559
      %v8289 = vsel %vm8288, %v8287, %v8286
      %v8290 = vrot.slane %v8214, 7
      %v8291 = vsel %vm8270, %v8290, %v8213
      %v8292 = vrot.slane %v8215, 6
      %v8293 = vsel %vm8273, %v8292, %v8291
      %v8294 = vrot.slane %v8216, 5
      %v8295 = vsel %vm8276, %v8294, %v8293
      %v8296 = vrot.slane %v8217, 4
      %v8297 = vsel %vm8279, %v8296, %v8295
      %v8298 = vrot.slane %v8218, 3
      %v8299 = vsel %vm8282, %v8298, %v8297
      %v8300 = vrot.slane %v8219, 2
      %v8301 = vsel %vm8285, %v8300, %v8299
      %v8302 = vrot.slane %v8220, 1
      %v8303 = vsel %vm8288, %v8302, %v8301
      %v8304 = vrot.slane %v8222, 7
      %v8305 = vsel %vm8270, %v8304, %v8221
      %v8306 = vrot.slane %v8223, 6
      %v8307 = vsel %vm8273, %v8306, %v8305
      %v8308 = vrot.slane %v8224, 5
      %v8309 = vsel %vm8276, %v8308, %v8307
      %v8310 = vrot.slane %v8225, 4
      %v8311 = vsel %vm8279, %v8310, %v8309
      %v8312 = vrot.slane %v8226, 3
      %v8313 = vsel %vm8282, %v8312, %v8311
      %v8314 = vrot.slane %v8227, 2
      %v8315 = vsel %vm8285, %v8314, %v8313
      %v8316 = vrot.slane %v8228, 1
      %v8317 = vsel %vm8288, %v8316, %v8315
      %v8318 = vrot.slane %v8230, 7
      %v8319 = vsel %vm8270, %v8318, %v8229
      %v8320 = vrot.slane %v8231, 6
      %v8321 = vsel %vm8273, %v8320, %v8319
      %v8322 = vrot.slane %v8232, 5
      %v8323 = vsel %vm8276, %v8322, %v8321
      %v8324 = vrot.slane %v8233, 4
      %v8325 = vsel %vm8279, %v8324, %v8323
      %v8326 = vrot.slane %v8234, 3
      %v8327 = vsel %vm8282, %v8326, %v8325
      %v8328 = vrot.slane %v8235, 2
      %v8329 = vsel %vm8285, %v8328, %v8327
      %v8330 = vrot.slane %v8236, 1
      %v8331 = vsel %vm8288, %v8330, %v8329
      %v8332 = vrot.slane %v8238, 7
      %v8333 = vsel %vm8270, %v8332, %v8237
      %v8334 = vrot.slane %v8239, 6
      %v8335 = vsel %vm8273, %v8334, %v8333
      %v8336 = vrot.slane %v8240, 5
      %v8337 = vsel %vm8276, %v8336, %v8335
      %v8338 = vrot.slane %v8241, 4
      %v8339 = vsel %vm8279, %v8338, %v8337
      %v8340 = vrot.slane %v8242, 3
      %v8341 = vsel %vm8282, %v8340, %v8339
      %v8342 = vrot.slane %v8243, 2
      %v8343 = vsel %vm8285, %v8342, %v8341
      %v8344 = vrot.slane %v8244, 1
      %v8345 = vsel %vm8288, %v8344, %v8343
      %v8346 = vrot.slane %v8246, 7
      %v8347 = vsel %vm8270, %v8346, %v8245
      %v8348 = vrot.slane %v8247, 6
      %v8349 = vsel %vm8273, %v8348, %v8347
      %v8350 = vrot.slane %v8248, 5
      %v8351 = vsel %vm8276, %v8350, %v8349
      %v8352 = vrot.slane %v8249, 4
      %v8353 = vsel %vm8279, %v8352, %v8351
      %v8354 = vrot.slane %v8250, 3
      %v8355 = vsel %vm8282, %v8354, %v8353
      %v8356 = vrot.slane %v8251, 2
      %v8357 = vsel %vm8285, %v8356, %v8355
      %v8358 = vrot.slane %v8252, 1
      %v8359 = vsel %vm8288, %v8358, %v8357
      %v8360 = vrot.slane %v8254, 7
      %v8361 = vsel %vm8270, %v8360, %v8253
      %v8362 = vrot.slane %v8255, 6
      %v8363 = vsel %vm8273, %v8362, %v8361
      %v8364 = vrot.slane %v8256, 5
      %v8365 = vsel %vm8276, %v8364, %v8363
      %v8366 = vrot.slane %v8257, 4
      %v8367 = vsel %vm8279, %v8366, %v8365
      %v8368 = vrot.slane %v8258, 3
      %v8369 = vsel %vm8282, %v8368, %v8367
      %v8370 = vrot.slane %v8259, 2
      %v8371 = vsel %vm8285, %v8370, %v8369
      %v8372 = vrot.slane %v8260, 1
      %v8373 = vsel %vm8288, %v8372, %v8371
      %v8374 = vrot.slane %v8262, 7
      %v8375 = vsel %vm8270, %v8374, %v8261
      %v8376 = vrot.slane %v8263, 6
      %v8377 = vsel %vm8273, %v8376, %v8375
      %v8378 = vrot.slane %v8264, 5
      %v8379 = vsel %vm8276, %v8378, %v8377
      %v8380 = vrot.slane %v8265, 4
      %v8381 = vsel %vm8279, %v8380, %v8379
      %v8382 = vrot.slane %v8266, 3
      %v8383 = vsel %vm8282, %v8382, %v8381
      %v8384 = vrot.slane %v8267, 2
      %v8385 = vsel %vm8285, %v8384, %v8383
      %v8386 = vrot.slane %v8268, 1
      %v8387 = vsel %vm8288, %v8386, %v8385
      %v8388 = vpack.c.b16 %v8289, %v8289
      %v8389 = vpack.c.b16 %v8303, %v8303
      %v8390 = vpack.c.b16 %v8317, %v8317
      %v8391 = vpack.c.b16 %v8331, %v8331
      %v8392 = vpack.c.b16 %v8345, %v8345
      %v8393 = vpack.c.b16 %v8359, %v8359
      %v8394 = vpack.c.b16 %v8373, %v8373
      %v8395 = vpack.c.b16 %v8387, %v8387
      %vm8404 = vcmask 257024
      %8405 = vst.msk [vmem:[%s224] sm:$0xf] %vm8404, %v8388
      %8406 = vst.msk [vmem:[%s224 + $0x4] sm:$0xf] %vm8404, %v8389
      %8407 = vst.msk [vmem:[%s224 + $0x8] sm:$0xf] %vm8404, %v8390
      %8408 = vst.msk [vmem:[%s224 + $0xc] sm:$0xf] %vm8404, %v8391
      %8409 = vst.msk [vmem:[%s224 + $0x10] sm:$0xf] %vm8404, %v8392
      %8410 = vst.msk [vmem:[%s224 + $0x14] sm:$0xf] %vm8404, %v8393
      %8411 = vst.msk [vmem:[%s224 + $0x18] sm:$0xf] %vm8404, %v8394
      %8412 = vst.msk [vmem:[%s224 + $0x1c] sm:$0xf] %vm8404, %v8395
      %p8413 = scmp.lt.s32.totalorder %s16, 1
      %s8414 = scalar_select %p8413, %s16, 1
      %s8415 = smul.addr %s8414, 8
      %s8416 = smul.addr %s8415, 4
      %s8417 = scalar_lea.vmem %s5, %s8416
      // Predicated region
      $region41: #{_lambda_.2} parent=39 // pred_check
        %p8418 = pneg %p144
      $region42: #{_lambda_.2} parent=39 // pred_check_branch
        %8420 = sbr.rel (%p8418) target = $region44
      $region43: #{_lambda_.2} parent=39 // pred_region
        _
      $region44: #{_lambda_.2} parent=39 // pred_fallthru
        _
    $region40: #{_lambda_.2} parent=5 // pred_fallthru
      _
    %p8421 = scmp.le.s32.totalorder 2, %s11
    // Predicated region
    $region45: #{_lambda_.2} parent=5 // pred_check
      %p8422 = pneg %p8421
    $region46: #{_lambda_.2} parent=5 // pred_check_branch
      %8424 = sbr.rel (%p8422) target = $region48
    $region47: #{_lambda_.2} parent=5 // pred_region
      %s8425 = ssub.s32 %s11, 2
      // Predicated region
      $region49: #{_lambda_.2} parent=47 // pred_check
        %p8426 = pneg %p150
      $region50: #{_lambda_.2} parent=47 // pred_check_branch
        %8428 = sbr.rel (%p8426) target = $region52
      $region51: #{_lambda_.2} parent=47 // pred_region
        %p8429 = scmp.lt.s32.totalorder %s17, 1
        %s8430 = scalar_select %p8429, %s17, 1
        %s8431 = smul.addr %s8430, 8
        %s8432 = smul.addr %s8431, 4
        %s8433 = scalar_lea.vmem %s5, %s8432
      $region52: #{_lambda_.2} parent=47 // pred_fallthru
        _
    $region48: #{_lambda_.2} parent=5 // pred_fallthru
      _
  $region6: #{_lambda_.2} parent=0 // loop_footer
    %s15 = sadd.s32 1, %s11
  $region7: #{_lambda_.2} parent=0 // loop_footer_branch
    %10 = sbr.rel target = $region3
  $region8: #{_lambda_.2} parent=0 // loop_exit
    _

</llo_original>
